<compile_context>
chip_gen: v7x
topology: tpu7x:2x2x1
jax: 0.10.0
libtpu: 0.0.40
codegen_flags: <defaults>
</compile_context>

<pallas_src>
import jax
import jax.numpy as jnp
import numpy as np
from jax import lax
from jax.experimental import pallas as pl
from jax.experimental.pallas import tpu as pltpu


def basic_block_kernel(x_ref, w1_ref, b1_ref, w2_ref, b2_ref, out_ref,
                       xpad_ref, midpad_ref, col_ref):
    """Fused conv3x3 -> bn1(+relu) -> conv3x3 -> bn2 -> +identity -> relu.

    x_ref    : (1, H, W, C)   bf16   input block (also the identity branch)
    w1_ref   : (9*C, C)       bf16   conv1 weights, BN1 scale pre-folded, taps in K
    b1_ref   : (1, C)         f32    folded BN1 bias
    w2_ref   : (9*C, C)       bf16   conv2 weights, BN2 scale pre-folded
    b2_ref   : (1, C)         f32    folded BN2 bias
    out_ref  : (1, H, W, C)   f32
    xpad_ref : (H+2, W+2, C)  bf16   scratch: padded input (halo-only zeroing)
    midpad_ref:(H+2, W+2, C)  bf16   scratch: padded intermediate
    col_ref  : (H*W, 9*C)     bf16   scratch: im2col operand (reused for both convs)
    """
    _, H, W, Cin = x_ref.shape
    Cout = w1_ref.shape[-1]

    x_blk = x_ref[...]                         # (1, H, W, Cin) bf16

    # ---- stage input into padded scratch: zero only the 1-pixel halo ----------
    zrow_i = jnp.zeros((1, W + 2, Cin), xpad_ref.dtype)
    zcol_i = jnp.zeros((H + 2, 1, Cin), xpad_ref.dtype)
    xpad_ref[0:1, :, :] = zrow_i
    xpad_ref[H + 1:H + 2, :, :] = zrow_i
    xpad_ref[:, 0:1, :] = zcol_i
    xpad_ref[:, W + 1:W + 2, :] = zcol_i
    xpad_ref[1:H + 1, 1:W + 1, :] = x_blk.reshape(H, W, Cin)

    # ---- im2col for conv1: fuse the 9 taps into the contraction dim (K=9*Cin) --
    for kh in range(3):
        for kw in range(3):
            t = kh * 3 + kw
            col_ref[:, t * Cin:(t + 1) * Cin] = (
                xpad_ref[kh:kh + H, kw:kw + W, :].reshape(H * W, Cin))

    # ---- conv1 (single MXU matmul) + folded-BN bias + relu ---------------------
    y = jnp.dot(col_ref[...], w1_ref[...], preferred_element_type=jnp.float32)
    y = jnp.maximum(y + b1_ref[...], 0.0)

    # ---- re-pad intermediate (halo-only zeroing) -------------------------------
    zrow_m = jnp.zeros((1, W + 2, Cout), midpad_ref.dtype)
    zcol_m = jnp.zeros((H + 2, 1, Cout), midpad_ref.dtype)
    midpad_ref[0:1, :, :] = zrow_m
    midpad_ref[H + 1:H + 2, :, :] = zrow_m
    midpad_ref[:, 0:1, :] = zcol_m
    midpad_ref[:, W + 1:W + 2, :] = zcol_m
    midpad_ref[1:H + 1, 1:W + 1, :] = (
        y.astype(midpad_ref.dtype).reshape(H, W, Cout))

    # ---- im2col for conv2 (reuses col scratch; Cin == Cout for downsample=None)
    for kh in range(3):
        for kw in range(3):
            t = kh * 3 + kw
            col_ref[:, t * Cout:(t + 1) * Cout] = (
                midpad_ref[kh:kh + H, kw:kw + W, :].reshape(H * W, Cout))

    # ---- conv2 + folded-BN bias + residual add + relu --------------------------
    z = jnp.dot(col_ref[...], w2_ref[...], preferred_element_type=jnp.float32)
    z = z + b2_ref[...]
    z = z + x_blk.reshape(H * W, Cin).astype(jnp.float32)
    out_ref[...] = jnp.maximum(z, 0.0).reshape(1, H, W, Cout)


def basic_block_pallas(x_nhwc, w1_hwio, g1, bt1, m1, v1,
                       w2_hwio, g2, bt2, m2, v2, eps=1e-5):
    N, H, W, Cin = x_nhwc.shape
    Cout = w1_hwio.shape[-1]
    assert Cin == Cout, "downsample=None requires inplanes == planes"

    # Fold BatchNorm (inference) into the conv weights (scale) + a bias.
    s1 = g1 / jnp.sqrt(v1 + eps)
    b1 = (bt1 - m1 * s1).reshape(1, Cout).astype(jnp.float32)
    s2 = g2 / jnp.sqrt(v2 + eps)
    b2 = (bt2 - m2 * s2).reshape(1, Cout).astype(jnp.float32)

    # Weights: HWIO * scale, flattened so the 3x3 taps live in the K dimension.
    w1f = (w1_hwio * s1[None, None, None, :]).reshape(9 * Cin, Cout)
    w2f = (w2_hwio * s2[None, None, None, :]).reshape(9 * Cout, Cout)

    # bf16 operands for the MXU; accumulation stays f32 inside the kernel.
    x_bf = x_nhwc.astype(jnp.bfloat16)
    w1f = w1f.astype(jnp.bfloat16)
    w2f = w2f.astype(jnp.bfloat16)

    grid_spec = pltpu.PrefetchScalarGridSpec(
        num_scalar_prefetch=0,
        grid=(N,),
        in_specs=[
            pl.BlockSpec((1, H, W, Cin), lambda n: (n, 0, 0, 0)),   # x (conv + identity)
            pl.BlockSpec((9 * Cin, Cout), lambda n: (0, 0)),        # w1 (fetched once)
            pl.BlockSpec((1, Cout), lambda n: (0, 0)),              # b1
            pl.BlockSpec((9 * Cout, Cout), lambda n: (0, 0)),       # w2
            pl.BlockSpec((1, Cout), lambda n: (0, 0)),              # b2
        ],
        out_specs=pl.BlockSpec((1, H, W, Cout), lambda n: (n, 0, 0, 0)),
        scratch_shapes=[
            pltpu.VMEM((H + 2, W + 2, Cin), jnp.bfloat16),    # padded input
            pltpu.VMEM((H + 2, W + 2, Cout), jnp.bfloat16),   # padded intermediate
            pltpu.VMEM((H * W, 9 * Cin), jnp.bfloat16),       # im2col operand
        ],
    )

    out = pl.pallas_call(
        basic_block_kernel,
        out_shape=jax.ShapeDtypeStruct((N, H, W, Cout), jnp.float32),
        grid_spec=grid_spec,
        compiler_params=pltpu.CompilerParams(
            dimension_semantics=("parallel",),        # batch elements independent
            vmem_limit_bytes=32 * 1024 * 1024,        # explicit; safe on v5e/v6e/v7x
        ),
    )(x_bf, w1f, b1, w2f, b2)
    return out


# ------------------------- pure-JAX reference -------------------------------
def ref_basic_block(x_nchw, w1_oihw, g1, bt1, m1, v1,
                    w2_oihw, g2, bt2, m2, v2, eps=1e-5):
    def conv(x, w):
        return lax.conv_general_dilated(
            x, w, window_strides=(1, 1), padding=((1, 1), (1, 1)),
            dimension_numbers=("NCHW", "OIHW", "NCHW"))

    def bn(x, g, b, m, v):
        g = g.reshape(1, -1, 1, 1); b = b.reshape(1, -1, 1, 1)
        m = m.reshape(1, -1, 1, 1); v = v.reshape(1, -1, 1, 1)
        return (x - m) / jnp.sqrt(v + eps) * g + b

    out = jnp.maximum(bn(conv(x_nchw, w1_oihw), g1, bt1, m1, v1), 0.0)
    out = bn(conv(out, w2_oihw), g2, bt2, m2, v2)
    out = out + x_nchw
    return jnp.maximum(out, 0.0)


if __name__ == "__main__":
    # Small shapes: inplanes = planes = 8 (downsample=None => residual add valid).
    N, C, H, W = 2, 8, 16, 16
    planes = 8

    key = jax.random.PRNGKey(0)
    ks = jax.random.split(key, 12)
    x_nchw = jax.random.normal(ks[0], (N, C, H, W), jnp.float32)

    w1_oihw = 0.1 * jax.random.normal(ks[1], (planes, C, 3, 3), jnp.float32)
    w2_oihw = 0.1 * jax.random.normal(ks[2], (planes, planes, 3, 3), jnp.float32)

    g1 = 1.0 + 0.1 * jax.random.normal(ks[3], (planes,), jnp.float32)
    bt1 = 0.1 * jax.random.normal(ks[4], (planes,), jnp.float32)
    m1 = 0.1 * jax.random.normal(ks[5], (planes,), jnp.float32)
    v1 = 0.5 + jnp.abs(jax.random.normal(ks[6], (planes,), jnp.float32))

    g2 = 1.0 + 0.1 * jax.random.normal(ks[7], (planes,), jnp.float32)
    bt2 = 0.1 * jax.random.normal(ks[8], (planes,), jnp.float32)
    m2 = 0.1 * jax.random.normal(ks[9], (planes,), jnp.float32)
    v2 = 0.5 + jnp.abs(jax.random.normal(ks[10], (planes,), jnp.float32))

    # NCHW -> NHWC, OIHW -> HWIO for the kernel.
    x_nhwc = jnp.transpose(x_nchw, (0, 2, 3, 1))
    w1_hwio = jnp.transpose(w1_oihw, (2, 3, 1, 0))
    w2_hwio = jnp.transpose(w2_oihw, (2, 3, 1, 0))

    out_nhwc = basic_block_pallas(x_nhwc, w1_hwio, g1, bt1, m1, v1,
                                  w2_hwio, g2, bt2, m2, v2)
    out_nhwc = jax.block_until_ready(out_nhwc)
    out_nchw = jnp.transpose(out_nhwc, (0, 3, 1, 2))

    ref = ref_basic_block(x_nchw, w1_oihw, g1, bt1, m1, v1,
                          w2_oihw, g2, bt2, m2, v2)
    # bf16 MXU inputs (f32 accumulation) => loosened tolerance vs f32 reference.
    np.testing.assert_allclose(np.asarray(out_nchw), np.asarray(ref),
                               rtol=3e-2, atol=3e-2)
    print("KERNEL_OK")
</pallas_src>

<mosaic_0001>
module attributes {stable_mosaic.version = 11 : i64} {
  func.func @basic_block_kernel(%arg0: i32, %arg1: memref<1x16x16x8xbf16, #tpu.memory_space<vmem>>, %arg2: memref<72x8xbf16, #tpu.memory_space<vmem>>, %arg3: memref<1x8xf32, #tpu.memory_space<vmem>>, %arg4: memref<72x8xbf16, #tpu.memory_space<vmem>>, %arg5: memref<1x8xf32, #tpu.memory_space<vmem>>, %arg6: memref<1x16x16x8xf32, #tpu.memory_space<vmem>>, %arg7: memref<18x18x8xbf16, #tpu.memory_space<vmem>>, %arg8: memref<18x18x8xbf16, #tpu.memory_space<vmem>>, %arg9: memref<256x72xbf16, #tpu.memory_space<vmem>>) attributes {dimension_semantics = [#tpu.dimension_semantics<parallel>], iteration_bounds = array<i64: 2>, scalar_prefetch = 0 : i64, scratch_operands = 3 : i64, tpu.core_type = #tpu.core_type<tc>, window_params = [{transform_indices = @transform_0, window_bounds = array<i64: 1, 16, 16, 8>}, {pipeline_mode = #tpu.pipeline_mode<synchronous>, transform_indices = @transform_1, window_bounds = array<i64: 72, 8>}, {pipeline_mode = #tpu.pipeline_mode<synchronous>, transform_indices = @transform_2, window_bounds = array<i64: 1, 8>}, {pipeline_mode = #tpu.pipeline_mode<synchronous>, transform_indices = @transform_3, window_bounds = array<i64: 72, 8>}, {pipeline_mode = #tpu.pipeline_mode<synchronous>, transform_indices = @transform_4, window_bounds = array<i64: 1, 8>}, {transform_indices = @transform_5, window_bounds = array<i64: 1, 16, 16, 8>}]} {
    %c0 = arith.constant 0 : index
    %c0_0 = arith.constant 0 : index
    %c0_1 = arith.constant 0 : index
    %c0_2 = arith.constant 0 : index
    %0 = vector.load %arg1[%c0, %c0_0, %c0_1, %c0_2] : memref<1x16x16x8xbf16, #tpu.memory_space<vmem>>, vector<1x16x16x8xbf16>
    %cst = arith.constant 0.000000e+00 : bf16
    %1 = vector.broadcast %cst : bf16 to vector<1x18x8xbf16>
    %cst_3 = arith.constant 0.000000e+00 : bf16
    %2 = vector.broadcast %cst_3 : bf16 to vector<18x1x8xbf16>
    %c0_4 = arith.constant 0 : index
    %c0_5 = arith.constant 0 : index
    %c0_6 = arith.constant 0 : index
    %3 = vector.load %arg7[%c0_4, %c0_5, %c0_6] : memref<18x18x8xbf16, #tpu.memory_space<vmem>>, vector<1x18x8xbf16>
    tpu.vector_store %arg7[%c0_4, %c0_5, %c0_6], %1 {strides = array<i32>} : memref<18x18x8xbf16, #tpu.memory_space<vmem>>, vector<1x18x8xbf16>,
    %c17 = arith.constant 17 : index
    %c0_7 = arith.constant 0 : index
    %c0_8 = arith.constant 0 : index
    %4 = vector.load %arg7[%c17, %c0_7, %c0_8] : memref<18x18x8xbf16, #tpu.memory_space<vmem>>, vector<1x18x8xbf16>
    tpu.vector_store %arg7[%c17, %c0_7, %c0_8], %1 {strides = array<i32>} : memref<18x18x8xbf16, #tpu.memory_space<vmem>>, vector<1x18x8xbf16>,
    %c0_9 = arith.constant 0 : index
    %c0_10 = arith.constant 0 : index
    %c0_11 = arith.constant 0 : index
    %5 = vector.load %arg7[%c0_9, %c0_10, %c0_11] : memref<18x18x8xbf16, #tpu.memory_space<vmem>>, vector<18x1x8xbf16>
    tpu.vector_store %arg7[%c0_9, %c0_10, %c0_11], %2 {strides = array<i32>} : memref<18x18x8xbf16, #tpu.memory_space<vmem>>, vector<18x1x8xbf16>,
    %c0_12 = arith.constant 0 : index
    %c17_13 = arith.constant 17 : index
    %c0_14 = arith.constant 0 : index
    %6 = vector.load %arg7[%c0_12, %c17_13, %c0_14] : memref<18x18x8xbf16, #tpu.memory_space<vmem>>, vector<18x1x8xbf16>
    tpu.vector_store %arg7[%c0_12, %c17_13, %c0_14], %2 {strides = array<i32>} : memref<18x18x8xbf16, #tpu.memory_space<vmem>>, vector<18x1x8xbf16>,
    %7 = vector.shape_cast %0 : vector<1x16x16x8xbf16> to vector<16x16x8xbf16>
    %c1 = arith.constant 1 : index
    %c1_15 = arith.constant 1 : index
    %c0_16 = arith.constant 0 : index
    %8 = vector.load %arg7[%c1, %c1_15, %c0_16] : memref<18x18x8xbf16, #tpu.memory_space<vmem>>, vector<16x16x8xbf16>
    tpu.vector_store %arg7[%c1, %c1_15, %c0_16], %7 {strides = array<i32>} : memref<18x18x8xbf16, #tpu.memory_space<vmem>>, vector<16x16x8xbf16>,
    %c0_17 = arith.constant 0 : index
    %c0_18 = arith.constant 0 : index
    %c0_19 = arith.constant 0 : index
    %9 = vector.load %arg7[%c0_17, %c0_18, %c0_19] : memref<18x18x8xbf16, #tpu.memory_space<vmem>>, vector<16x16x8xbf16>
    %10 = vector.shape_cast %9 : vector<16x16x8xbf16> to vector<256x8xbf16>
    %c0_20 = arith.constant 0 : index
    %c0_21 = arith.constant 0 : index
    %11 = vector.load %arg9[%c0_20, %c0_21] : memref<256x72xbf16, #tpu.memory_space<vmem>>, vector<256x8xbf16>
    tpu.vector_store %arg9[%c0_20, %c0_21], %10 {strides = array<i32>} : memref<256x72xbf16, #tpu.memory_space<vmem>>, vector<256x8xbf16>,
    %c0_22 = arith.constant 0 : index
    %c1_23 = arith.constant 1 : index
    %c0_24 = arith.constant 0 : index
    %12 = vector.load %arg7[%c0_22, %c1_23, %c0_24] : memref<18x18x8xbf16, #tpu.memory_space<vmem>>, vector<16x16x8xbf16>
    %13 = vector.shape_cast %12 : vector<16x16x8xbf16> to vector<256x8xbf16>
    %c0_25 = arith.constant 0 : index
    %c8 = arith.constant 8 : index
    %14 = vector.load %arg9[%c0_25, %c8] : memref<256x72xbf16, #tpu.memory_space<vmem>>, vector<256x8xbf16>
    tpu.vector_store %arg9[%c0_25, %c8], %13 {strides = array<i32>} : memref<256x72xbf16, #tpu.memory_space<vmem>>, vector<256x8xbf16>,
    %c0_26 = arith.constant 0 : index
    %c2 = arith.constant 2 : index
    %c0_27 = arith.constant 0 : index
    %15 = vector.load %arg7[%c0_26, %c2, %c0_27] : memref<18x18x8xbf16, #tpu.memory_space<vmem>>, vector<16x16x8xbf16>
    %16 = vector.shape_cast %15 : vector<16x16x8xbf16> to vector<256x8xbf16>
    %c0_28 = arith.constant 0 : index
    %c16 = arith.constant 16 : index
    %17 = vector.load %arg9[%c0_28, %c16] : memref<256x72xbf16, #tpu.memory_space<vmem>>, vector<256x8xbf16>
    tpu.vector_store %arg9[%c0_28, %c16], %16 {strides = array<i32>} : memref<256x72xbf16, #tpu.memory_space<vmem>>, vector<256x8xbf16>,
    %c1_29 = arith.constant 1 : index
    %c0_30 = arith.constant 0 : index
    %c0_31 = arith.constant 0 : index
    %18 = vector.load %arg7[%c1_29, %c0_30, %c0_31] : memref<18x18x8xbf16, #tpu.memory_space<vmem>>, vector<16x16x8xbf16>
    %19 = vector.shape_cast %18 : vector<16x16x8xbf16> to vector<256x8xbf16>
    %c0_32 = arith.constant 0 : index
    %c24 = arith.constant 24 : index
    %20 = vector.load %arg9[%c0_32, %c24] : memref<256x72xbf16, #tpu.memory_space<vmem>>, vector<256x8xbf16>
    tpu.vector_store %arg9[%c0_32, %c24], %19 {strides = array<i32>} : memref<256x72xbf16, #tpu.memory_space<vmem>>, vector<256x8xbf16>,
    %c1_33 = arith.constant 1 : index
    %c1_34 = arith.constant 1 : index
    %c0_35 = arith.constant 0 : index
    %21 = vector.load %arg7[%c1_33, %c1_34, %c0_35] : memref<18x18x8xbf16, #tpu.memory_space<vmem>>, vector<16x16x8xbf16>
    %22 = vector.shape_cast %21 : vector<16x16x8xbf16> to vector<256x8xbf16>
    %c0_36 = arith.constant 0 : index
    %c32 = arith.constant 32 : index
    %23 = vector.load %arg9[%c0_36, %c32] : memref<256x72xbf16, #tpu.memory_space<vmem>>, vector<256x8xbf16>
    tpu.vector_store %arg9[%c0_36, %c32], %22 {strides = array<i32>} : memref<256x72xbf16, #tpu.memory_space<vmem>>, vector<256x8xbf16>,
    %c1_37 = arith.constant 1 : index
    %c2_38 = arith.constant 2 : index
    %c0_39 = arith.constant 0 : index
    %24 = vector.load %arg7[%c1_37, %c2_38, %c0_39] : memref<18x18x8xbf16, #tpu.memory_space<vmem>>, vector<16x16x8xbf16>
    %25 = vector.shape_cast %24 : vector<16x16x8xbf16> to vector<256x8xbf16>
    %c0_40 = arith.constant 0 : index
    %c40 = arith.constant 40 : index
    %26 = vector.load %arg9[%c0_40, %c40] : memref<256x72xbf16, #tpu.memory_space<vmem>>, vector<256x8xbf16>
    tpu.vector_store %arg9[%c0_40, %c40], %25 {strides = array<i32>} : memref<256x72xbf16, #tpu.memory_space<vmem>>, vector<256x8xbf16>,
    %c2_41 = arith.constant 2 : index
    %c0_42 = arith.constant 0 : index
    %c0_43 = arith.constant 0 : index
    %27 = vector.load %arg7[%c2_41, %c0_42, %c0_43] : memref<18x18x8xbf16, #tpu.memory_space<vmem>>, vector<16x16x8xbf16>
    %28 = vector.shape_cast %27 : vector<16x16x8xbf16> to vector<256x8xbf16>
    %c0_44 = arith.constant 0 : index
    %c48 = arith.constant 48 : index
    %29 = vector.load %arg9[%c0_44, %c48] : memref<256x72xbf16, #tpu.memory_space<vmem>>, vector<256x8xbf16>
    tpu.vector_store %arg9[%c0_44, %c48], %28 {strides = array<i32>} : memref<256x72xbf16, #tpu.memory_space<vmem>>, vector<256x8xbf16>,
    %c2_45 = arith.constant 2 : index
    %c1_46 = arith.constant 1 : index
    %c0_47 = arith.constant 0 : index
    %30 = vector.load %arg7[%c2_45, %c1_46, %c0_47] : memref<18x18x8xbf16, #tpu.memory_space<vmem>>, vector<16x16x8xbf16>
    %31 = vector.shape_cast %30 : vector<16x16x8xbf16> to vector<256x8xbf16>
    %c0_48 = arith.constant 0 : index
    %c56 = arith.constant 56 : index
    %32 = vector.load %arg9[%c0_48, %c56] : memref<256x72xbf16, #tpu.memory_space<vmem>>, vector<256x8xbf16>
    tpu.vector_store %arg9[%c0_48, %c56], %31 {strides = array<i32>} : memref<256x72xbf16, #tpu.memory_space<vmem>>, vector<256x8xbf16>,
    %c2_49 = arith.constant 2 : index
    %c2_50 = arith.constant 2 : index
    %c0_51 = arith.constant 0 : index
    %33 = vector.load %arg7[%c2_49, %c2_50, %c0_51] : memref<18x18x8xbf16, #tpu.memory_space<vmem>>, vector<16x16x8xbf16>
    %34 = vector.shape_cast %33 : vector<16x16x8xbf16> to vector<256x8xbf16>
    %c0_52 = arith.constant 0 : index
    %c64 = arith.constant 64 : index
    %35 = vector.load %arg9[%c0_52, %c64] : memref<256x72xbf16, #tpu.memory_space<vmem>>, vector<256x8xbf16>
    tpu.vector_store %arg9[%c0_52, %c64], %34 {strides = array<i32>} : memref<256x72xbf16, #tpu.memory_space<vmem>>, vector<256x8xbf16>,
    %c0_53 = arith.constant 0 : index
    %c0_54 = arith.constant 0 : index
    %36 = vector.load %arg9[%c0_53, %c0_54] : memref<256x72xbf16, #tpu.memory_space<vmem>>, vector<256x72xbf16>
    %c0_55 = arith.constant 0 : index
    %c0_56 = arith.constant 0 : index
    %37 = vector.load %arg2[%c0_55, %c0_56] : memref<72x8xbf16, #tpu.memory_space<vmem>>, vector<72x8xbf16>
    %cst_57 = arith.constant dense<0.000000e+00> : vector<256x8xf32>
    %38 = tpu.matmul %36, %37, %cst_57 {dimension_numbers = #tpu.dot_dimension_numbers<[1], [0], [0], [1], [0, 0, 1, 1], [], []>} : vector<256x72xbf16>, vector<72x8xbf16>, vector<256x8xf32> -> vector<256x8xf32>
    %c0_58 = arith.constant 0 : index
    %c0_59 = arith.constant 0 : index
    %39 = vector.load %arg3[%c0_58, %c0_59] : memref<1x8xf32, #tpu.memory_space<vmem>>, vector<1x8xf32>
    %40 = vector.broadcast %39 : vector<1x8xf32> to vector<256x8xf32>
    %41 = arith.addf %38, %40 : vector<256x8xf32>
    %cst_60 = arith.constant 0.000000e+00 : f32
    %42 = vector.broadcast %cst_60 : f32 to vector<256x8xf32>
    %43 = arith.maximumf %41, %42 : vector<256x8xf32>
    %cst_61 = arith.constant 0.000000e+00 : bf16
    %44 = vector.broadcast %cst_61 : bf16 to vector<1x18x8xbf16>
    %cst_62 = arith.constant 0.000000e+00 : bf16
    %45 = vector.broadcast %cst_62 : bf16 to vector<18x1x8xbf16>
    %c0_63 = arith.constant 0 : index
    %c0_64 = arith.constant 0 : index
    %c0_65 = arith.constant 0 : index
    %46 = vector.load %arg8[%c0_63, %c0_64, %c0_65] : memref<18x18x8xbf16, #tpu.memory_space<vmem>>, vector<1x18x8xbf16>
    tpu.vector_store %arg8[%c0_63, %c0_64, %c0_65], %44 {strides = array<i32>} : memref<18x18x8xbf16, #tpu.memory_space<vmem>>, vector<1x18x8xbf16>,
    %c17_66 = arith.constant 17 : index
    %c0_67 = arith.constant 0 : index
    %c0_68 = arith.constant 0 : index
    %47 = vector.load %arg8[%c17_66, %c0_67, %c0_68] : memref<18x18x8xbf16, #tpu.memory_space<vmem>>, vector<1x18x8xbf16>
    tpu.vector_store %arg8[%c17_66, %c0_67, %c0_68], %44 {strides = array<i32>} : memref<18x18x8xbf16, #tpu.memory_space<vmem>>, vector<1x18x8xbf16>,
    %c0_69 = arith.constant 0 : index
    %c0_70 = arith.constant 0 : index
    %c0_71 = arith.constant 0 : index
    %48 = vector.load %arg8[%c0_69, %c0_70, %c0_71] : memref<18x18x8xbf16, #tpu.memory_space<vmem>>, vector<18x1x8xbf16>
    tpu.vector_store %arg8[%c0_69, %c0_70, %c0_71], %45 {strides = array<i32>} : memref<18x18x8xbf16, #tpu.memory_space<vmem>>, vector<18x1x8xbf16>,
    %c0_72 = arith.constant 0 : index
    %c17_73 = arith.constant 17 : index
    %c0_74 = arith.constant 0 : index
    %49 = vector.load %arg8[%c0_72, %c17_73, %c0_74] : memref<18x18x8xbf16, #tpu.memory_space<vmem>>, vector<18x1x8xbf16>
    tpu.vector_store %arg8[%c0_72, %c17_73, %c0_74], %45 {strides = array<i32>} : memref<18x18x8xbf16, #tpu.memory_space<vmem>>, vector<18x1x8xbf16>,
    %50 = arith.truncf %43 : vector<256x8xf32> to vector<256x8xbf16>
    %51 = vector.shape_cast %50 : vector<256x8xbf16> to vector<16x16x8xbf16>
    %c1_75 = arith.constant 1 : index
    %c1_76 = arith.constant 1 : index
    %c0_77 = arith.constant 0 : index
    %52 = vector.load %arg8[%c1_75, %c1_76, %c0_77] : memref<18x18x8xbf16, #tpu.memory_space<vmem>>, vector<16x16x8xbf16>
    tpu.vector_store %arg8[%c1_75, %c1_76, %c0_77], %51 {strides = array<i32>} : memref<18x18x8xbf16, #tpu.memory_space<vmem>>, vector<16x16x8xbf16>,
    %c0_78 = arith.constant 0 : index
    %c0_79 = arith.constant 0 : index
    %c0_80 = arith.constant 0 : index
    %53 = vector.load %arg8[%c0_78, %c0_79, %c0_80] : memref<18x18x8xbf16, #tpu.memory_space<vmem>>, vector<16x16x8xbf16>
    %54 = vector.shape_cast %53 : vector<16x16x8xbf16> to vector<256x8xbf16>
    %c0_81 = arith.constant 0 : index
    %c0_82 = arith.constant 0 : index
    %55 = vector.load %arg9[%c0_81, %c0_82] : memref<256x72xbf16, #tpu.memory_space<vmem>>, vector<256x8xbf16>
    tpu.vector_store %arg9[%c0_81, %c0_82], %54 {strides = array<i32>} : memref<256x72xbf16, #tpu.memory_space<vmem>>, vector<256x8xbf16>,
    %c0_83 = arith.constant 0 : index
    %c1_84 = arith.constant 1 : index
    %c0_85 = arith.constant 0 : index
    %56 = vector.load %arg8[%c0_83, %c1_84, %c0_85] : memref<18x18x8xbf16, #tpu.memory_space<vmem>>, vector<16x16x8xbf16>
    %57 = vector.shape_cast %56 : vector<16x16x8xbf16> to vector<256x8xbf16>
    %c0_86 = arith.constant 0 : index
    %c8_87 = arith.constant 8 : index
    %58 = vector.load %arg9[%c0_86, %c8_87] : memref<256x72xbf16, #tpu.memory_space<vmem>>, vector<256x8xbf16>
    tpu.vector_store %arg9[%c0_86, %c8_87], %57 {strides = array<i32>} : memref<256x72xbf16, #tpu.memory_space<vmem>>, vector<256x8xbf16>,
    %c0_88 = arith.constant 0 : index
    %c2_89 = arith.constant 2 : index
    %c0_90 = arith.constant 0 : index
    %59 = vector.load %arg8[%c0_88, %c2_89, %c0_90] : memref<18x18x8xbf16, #tpu.memory_space<vmem>>, vector<16x16x8xbf16>
    %60 = vector.shape_cast %59 : vector<16x16x8xbf16> to vector<256x8xbf16>
    %c0_91 = arith.constant 0 : index
    %c16_92 = arith.constant 16 : index
    %61 = vector.load %arg9[%c0_91, %c16_92] : memref<256x72xbf16, #tpu.memory_space<vmem>>, vector<256x8xbf16>
    tpu.vector_store %arg9[%c0_91, %c16_92], %60 {strides = array<i32>} : memref<256x72xbf16, #tpu.memory_space<vmem>>, vector<256x8xbf16>,
    %c1_93 = arith.constant 1 : index
    %c0_94 = arith.constant 0 : index
    %c0_95 = arith.constant 0 : index
    %62 = vector.load %arg8[%c1_93, %c0_94, %c0_95] : memref<18x18x8xbf16, #tpu.memory_space<vmem>>, vector<16x16x8xbf16>
    %63 = vector.shape_cast %62 : vector<16x16x8xbf16> to vector<256x8xbf16>
    %c0_96 = arith.constant 0 : index
    %c24_97 = arith.constant 24 : index
    %64 = vector.load %arg9[%c0_96, %c24_97] : memref<256x72xbf16, #tpu.memory_space<vmem>>, vector<256x8xbf16>
    tpu.vector_store %arg9[%c0_96, %c24_97], %63 {strides = array<i32>} : memref<256x72xbf16, #tpu.memory_space<vmem>>, vector<256x8xbf16>,
    %c1_98 = arith.constant 1 : index
    %c1_99 = arith.constant 1 : index
    %c0_100 = arith.constant 0 : index
    %65 = vector.load %arg8[%c1_98, %c1_99, %c0_100] : memref<18x18x8xbf16, #tpu.memory_space<vmem>>, vector<16x16x8xbf16>
    %66 = vector.shape_cast %65 : vector<16x16x8xbf16> to vector<256x8xbf16>
    %c0_101 = arith.constant 0 : index
    %c32_102 = arith.constant 32 : index
    %67 = vector.load %arg9[%c0_101, %c32_102] : memref<256x72xbf16, #tpu.memory_space<vmem>>, vector<256x8xbf16>
    tpu.vector_store %arg9[%c0_101, %c32_102], %66 {strides = array<i32>} : memref<256x72xbf16, #tpu.memory_space<vmem>>, vector<256x8xbf16>,
    %c1_103 = arith.constant 1 : index
    %c2_104 = arith.constant 2 : index
    %c0_105 = arith.constant 0 : index
    %68 = vector.load %arg8[%c1_103, %c2_104, %c0_105] : memref<18x18x8xbf16, #tpu.memory_space<vmem>>, vector<16x16x8xbf16>
    %69 = vector.shape_cast %68 : vector<16x16x8xbf16> to vector<256x8xbf16>
    %c0_106 = arith.constant 0 : index
    %c40_107 = arith.constant 40 : index
    %70 = vector.load %arg9[%c0_106, %c40_107] : memref<256x72xbf16, #tpu.memory_space<vmem>>, vector<256x8xbf16>
    tpu.vector_store %arg9[%c0_106, %c40_107], %69 {strides = array<i32>} : memref<256x72xbf16, #tpu.memory_space<vmem>>, vector<256x8xbf16>,
    %c2_108 = arith.constant 2 : index
    %c0_109 = arith.constant 0 : index
    %c0_110 = arith.constant 0 : index
    %71 = vector.load %arg8[%c2_108, %c0_109, %c0_110] : memref<18x18x8xbf16, #tpu.memory_space<vmem>>, vector<16x16x8xbf16>
    %72 = vector.shape_cast %71 : vector<16x16x8xbf16> to vector<256x8xbf16>
    %c0_111 = arith.constant 0 : index
    %c48_112 = arith.constant 48 : index
    %73 = vector.load %arg9[%c0_111, %c48_112] : memref<256x72xbf16, #tpu.memory_space<vmem>>, vector<256x8xbf16>
    tpu.vector_store %arg9[%c0_111, %c48_112], %72 {strides = array<i32>} : memref<256x72xbf16, #tpu.memory_space<vmem>>, vector<256x8xbf16>,
    %c2_113 = arith.constant 2 : index
    %c1_114 = arith.constant 1 : index
    %c0_115 = arith.constant 0 : index
    %74 = vector.load %arg8[%c2_113, %c1_114, %c0_115] : memref<18x18x8xbf16, #tpu.memory_space<vmem>>, vector<16x16x8xbf16>
    %75 = vector.shape_cast %74 : vector<16x16x8xbf16> to vector<256x8xbf16>
    %c0_116 = arith.constant 0 : index
    %c56_117 = arith.constant 56 : index
    %76 = vector.load %arg9[%c0_116, %c56_117] : memref<256x72xbf16, #tpu.memory_space<vmem>>, vector<256x8xbf16>
    tpu.vector_store %arg9[%c0_116, %c56_117], %75 {strides = array<i32>} : memref<256x72xbf16, #tpu.memory_space<vmem>>, vector<256x8xbf16>,
    %c2_118 = arith.constant 2 : index
    %c2_119 = arith.constant 2 : index
    %c0_120 = arith.constant 0 : index
    %77 = vector.load %arg8[%c2_118, %c2_119, %c0_120] : memref<18x18x8xbf16, #tpu.memory_space<vmem>>, vector<16x16x8xbf16>
    %78 = vector.shape_cast %77 : vector<16x16x8xbf16> to vector<256x8xbf16>
    %c0_121 = arith.constant 0 : index
    %c64_122 = arith.constant 64 : index
    %79 = vector.load %arg9[%c0_121, %c64_122] : memref<256x72xbf16, #tpu.memory_space<vmem>>, vector<256x8xbf16>
    tpu.vector_store %arg9[%c0_121, %c64_122], %78 {strides = array<i32>} : memref<256x72xbf16, #tpu.memory_space<vmem>>, vector<256x8xbf16>,
    %c0_123 = arith.constant 0 : index
    %c0_124 = arith.constant 0 : index
    %80 = vector.load %arg9[%c0_123, %c0_124] : memref<256x72xbf16, #tpu.memory_space<vmem>>, vector<256x72xbf16>
    %c0_125 = arith.constant 0 : index
    %c0_126 = arith.constant 0 : index
    %81 = vector.load %arg4[%c0_125, %c0_126] : memref<72x8xbf16, #tpu.memory_space<vmem>>, vector<72x8xbf16>
    %cst_127 = arith.constant dense<0.000000e+00> : vector<256x8xf32>
    %82 = tpu.matmul %80, %81, %cst_127 {dimension_numbers = #tpu.dot_dimension_numbers<[1], [0], [0], [1], [0, 0, 1, 1], [], []>} : vector<256x72xbf16>, vector<72x8xbf16>, vector<256x8xf32> -> vector<256x8xf32>
    %c0_128 = arith.constant 0 : index
    %c0_129 = arith.constant 0 : index
    %83 = vector.load %arg5[%c0_128, %c0_129] : memref<1x8xf32, #tpu.memory_space<vmem>>, vector<1x8xf32>
    %84 = vector.broadcast %83 : vector<1x8xf32> to vector<256x8xf32>
    %85 = arith.addf %82, %84 : vector<256x8xf32>
    %86 = vector.shape_cast %0 : vector<1x16x16x8xbf16> to vector<256x8xbf16>
    %87 = arith.extf %86 : vector<256x8xbf16> to vector<256x8xf32>
    %88 = arith.addf %85, %87 : vector<256x8xf32>
    %cst_130 = arith.constant 0.000000e+00 : f32
    %89 = vector.broadcast %cst_130 : f32 to vector<256x8xf32>
    %90 = arith.maximumf %88, %89 : vector<256x8xf32>
    %91 = vector.shape_cast %90 : vector<256x8xf32> to vector<1x16x16x8xf32>
    %c0_131 = arith.constant 0 : index
    %c0_132 = arith.constant 0 : index
    %c0_133 = arith.constant 0 : index
    %c0_134 = arith.constant 0 : index
    %92 = vector.load %arg6[%c0_131, %c0_132, %c0_133, %c0_134] : memref<1x16x16x8xf32, #tpu.memory_space<vmem>>, vector<1x16x16x8xf32>
    tpu.vector_store %arg6[%c0_131, %c0_132, %c0_133, %c0_134], %91 {strides = array<i32>} : memref<1x16x16x8xf32, #tpu.memory_space<vmem>>, vector<1x16x16x8xf32>,
    return
  }
  func.func @transform_0(%arg0: i32) -> (i32, i32, i32, i32) {
    %c0_i32 = arith.constant 0 : i32
    %c0_i32_0 = arith.constant 0 : i32
    %c0_i32_1 = arith.constant 0 : i32
    %c0_i32_2 = arith.constant 0 : i32
    return %arg0, %c0_i32, %c0_i32_0, %c0_i32_1 : i32, i32, i32, i32
  }
  func.func @transform_1(%arg0: i32) -> (i32, i32) {
    %c0_i32 = arith.constant 0 : i32
    %c0_i32_0 = arith.constant 0 : i32
    %c0_i32_1 = arith.constant 0 : i32
    return %c0_i32, %c0_i32_0 : i32, i32
  }
  func.func @transform_2(%arg0: i32) -> (i32, i32) {
    %c0_i32 = arith.constant 0 : i32
    %c0_i32_0 = arith.constant 0 : i32
    %c0_i32_1 = arith.constant 0 : i32
    return %c0_i32, %c0_i32_0 : i32, i32
  }
  func.func @transform_3(%arg0: i32) -> (i32, i32) {
    %c0_i32 = arith.constant 0 : i32
    %c0_i32_0 = arith.constant 0 : i32
    %c0_i32_1 = arith.constant 0 : i32
    return %c0_i32, %c0_i32_0 : i32, i32
  }
  func.func @transform_4(%arg0: i32) -> (i32, i32) {
    %c0_i32 = arith.constant 0 : i32
    %c0_i32_0 = arith.constant 0 : i32
    %c0_i32_1 = arith.constant 0 : i32
    return %c0_i32, %c0_i32_0 : i32, i32
  }
  func.func @transform_5(%arg0: i32) -> (i32, i32, i32, i32) {
    %c0_i32 = arith.constant 0 : i32
    %c0_i32_0 = arith.constant 0 : i32
    %c0_i32_1 = arith.constant 0 : i32
    %c0_i32_2 = arith.constant 0 : i32
    return %arg0, %c0_i32, %c0_i32_0, %c0_i32_1 : i32, i32, i32, i32
  }
}

</mosaic_0001>

<llo_original>
// kernel: tpu_custom_call.1
$region0: #{tpu_custom_call.1}
  #allocation0 [shape = 'u32[]', space=smem, size = 0x4, offset = 0x4, fixed_abs, tag = 'smem constant byte address 0x4 - core index']
  #allocation1 [shape = 'u32[144,128]{1,0:T(1,128)}', space=vmem, size = 0x12000, scoped, tag = 'internal scratch']
  #allocation2 [shape = 'bf16[18,18,8]{2,1,0:T(8,128)(2,1)}', space=vmem, size = 0x1b000, scoped, tag = 'scratch operand']
  #allocation3 [shape = 'bf16[18,18,8]{2,1,0:T(8,128)(2,1)}', space=vmem, size = 0x1b000, scoped, tag = 'scratch operand']
  #allocation4 [shape = 'bf16[256,72]{1,0:T(16,128)(2,1)}', space=vmem, size = 0x10000, scoped, tag = 'scratch operand']
  %s0 = inlined_call_operand.vmem [shape: bf16[2,16,16,8], index: 0, kind: input, shape index: {}]
  %s1 = inlined_call_operand.vmem [shape: bf16[72,8], index: 1, kind: input, shape index: {}]
  %s2 = inlined_call_operand.vmem [shape: f32[1,8], index: 2, kind: input, shape index: {}]
  %s3 = inlined_call_operand.vmem [shape: bf16[72,8], index: 3, kind: input, shape index: {}]
  %s4 = inlined_call_operand.vmem [shape: f32[1,8], index: 4, kind: input, shape index: {}]
  %s5 = inlined_call_operand.vmem [shape: f32[2,16,16,8], index: 5, kind: output, shape index: {}]
  %s6 = sld [smem:[#allocation0]]
  $region53: #{tpu_custom_call.1} parent=0
    _
  %s8 = ssub.s32 1, %s6
  %s9 = scalar_select 0, %s8, %s6
  loop: start=0, step=1, limit=4
  $region2: #{tpu_custom_call.1} parent=0 // loop_pre_header
    _
  $region3: #{tpu_custom_call.1} parent=0 // loop_header
    %s11 = sphi 0, %s15
    %p12 = scmp.ge.s32.totalorder %s11, 4
    %s21 = sphi 0, %s23
    %s24 = sphi 0, %s21
    %s25 = sphi 0, %s24
    %s41 = sphi 0, %s25
    %s45 = sphi 0, %s45
    %s47 = sphi 0, %s45
    %s48 = sphi 0, %s47
    %s62 = sphi 0, %s48
    %s66 = sphi 0, %s66
    %s68 = sphi 0, %s66
    %s69 = sphi 0, %s68
    %s83 = sphi 0, %s69
    %s87 = sphi 0, %s87
    %s89 = sphi 0, %s87
    %s90 = sphi 0, %s89
    %s104 = sphi 0, %s90
    %s108 = sphi 0, %s108
    %s110 = sphi 0, %s108
    %s111 = sphi 0, %s110
    %s125 = sphi 0, %s111
    %s131 = sphi 0, %s133
    %s134 = sphi 0, %s131
    %s135 = sphi 0, %s134
    %s151 = sphi 0, %s135
  $region4: #{tpu_custom_call.1} parent=0 // loop_header_branch
    %14 = sbr.rel (%p12) target = $region8
  $region5: #{tpu_custom_call.1} parent=0 // loop_body
    %s16 = ssub.s32 %s11, 1
    %s17 = ssub.s32 %s11, 2
    %s18 = sadd.s32 %s11, 1
    %s19 = ssub.s32 %s11, %s18
    %p20 = scmp.eq.s32.totalorder %s19, 0
    %s22 = sadd.s32 %s21, 1
    %s23 = scalar_select %p20, %s21, %s22
    %p26 = pneg %p20
    %p27 = scmp.eq.s32.totalorder %s11, 1
    %p28 = por %p26, %p27
    %p29 = scmp.ne.s32.totalorder %s21, %s24
    %p30 = scmp.eq.s32.totalorder %s11, 0
    %p31 = por %p29, %p30
    %p32 = scmp.ne.s32.totalorder %s21, %s24
    %p33 = scmp.eq.s32.totalorder %s16, 1
    %p34 = por %p32, %p33
    %p35 = scmp.ne.s32.totalorder %s24, %s25
    %p36 = scmp.eq.s32.totalorder %s16, 0
    %p37 = por %p35, %p36
    %p38 = scmp.ne.s32.totalorder %s24, %s25
    %p39 = scmp.eq.s32.totalorder %s17, 1
    %p40 = por %p38, %p39
    %p42 = scmp.ne.s32.totalorder %s25, %s41
    %p43 = scmp.eq.s32.totalorder %s17, 0
    %p44 = por %p42, %p43
    %s46 = sadd.s32 %s45, 1
    %p49 = scmp.eq.s32.totalorder %s11, 1
    %p50 = scmp.ne.s32.totalorder %s45, %s47
    %p51 = scmp.eq.s32.totalorder %s11, 0
    %p52 = por %p50, %p51
    %p53 = scmp.ne.s32.totalorder %s45, %s47
    %p54 = scmp.eq.s32.totalorder %s16, 1
    %p55 = por %p53, %p54
    %p56 = scmp.ne.s32.totalorder %s47, %s48
    %p57 = scmp.eq.s32.totalorder %s16, 0
    %p58 = por %p56, %p57
    %p59 = scmp.ne.s32.totalorder %s47, %s48
    %p60 = scmp.eq.s32.totalorder %s17, 1
    %p61 = por %p59, %p60
    %p63 = scmp.ne.s32.totalorder %s48, %s62
    %p64 = scmp.eq.s32.totalorder %s17, 0
    %p65 = por %p63, %p64
    %s67 = sadd.s32 %s66, 1
    %p70 = scmp.eq.s32.totalorder %s11, 1
    %p71 = scmp.ne.s32.totalorder %s66, %s68
    %p72 = scmp.eq.s32.totalorder %s11, 0
    %p73 = por %p71, %p72
    %p74 = scmp.ne.s32.totalorder %s66, %s68
    %p75 = scmp.eq.s32.totalorder %s16, 1
    %p76 = por %p74, %p75
    %p77 = scmp.ne.s32.totalorder %s68, %s69
    %p78 = scmp.eq.s32.totalorder %s16, 0
    %p79 = por %p77, %p78
    %p80 = scmp.ne.s32.totalorder %s68, %s69
    %p81 = scmp.eq.s32.totalorder %s17, 1
    %p82 = por %p80, %p81
    %p84 = scmp.ne.s32.totalorder %s69, %s83
    %p85 = scmp.eq.s32.totalorder %s17, 0
    %p86 = por %p84, %p85
    %s88 = sadd.s32 %s87, 1
    %p91 = scmp.eq.s32.totalorder %s11, 1
    %p92 = scmp.ne.s32.totalorder %s87, %s89
    %p93 = scmp.eq.s32.totalorder %s11, 0
    %p94 = por %p92, %p93
    %p95 = scmp.ne.s32.totalorder %s87, %s89
    %p96 = scmp.eq.s32.totalorder %s16, 1
    %p97 = por %p95, %p96
    %p98 = scmp.ne.s32.totalorder %s89, %s90
    %p99 = scmp.eq.s32.totalorder %s16, 0
    %p100 = por %p98, %p99
    %p101 = scmp.ne.s32.totalorder %s89, %s90
    %p102 = scmp.eq.s32.totalorder %s17, 1
    %p103 = por %p101, %p102
    %p105 = scmp.ne.s32.totalorder %s90, %s104
    %p106 = scmp.eq.s32.totalorder %s17, 0
    %p107 = por %p105, %p106
    %s109 = sadd.s32 %s108, 1
    %p112 = scmp.eq.s32.totalorder %s11, 1
    %p113 = scmp.ne.s32.totalorder %s108, %s110
    %p114 = scmp.eq.s32.totalorder %s11, 0
    %p115 = por %p113, %p114
    %p116 = scmp.ne.s32.totalorder %s108, %s110
    %p117 = scmp.eq.s32.totalorder %s16, 1
    %p118 = por %p116, %p117
    %p119 = scmp.ne.s32.totalorder %s110, %s111
    %p120 = scmp.eq.s32.totalorder %s16, 0
    %p121 = por %p119, %p120
    %p122 = scmp.ne.s32.totalorder %s110, %s111
    %p123 = scmp.eq.s32.totalorder %s17, 1
    %p124 = por %p122, %p123
    %p126 = scmp.ne.s32.totalorder %s111, %s125
    %p127 = scmp.eq.s32.totalorder %s17, 0
    %p128 = por %p126, %p127
    %s129 = ssub.s32 %s11, %s18
    %p130 = scmp.eq.s32.totalorder %s129, 0
    %s132 = sadd.s32 %s131, 1
    %s133 = scalar_select %p130, %s131, %s132
    %p136 = pneg %p130
    %p137 = scmp.eq.s32.totalorder %s11, 1
    %p138 = por %p136, %p137
    %p139 = scmp.ne.s32.totalorder %s131, %s134
    %p140 = scmp.eq.s32.totalorder %s11, 0
    %p141 = por %p139, %p140
    %p142 = scmp.ne.s32.totalorder %s131, %s134
    %p143 = scmp.eq.s32.totalorder %s16, 1
    %p144 = por %p142, %p143
    %p145 = scmp.ne.s32.totalorder %s134, %s135
    %p146 = scmp.eq.s32.totalorder %s16, 0
    %p147 = por %p145, %p146
    %p148 = scmp.ne.s32.totalorder %s134, %s135
    %p149 = scmp.eq.s32.totalorder %s17, 1
    %p150 = por %p148, %p149
    %p152 = scmp.ne.s32.totalorder %s135, %s151
    %p153 = scmp.eq.s32.totalorder %s17, 0
    %p154 = por %p152, %p153
    %p155 = scmp.le.s32.totalorder 1, %s11
    %p156 = scmp.lt.s32.totalorder %s11, 3
    %p157 = pnand %p155, %p156
    %p158 = pneg %p157
    // Predicated region
    $region9: #{tpu_custom_call.1} parent=5 // pred_check
      _
    $region10: #{tpu_custom_call.1} parent=5 // pred_check_branch
      %160 = sbr.rel (%p157) target = $region12
    $region11: #{tpu_custom_call.1} parent=5 // pred_region
      %s161 = ssub.s32 %s11, 1
      // Predicated region
      $region13: #{tpu_custom_call.1} parent=11 // pred_check
        %p162 = pneg %p58
      $region14: #{tpu_custom_call.1} parent=11 // pred_check_branch
        %164 = sbr.rel (%p162) target = $region16
      $region15: #{tpu_custom_call.1} parent=11 // pred_region
        _
      $region16: #{tpu_custom_call.1} parent=11 // pred_fallthru
        _
      // Predicated region
      $region17: #{tpu_custom_call.1} parent=11 // pred_check
        %p165 = pneg %p79
      $region18: #{tpu_custom_call.1} parent=11 // pred_check_branch
        %167 = sbr.rel (%p165) target = $region20
      $region19: #{tpu_custom_call.1} parent=11 // pred_region
        _
      $region20: #{tpu_custom_call.1} parent=11 // pred_fallthru
        _
      // Predicated region
      $region21: #{tpu_custom_call.1} parent=11 // pred_check
        %p168 = pneg %p100
      $region22: #{tpu_custom_call.1} parent=11 // pred_check_branch
        %170 = sbr.rel (%p168) target = $region24
      $region23: #{tpu_custom_call.1} parent=11 // pred_region
        _
      $region24: #{tpu_custom_call.1} parent=11 // pred_fallthru
        _
      // Predicated region
      $region25: #{tpu_custom_call.1} parent=11 // pred_check
        %p171 = pneg %p121
      $region26: #{tpu_custom_call.1} parent=11 // pred_check_branch
        %173 = sbr.rel (%p171) target = $region28
      $region27: #{tpu_custom_call.1} parent=11 // pred_region
        _
      $region28: #{tpu_custom_call.1} parent=11 // pred_fallthru
        _
    $region12: #{tpu_custom_call.1} parent=5 // pred_fallthru
      _
    %p174 = scmp.lt.s32.totalorder %s11, 2
    // Predicated region
    $region29: #{tpu_custom_call.1} parent=5 // pred_check
      %p175 = pneg %p174
    $region30: #{tpu_custom_call.1} parent=5 // pred_check_branch
      %177 = sbr.rel (%p175) target = $region32
    $region31: #{tpu_custom_call.1} parent=5 // pred_region
      // Predicated region
      $region33: #{tpu_custom_call.1} parent=31 // pred_check
        %p178 = pneg %p31
      $region34: #{tpu_custom_call.1} parent=31 // pred_check_branch
        %180 = sbr.rel (%p178) target = $region36
      $region35: #{tpu_custom_call.1} parent=31 // pred_region
        %p181 = scmp.lt.s32.totalorder %s11, 1
        %s182 = scalar_select %p181, %s11, 1
        %s183 = smul.addr %s182, 32
        %s184 = smul.addr %s183, 4
        %s185 = scalar_lea.vmem %s0, %s184
      $region36: #{tpu_custom_call.1} parent=31 // pred_fallthru
        _
    $region32: #{tpu_custom_call.1} parent=5 // pred_fallthru
      _
    %p186 = scmp.le.s32.totalorder 1, %s11
    %p187 = scmp.lt.s32.totalorder %s11, 3
    %p188 = pnand %p186, %p187
    %p189 = pneg %p188
    // Predicated region
    $region37: #{tpu_custom_call.1} parent=5 // pred_check
      _
    $region38: #{tpu_custom_call.1} parent=5 // pred_check_branch
      %191 = sbr.rel (%p188) target = $region40
    $region39: #{tpu_custom_call.1} parent=5 // pred_region
      %s192 = ssub.s32 %s11, 1
      %p193 = scmp.lt.s32.totalorder %s16, 1
      %s194 = scalar_select %p193, %s16, 1
      %s195 = smul.addr %s194, 32
      %s196 = smul.addr %s195, 4
      %s197 = scalar_lea.vmem %s0, %s196
      %p198 = pneg %p37
      %p199 = pneg %p34
      %p200 = pneg %p58
      %p201 = pneg %p55
      %p202 = pneg %p79
      %p203 = pneg %p76
      %p204 = pneg %p100
      %p205 = pneg %p97
      %p206 = pneg %p121
      %p207 = pneg %p118
      %p208 = pneg %p147
      %p209 = pneg %p144
      %p210 = scmp.lt.s32.totalorder %s16, 1
      %s211 = scalar_select %p210, %s16, 1
      %s212 = smul.addr %s211, 32
      %s213 = smul.addr %s212, 8
      %s214 = scalar_lea.vmem %s5, %s213
      %p215 = scmp.lt.s32.totalorder %s16, 1
      %s216 = scalar_select %p215, %s16, 1
      %s217 = smul.addr %s216, 32
      %s218 = smul.addr %s217, 4
      %s219 = scalar_lea.vmem %s0, %s218
      %p220 = scmp.lt.s32.totalorder %s16, 1
      %s221 = scalar_select %p220, %s16, 1
      %s222 = smul.addr %s221, 32
      %s223 = smul.addr %s222, 8
      %s224 = scalar_lea.vmem %s5, %s223
      %v226 = vld [vmem:[%s219] sm:$0xf]
      %v227 = vld [vmem:[%s219 + $0x4] sm:$0xf]
      %v228 = vld [vmem:[%s219 + $0x8] sm:$0xf]
      %v229 = vld [vmem:[%s219 + $0xc] sm:$0xf]
      %v230 = vld [vmem:[%s219 + $0x10] sm:$0xf]
      %v231 = vld [vmem:[%s219 + $0x14] sm:$0xf]
      %v232 = vld [vmem:[%s219 + $0x18] sm:$0xf]
      %v233 = vld [vmem:[%s219 + $0x1c] sm:$0xf]
      %v234 = vld [vmem:[%s219 + $0x20] sm:$0xf]
      %v235 = vld [vmem:[%s219 + $0x24] sm:$0xf]
      %v236 = vld [vmem:[%s219 + $0x28] sm:$0xf]
      %v237 = vld [vmem:[%s219 + $0x2c] sm:$0xf]
      %v238 = vld [vmem:[%s219 + $0x30] sm:$0xf]
      %v239 = vld [vmem:[%s219 + $0x34] sm:$0xf]
      %v240 = vld [vmem:[%s219 + $0x38] sm:$0xf]
      %v241 = vld [vmem:[%s219 + $0x3c] sm:$0xf]
      %v242 = vld [vmem:[%s219 + $0x40] sm:$0xf]
      %v243 = vld [vmem:[%s219 + $0x44] sm:$0xf]
      %v244 = vld [vmem:[%s219 + $0x48] sm:$0xf]
      %v245 = vld [vmem:[%s219 + $0x4c] sm:$0xf]
      %v246 = vld [vmem:[%s219 + $0x50] sm:$0xf]
      %v247 = vld [vmem:[%s219 + $0x54] sm:$0xf]
      %v248 = vld [vmem:[%s219 + $0x58] sm:$0xf]
      %v249 = vld [vmem:[%s219 + $0x5c] sm:$0xf]
      %v250 = vld [vmem:[%s219 + $0x60] sm:$0xf]
      %v251 = vld [vmem:[%s219 + $0x64] sm:$0xf]
      %v252 = vld [vmem:[%s219 + $0x68] sm:$0xf]
      %v253 = vld [vmem:[%s219 + $0x6c] sm:$0xf]
      %v254 = vld [vmem:[%s219 + $0x70] sm:$0xf]
      %v255 = vld [vmem:[%s219 + $0x74] sm:$0xf]
      %v256 = vld [vmem:[%s219 + $0x78] sm:$0xf]
      %v257 = vld [vmem:[%s219 + $0x7c] sm:$0xf]
      %vm258 = vcmask 60416
      %259 = vst.msk [vmem:[#allocation2] sm:$0xf] %vm258, 0
      %260 = vst.msk [vmem:[#allocation2 + $0x4] sm:$0xf] %vm258, 0
      %vm261 = vcmask 57344
      %262 = vst.msk [vmem:[#allocation2 + $0x8] sm:$0x1] %vm261, 0
      %s263 = scalar_lea.vmem [#allocation2], 204
      %264 = vst.msk [vmem:[%s263] sm:$0xf] %vm258, 0
      %265 = vst.msk [vmem:[%s263 + $0x4] sm:$0xf] %vm258, 0
      %266 = vst.msk [vmem:[%s263 + $0x8] sm:$0x1] %vm261, 0
      %vm267 = vcmask 57344
      %vm268 = vsmask.f32 256
      %vm269 = vmand %vm267, %vm268
      %v270 = vld [vmem:[#allocation2] sm:$0x1]
      %v271 = vsel %vm269, 0, %v270
      %272 = vst [vmem:[#allocation2] sm:$0x1] %v271
      %v273 = vld [vmem:[#allocation2 + $0xc] sm:$0x1]
      %v274 = vsel %vm269, 0, %v273
      %275 = vst [vmem:[#allocation2 + $0xc] sm:$0x1] %v274
      %v276 = vld [vmem:[#allocation2 + $0x18] sm:$0x1]
      %v277 = vsel %vm269, 0, %v276
      %278 = vst [vmem:[#allocation2 + $0x18] sm:$0x1] %v277
      %v279 = vld [vmem:[#allocation2 + $0x24] sm:$0x1]
      %v280 = vsel %vm269, 0, %v279
      %281 = vst [vmem:[#allocation2 + $0x24] sm:$0x1] %v280
      %v282 = vld [vmem:[#allocation2 + $0x30] sm:$0x1]
      %v283 = vsel %vm269, 0, %v282
      %284 = vst [vmem:[#allocation2 + $0x30] sm:$0x1] %v283
      %v285 = vld [vmem:[#allocation2 + $0x3c] sm:$0x1]
      %v286 = vsel %vm269, 0, %v285
      %287 = vst [vmem:[#allocation2 + $0x3c] sm:$0x1] %v286
      %v288 = vld [vmem:[#allocation2 + $0x48] sm:$0x1]
      %v289 = vsel %vm269, 0, %v288
      %290 = vst [vmem:[#allocation2 + $0x48] sm:$0x1] %v289
      %v291 = vld [vmem:[#allocation2 + $0x54] sm:$0x1]
      %v292 = vsel %vm269, 0, %v291
      %293 = vst [vmem:[#allocation2 + $0x54] sm:$0x1] %v292
      %v294 = vld [vmem:[#allocation2 + $0x60] sm:$0x1]
      %v295 = vsel %vm269, 0, %v294
      %296 = vst [vmem:[#allocation2 + $0x60] sm:$0x1] %v295
      %v297 = vld [vmem:[#allocation2 + $0x6c] sm:$0x1]
      %v298 = vsel %vm269, 0, %v297
      %299 = vst [vmem:[#allocation2 + $0x6c] sm:$0x1] %v298
      %v300 = vld [vmem:[#allocation2 + $0x78] sm:$0x1]
      %v301 = vsel %vm269, 0, %v300
      %302 = vst [vmem:[#allocation2 + $0x78] sm:$0x1] %v301
      %v303 = vld [vmem:[#allocation2 + $0x84] sm:$0x1]
      %v304 = vsel %vm269, 0, %v303
      %305 = vst [vmem:[#allocation2 + $0x84] sm:$0x1] %v304
      %v306 = vld [vmem:[#allocation2 + $0x90] sm:$0x1]
      %v307 = vsel %vm269, 0, %v306
      %308 = vst [vmem:[#allocation2 + $0x90] sm:$0x1] %v307
      %v309 = vld [vmem:[#allocation2 + $0x9c] sm:$0x1]
      %v310 = vsel %vm269, 0, %v309
      %311 = vst [vmem:[#allocation2 + $0x9c] sm:$0x1] %v310
      %v312 = vld [vmem:[#allocation2 + $0xa8] sm:$0x1]
      %v313 = vsel %vm269, 0, %v312
      %314 = vst [vmem:[#allocation2 + $0xa8] sm:$0x1] %v313
      %v315 = vld [vmem:[#allocation2 + $0xb4] sm:$0x1]
      %v316 = vsel %vm269, 0, %v315
      %317 = vst [vmem:[#allocation2 + $0xb4] sm:$0x1] %v316
      %v318 = vld [vmem:[#allocation2 + $0xc0] sm:$0x1]
      %v319 = vsel %vm269, 0, %v318
      %320 = vst [vmem:[#allocation2 + $0xc0] sm:$0x1] %v319
      %v321 = vld [vmem:[#allocation2 + $0xcc] sm:$0x1]
      %v322 = vsel %vm269, 0, %v321
      %323 = vst [vmem:[#allocation2 + $0xcc] sm:$0x1] %v322
      %vm324 = vsmask.f32 7938
      %vm325 = vmand %vm267, %vm324
      %v326 = vld [vmem:[#allocation2 + $0x8] sm:$0x1]
      %v327 = vsel %vm325, 0, %v326
      %328 = vst [vmem:[#allocation2 + $0x8] sm:$0x1] %v327
      %v329 = vld [vmem:[#allocation2 + $0x14] sm:$0x1]
      %v330 = vsel %vm325, 0, %v329
      %331 = vst [vmem:[#allocation2 + $0x14] sm:$0x1] %v330
      %v332 = vld [vmem:[#allocation2 + $0x20] sm:$0x1]
      %v333 = vsel %vm325, 0, %v332
      %334 = vst [vmem:[#allocation2 + $0x20] sm:$0x1] %v333
      %v335 = vld [vmem:[#allocation2 + $0x2c] sm:$0x1]
      %v336 = vsel %vm325, 0, %v335
      %337 = vst [vmem:[#allocation2 + $0x2c] sm:$0x1] %v336
      %v338 = vld [vmem:[#allocation2 + $0x38] sm:$0x1]
      %v339 = vsel %vm325, 0, %v338
      %340 = vst [vmem:[#allocation2 + $0x38] sm:$0x1] %v339
      %v341 = vld [vmem:[#allocation2 + $0x44] sm:$0x1]
      %v342 = vsel %vm325, 0, %v341
      %343 = vst [vmem:[#allocation2 + $0x44] sm:$0x1] %v342
      %v344 = vld [vmem:[#allocation2 + $0x50] sm:$0x1]
      %v345 = vsel %vm325, 0, %v344
      %346 = vst [vmem:[#allocation2 + $0x50] sm:$0x1] %v345
      %v347 = vld [vmem:[#allocation2 + $0x5c] sm:$0x1]
      %v348 = vsel %vm325, 0, %v347
      %349 = vst [vmem:[#allocation2 + $0x5c] sm:$0x1] %v348
      %v350 = vld [vmem:[#allocation2 + $0x68] sm:$0x1]
      %v351 = vsel %vm325, 0, %v350
      %352 = vst [vmem:[#allocation2 + $0x68] sm:$0x1] %v351
      %v353 = vld [vmem:[#allocation2 + $0x74] sm:$0x1]
      %v354 = vsel %vm325, 0, %v353
      %355 = vst [vmem:[#allocation2 + $0x74] sm:$0x1] %v354
      %v356 = vld [vmem:[#allocation2 + $0x80] sm:$0x1]
      %v357 = vsel %vm325, 0, %v356
      %358 = vst [vmem:[#allocation2 + $0x80] sm:$0x1] %v357
      %v359 = vld [vmem:[#allocation2 + $0x8c] sm:$0x1]
      %v360 = vsel %vm325, 0, %v359
      %361 = vst [vmem:[#allocation2 + $0x8c] sm:$0x1] %v360
      %v362 = vld [vmem:[#allocation2 + $0x98] sm:$0x1]
      %v363 = vsel %vm325, 0, %v362
      %364 = vst [vmem:[#allocation2 + $0x98] sm:$0x1] %v363
      %v365 = vld [vmem:[#allocation2 + $0xa4] sm:$0x1]
      %v366 = vsel %vm325, 0, %v365
      %367 = vst [vmem:[#allocation2 + $0xa4] sm:$0x1] %v366
      %v368 = vld [vmem:[#allocation2 + $0xb0] sm:$0x1]
      %v369 = vsel %vm325, 0, %v368
      %370 = vst [vmem:[#allocation2 + $0xb0] sm:$0x1] %v369
      %v371 = vld [vmem:[#allocation2 + $0xbc] sm:$0x1]
      %v372 = vsel %vm325, 0, %v371
      %373 = vst [vmem:[#allocation2 + $0xbc] sm:$0x1] %v372
      %v374 = vld [vmem:[#allocation2 + $0xc8] sm:$0x1]
      %v375 = vsel %vm325, 0, %v374
      %376 = vst [vmem:[#allocation2 + $0xc8] sm:$0x1] %v375
      %v377 = vld [vmem:[#allocation2 + $0xd4] sm:$0x1]
      %v378 = vsel %vm325, 0, %v377
      %379 = vst [vmem:[#allocation2 + $0xd4] sm:$0x1] %v378
      %vm380 = vsmask.f32 4368
      %vm381 = vmor %vm268, %vm380
      %v383 = vshrl.u32 %v226, 16
      %v385 = vrot.slane %v383, 7
      %v386 = vshll.u32 %v226, 16
      %v388 = vor.u32 %v385, %v386
      %v389 = vrot.slane %v385, 4
      %v391 = vshrl.u32 %v227, 16
      %v393 = vrot.slane %v391, 7
      %v394 = vshll.u32 %v227, 16
      %v396 = vor.u32 %v393, %v394
      %v397 = vsel %vm381, %v389, %v396
      %v398 = vrot.slane %v393, 4
      %v400 = vshrl.u32 %v228, 16
      %v402 = vrot.slane %v400, 7
      %v403 = vshll.u32 %v228, 16
      %v405 = vor.u32 %v402, %v403
      %v406 = vrot.slane %v402, 4
      %v408 = vshrl.u32 %v229, 16
      %v410 = vrot.slane %v408, 7
      %v411 = vshll.u32 %v229, 16
      %v413 = vor.u32 %v410, %v411
      %v414 = vsel %vm381, %v406, %v413
      %v415 = vrot.slane %v410, 4
      %v417 = vshrl.u32 %v230, 16
      %v419 = vrot.slane %v417, 7
      %v420 = vshll.u32 %v230, 16
      %v422 = vor.u32 %v419, %v420
      %v423 = vrot.slane %v419, 4
      %v425 = vshrl.u32 %v231, 16
      %v427 = vrot.slane %v425, 7
      %v428 = vshll.u32 %v231, 16
      %v430 = vor.u32 %v427, %v428
      %v431 = vsel %vm381, %v423, %v430
      %v432 = vrot.slane %v427, 4
      %v434 = vshrl.u32 %v232, 16
      %v436 = vrot.slane %v434, 7
      %v437 = vshll.u32 %v232, 16
      %v439 = vor.u32 %v436, %v437
      %v440 = vrot.slane %v436, 4
      %v442 = vshrl.u32 %v233, 16
      %v444 = vrot.slane %v442, 7
      %v445 = vshll.u32 %v233, 16
      %v447 = vor.u32 %v444, %v445
      %v448 = vsel %vm381, %v440, %v447
      %v449 = vrot.slane %v444, 4
      %v451 = vshrl.u32 %v234, 16
      %v453 = vrot.slane %v451, 7
      %v454 = vshll.u32 %v234, 16
      %v456 = vor.u32 %v453, %v454
      %v457 = vrot.slane %v453, 4
      %v459 = vshrl.u32 %v235, 16
      %v461 = vrot.slane %v459, 7
      %v462 = vshll.u32 %v235, 16
      %v464 = vor.u32 %v461, %v462
      %v465 = vsel %vm381, %v457, %v464
      %v466 = vrot.slane %v461, 4
      %v468 = vshrl.u32 %v236, 16
      %v470 = vrot.slane %v468, 7
      %v471 = vshll.u32 %v236, 16
      %v473 = vor.u32 %v470, %v471
      %v474 = vrot.slane %v470, 4
      %v476 = vshrl.u32 %v237, 16
      %v478 = vrot.slane %v476, 7
      %v479 = vshll.u32 %v237, 16
      %v481 = vor.u32 %v478, %v479
      %v482 = vsel %vm381, %v474, %v481
      %v483 = vrot.slane %v478, 4
      %v485 = vshrl.u32 %v238, 16
      %v487 = vrot.slane %v485, 7
      %v488 = vshll.u32 %v238, 16
      %v490 = vor.u32 %v487, %v488
      %v491 = vrot.slane %v487, 4
      %v493 = vshrl.u32 %v239, 16
      %v495 = vrot.slane %v493, 7
      %v496 = vshll.u32 %v239, 16
      %v498 = vor.u32 %v495, %v496
      %v499 = vsel %vm381, %v491, %v498
      %v500 = vrot.slane %v495, 4
      %v502 = vshrl.u32 %v240, 16
      %v504 = vrot.slane %v502, 7
      %v505 = vshll.u32 %v240, 16
      %v507 = vor.u32 %v504, %v505
      %v508 = vrot.slane %v504, 4
      %v510 = vshrl.u32 %v241, 16
      %v512 = vrot.slane %v510, 7
      %v513 = vshll.u32 %v241, 16
      %v515 = vor.u32 %v512, %v513
      %v516 = vsel %vm381, %v508, %v515
      %v517 = vrot.slane %v512, 4
      %v519 = vshrl.u32 %v242, 16
      %v521 = vrot.slane %v519, 7
      %v522 = vshll.u32 %v242, 16
      %v524 = vor.u32 %v521, %v522
      %v525 = vrot.slane %v521, 4
      %v527 = vshrl.u32 %v243, 16
      %v529 = vrot.slane %v527, 7
      %v530 = vshll.u32 %v243, 16
      %v532 = vor.u32 %v529, %v530
      %v533 = vsel %vm381, %v525, %v532
      %v534 = vrot.slane %v529, 4
      %v536 = vshrl.u32 %v244, 16
      %v538 = vrot.slane %v536, 7
      %v539 = vshll.u32 %v244, 16
      %v541 = vor.u32 %v538, %v539
      %v542 = vrot.slane %v538, 4
      %v544 = vshrl.u32 %v245, 16
      %v546 = vrot.slane %v544, 7
      %v547 = vshll.u32 %v245, 16
      %v549 = vor.u32 %v546, %v547
      %v550 = vsel %vm381, %v542, %v549
      %v551 = vrot.slane %v546, 4
      %v553 = vshrl.u32 %v246, 16
      %v555 = vrot.slane %v553, 7
      %v556 = vshll.u32 %v246, 16
      %v558 = vor.u32 %v555, %v556
      %v559 = vrot.slane %v555, 4
      %v561 = vshrl.u32 %v247, 16
      %v563 = vrot.slane %v561, 7
      %v564 = vshll.u32 %v247, 16
      %v566 = vor.u32 %v563, %v564
      %v567 = vsel %vm381, %v559, %v566
      %v568 = vrot.slane %v563, 4
      %v570 = vshrl.u32 %v248, 16
      %v572 = vrot.slane %v570, 7
      %v573 = vshll.u32 %v248, 16
      %v575 = vor.u32 %v572, %v573
      %v576 = vrot.slane %v572, 4
      %v578 = vshrl.u32 %v249, 16
      %v580 = vrot.slane %v578, 7
      %v581 = vshll.u32 %v249, 16
      %v583 = vor.u32 %v580, %v581
      %v584 = vsel %vm381, %v576, %v583
      %v585 = vrot.slane %v580, 4
      %v587 = vshrl.u32 %v250, 16
      %v589 = vrot.slane %v587, 7
      %v590 = vshll.u32 %v250, 16
      %v592 = vor.u32 %v589, %v590
      %v593 = vrot.slane %v589, 4
      %v595 = vshrl.u32 %v251, 16
      %v597 = vrot.slane %v595, 7
      %v598 = vshll.u32 %v251, 16
      %v600 = vor.u32 %v597, %v598
      %v601 = vsel %vm381, %v593, %v600
      %v602 = vrot.slane %v597, 4
      %v604 = vshrl.u32 %v252, 16
      %v606 = vrot.slane %v604, 7
      %v607 = vshll.u32 %v252, 16
      %v609 = vor.u32 %v606, %v607
      %v610 = vrot.slane %v606, 4
      %v612 = vshrl.u32 %v253, 16
      %v614 = vrot.slane %v612, 7
      %v615 = vshll.u32 %v253, 16
      %v617 = vor.u32 %v614, %v615
      %v618 = vsel %vm381, %v610, %v617
      %v619 = vrot.slane %v614, 4
      %v621 = vshrl.u32 %v254, 16
      %v623 = vrot.slane %v621, 7
      %v624 = vshll.u32 %v254, 16
      %v626 = vor.u32 %v623, %v624
      %v627 = vrot.slane %v623, 4
      %v629 = vshrl.u32 %v255, 16
      %v631 = vrot.slane %v629, 7
      %v632 = vshll.u32 %v255, 16
      %v634 = vor.u32 %v631, %v632
      %v635 = vsel %vm381, %v627, %v634
      %v636 = vrot.slane %v631, 4
      %v638 = vshrl.u32 %v256, 16
      %v640 = vrot.slane %v638, 7
      %v641 = vshll.u32 %v256, 16
      %v643 = vor.u32 %v640, %v641
      %v644 = vrot.slane %v640, 4
      %v646 = vshrl.u32 %v257, 16
      %v648 = vrot.slane %v646, 7
      %v649 = vshll.u32 %v257, 16
      %v651 = vor.u32 %v648, %v649
      %v652 = vsel %vm381, %v644, %v651
      %v653 = vrot.slane %v648, 4
      %s702 = scalar_lea.vmem [#allocation2], 12
      %vm703 = vcmask 60416
      %vm704 = vmand %vm703, %vm324
      %v705 = vld [vmem:[%s702] sm:$0xf]
      %v706 = vsel %vm704, %v388, %v705
      %707 = vst [vmem:[%s702] sm:$0xf] %v706
      %708 = vst.msk [vmem:[%s702 + $0x4] sm:$0xf] %vm258, %v397
      %v709 = vld [vmem:[%s702 + $0x8] sm:$0x1]
      %v710 = vsel %vm269, %v398, %v709
      %711 = vst [vmem:[%s702 + $0x8] sm:$0x1] %v710
      %v712 = vld [vmem:[%s702 + $0xc] sm:$0xf]
      %v713 = vsel %vm704, %v405, %v712
      %714 = vst [vmem:[%s702 + $0xc] sm:$0xf] %v713
      %715 = vst.msk [vmem:[%s702 + $0x10] sm:$0xf] %vm258, %v414
      %v716 = vld [vmem:[%s702 + $0x14] sm:$0x1]
      %v717 = vsel %vm269, %v415, %v716
      %718 = vst [vmem:[%s702 + $0x14] sm:$0x1] %v717
      %v719 = vld [vmem:[%s702 + $0x18] sm:$0xf]
      %v720 = vsel %vm704, %v422, %v719
      %721 = vst [vmem:[%s702 + $0x18] sm:$0xf] %v720
      %722 = vst.msk [vmem:[%s702 + $0x1c] sm:$0xf] %vm258, %v431
      %v723 = vld [vmem:[%s702 + $0x20] sm:$0x1]
      %v724 = vsel %vm269, %v432, %v723
      %725 = vst [vmem:[%s702 + $0x20] sm:$0x1] %v724
      %v726 = vld [vmem:[%s702 + $0x24] sm:$0xf]
      %v727 = vsel %vm704, %v439, %v726
      %728 = vst [vmem:[%s702 + $0x24] sm:$0xf] %v727
      %729 = vst.msk [vmem:[%s702 + $0x28] sm:$0xf] %vm258, %v448
      %v730 = vld [vmem:[%s702 + $0x2c] sm:$0x1]
      %v731 = vsel %vm269, %v449, %v730
      %732 = vst [vmem:[%s702 + $0x2c] sm:$0x1] %v731
      %v733 = vld [vmem:[%s702 + $0x30] sm:$0xf]
      %v734 = vsel %vm704, %v456, %v733
      %735 = vst [vmem:[%s702 + $0x30] sm:$0xf] %v734
      %736 = vst.msk [vmem:[%s702 + $0x34] sm:$0xf] %vm258, %v465
      %v737 = vld [vmem:[%s702 + $0x38] sm:$0x1]
      %v738 = vsel %vm269, %v466, %v737
      %739 = vst [vmem:[%s702 + $0x38] sm:$0x1] %v738
      %v740 = vld [vmem:[%s702 + $0x3c] sm:$0xf]
      %v741 = vsel %vm704, %v473, %v740
      %742 = vst [vmem:[%s702 + $0x3c] sm:$0xf] %v741
      %743 = vst.msk [vmem:[%s702 + $0x40] sm:$0xf] %vm258, %v482
      %v744 = vld [vmem:[%s702 + $0x44] sm:$0x1]
      %v745 = vsel %vm269, %v483, %v744
      %746 = vst [vmem:[%s702 + $0x44] sm:$0x1] %v745
      %v747 = vld [vmem:[%s702 + $0x48] sm:$0xf]
      %v748 = vsel %vm704, %v490, %v747
      %749 = vst [vmem:[%s702 + $0x48] sm:$0xf] %v748
      %750 = vst.msk [vmem:[%s702 + $0x4c] sm:$0xf] %vm258, %v499
      %v751 = vld [vmem:[%s702 + $0x50] sm:$0x1]
      %v752 = vsel %vm269, %v500, %v751
      %753 = vst [vmem:[%s702 + $0x50] sm:$0x1] %v752
      %v754 = vld [vmem:[%s702 + $0x54] sm:$0xf]
      %v755 = vsel %vm704, %v507, %v754
      %756 = vst [vmem:[%s702 + $0x54] sm:$0xf] %v755
      %757 = vst.msk [vmem:[%s702 + $0x58] sm:$0xf] %vm258, %v516
      %v758 = vld [vmem:[%s702 + $0x5c] sm:$0x1]
      %v759 = vsel %vm269, %v517, %v758
      %760 = vst [vmem:[%s702 + $0x5c] sm:$0x1] %v759
      %v761 = vld [vmem:[%s702 + $0x60] sm:$0xf]
      %v762 = vsel %vm704, %v524, %v761
      %763 = vst [vmem:[%s702 + $0x60] sm:$0xf] %v762
      %764 = vst.msk [vmem:[%s702 + $0x64] sm:$0xf] %vm258, %v533
      %v765 = vld [vmem:[%s702 + $0x68] sm:$0x1]
      %v766 = vsel %vm269, %v534, %v765
      %767 = vst [vmem:[%s702 + $0x68] sm:$0x1] %v766
      %v768 = vld [vmem:[%s702 + $0x6c] sm:$0xf]
      %v769 = vsel %vm704, %v541, %v768
      %770 = vst [vmem:[%s702 + $0x6c] sm:$0xf] %v769
      %771 = vst.msk [vmem:[%s702 + $0x70] sm:$0xf] %vm258, %v550
      %v772 = vld [vmem:[%s702 + $0x74] sm:$0x1]
      %v773 = vsel %vm269, %v551, %v772
      %774 = vst [vmem:[%s702 + $0x74] sm:$0x1] %v773
      %v775 = vld [vmem:[%s702 + $0x78] sm:$0xf]
      %v776 = vsel %vm704, %v558, %v775
      %777 = vst [vmem:[%s702 + $0x78] sm:$0xf] %v776
      %778 = vst.msk [vmem:[%s702 + $0x7c] sm:$0xf] %vm258, %v567
      %v779 = vld [vmem:[%s702 + $0x80] sm:$0x1]
      %v780 = vsel %vm269, %v568, %v779
      %781 = vst [vmem:[%s702 + $0x80] sm:$0x1] %v780
      %v782 = vld [vmem:[%s702 + $0x84] sm:$0xf]
      %v783 = vsel %vm704, %v575, %v782
      %784 = vst [vmem:[%s702 + $0x84] sm:$0xf] %v783
      %785 = vst.msk [vmem:[%s702 + $0x88] sm:$0xf] %vm258, %v584
      %v786 = vld [vmem:[%s702 + $0x8c] sm:$0x1]
      %v787 = vsel %vm269, %v585, %v786
      %788 = vst [vmem:[%s702 + $0x8c] sm:$0x1] %v787
      %v789 = vld [vmem:[%s702 + $0x90] sm:$0xf]
      %v790 = vsel %vm704, %v592, %v789
      %791 = vst [vmem:[%s702 + $0x90] sm:$0xf] %v790
      %792 = vst.msk [vmem:[%s702 + $0x94] sm:$0xf] %vm258, %v601
      %v793 = vld [vmem:[%s702 + $0x98] sm:$0x1]
      %v794 = vsel %vm269, %v602, %v793
      %795 = vst [vmem:[%s702 + $0x98] sm:$0x1] %v794
      %v796 = vld [vmem:[%s702 + $0x9c] sm:$0xf]
      %v797 = vsel %vm704, %v609, %v796
      %798 = vst [vmem:[%s702 + $0x9c] sm:$0xf] %v797
      %799 = vst.msk [vmem:[%s702 + $0xa0] sm:$0xf] %vm258, %v618
      %v800 = vld [vmem:[%s702 + $0xa4] sm:$0x1]
      %v801 = vsel %vm269, %v619, %v800
      %802 = vst [vmem:[%s702 + $0xa4] sm:$0x1] %v801
      %v803 = vld [vmem:[%s702 + $0xa8] sm:$0xf]
      %v804 = vsel %vm704, %v626, %v803
      %805 = vst [vmem:[%s702 + $0xa8] sm:$0xf] %v804
      %806 = vst.msk [vmem:[%s702 + $0xac] sm:$0xf] %vm258, %v635
      %v807 = vld [vmem:[%s702 + $0xb0] sm:$0x1]
      %v808 = vsel %vm269, %v636, %v807
      %809 = vst [vmem:[%s702 + $0xb0] sm:$0x1] %v808
      %v810 = vld [vmem:[%s702 + $0xb4] sm:$0xf]
      %v811 = vsel %vm704, %v643, %v810
      %812 = vst [vmem:[%s702 + $0xb4] sm:$0xf] %v811
      %813 = vst.msk [vmem:[%s702 + $0xb8] sm:$0xf] %vm258, %v652
      %v814 = vld [vmem:[%s702 + $0xbc] sm:$0x1]
      %v815 = vsel %vm269, %v653, %v814
      %816 = vst [vmem:[%s702 + $0xbc] sm:$0x1] %v815
      %v817 = vld [vmem:[#allocation2] sm:$0xf]
      %v818 = vld [vmem:[#allocation2 + $0x4] sm:$0xf]
      %v819 = vld [vmem:[#allocation2 + $0xc] sm:$0xf]
      %v820 = vld [vmem:[#allocation2 + $0x10] sm:$0xf]
      %v821 = vld [vmem:[#allocation2 + $0x18] sm:$0xf]
      %v822 = vld [vmem:[#allocation2 + $0x1c] sm:$0xf]
      %v823 = vld [vmem:[#allocation2 + $0x24] sm:$0xf]
      %v824 = vld [vmem:[#allocation2 + $0x28] sm:$0xf]
      %v825 = vld [vmem:[#allocation2 + $0x30] sm:$0xf]
      %v826 = vld [vmem:[#allocation2 + $0x34] sm:$0xf]
      %v827 = vld [vmem:[#allocation2 + $0x3c] sm:$0xf]
      %v828 = vld [vmem:[#allocation2 + $0x40] sm:$0xf]
      %v829 = vld [vmem:[#allocation2 + $0x48] sm:$0xf]
      %v830 = vld [vmem:[#allocation2 + $0x4c] sm:$0xf]
      %v831 = vld [vmem:[#allocation2 + $0x54] sm:$0xf]
      %v832 = vld [vmem:[#allocation2 + $0x58] sm:$0xf]
      %v833 = vld [vmem:[#allocation2 + $0x60] sm:$0xf]
      %v834 = vld [vmem:[#allocation2 + $0x64] sm:$0xf]
      %v835 = vld [vmem:[#allocation2 + $0x6c] sm:$0xf]
      %v836 = vld [vmem:[#allocation2 + $0x70] sm:$0xf]
      %v837 = vld [vmem:[#allocation2 + $0x78] sm:$0xf]
      %v838 = vld [vmem:[#allocation2 + $0x7c] sm:$0xf]
      %v839 = vld [vmem:[#allocation2 + $0x84] sm:$0xf]
      %v840 = vld [vmem:[#allocation2 + $0x88] sm:$0xf]
      %v841 = vld [vmem:[#allocation2 + $0x90] sm:$0xf]
      %v842 = vld [vmem:[#allocation2 + $0x94] sm:$0xf]
      %v843 = vld [vmem:[#allocation2 + $0x9c] sm:$0xf]
      %v844 = vld [vmem:[#allocation2 + $0xa0] sm:$0xf]
      %v845 = vld [vmem:[#allocation2 + $0xa8] sm:$0xf]
      %v846 = vld [vmem:[#allocation2 + $0xac] sm:$0xf]
      %v847 = vld [vmem:[#allocation2 + $0xb4] sm:$0xf]
      %v848 = vld [vmem:[#allocation2 + $0xb8] sm:$0xf]
      %v881 = vunpack.c.l.b16 %v817
      %v882 = vunpack.c.l.b16 %v818
      %v883 = vunpack.c.l.b16 %v819
      %v884 = vunpack.c.l.b16 %v820
      %v885 = vunpack.c.l.b16 %v821
      %v886 = vunpack.c.l.b16 %v822
      %v887 = vunpack.c.l.b16 %v823
      %v888 = vunpack.c.l.b16 %v824
      %v889 = vunpack.c.l.b16 %v825
      %v890 = vunpack.c.l.b16 %v826
      %v891 = vunpack.c.l.b16 %v827
      %v892 = vunpack.c.l.b16 %v828
      %v893 = vunpack.c.l.b16 %v829
      %v894 = vunpack.c.l.b16 %v830
      %v895 = vunpack.c.l.b16 %v831
      %v896 = vunpack.c.l.b16 %v832
      %v897 = vunpack.c.l.b16 %v833
      %v898 = vunpack.c.l.b16 %v834
      %v899 = vunpack.c.l.b16 %v835
      %v900 = vunpack.c.l.b16 %v836
      %v901 = vunpack.c.l.b16 %v837
      %v902 = vunpack.c.l.b16 %v838
      %v903 = vunpack.c.l.b16 %v839
      %v904 = vunpack.c.l.b16 %v840
      %v905 = vunpack.c.l.b16 %v841
      %v906 = vunpack.c.l.b16 %v842
      %v907 = vunpack.c.l.b16 %v843
      %v908 = vunpack.c.l.b16 %v844
      %v909 = vunpack.c.l.b16 %v845
      %v910 = vunpack.c.l.b16 %v846
      %v911 = vunpack.c.l.b16 %v847
      %v912 = vunpack.c.l.b16 %v848
      %v913 = vpack.c.b16 %v882, %v881
      %v914 = vpack.c.b16 %v884, %v883
      %v915 = vpack.c.b16 %v886, %v885
      %v916 = vpack.c.b16 %v888, %v887
      %v917 = vpack.c.b16 %v890, %v889
      %v918 = vpack.c.b16 %v892, %v891
      %v919 = vpack.c.b16 %v894, %v893
      %v920 = vpack.c.b16 %v896, %v895
      %v921 = vpack.c.b16 %v898, %v897
      %v922 = vpack.c.b16 %v900, %v899
      %v923 = vpack.c.b16 %v902, %v901
      %v924 = vpack.c.b16 %v904, %v903
      %v925 = vpack.c.b16 %v906, %v905
      %v926 = vpack.c.b16 %v908, %v907
      %v927 = vpack.c.b16 %v910, %v909
      %v928 = vpack.c.b16 %v912, %v911
      %vm945 = vcmask 64512
      %946 = vst.msk [vmem:[#allocation4] sm:$0xff] %vm945, %v913
      %947 = vst.msk [vmem:[#allocation4 + $0x8] sm:$0xff] %vm945, %v914
      %948 = vst.msk [vmem:[#allocation4 + $0x10] sm:$0xff] %vm945, %v915
      %949 = vst.msk [vmem:[#allocation4 + $0x18] sm:$0xff] %vm945, %v916
      %950 = vst.msk [vmem:[#allocation4 + $0x20] sm:$0xff] %vm945, %v917
      %951 = vst.msk [vmem:[#allocation4 + $0x28] sm:$0xff] %vm945, %v918
      %952 = vst.msk [vmem:[#allocation4 + $0x30] sm:$0xff] %vm945, %v919
      %953 = vst.msk [vmem:[#allocation4 + $0x38] sm:$0xff] %vm945, %v920
      %954 = vst.msk [vmem:[#allocation4 + $0x40] sm:$0xff] %vm945, %v921
      %955 = vst.msk [vmem:[#allocation4 + $0x48] sm:$0xff] %vm945, %v922
      %956 = vst.msk [vmem:[#allocation4 + $0x50] sm:$0xff] %vm945, %v923
      %957 = vst.msk [vmem:[#allocation4 + $0x58] sm:$0xff] %vm945, %v924
      %958 = vst.msk [vmem:[#allocation4 + $0x60] sm:$0xff] %vm945, %v925
      %959 = vst.msk [vmem:[#allocation4 + $0x68] sm:$0xff] %vm945, %v926
      %960 = vst.msk [vmem:[#allocation4 + $0x70] sm:$0xff] %vm945, %v927
      %961 = vst.msk [vmem:[#allocation4 + $0x78] sm:$0xff] %vm945, %v928
      %v962 = vld [vmem:[#allocation2] sm:$0xf]
      %v963 = vld [vmem:[#allocation2 + $0x4] sm:$0xf]
      %v964 = vld [vmem:[#allocation2 + $0x8] sm:$0x1]
      %v965 = vld [vmem:[#allocation2 + $0xc] sm:$0xf]
      %v966 = vld [vmem:[#allocation2 + $0x10] sm:$0xf]
      %v967 = vld [vmem:[#allocation2 + $0x14] sm:$0x1]
      %v968 = vld [vmem:[#allocation2 + $0x18] sm:$0xf]
      %v969 = vld [vmem:[#allocation2 + $0x1c] sm:$0xf]
      %v970 = vld [vmem:[#allocation2 + $0x20] sm:$0x1]
      %v971 = vld [vmem:[#allocation2 + $0x24] sm:$0xf]
      %v972 = vld [vmem:[#allocation2 + $0x28] sm:$0xf]
      %v973 = vld [vmem:[#allocation2 + $0x2c] sm:$0x1]
      %v974 = vld [vmem:[#allocation2 + $0x30] sm:$0xf]
      %v975 = vld [vmem:[#allocation2 + $0x34] sm:$0xf]
      %v976 = vld [vmem:[#allocation2 + $0x38] sm:$0x1]
      %v977 = vld [vmem:[#allocation2 + $0x3c] sm:$0xf]
      %v978 = vld [vmem:[#allocation2 + $0x40] sm:$0xf]
      %v979 = vld [vmem:[#allocation2 + $0x44] sm:$0x1]
      %v980 = vld [vmem:[#allocation2 + $0x48] sm:$0xf]
      %v981 = vld [vmem:[#allocation2 + $0x4c] sm:$0xf]
      %v982 = vld [vmem:[#allocation2 + $0x50] sm:$0x1]
      %v983 = vld [vmem:[#allocation2 + $0x54] sm:$0xf]
      %v984 = vld [vmem:[#allocation2 + $0x58] sm:$0xf]
      %v985 = vld [vmem:[#allocation2 + $0x5c] sm:$0x1]
      %v986 = vld [vmem:[#allocation2 + $0x60] sm:$0xf]
      %v987 = vld [vmem:[#allocation2 + $0x64] sm:$0xf]
      %v988 = vld [vmem:[#allocation2 + $0x68] sm:$0x1]
      %v989 = vld [vmem:[#allocation2 + $0x6c] sm:$0xf]
      %v990 = vld [vmem:[#allocation2 + $0x70] sm:$0xf]
      %v991 = vld [vmem:[#allocation2 + $0x74] sm:$0x1]
      %v992 = vld [vmem:[#allocation2 + $0x78] sm:$0xf]
      %v993 = vld [vmem:[#allocation2 + $0x7c] sm:$0xf]
      %v994 = vld [vmem:[#allocation2 + $0x80] sm:$0x1]
      %v995 = vld [vmem:[#allocation2 + $0x84] sm:$0xf]
      %v996 = vld [vmem:[#allocation2 + $0x88] sm:$0xf]
      %v997 = vld [vmem:[#allocation2 + $0x8c] sm:$0x1]
      %v998 = vld [vmem:[#allocation2 + $0x90] sm:$0xf]
      %v999 = vld [vmem:[#allocation2 + $0x94] sm:$0xf]
      %v1000 = vld [vmem:[#allocation2 + $0x98] sm:$0x1]
      %v1001 = vld [vmem:[#allocation2 + $0x9c] sm:$0xf]
      %v1002 = vld [vmem:[#allocation2 + $0xa0] sm:$0xf]
      %v1003 = vld [vmem:[#allocation2 + $0xa4] sm:$0x1]
      %v1004 = vld [vmem:[#allocation2 + $0xa8] sm:$0xf]
      %v1005 = vld [vmem:[#allocation2 + $0xac] sm:$0xf]
      %v1006 = vld [vmem:[#allocation2 + $0xb0] sm:$0x1]
      %v1007 = vld [vmem:[#allocation2 + $0xb4] sm:$0xf]
      %v1008 = vld [vmem:[#allocation2 + $0xb8] sm:$0xf]
      %v1009 = vld [vmem:[#allocation2 + $0xbc] sm:$0x1]
      %vm1010 = vsmask.f32 3328
      %vm1011 = vsmask.f32 7440
      %vm1012 = vmor %vm1010, %vm1011
      %v1014 = vshrl.u32 %v962, 16
      %v1016 = vrot.slane %v1014, 4
      %v1017 = vshll.u32 %v962, 16
      %v1019 = vrot.slane %v1017, 5
      %v1020 = vor.u32 %v1016, %v1019
      %v1021 = vrot.slane %v1020, 4
      %v1023 = vshll.u32 %v963, 16
      %v1025 = vrot.slane %v1023, 5
      %v1026 = vsel %vm1012, %v1021, %v1025
      %v1027 = vshrl.u32 %v963, 16
      %v1029 = vrot.slane %v1027, 4
      %v1030 = vor.u32 %v1029, %v1025
      %v1031 = vrot.slane %v1030, 4
      %v1033 = vshll.u32 %v964, 16
      %v1035 = vrot.slane %v1033, 5
      %v1036 = vsel %vm1012, %v1031, %v1035
      %v1038 = vshrl.u32 %v965, 16
      %v1040 = vrot.slane %v1038, 4
      %v1041 = vshll.u32 %v965, 16
      %v1043 = vrot.slane %v1041, 5
      %v1044 = vor.u32 %v1040, %v1043
      %v1045 = vrot.slane %v1044, 4
      %v1047 = vshll.u32 %v966, 16
      %v1049 = vrot.slane %v1047, 5
      %v1050 = vsel %vm1012, %v1045, %v1049
      %v1051 = vshrl.u32 %v966, 16
      %v1053 = vrot.slane %v1051, 4
      %v1054 = vor.u32 %v1053, %v1049
      %v1055 = vrot.slane %v1054, 4
      %v1057 = vshll.u32 %v967, 16
      %v1059 = vrot.slane %v1057, 5
      %v1060 = vsel %vm1012, %v1055, %v1059
      %v1062 = vshrl.u32 %v968, 16
      %v1064 = vrot.slane %v1062, 4
      %v1065 = vshll.u32 %v968, 16
      %v1067 = vrot.slane %v1065, 5
      %v1068 = vor.u32 %v1064, %v1067
      %v1069 = vrot.slane %v1068, 4
      %v1071 = vshll.u32 %v969, 16
      %v1073 = vrot.slane %v1071, 5
      %v1074 = vsel %vm1012, %v1069, %v1073
      %v1075 = vshrl.u32 %v969, 16
      %v1077 = vrot.slane %v1075, 4
      %v1078 = vor.u32 %v1077, %v1073
      %v1079 = vrot.slane %v1078, 4
      %v1081 = vshll.u32 %v970, 16
      %v1083 = vrot.slane %v1081, 5
      %v1084 = vsel %vm1012, %v1079, %v1083
      %v1086 = vshrl.u32 %v971, 16
      %v1088 = vrot.slane %v1086, 4
      %v1089 = vshll.u32 %v971, 16
      %v1091 = vrot.slane %v1089, 5
      %v1092 = vor.u32 %v1088, %v1091
      %v1093 = vrot.slane %v1092, 4
      %v1095 = vshll.u32 %v972, 16
      %v1097 = vrot.slane %v1095, 5
      %v1098 = vsel %vm1012, %v1093, %v1097
      %v1099 = vshrl.u32 %v972, 16
      %v1101 = vrot.slane %v1099, 4
      %v1102 = vor.u32 %v1101, %v1097
      %v1103 = vrot.slane %v1102, 4
      %v1105 = vshll.u32 %v973, 16
      %v1107 = vrot.slane %v1105, 5
      %v1108 = vsel %vm1012, %v1103, %v1107
      %v1110 = vshrl.u32 %v974, 16
      %v1112 = vrot.slane %v1110, 4
      %v1113 = vshll.u32 %v974, 16
      %v1115 = vrot.slane %v1113, 5
      %v1116 = vor.u32 %v1112, %v1115
      %v1117 = vrot.slane %v1116, 4
      %v1119 = vshll.u32 %v975, 16
      %v1121 = vrot.slane %v1119, 5
      %v1122 = vsel %vm1012, %v1117, %v1121
      %v1123 = vshrl.u32 %v975, 16
      %v1125 = vrot.slane %v1123, 4
      %v1126 = vor.u32 %v1125, %v1121
      %v1127 = vrot.slane %v1126, 4
      %v1129 = vshll.u32 %v976, 16
      %v1131 = vrot.slane %v1129, 5
      %v1132 = vsel %vm1012, %v1127, %v1131
      %v1134 = vshrl.u32 %v977, 16
      %v1136 = vrot.slane %v1134, 4
      %v1137 = vshll.u32 %v977, 16
      %v1139 = vrot.slane %v1137, 5
      %v1140 = vor.u32 %v1136, %v1139
      %v1141 = vrot.slane %v1140, 4
      %v1143 = vshll.u32 %v978, 16
      %v1145 = vrot.slane %v1143, 5
      %v1146 = vsel %vm1012, %v1141, %v1145
      %v1147 = vshrl.u32 %v978, 16
      %v1149 = vrot.slane %v1147, 4
      %v1150 = vor.u32 %v1149, %v1145
      %v1151 = vrot.slane %v1150, 4
      %v1153 = vshll.u32 %v979, 16
      %v1155 = vrot.slane %v1153, 5
      %v1156 = vsel %vm1012, %v1151, %v1155
      %v1158 = vshrl.u32 %v980, 16
      %v1160 = vrot.slane %v1158, 4
      %v1161 = vshll.u32 %v980, 16
      %v1163 = vrot.slane %v1161, 5
      %v1164 = vor.u32 %v1160, %v1163
      %v1165 = vrot.slane %v1164, 4
      %v1167 = vshll.u32 %v981, 16
      %v1169 = vrot.slane %v1167, 5
      %v1170 = vsel %vm1012, %v1165, %v1169
      %v1171 = vshrl.u32 %v981, 16
      %v1173 = vrot.slane %v1171, 4
      %v1174 = vor.u32 %v1173, %v1169
      %v1175 = vrot.slane %v1174, 4
      %v1177 = vshll.u32 %v982, 16
      %v1179 = vrot.slane %v1177, 5
      %v1180 = vsel %vm1012, %v1175, %v1179
      %v1182 = vshrl.u32 %v983, 16
      %v1184 = vrot.slane %v1182, 4
      %v1185 = vshll.u32 %v983, 16
      %v1187 = vrot.slane %v1185, 5
      %v1188 = vor.u32 %v1184, %v1187
      %v1189 = vrot.slane %v1188, 4
      %v1191 = vshll.u32 %v984, 16
      %v1193 = vrot.slane %v1191, 5
      %v1194 = vsel %vm1012, %v1189, %v1193
      %v1195 = vshrl.u32 %v984, 16
      %v1197 = vrot.slane %v1195, 4
      %v1198 = vor.u32 %v1197, %v1193
      %v1199 = vrot.slane %v1198, 4
      %v1201 = vshll.u32 %v985, 16
      %v1203 = vrot.slane %v1201, 5
      %v1204 = vsel %vm1012, %v1199, %v1203
      %v1206 = vshrl.u32 %v986, 16
      %v1208 = vrot.slane %v1206, 4
      %v1209 = vshll.u32 %v986, 16
      %v1211 = vrot.slane %v1209, 5
      %v1212 = vor.u32 %v1208, %v1211
      %v1213 = vrot.slane %v1212, 4
      %v1215 = vshll.u32 %v987, 16
      %v1217 = vrot.slane %v1215, 5
      %v1218 = vsel %vm1012, %v1213, %v1217
      %v1219 = vshrl.u32 %v987, 16
      %v1221 = vrot.slane %v1219, 4
      %v1222 = vor.u32 %v1221, %v1217
      %v1223 = vrot.slane %v1222, 4
      %v1225 = vshll.u32 %v988, 16
      %v1227 = vrot.slane %v1225, 5
      %v1228 = vsel %vm1012, %v1223, %v1227
      %v1230 = vshrl.u32 %v989, 16
      %v1232 = vrot.slane %v1230, 4
      %v1233 = vshll.u32 %v989, 16
      %v1235 = vrot.slane %v1233, 5
      %v1236 = vor.u32 %v1232, %v1235
      %v1237 = vrot.slane %v1236, 4
      %v1239 = vshll.u32 %v990, 16
      %v1241 = vrot.slane %v1239, 5
      %v1242 = vsel %vm1012, %v1237, %v1241
      %v1243 = vshrl.u32 %v990, 16
      %v1245 = vrot.slane %v1243, 4
      %v1246 = vor.u32 %v1245, %v1241
      %v1247 = vrot.slane %v1246, 4
      %v1249 = vshll.u32 %v991, 16
      %v1251 = vrot.slane %v1249, 5
      %v1252 = vsel %vm1012, %v1247, %v1251
      %v1254 = vshrl.u32 %v992, 16
      %v1256 = vrot.slane %v1254, 4
      %v1257 = vshll.u32 %v992, 16
      %v1259 = vrot.slane %v1257, 5
      %v1260 = vor.u32 %v1256, %v1259
      %v1261 = vrot.slane %v1260, 4
      %v1263 = vshll.u32 %v993, 16
      %v1265 = vrot.slane %v1263, 5
      %v1266 = vsel %vm1012, %v1261, %v1265
      %v1267 = vshrl.u32 %v993, 16
      %v1269 = vrot.slane %v1267, 4
      %v1270 = vor.u32 %v1269, %v1265
      %v1271 = vrot.slane %v1270, 4
      %v1273 = vshll.u32 %v994, 16
      %v1275 = vrot.slane %v1273, 5
      %v1276 = vsel %vm1012, %v1271, %v1275
      %v1278 = vshrl.u32 %v995, 16
      %v1280 = vrot.slane %v1278, 4
      %v1281 = vshll.u32 %v995, 16
      %v1283 = vrot.slane %v1281, 5
      %v1284 = vor.u32 %v1280, %v1283
      %v1285 = vrot.slane %v1284, 4
      %v1287 = vshll.u32 %v996, 16
      %v1289 = vrot.slane %v1287, 5
      %v1290 = vsel %vm1012, %v1285, %v1289
      %v1291 = vshrl.u32 %v996, 16
      %v1293 = vrot.slane %v1291, 4
      %v1294 = vor.u32 %v1293, %v1289
      %v1295 = vrot.slane %v1294, 4
      %v1297 = vshll.u32 %v997, 16
      %v1299 = vrot.slane %v1297, 5
      %v1300 = vsel %vm1012, %v1295, %v1299
      %v1302 = vshrl.u32 %v998, 16
      %v1304 = vrot.slane %v1302, 4
      %v1305 = vshll.u32 %v998, 16
      %v1307 = vrot.slane %v1305, 5
      %v1308 = vor.u32 %v1304, %v1307
      %v1309 = vrot.slane %v1308, 4
      %v1311 = vshll.u32 %v999, 16
      %v1313 = vrot.slane %v1311, 5
      %v1314 = vsel %vm1012, %v1309, %v1313
      %v1315 = vshrl.u32 %v999, 16
      %v1317 = vrot.slane %v1315, 4
      %v1318 = vor.u32 %v1317, %v1313
      %v1319 = vrot.slane %v1318, 4
      %v1321 = vshll.u32 %v1000, 16
      %v1323 = vrot.slane %v1321, 5
      %v1324 = vsel %vm1012, %v1319, %v1323
      %v1326 = vshrl.u32 %v1001, 16
      %v1328 = vrot.slane %v1326, 4
      %v1329 = vshll.u32 %v1001, 16
      %v1331 = vrot.slane %v1329, 5
      %v1332 = vor.u32 %v1328, %v1331
      %v1333 = vrot.slane %v1332, 4
      %v1335 = vshll.u32 %v1002, 16
      %v1337 = vrot.slane %v1335, 5
      %v1338 = vsel %vm1012, %v1333, %v1337
      %v1339 = vshrl.u32 %v1002, 16
      %v1341 = vrot.slane %v1339, 4
      %v1342 = vor.u32 %v1341, %v1337
      %v1343 = vrot.slane %v1342, 4
      %v1345 = vshll.u32 %v1003, 16
      %v1347 = vrot.slane %v1345, 5
      %v1348 = vsel %vm1012, %v1343, %v1347
      %v1350 = vshrl.u32 %v1004, 16
      %v1352 = vrot.slane %v1350, 4
      %v1353 = vshll.u32 %v1004, 16
      %v1355 = vrot.slane %v1353, 5
      %v1356 = vor.u32 %v1352, %v1355
      %v1357 = vrot.slane %v1356, 4
      %v1359 = vshll.u32 %v1005, 16
      %v1361 = vrot.slane %v1359, 5
      %v1362 = vsel %vm1012, %v1357, %v1361
      %v1363 = vshrl.u32 %v1005, 16
      %v1365 = vrot.slane %v1363, 4
      %v1366 = vor.u32 %v1365, %v1361
      %v1367 = vrot.slane %v1366, 4
      %v1369 = vshll.u32 %v1006, 16
      %v1371 = vrot.slane %v1369, 5
      %v1372 = vsel %vm1012, %v1367, %v1371
      %v1374 = vshrl.u32 %v1007, 16
      %v1376 = vrot.slane %v1374, 4
      %v1377 = vshll.u32 %v1007, 16
      %v1379 = vrot.slane %v1377, 5
      %v1380 = vor.u32 %v1376, %v1379
      %v1381 = vrot.slane %v1380, 4
      %v1383 = vshll.u32 %v1008, 16
      %v1385 = vrot.slane %v1383, 5
      %v1386 = vsel %vm1012, %v1381, %v1385
      %v1387 = vshrl.u32 %v1008, 16
      %v1389 = vrot.slane %v1387, 4
      %v1390 = vor.u32 %v1389, %v1385
      %v1391 = vrot.slane %v1390, 4
      %v1393 = vshll.u32 %v1009, 16
      %v1395 = vrot.slane %v1393, 5
      %v1396 = vsel %vm1012, %v1391, %v1395
      %v1397 = vunpack.c.l.b16 %v1026
      %v1398 = vunpack.c.l.b16 %v1036
      %v1399 = vunpack.c.l.b16 %v1050
      %v1400 = vunpack.c.l.b16 %v1060
      %v1401 = vunpack.c.l.b16 %v1074
      %v1402 = vunpack.c.l.b16 %v1084
      %v1403 = vunpack.c.l.b16 %v1098
      %v1404 = vunpack.c.l.b16 %v1108
      %v1405 = vunpack.c.l.b16 %v1122
      %v1406 = vunpack.c.l.b16 %v1132
      %v1407 = vunpack.c.l.b16 %v1146
      %v1408 = vunpack.c.l.b16 %v1156
      %v1409 = vunpack.c.l.b16 %v1170
      %v1410 = vunpack.c.l.b16 %v1180
      %v1411 = vunpack.c.l.b16 %v1194
      %v1412 = vunpack.c.l.b16 %v1204
      %v1413 = vunpack.c.l.b16 %v1218
      %v1414 = vunpack.c.l.b16 %v1228
      %v1415 = vunpack.c.l.b16 %v1242
      %v1416 = vunpack.c.l.b16 %v1252
      %v1417 = vunpack.c.l.b16 %v1266
      %v1418 = vunpack.c.l.b16 %v1276
      %v1419 = vunpack.c.l.b16 %v1290
      %v1420 = vunpack.c.l.b16 %v1300
      %v1421 = vunpack.c.l.b16 %v1314
      %v1422 = vunpack.c.l.b16 %v1324
      %v1423 = vunpack.c.l.b16 %v1338
      %v1424 = vunpack.c.l.b16 %v1348
      %v1425 = vunpack.c.l.b16 %v1362
      %v1426 = vunpack.c.l.b16 %v1372
      %v1427 = vunpack.c.l.b16 %v1386
      %v1428 = vunpack.c.l.b16 %v1396
      %v1429 = vpack.c.b16 %v1398, %v1397
      %v1430 = vpack.c.b16 %v1400, %v1399
      %v1431 = vpack.c.b16 %v1402, %v1401
      %v1432 = vpack.c.b16 %v1404, %v1403
      %v1433 = vpack.c.b16 %v1406, %v1405
      %v1434 = vpack.c.b16 %v1408, %v1407
      %v1435 = vpack.c.b16 %v1410, %v1409
      %v1436 = vpack.c.b16 %v1412, %v1411
      %v1437 = vpack.c.b16 %v1414, %v1413
      %v1438 = vpack.c.b16 %v1416, %v1415
      %v1439 = vpack.c.b16 %v1418, %v1417
      %v1440 = vpack.c.b16 %v1420, %v1419
      %v1441 = vpack.c.b16 %v1422, %v1421
      %v1442 = vpack.c.b16 %v1424, %v1423
      %v1443 = vpack.c.b16 %v1426, %v1425
      %v1444 = vpack.c.b16 %v1428, %v1427
      %1445 = vrot.lane.b32.xlu0 %v1429, 8
      %v1446 = vpop.permute.xlu0 %1445
      %1447 = vrot.lane.b32.xlu0 %v1430, 8
      %v1448 = vpop.permute.xlu0 %1447
      %1449 = vrot.lane.b32.xlu0 %v1431, 8
      %v1450 = vpop.permute.xlu0 %1449
      %1451 = vrot.lane.b32.xlu0 %v1432, 8
      %v1452 = vpop.permute.xlu0 %1451
      %1453 = vrot.lane.b32.xlu0 %v1433, 8
      %v1454 = vpop.permute.xlu0 %1453
      %1455 = vrot.lane.b32.xlu0 %v1434, 8
      %v1456 = vpop.permute.xlu0 %1455
      %1457 = vrot.lane.b32.xlu0 %v1435, 8
      %v1458 = vpop.permute.xlu0 %1457
      %1459 = vrot.lane.b32.xlu0 %v1436, 8
      %v1460 = vpop.permute.xlu0 %1459
      %1461 = vrot.lane.b32.xlu0 %v1437, 8
      %v1462 = vpop.permute.xlu0 %1461
      %1463 = vrot.lane.b32.xlu0 %v1438, 8
      %v1464 = vpop.permute.xlu0 %1463
      %1465 = vrot.lane.b32.xlu0 %v1439, 8
      %v1466 = vpop.permute.xlu0 %1465
      %1467 = vrot.lane.b32.xlu0 %v1440, 8
      %v1468 = vpop.permute.xlu0 %1467
      %1469 = vrot.lane.b32.xlu0 %v1441, 8
      %v1470 = vpop.permute.xlu0 %1469
      %1471 = vrot.lane.b32.xlu0 %v1442, 8
      %v1472 = vpop.permute.xlu0 %1471
      %1473 = vrot.lane.b32.xlu0 %v1443, 8
      %v1474 = vpop.permute.xlu0 %1473
      %1475 = vrot.lane.b32.xlu0 %v1444, 8
      %v1476 = vpop.permute.xlu0 %1475
      %vm1493 = vcmask 130112
      %1494 = vst.msk [vmem:[#allocation4] sm:$0xff] %vm1493, %v1446
      %1495 = vst.msk [vmem:[#allocation4 + $0x8] sm:$0xff] %vm1493, %v1448
      %1496 = vst.msk [vmem:[#allocation4 + $0x10] sm:$0xff] %vm1493, %v1450
      %1497 = vst.msk [vmem:[#allocation4 + $0x18] sm:$0xff] %vm1493, %v1452
      %1498 = vst.msk [vmem:[#allocation4 + $0x20] sm:$0xff] %vm1493, %v1454
      %1499 = vst.msk [vmem:[#allocation4 + $0x28] sm:$0xff] %vm1493, %v1456
      %1500 = vst.msk [vmem:[#allocation4 + $0x30] sm:$0xff] %vm1493, %v1458
      %1501 = vst.msk [vmem:[#allocation4 + $0x38] sm:$0xff] %vm1493, %v1460
      %1502 = vst.msk [vmem:[#allocation4 + $0x40] sm:$0xff] %vm1493, %v1462
      %1503 = vst.msk [vmem:[#allocation4 + $0x48] sm:$0xff] %vm1493, %v1464
      %1504 = vst.msk [vmem:[#allocation4 + $0x50] sm:$0xff] %vm1493, %v1466
      %1505 = vst.msk [vmem:[#allocation4 + $0x58] sm:$0xff] %vm1493, %v1468
      %1506 = vst.msk [vmem:[#allocation4 + $0x60] sm:$0xff] %vm1493, %v1470
      %1507 = vst.msk [vmem:[#allocation4 + $0x68] sm:$0xff] %vm1493, %v1472
      %1508 = vst.msk [vmem:[#allocation4 + $0x70] sm:$0xff] %vm1493, %v1474
      %1509 = vst.msk [vmem:[#allocation4 + $0x78] sm:$0xff] %vm1493, %v1476
      %v1510 = vld [vmem:[#allocation2] sm:$0xe]
      %v1511 = vld [vmem:[#allocation2 + $0x4] sm:$0xf]
      %v1512 = vld [vmem:[#allocation2 + $0x8] sm:$0x1]
      %v1513 = vld [vmem:[#allocation2 + $0xc] sm:$0xe]
      %v1514 = vld [vmem:[#allocation2 + $0x10] sm:$0xf]
      %v1515 = vld [vmem:[#allocation2 + $0x14] sm:$0x1]
      %v1516 = vld [vmem:[#allocation2 + $0x18] sm:$0xe]
      %v1517 = vld [vmem:[#allocation2 + $0x1c] sm:$0xf]
      %v1518 = vld [vmem:[#allocation2 + $0x20] sm:$0x1]
      %v1519 = vld [vmem:[#allocation2 + $0x24] sm:$0xe]
      %v1520 = vld [vmem:[#allocation2 + $0x28] sm:$0xf]
      %v1521 = vld [vmem:[#allocation2 + $0x2c] sm:$0x1]
      %v1522 = vld [vmem:[#allocation2 + $0x30] sm:$0xe]
      %v1523 = vld [vmem:[#allocation2 + $0x34] sm:$0xf]
      %v1524 = vld [vmem:[#allocation2 + $0x38] sm:$0x1]
      %v1525 = vld [vmem:[#allocation2 + $0x3c] sm:$0xe]
      %v1526 = vld [vmem:[#allocation2 + $0x40] sm:$0xf]
      %v1527 = vld [vmem:[#allocation2 + $0x44] sm:$0x1]
      %v1528 = vld [vmem:[#allocation2 + $0x48] sm:$0xe]
      %v1529 = vld [vmem:[#allocation2 + $0x4c] sm:$0xf]
      %v1530 = vld [vmem:[#allocation2 + $0x50] sm:$0x1]
      %v1531 = vld [vmem:[#allocation2 + $0x54] sm:$0xe]
      %v1532 = vld [vmem:[#allocation2 + $0x58] sm:$0xf]
      %v1533 = vld [vmem:[#allocation2 + $0x5c] sm:$0x1]
      %v1534 = vld [vmem:[#allocation2 + $0x60] sm:$0xe]
      %v1535 = vld [vmem:[#allocation2 + $0x64] sm:$0xf]
      %v1536 = vld [vmem:[#allocation2 + $0x68] sm:$0x1]
      %v1537 = vld [vmem:[#allocation2 + $0x6c] sm:$0xe]
      %v1538 = vld [vmem:[#allocation2 + $0x70] sm:$0xf]
      %v1539 = vld [vmem:[#allocation2 + $0x74] sm:$0x1]
      %v1540 = vld [vmem:[#allocation2 + $0x78] sm:$0xe]
      %v1541 = vld [vmem:[#allocation2 + $0x7c] sm:$0xf]
      %v1542 = vld [vmem:[#allocation2 + $0x80] sm:$0x1]
      %v1543 = vld [vmem:[#allocation2 + $0x84] sm:$0xe]
      %v1544 = vld [vmem:[#allocation2 + $0x88] sm:$0xf]
      %v1545 = vld [vmem:[#allocation2 + $0x8c] sm:$0x1]
      %v1546 = vld [vmem:[#allocation2 + $0x90] sm:$0xe]
      %v1547 = vld [vmem:[#allocation2 + $0x94] sm:$0xf]
      %v1548 = vld [vmem:[#allocation2 + $0x98] sm:$0x1]
      %v1549 = vld [vmem:[#allocation2 + $0x9c] sm:$0xe]
      %v1550 = vld [vmem:[#allocation2 + $0xa0] sm:$0xf]
      %v1551 = vld [vmem:[#allocation2 + $0xa4] sm:$0x1]
      %v1552 = vld [vmem:[#allocation2 + $0xa8] sm:$0xe]
      %v1553 = vld [vmem:[#allocation2 + $0xac] sm:$0xf]
      %v1554 = vld [vmem:[#allocation2 + $0xb0] sm:$0x1]
      %v1555 = vld [vmem:[#allocation2 + $0xb4] sm:$0xe]
      %v1556 = vld [vmem:[#allocation2 + $0xb8] sm:$0xf]
      %v1557 = vld [vmem:[#allocation2 + $0xbc] sm:$0x1]
      %vm1606 = vcmask 1042432
      %vm1607 = vcmask 1046532
      %vm1608 = vmor %vm1606, %vm1607
      %v1609 = vrot.slane %v1510, 5
      %v1610 = vrot.slane %v1609, 4
      %v1611 = vrot.slane %v1511, 5
      %v1612 = vsel %vm1608, %v1610, %v1611
      %v1613 = vrot.slane %v1611, 4
      %v1614 = vrot.slane %v1512, 5
      %v1615 = vsel %vm1608, %v1613, %v1614
      %v1616 = vrot.slane %v1513, 5
      %v1617 = vrot.slane %v1616, 4
      %v1618 = vrot.slane %v1514, 5
      %v1619 = vsel %vm1608, %v1617, %v1618
      %v1620 = vrot.slane %v1618, 4
      %v1621 = vrot.slane %v1515, 5
      %v1622 = vsel %vm1608, %v1620, %v1621
      %v1623 = vrot.slane %v1516, 5
      %v1624 = vrot.slane %v1623, 4
      %v1625 = vrot.slane %v1517, 5
      %v1626 = vsel %vm1608, %v1624, %v1625
      %v1627 = vrot.slane %v1625, 4
      %v1628 = vrot.slane %v1518, 5
      %v1629 = vsel %vm1608, %v1627, %v1628
      %v1630 = vrot.slane %v1519, 5
      %v1631 = vrot.slane %v1630, 4
      %v1632 = vrot.slane %v1520, 5
      %v1633 = vsel %vm1608, %v1631, %v1632
      %v1634 = vrot.slane %v1632, 4
      %v1635 = vrot.slane %v1521, 5
      %v1636 = vsel %vm1608, %v1634, %v1635
      %v1637 = vrot.slane %v1522, 5
      %v1638 = vrot.slane %v1637, 4
      %v1639 = vrot.slane %v1523, 5
      %v1640 = vsel %vm1608, %v1638, %v1639
      %v1641 = vrot.slane %v1639, 4
      %v1642 = vrot.slane %v1524, 5
      %v1643 = vsel %vm1608, %v1641, %v1642
      %v1644 = vrot.slane %v1525, 5
      %v1645 = vrot.slane %v1644, 4
      %v1646 = vrot.slane %v1526, 5
      %v1647 = vsel %vm1608, %v1645, %v1646
      %v1648 = vrot.slane %v1646, 4
      %v1649 = vrot.slane %v1527, 5
      %v1650 = vsel %vm1608, %v1648, %v1649
      %v1651 = vrot.slane %v1528, 5
      %v1652 = vrot.slane %v1651, 4
      %v1653 = vrot.slane %v1529, 5
      %v1654 = vsel %vm1608, %v1652, %v1653
      %v1655 = vrot.slane %v1653, 4
      %v1656 = vrot.slane %v1530, 5
      %v1657 = vsel %vm1608, %v1655, %v1656
      %v1658 = vrot.slane %v1531, 5
      %v1659 = vrot.slane %v1658, 4
      %v1660 = vrot.slane %v1532, 5
      %v1661 = vsel %vm1608, %v1659, %v1660
      %v1662 = vrot.slane %v1660, 4
      %v1663 = vrot.slane %v1533, 5
      %v1664 = vsel %vm1608, %v1662, %v1663
      %v1665 = vrot.slane %v1534, 5
      %v1666 = vrot.slane %v1665, 4
      %v1667 = vrot.slane %v1535, 5
      %v1668 = vsel %vm1608, %v1666, %v1667
      %v1669 = vrot.slane %v1667, 4
      %v1670 = vrot.slane %v1536, 5
      %v1671 = vsel %vm1608, %v1669, %v1670
      %v1672 = vrot.slane %v1537, 5
      %v1673 = vrot.slane %v1672, 4
      %v1674 = vrot.slane %v1538, 5
      %v1675 = vsel %vm1608, %v1673, %v1674
      %v1676 = vrot.slane %v1674, 4
      %v1677 = vrot.slane %v1539, 5
      %v1678 = vsel %vm1608, %v1676, %v1677
      %v1679 = vrot.slane %v1540, 5
      %v1680 = vrot.slane %v1679, 4
      %v1681 = vrot.slane %v1541, 5
      %v1682 = vsel %vm1608, %v1680, %v1681
      %v1683 = vrot.slane %v1681, 4
      %v1684 = vrot.slane %v1542, 5
      %v1685 = vsel %vm1608, %v1683, %v1684
      %v1686 = vrot.slane %v1543, 5
      %v1687 = vrot.slane %v1686, 4
      %v1688 = vrot.slane %v1544, 5
      %v1689 = vsel %vm1608, %v1687, %v1688
      %v1690 = vrot.slane %v1688, 4
      %v1691 = vrot.slane %v1545, 5
      %v1692 = vsel %vm1608, %v1690, %v1691
      %v1693 = vrot.slane %v1546, 5
      %v1694 = vrot.slane %v1693, 4
      %v1695 = vrot.slane %v1547, 5
      %v1696 = vsel %vm1608, %v1694, %v1695
      %v1697 = vrot.slane %v1695, 4
      %v1698 = vrot.slane %v1548, 5
      %v1699 = vsel %vm1608, %v1697, %v1698
      %v1700 = vrot.slane %v1549, 5
      %v1701 = vrot.slane %v1700, 4
      %v1702 = vrot.slane %v1550, 5
      %v1703 = vsel %vm1608, %v1701, %v1702
      %v1704 = vrot.slane %v1702, 4
      %v1705 = vrot.slane %v1551, 5
      %v1706 = vsel %vm1608, %v1704, %v1705
      %v1707 = vrot.slane %v1552, 5
      %v1708 = vrot.slane %v1707, 4
      %v1709 = vrot.slane %v1553, 5
      %v1710 = vsel %vm1608, %v1708, %v1709
      %v1711 = vrot.slane %v1709, 4
      %v1712 = vrot.slane %v1554, 5
      %v1713 = vsel %vm1608, %v1711, %v1712
      %v1714 = vrot.slane %v1555, 5
      %v1715 = vrot.slane %v1714, 4
      %v1716 = vrot.slane %v1556, 5
      %v1717 = vsel %vm1608, %v1715, %v1716
      %v1718 = vrot.slane %v1716, 4
      %v1719 = vrot.slane %v1557, 5
      %v1720 = vsel %vm1608, %v1718, %v1719
      %v1721 = vunpack.c.l.b16 %v1612
      %v1722 = vunpack.c.l.b16 %v1615
      %v1723 = vunpack.c.l.b16 %v1619
      %v1724 = vunpack.c.l.b16 %v1622
      %v1725 = vunpack.c.l.b16 %v1626
      %v1726 = vunpack.c.l.b16 %v1629
      %v1727 = vunpack.c.l.b16 %v1633
      %v1728 = vunpack.c.l.b16 %v1636
      %v1729 = vunpack.c.l.b16 %v1640
      %v1730 = vunpack.c.l.b16 %v1643
      %v1731 = vunpack.c.l.b16 %v1647
      %v1732 = vunpack.c.l.b16 %v1650
      %v1733 = vunpack.c.l.b16 %v1654
      %v1734 = vunpack.c.l.b16 %v1657
      %v1735 = vunpack.c.l.b16 %v1661
      %v1736 = vunpack.c.l.b16 %v1664
      %v1737 = vunpack.c.l.b16 %v1668
      %v1738 = vunpack.c.l.b16 %v1671
      %v1739 = vunpack.c.l.b16 %v1675
      %v1740 = vunpack.c.l.b16 %v1678
      %v1741 = vunpack.c.l.b16 %v1682
      %v1742 = vunpack.c.l.b16 %v1685
      %v1743 = vunpack.c.l.b16 %v1689
      %v1744 = vunpack.c.l.b16 %v1692
      %v1745 = vunpack.c.l.b16 %v1696
      %v1746 = vunpack.c.l.b16 %v1699
      %v1747 = vunpack.c.l.b16 %v1703
      %v1748 = vunpack.c.l.b16 %v1706
      %v1749 = vunpack.c.l.b16 %v1710
      %v1750 = vunpack.c.l.b16 %v1713
      %v1751 = vunpack.c.l.b16 %v1717
      %v1752 = vunpack.c.l.b16 %v1720
      %v1753 = vpack.c.b16 %v1722, %v1721
      %v1754 = vpack.c.b16 %v1724, %v1723
      %v1755 = vpack.c.b16 %v1726, %v1725
      %v1756 = vpack.c.b16 %v1728, %v1727
      %v1757 = vpack.c.b16 %v1730, %v1729
      %v1758 = vpack.c.b16 %v1732, %v1731
      %v1759 = vpack.c.b16 %v1734, %v1733
      %v1760 = vpack.c.b16 %v1736, %v1735
      %v1761 = vpack.c.b16 %v1738, %v1737
      %v1762 = vpack.c.b16 %v1740, %v1739
      %v1763 = vpack.c.b16 %v1742, %v1741
      %v1764 = vpack.c.b16 %v1744, %v1743
      %v1765 = vpack.c.b16 %v1746, %v1745
      %v1766 = vpack.c.b16 %v1748, %v1747
      %v1767 = vpack.c.b16 %v1750, %v1749
      %v1768 = vpack.c.b16 %v1752, %v1751
      %1769 = vrot.lane.b32.xlu0 %v1753, 16
      %v1770 = vpop.permute.xlu0 %1769
      %1771 = vrot.lane.b32.xlu0 %v1754, 16
      %v1772 = vpop.permute.xlu0 %1771
      %1773 = vrot.lane.b32.xlu0 %v1755, 16
      %v1774 = vpop.permute.xlu0 %1773
      %1775 = vrot.lane.b32.xlu0 %v1756, 16
      %v1776 = vpop.permute.xlu0 %1775
      %1777 = vrot.lane.b32.xlu0 %v1757, 16
      %v1778 = vpop.permute.xlu0 %1777
      %1779 = vrot.lane.b32.xlu0 %v1758, 16
      %v1780 = vpop.permute.xlu0 %1779
      %1781 = vrot.lane.b32.xlu0 %v1759, 16
      %v1782 = vpop.permute.xlu0 %1781
      %1783 = vrot.lane.b32.xlu0 %v1760, 16
      %v1784 = vpop.permute.xlu0 %1783
      %1785 = vrot.lane.b32.xlu0 %v1761, 16
      %v1786 = vpop.permute.xlu0 %1785
      %1787 = vrot.lane.b32.xlu0 %v1762, 16
      %v1788 = vpop.permute.xlu0 %1787
      %1789 = vrot.lane.b32.xlu0 %v1763, 16
      %v1790 = vpop.permute.xlu0 %1789
      %1791 = vrot.lane.b32.xlu0 %v1764, 16
      %v1792 = vpop.permute.xlu0 %1791
      %1793 = vrot.lane.b32.xlu0 %v1765, 16
      %v1794 = vpop.permute.xlu0 %1793
      %1795 = vrot.lane.b32.xlu0 %v1766, 16
      %v1796 = vpop.permute.xlu0 %1795
      %1797 = vrot.lane.b32.xlu0 %v1767, 16
      %v1798 = vpop.permute.xlu0 %1797
      %1799 = vrot.lane.b32.xlu0 %v1768, 16
      %v1800 = vpop.permute.xlu0 %1799
      %vm1817 = vcmask 195712
      %1818 = vst.msk [vmem:[#allocation4] sm:$0xff] %vm1817, %v1770
      %1819 = vst.msk [vmem:[#allocation4 + $0x8] sm:$0xff] %vm1817, %v1772
      %1820 = vst.msk [vmem:[#allocation4 + $0x10] sm:$0xff] %vm1817, %v1774
      %1821 = vst.msk [vmem:[#allocation4 + $0x18] sm:$0xff] %vm1817, %v1776
      %1822 = vst.msk [vmem:[#allocation4 + $0x20] sm:$0xff] %vm1817, %v1778
      %1823 = vst.msk [vmem:[#allocation4 + $0x28] sm:$0xff] %vm1817, %v1780
      %1824 = vst.msk [vmem:[#allocation4 + $0x30] sm:$0xff] %vm1817, %v1782
      %1825 = vst.msk [vmem:[#allocation4 + $0x38] sm:$0xff] %vm1817, %v1784
      %1826 = vst.msk [vmem:[#allocation4 + $0x40] sm:$0xff] %vm1817, %v1786
      %1827 = vst.msk [vmem:[#allocation4 + $0x48] sm:$0xff] %vm1817, %v1788
      %1828 = vst.msk [vmem:[#allocation4 + $0x50] sm:$0xff] %vm1817, %v1790
      %1829 = vst.msk [vmem:[#allocation4 + $0x58] sm:$0xff] %vm1817, %v1792
      %1830 = vst.msk [vmem:[#allocation4 + $0x60] sm:$0xff] %vm1817, %v1794
      %1831 = vst.msk [vmem:[#allocation4 + $0x68] sm:$0xff] %vm1817, %v1796
      %1832 = vst.msk [vmem:[#allocation4 + $0x70] sm:$0xff] %vm1817, %v1798
      %1833 = vst.msk [vmem:[#allocation4 + $0x78] sm:$0xff] %vm1817, %v1800
      %v1834 = vld [vmem:[%s702] sm:$0xf]
      %v1835 = vld [vmem:[%s702 + $0x4] sm:$0xf]
      %v1836 = vld [vmem:[%s702 + $0xc] sm:$0xf]
      %v1837 = vld [vmem:[%s702 + $0x10] sm:$0xf]
      %v1838 = vld [vmem:[%s702 + $0x18] sm:$0xf]
      %v1839 = vld [vmem:[%s702 + $0x1c] sm:$0xf]
      %v1840 = vld [vmem:[%s702 + $0x24] sm:$0xf]
      %v1841 = vld [vmem:[%s702 + $0x28] sm:$0xf]
      %v1842 = vld [vmem:[%s702 + $0x30] sm:$0xf]
      %v1843 = vld [vmem:[%s702 + $0x34] sm:$0xf]
      %v1844 = vld [vmem:[%s702 + $0x3c] sm:$0xf]
      %v1845 = vld [vmem:[%s702 + $0x40] sm:$0xf]
      %v1846 = vld [vmem:[%s702 + $0x48] sm:$0xf]
      %v1847 = vld [vmem:[%s702 + $0x4c] sm:$0xf]
      %v1848 = vld [vmem:[%s702 + $0x54] sm:$0xf]
      %v1849 = vld [vmem:[%s702 + $0x58] sm:$0xf]
      %v1850 = vld [vmem:[%s702 + $0x60] sm:$0xf]
      %v1851 = vld [vmem:[%s702 + $0x64] sm:$0xf]
      %v1852 = vld [vmem:[%s702 + $0x6c] sm:$0xf]
      %v1853 = vld [vmem:[%s702 + $0x70] sm:$0xf]
      %v1854 = vld [vmem:[%s702 + $0x78] sm:$0xf]
      %v1855 = vld [vmem:[%s702 + $0x7c] sm:$0xf]
      %v1856 = vld [vmem:[%s702 + $0x84] sm:$0xf]
      %v1857 = vld [vmem:[%s702 + $0x88] sm:$0xf]
      %v1858 = vld [vmem:[%s702 + $0x90] sm:$0xf]
      %v1859 = vld [vmem:[%s702 + $0x94] sm:$0xf]
      %v1860 = vld [vmem:[%s702 + $0x9c] sm:$0xf]
      %v1861 = vld [vmem:[%s702 + $0xa0] sm:$0xf]
      %v1862 = vld [vmem:[%s702 + $0xa8] sm:$0xf]
      %v1863 = vld [vmem:[%s702 + $0xac] sm:$0xf]
      %v1864 = vld [vmem:[%s702 + $0xb4] sm:$0xf]
      %v1865 = vld [vmem:[%s702 + $0xb8] sm:$0xf]
      %v1898 = vunpack.c.l.b16 %v1834
      %v1899 = vunpack.c.l.b16 %v1835
      %v1900 = vunpack.c.l.b16 %v1836
      %v1901 = vunpack.c.l.b16 %v1837
      %v1902 = vunpack.c.l.b16 %v1838
      %v1903 = vunpack.c.l.b16 %v1839
      %v1904 = vunpack.c.l.b16 %v1840
      %v1905 = vunpack.c.l.b16 %v1841
      %v1906 = vunpack.c.l.b16 %v1842
      %v1907 = vunpack.c.l.b16 %v1843
      %v1908 = vunpack.c.l.b16 %v1844
      %v1909 = vunpack.c.l.b16 %v1845
      %v1910 = vunpack.c.l.b16 %v1846
      %v1911 = vunpack.c.l.b16 %v1847
      %v1912 = vunpack.c.l.b16 %v1848
      %v1913 = vunpack.c.l.b16 %v1849
      %v1914 = vunpack.c.l.b16 %v1850
      %v1915 = vunpack.c.l.b16 %v1851
      %v1916 = vunpack.c.l.b16 %v1852
      %v1917 = vunpack.c.l.b16 %v1853
      %v1918 = vunpack.c.l.b16 %v1854
      %v1919 = vunpack.c.l.b16 %v1855
      %v1920 = vunpack.c.l.b16 %v1856
      %v1921 = vunpack.c.l.b16 %v1857
      %v1922 = vunpack.c.l.b16 %v1858
      %v1923 = vunpack.c.l.b16 %v1859
      %v1924 = vunpack.c.l.b16 %v1860
      %v1925 = vunpack.c.l.b16 %v1861
      %v1926 = vunpack.c.l.b16 %v1862
      %v1927 = vunpack.c.l.b16 %v1863
      %v1928 = vunpack.c.l.b16 %v1864
      %v1929 = vunpack.c.l.b16 %v1865
      %v1930 = vpack.c.b16 %v1899, %v1898
      %v1931 = vpack.c.b16 %v1901, %v1900
      %v1932 = vpack.c.b16 %v1903, %v1902
      %v1933 = vpack.c.b16 %v1905, %v1904
      %v1934 = vpack.c.b16 %v1907, %v1906
      %v1935 = vpack.c.b16 %v1909, %v1908
      %v1936 = vpack.c.b16 %v1911, %v1910
      %v1937 = vpack.c.b16 %v1913, %v1912
      %v1938 = vpack.c.b16 %v1915, %v1914
      %v1939 = vpack.c.b16 %v1917, %v1916
      %v1940 = vpack.c.b16 %v1919, %v1918
      %v1941 = vpack.c.b16 %v1921, %v1920
      %v1942 = vpack.c.b16 %v1923, %v1922
      %v1943 = vpack.c.b16 %v1925, %v1924
      %v1944 = vpack.c.b16 %v1927, %v1926
      %v1945 = vpack.c.b16 %v1929, %v1928
      %1946 = vrot.lane.b32.xlu0 %v1930, 24
      %v1947 = vpop.permute.xlu0 %1946
      %1948 = vrot.lane.b32.xlu0 %v1931, 24
      %v1949 = vpop.permute.xlu0 %1948
      %1950 = vrot.lane.b32.xlu0 %v1932, 24
      %v1951 = vpop.permute.xlu0 %1950
      %1952 = vrot.lane.b32.xlu0 %v1933, 24
      %v1953 = vpop.permute.xlu0 %1952
      %1954 = vrot.lane.b32.xlu0 %v1934, 24
      %v1955 = vpop.permute.xlu0 %1954
      %1956 = vrot.lane.b32.xlu0 %v1935, 24
      %v1957 = vpop.permute.xlu0 %1956
      %1958 = vrot.lane.b32.xlu0 %v1936, 24
      %v1959 = vpop.permute.xlu0 %1958
      %1960 = vrot.lane.b32.xlu0 %v1937, 24
      %v1961 = vpop.permute.xlu0 %1960
      %1962 = vrot.lane.b32.xlu0 %v1938, 24
      %v1963 = vpop.permute.xlu0 %1962
      %1964 = vrot.lane.b32.xlu0 %v1939, 24
      %v1965 = vpop.permute.xlu0 %1964
      %1966 = vrot.lane.b32.xlu0 %v1940, 24
      %v1967 = vpop.permute.xlu0 %1966
      %1968 = vrot.lane.b32.xlu0 %v1941, 24
      %v1969 = vpop.permute.xlu0 %1968
      %1970 = vrot.lane.b32.xlu0 %v1942, 24
      %v1971 = vpop.permute.xlu0 %1970
      %1972 = vrot.lane.b32.xlu0 %v1943, 24
      %v1973 = vpop.permute.xlu0 %1972
      %1974 = vrot.lane.b32.xlu0 %v1944, 24
      %v1975 = vpop.permute.xlu0 %1974
      %1976 = vrot.lane.b32.xlu0 %v1945, 24
      %v1977 = vpop.permute.xlu0 %1976
      %vm1994 = vcmask 261312
      %1995 = vst.msk [vmem:[#allocation4] sm:$0xff] %vm1994, %v1947
      %1996 = vst.msk [vmem:[#allocation4 + $0x8] sm:$0xff] %vm1994, %v1949
      %1997 = vst.msk [vmem:[#allocation4 + $0x10] sm:$0xff] %vm1994, %v1951
      %1998 = vst.msk [vmem:[#allocation4 + $0x18] sm:$0xff] %vm1994, %v1953
      %1999 = vst.msk [vmem:[#allocation4 + $0x20] sm:$0xff] %vm1994, %v1955
      %2000 = vst.msk [vmem:[#allocation4 + $0x28] sm:$0xff] %vm1994, %v1957
      %2001 = vst.msk [vmem:[#allocation4 + $0x30] sm:$0xff] %vm1994, %v1959
      %2002 = vst.msk [vmem:[#allocation4 + $0x38] sm:$0xff] %vm1994, %v1961
      %2003 = vst.msk [vmem:[#allocation4 + $0x40] sm:$0xff] %vm1994, %v1963
      %2004 = vst.msk [vmem:[#allocation4 + $0x48] sm:$0xff] %vm1994, %v1965
      %2005 = vst.msk [vmem:[#allocation4 + $0x50] sm:$0xff] %vm1994, %v1967
      %2006 = vst.msk [vmem:[#allocation4 + $0x58] sm:$0xff] %vm1994, %v1969
      %2007 = vst.msk [vmem:[#allocation4 + $0x60] sm:$0xff] %vm1994, %v1971
      %2008 = vst.msk [vmem:[#allocation4 + $0x68] sm:$0xff] %vm1994, %v1973
      %2009 = vst.msk [vmem:[#allocation4 + $0x70] sm:$0xff] %vm1994, %v1975
      %2010 = vst.msk [vmem:[#allocation4 + $0x78] sm:$0xff] %vm1994, %v1977
      %v2011 = vld [vmem:[%s702] sm:$0xf]
      %v2012 = vld [vmem:[%s702 + $0x4] sm:$0xf]
      %v2013 = vld [vmem:[%s702 + $0x8] sm:$0x1]
      %v2014 = vld [vmem:[%s702 + $0xc] sm:$0xf]
      %v2015 = vld [vmem:[%s702 + $0x10] sm:$0xf]
      %v2016 = vld [vmem:[%s702 + $0x14] sm:$0x1]
      %v2017 = vld [vmem:[%s702 + $0x18] sm:$0xf]
      %v2018 = vld [vmem:[%s702 + $0x1c] sm:$0xf]
      %v2019 = vld [vmem:[%s702 + $0x20] sm:$0x1]
      %v2020 = vld [vmem:[%s702 + $0x24] sm:$0xf]
      %v2021 = vld [vmem:[%s702 + $0x28] sm:$0xf]
      %v2022 = vld [vmem:[%s702 + $0x2c] sm:$0x1]
      %v2023 = vld [vmem:[%s702 + $0x30] sm:$0xf]
      %v2024 = vld [vmem:[%s702 + $0x34] sm:$0xf]
      %v2025 = vld [vmem:[%s702 + $0x38] sm:$0x1]
      %v2026 = vld [vmem:[%s702 + $0x3c] sm:$0xf]
      %v2027 = vld [vmem:[%s702 + $0x40] sm:$0xf]
      %v2028 = vld [vmem:[%s702 + $0x44] sm:$0x1]
      %v2029 = vld [vmem:[%s702 + $0x48] sm:$0xf]
      %v2030 = vld [vmem:[%s702 + $0x4c] sm:$0xf]
      %v2031 = vld [vmem:[%s702 + $0x50] sm:$0x1]
      %v2032 = vld [vmem:[%s702 + $0x54] sm:$0xf]
      %v2033 = vld [vmem:[%s702 + $0x58] sm:$0xf]
      %v2034 = vld [vmem:[%s702 + $0x5c] sm:$0x1]
      %v2035 = vld [vmem:[%s702 + $0x60] sm:$0xf]
      %v2036 = vld [vmem:[%s702 + $0x64] sm:$0xf]
      %v2037 = vld [vmem:[%s702 + $0x68] sm:$0x1]
      %v2038 = vld [vmem:[%s702 + $0x6c] sm:$0xf]
      %v2039 = vld [vmem:[%s702 + $0x70] sm:$0xf]
      %v2040 = vld [vmem:[%s702 + $0x74] sm:$0x1]
      %v2041 = vld [vmem:[%s702 + $0x78] sm:$0xf]
      %v2042 = vld [vmem:[%s702 + $0x7c] sm:$0xf]
      %v2043 = vld [vmem:[%s702 + $0x80] sm:$0x1]
      %v2044 = vld [vmem:[%s702 + $0x84] sm:$0xf]
      %v2045 = vld [vmem:[%s702 + $0x88] sm:$0xf]
      %v2046 = vld [vmem:[%s702 + $0x8c] sm:$0x1]
      %v2047 = vld [vmem:[%s702 + $0x90] sm:$0xf]
      %v2048 = vld [vmem:[%s702 + $0x94] sm:$0xf]
      %v2049 = vld [vmem:[%s702 + $0x98] sm:$0x1]
      %v2050 = vld [vmem:[%s702 + $0x9c] sm:$0xf]
      %v2051 = vld [vmem:[%s702 + $0xa0] sm:$0xf]
      %v2052 = vld [vmem:[%s702 + $0xa4] sm:$0x1]
      %v2053 = vld [vmem:[%s702 + $0xa8] sm:$0xf]
      %v2054 = vld [vmem:[%s702 + $0xac] sm:$0xf]
      %v2055 = vld [vmem:[%s702 + $0xb0] sm:$0x1]
      %v2056 = vld [vmem:[%s702 + $0xb4] sm:$0xf]
      %v2057 = vld [vmem:[%s702 + $0xb8] sm:$0xf]
      %v2058 = vld [vmem:[%s702 + $0xbc] sm:$0x1]
      %v2060 = vshrl.u32 %v2011, 16
      %v2062 = vrot.slane %v2060, 4
      %v2063 = vshll.u32 %v2011, 16
      %v2065 = vrot.slane %v2063, 5
      %v2066 = vor.u32 %v2062, %v2065
      %v2067 = vrot.slane %v2066, 4
      %v2069 = vshll.u32 %v2012, 16
      %v2071 = vrot.slane %v2069, 5
      %v2072 = vsel %vm1012, %v2067, %v2071
      %v2073 = vshrl.u32 %v2012, 16
      %v2075 = vrot.slane %v2073, 4
      %v2076 = vor.u32 %v2075, %v2071
      %v2077 = vrot.slane %v2076, 4
      %v2079 = vshll.u32 %v2013, 16
      %v2081 = vrot.slane %v2079, 5
      %v2082 = vsel %vm1012, %v2077, %v2081
      %v2084 = vshrl.u32 %v2014, 16
      %v2086 = vrot.slane %v2084, 4
      %v2087 = vshll.u32 %v2014, 16
      %v2089 = vrot.slane %v2087, 5
      %v2090 = vor.u32 %v2086, %v2089
      %v2091 = vrot.slane %v2090, 4
      %v2093 = vshll.u32 %v2015, 16
      %v2095 = vrot.slane %v2093, 5
      %v2096 = vsel %vm1012, %v2091, %v2095
      %v2097 = vshrl.u32 %v2015, 16
      %v2099 = vrot.slane %v2097, 4
      %v2100 = vor.u32 %v2099, %v2095
      %v2101 = vrot.slane %v2100, 4
      %v2103 = vshll.u32 %v2016, 16
      %v2105 = vrot.slane %v2103, 5
      %v2106 = vsel %vm1012, %v2101, %v2105
      %v2108 = vshrl.u32 %v2017, 16
      %v2110 = vrot.slane %v2108, 4
      %v2111 = vshll.u32 %v2017, 16
      %v2113 = vrot.slane %v2111, 5
      %v2114 = vor.u32 %v2110, %v2113
      %v2115 = vrot.slane %v2114, 4
      %v2117 = vshll.u32 %v2018, 16
      %v2119 = vrot.slane %v2117, 5
      %v2120 = vsel %vm1012, %v2115, %v2119
      %v2121 = vshrl.u32 %v2018, 16
      %v2123 = vrot.slane %v2121, 4
      %v2124 = vor.u32 %v2123, %v2119
      %v2125 = vrot.slane %v2124, 4
      %v2127 = vshll.u32 %v2019, 16
      %v2129 = vrot.slane %v2127, 5
      %v2130 = vsel %vm1012, %v2125, %v2129
      %v2132 = vshrl.u32 %v2020, 16
      %v2134 = vrot.slane %v2132, 4
      %v2135 = vshll.u32 %v2020, 16
      %v2137 = vrot.slane %v2135, 5
      %v2138 = vor.u32 %v2134, %v2137
      %v2139 = vrot.slane %v2138, 4
      %v2141 = vshll.u32 %v2021, 16
      %v2143 = vrot.slane %v2141, 5
      %v2144 = vsel %vm1012, %v2139, %v2143
      %v2145 = vshrl.u32 %v2021, 16
      %v2147 = vrot.slane %v2145, 4
      %v2148 = vor.u32 %v2147, %v2143
      %v2149 = vrot.slane %v2148, 4
      %v2151 = vshll.u32 %v2022, 16
      %v2153 = vrot.slane %v2151, 5
      %v2154 = vsel %vm1012, %v2149, %v2153
      %v2156 = vshrl.u32 %v2023, 16
      %v2158 = vrot.slane %v2156, 4
      %v2159 = vshll.u32 %v2023, 16
      %v2161 = vrot.slane %v2159, 5
      %v2162 = vor.u32 %v2158, %v2161
      %v2163 = vrot.slane %v2162, 4
      %v2165 = vshll.u32 %v2024, 16
      %v2167 = vrot.slane %v2165, 5
      %v2168 = vsel %vm1012, %v2163, %v2167
      %v2169 = vshrl.u32 %v2024, 16
      %v2171 = vrot.slane %v2169, 4
      %v2172 = vor.u32 %v2171, %v2167
      %v2173 = vrot.slane %v2172, 4
      %v2175 = vshll.u32 %v2025, 16
      %v2177 = vrot.slane %v2175, 5
      %v2178 = vsel %vm1012, %v2173, %v2177
      %v2180 = vshrl.u32 %v2026, 16
      %v2182 = vrot.slane %v2180, 4
      %v2183 = vshll.u32 %v2026, 16
      %v2185 = vrot.slane %v2183, 5
      %v2186 = vor.u32 %v2182, %v2185
      %v2187 = vrot.slane %v2186, 4
      %v2189 = vshll.u32 %v2027, 16
      %v2191 = vrot.slane %v2189, 5
      %v2192 = vsel %vm1012, %v2187, %v2191
      %v2193 = vshrl.u32 %v2027, 16
      %v2195 = vrot.slane %v2193, 4
      %v2196 = vor.u32 %v2195, %v2191
      %v2197 = vrot.slane %v2196, 4
      %v2199 = vshll.u32 %v2028, 16
      %v2201 = vrot.slane %v2199, 5
      %v2202 = vsel %vm1012, %v2197, %v2201
      %v2204 = vshrl.u32 %v2029, 16
      %v2206 = vrot.slane %v2204, 4
      %v2207 = vshll.u32 %v2029, 16
      %v2209 = vrot.slane %v2207, 5
      %v2210 = vor.u32 %v2206, %v2209
      %v2211 = vrot.slane %v2210, 4
      %v2213 = vshll.u32 %v2030, 16
      %v2215 = vrot.slane %v2213, 5
      %v2216 = vsel %vm1012, %v2211, %v2215
      %v2217 = vshrl.u32 %v2030, 16
      %v2219 = vrot.slane %v2217, 4
      %v2220 = vor.u32 %v2219, %v2215
      %v2221 = vrot.slane %v2220, 4
      %v2223 = vshll.u32 %v2031, 16
      %v2225 = vrot.slane %v2223, 5
      %v2226 = vsel %vm1012, %v2221, %v2225
      %v2228 = vshrl.u32 %v2032, 16
      %v2230 = vrot.slane %v2228, 4
      %v2231 = vshll.u32 %v2032, 16
      %v2233 = vrot.slane %v2231, 5
      %v2234 = vor.u32 %v2230, %v2233
      %v2235 = vrot.slane %v2234, 4
      %v2237 = vshll.u32 %v2033, 16
      %v2239 = vrot.slane %v2237, 5
      %v2240 = vsel %vm1012, %v2235, %v2239
      %v2241 = vshrl.u32 %v2033, 16
      %v2243 = vrot.slane %v2241, 4
      %v2244 = vor.u32 %v2243, %v2239
      %v2245 = vrot.slane %v2244, 4
      %v2247 = vshll.u32 %v2034, 16
      %v2249 = vrot.slane %v2247, 5
      %v2250 = vsel %vm1012, %v2245, %v2249
      %v2252 = vshrl.u32 %v2035, 16
      %v2254 = vrot.slane %v2252, 4
      %v2255 = vshll.u32 %v2035, 16
      %v2257 = vrot.slane %v2255, 5
      %v2258 = vor.u32 %v2254, %v2257
      %v2259 = vrot.slane %v2258, 4
      %v2261 = vshll.u32 %v2036, 16
      %v2263 = vrot.slane %v2261, 5
      %v2264 = vsel %vm1012, %v2259, %v2263
      %v2265 = vshrl.u32 %v2036, 16
      %v2267 = vrot.slane %v2265, 4
      %v2268 = vor.u32 %v2267, %v2263
      %v2269 = vrot.slane %v2268, 4
      %v2271 = vshll.u32 %v2037, 16
      %v2273 = vrot.slane %v2271, 5
      %v2274 = vsel %vm1012, %v2269, %v2273
      %v2276 = vshrl.u32 %v2038, 16
      %v2278 = vrot.slane %v2276, 4
      %v2279 = vshll.u32 %v2038, 16
      %v2281 = vrot.slane %v2279, 5
      %v2282 = vor.u32 %v2278, %v2281
      %v2283 = vrot.slane %v2282, 4
      %v2285 = vshll.u32 %v2039, 16
      %v2287 = vrot.slane %v2285, 5
      %v2288 = vsel %vm1012, %v2283, %v2287
      %v2289 = vshrl.u32 %v2039, 16
      %v2291 = vrot.slane %v2289, 4
      %v2292 = vor.u32 %v2291, %v2287
      %v2293 = vrot.slane %v2292, 4
      %v2295 = vshll.u32 %v2040, 16
      %v2297 = vrot.slane %v2295, 5
      %v2298 = vsel %vm1012, %v2293, %v2297
      %v2300 = vshrl.u32 %v2041, 16
      %v2302 = vrot.slane %v2300, 4
      %v2303 = vshll.u32 %v2041, 16
      %v2305 = vrot.slane %v2303, 5
      %v2306 = vor.u32 %v2302, %v2305
      %v2307 = vrot.slane %v2306, 4
      %v2309 = vshll.u32 %v2042, 16
      %v2311 = vrot.slane %v2309, 5
      %v2312 = vsel %vm1012, %v2307, %v2311
      %v2313 = vshrl.u32 %v2042, 16
      %v2315 = vrot.slane %v2313, 4
      %v2316 = vor.u32 %v2315, %v2311
      %v2317 = vrot.slane %v2316, 4
      %v2319 = vshll.u32 %v2043, 16
      %v2321 = vrot.slane %v2319, 5
      %v2322 = vsel %vm1012, %v2317, %v2321
      %v2324 = vshrl.u32 %v2044, 16
      %v2326 = vrot.slane %v2324, 4
      %v2327 = vshll.u32 %v2044, 16
      %v2329 = vrot.slane %v2327, 5
      %v2330 = vor.u32 %v2326, %v2329
      %v2331 = vrot.slane %v2330, 4
      %v2333 = vshll.u32 %v2045, 16
      %v2335 = vrot.slane %v2333, 5
      %v2336 = vsel %vm1012, %v2331, %v2335
      %v2337 = vshrl.u32 %v2045, 16
      %v2339 = vrot.slane %v2337, 4
      %v2340 = vor.u32 %v2339, %v2335
      %v2341 = vrot.slane %v2340, 4
      %v2343 = vshll.u32 %v2046, 16
      %v2345 = vrot.slane %v2343, 5
      %v2346 = vsel %vm1012, %v2341, %v2345
      %v2348 = vshrl.u32 %v2047, 16
      %v2350 = vrot.slane %v2348, 4
      %v2351 = vshll.u32 %v2047, 16
      %v2353 = vrot.slane %v2351, 5
      %v2354 = vor.u32 %v2350, %v2353
      %v2355 = vrot.slane %v2354, 4
      %v2357 = vshll.u32 %v2048, 16
      %v2359 = vrot.slane %v2357, 5
      %v2360 = vsel %vm1012, %v2355, %v2359
      %v2361 = vshrl.u32 %v2048, 16
      %v2363 = vrot.slane %v2361, 4
      %v2364 = vor.u32 %v2363, %v2359
      %v2365 = vrot.slane %v2364, 4
      %v2367 = vshll.u32 %v2049, 16
      %v2369 = vrot.slane %v2367, 5
      %v2370 = vsel %vm1012, %v2365, %v2369
      %v2372 = vshrl.u32 %v2050, 16
      %v2374 = vrot.slane %v2372, 4
      %v2375 = vshll.u32 %v2050, 16
      %v2377 = vrot.slane %v2375, 5
      %v2378 = vor.u32 %v2374, %v2377
      %v2379 = vrot.slane %v2378, 4
      %v2381 = vshll.u32 %v2051, 16
      %v2383 = vrot.slane %v2381, 5
      %v2384 = vsel %vm1012, %v2379, %v2383
      %v2385 = vshrl.u32 %v2051, 16
      %v2387 = vrot.slane %v2385, 4
      %v2388 = vor.u32 %v2387, %v2383
      %v2389 = vrot.slane %v2388, 4
      %v2391 = vshll.u32 %v2052, 16
      %v2393 = vrot.slane %v2391, 5
      %v2394 = vsel %vm1012, %v2389, %v2393
      %v2396 = vshrl.u32 %v2053, 16
      %v2398 = vrot.slane %v2396, 4
      %v2399 = vshll.u32 %v2053, 16
      %v2401 = vrot.slane %v2399, 5
      %v2402 = vor.u32 %v2398, %v2401
      %v2403 = vrot.slane %v2402, 4
      %v2405 = vshll.u32 %v2054, 16
      %v2407 = vrot.slane %v2405, 5
      %v2408 = vsel %vm1012, %v2403, %v2407
      %v2409 = vshrl.u32 %v2054, 16
      %v2411 = vrot.slane %v2409, 4
      %v2412 = vor.u32 %v2411, %v2407
      %v2413 = vrot.slane %v2412, 4
      %v2415 = vshll.u32 %v2055, 16
      %v2417 = vrot.slane %v2415, 5
      %v2418 = vsel %vm1012, %v2413, %v2417
      %v2420 = vshrl.u32 %v2056, 16
      %v2422 = vrot.slane %v2420, 4
      %v2423 = vshll.u32 %v2056, 16
      %v2425 = vrot.slane %v2423, 5
      %v2426 = vor.u32 %v2422, %v2425
      %v2427 = vrot.slane %v2426, 4
      %v2429 = vshll.u32 %v2057, 16
      %v2431 = vrot.slane %v2429, 5
      %v2432 = vsel %vm1012, %v2427, %v2431
      %v2433 = vshrl.u32 %v2057, 16
      %v2435 = vrot.slane %v2433, 4
      %v2436 = vor.u32 %v2435, %v2431
      %v2437 = vrot.slane %v2436, 4
      %v2439 = vshll.u32 %v2058, 16
      %v2441 = vrot.slane %v2439, 5
      %v2442 = vsel %vm1012, %v2437, %v2441
      %v2443 = vunpack.c.l.b16 %v2072
      %v2444 = vunpack.c.l.b16 %v2082
      %v2445 = vunpack.c.l.b16 %v2096
      %v2446 = vunpack.c.l.b16 %v2106
      %v2447 = vunpack.c.l.b16 %v2120
      %v2448 = vunpack.c.l.b16 %v2130
      %v2449 = vunpack.c.l.b16 %v2144
      %v2450 = vunpack.c.l.b16 %v2154
      %v2451 = vunpack.c.l.b16 %v2168
      %v2452 = vunpack.c.l.b16 %v2178
      %v2453 = vunpack.c.l.b16 %v2192
      %v2454 = vunpack.c.l.b16 %v2202
      %v2455 = vunpack.c.l.b16 %v2216
      %v2456 = vunpack.c.l.b16 %v2226
      %v2457 = vunpack.c.l.b16 %v2240
      %v2458 = vunpack.c.l.b16 %v2250
      %v2459 = vunpack.c.l.b16 %v2264
      %v2460 = vunpack.c.l.b16 %v2274
      %v2461 = vunpack.c.l.b16 %v2288
      %v2462 = vunpack.c.l.b16 %v2298
      %v2463 = vunpack.c.l.b16 %v2312
      %v2464 = vunpack.c.l.b16 %v2322
      %v2465 = vunpack.c.l.b16 %v2336
      %v2466 = vunpack.c.l.b16 %v2346
      %v2467 = vunpack.c.l.b16 %v2360
      %v2468 = vunpack.c.l.b16 %v2370
      %v2469 = vunpack.c.l.b16 %v2384
      %v2470 = vunpack.c.l.b16 %v2394
      %v2471 = vunpack.c.l.b16 %v2408
      %v2472 = vunpack.c.l.b16 %v2418
      %v2473 = vunpack.c.l.b16 %v2432
      %v2474 = vunpack.c.l.b16 %v2442
      %v2475 = vpack.c.b16 %v2444, %v2443
      %v2476 = vpack.c.b16 %v2446, %v2445
      %v2477 = vpack.c.b16 %v2448, %v2447
      %v2478 = vpack.c.b16 %v2450, %v2449
      %v2479 = vpack.c.b16 %v2452, %v2451
      %v2480 = vpack.c.b16 %v2454, %v2453
      %v2481 = vpack.c.b16 %v2456, %v2455
      %v2482 = vpack.c.b16 %v2458, %v2457
      %v2483 = vpack.c.b16 %v2460, %v2459
      %v2484 = vpack.c.b16 %v2462, %v2461
      %v2485 = vpack.c.b16 %v2464, %v2463
      %v2486 = vpack.c.b16 %v2466, %v2465
      %v2487 = vpack.c.b16 %v2468, %v2467
      %v2488 = vpack.c.b16 %v2470, %v2469
      %v2489 = vpack.c.b16 %v2472, %v2471
      %v2490 = vpack.c.b16 %v2474, %v2473
      %2491 = vrot.lane.b32.xlu0 %v2475, 32
      %v2492 = vpop.permute.xlu0 %2491
      %2493 = vrot.lane.b32.xlu0 %v2476, 32
      %v2494 = vpop.permute.xlu0 %2493
      %2495 = vrot.lane.b32.xlu0 %v2477, 32
      %v2496 = vpop.permute.xlu0 %2495
      %2497 = vrot.lane.b32.xlu0 %v2478, 32
      %v2498 = vpop.permute.xlu0 %2497
      %2499 = vrot.lane.b32.xlu0 %v2479, 32
      %v2500 = vpop.permute.xlu0 %2499
      %2501 = vrot.lane.b32.xlu0 %v2480, 32
      %v2502 = vpop.permute.xlu0 %2501
      %2503 = vrot.lane.b32.xlu0 %v2481, 32
      %v2504 = vpop.permute.xlu0 %2503
      %2505 = vrot.lane.b32.xlu0 %v2482, 32
      %v2506 = vpop.permute.xlu0 %2505
      %2507 = vrot.lane.b32.xlu0 %v2483, 32
      %v2508 = vpop.permute.xlu0 %2507
      %2509 = vrot.lane.b32.xlu0 %v2484, 32
      %v2510 = vpop.permute.xlu0 %2509
      %2511 = vrot.lane.b32.xlu0 %v2485, 32
      %v2512 = vpop.permute.xlu0 %2511
      %2513 = vrot.lane.b32.xlu0 %v2486, 32
      %v2514 = vpop.permute.xlu0 %2513
      %2515 = vrot.lane.b32.xlu0 %v2487, 32
      %v2516 = vpop.permute.xlu0 %2515
      %2517 = vrot.lane.b32.xlu0 %v2488, 32
      %v2518 = vpop.permute.xlu0 %2517
      %2519 = vrot.lane.b32.xlu0 %v2489, 32
      %v2520 = vpop.permute.xlu0 %2519
      %2521 = vrot.lane.b32.xlu0 %v2490, 32
      %v2522 = vpop.permute.xlu0 %2521
      %vm2539 = vcmask 326912
      %2540 = vst.msk [vmem:[#allocation4] sm:$0xff] %vm2539, %v2492
      %2541 = vst.msk [vmem:[#allocation4 + $0x8] sm:$0xff] %vm2539, %v2494
      %2542 = vst.msk [vmem:[#allocation4 + $0x10] sm:$0xff] %vm2539, %v2496
      %2543 = vst.msk [vmem:[#allocation4 + $0x18] sm:$0xff] %vm2539, %v2498
      %2544 = vst.msk [vmem:[#allocation4 + $0x20] sm:$0xff] %vm2539, %v2500
      %2545 = vst.msk [vmem:[#allocation4 + $0x28] sm:$0xff] %vm2539, %v2502
      %2546 = vst.msk [vmem:[#allocation4 + $0x30] sm:$0xff] %vm2539, %v2504
      %2547 = vst.msk [vmem:[#allocation4 + $0x38] sm:$0xff] %vm2539, %v2506
      %2548 = vst.msk [vmem:[#allocation4 + $0x40] sm:$0xff] %vm2539, %v2508
      %2549 = vst.msk [vmem:[#allocation4 + $0x48] sm:$0xff] %vm2539, %v2510
      %2550 = vst.msk [vmem:[#allocation4 + $0x50] sm:$0xff] %vm2539, %v2512
      %2551 = vst.msk [vmem:[#allocation4 + $0x58] sm:$0xff] %vm2539, %v2514
      %2552 = vst.msk [vmem:[#allocation4 + $0x60] sm:$0xff] %vm2539, %v2516
      %2553 = vst.msk [vmem:[#allocation4 + $0x68] sm:$0xff] %vm2539, %v2518
      %2554 = vst.msk [vmem:[#allocation4 + $0x70] sm:$0xff] %vm2539, %v2520
      %2555 = vst.msk [vmem:[#allocation4 + $0x78] sm:$0xff] %vm2539, %v2522
      %v2556 = vld [vmem:[%s702] sm:$0xe]
      %v2557 = vld [vmem:[%s702 + $0x4] sm:$0xf]
      %v2558 = vld [vmem:[%s702 + $0x8] sm:$0x1]
      %v2559 = vld [vmem:[%s702 + $0xc] sm:$0xe]
      %v2560 = vld [vmem:[%s702 + $0x10] sm:$0xf]
      %v2561 = vld [vmem:[%s702 + $0x14] sm:$0x1]
      %v2562 = vld [vmem:[%s702 + $0x18] sm:$0xe]
      %v2563 = vld [vmem:[%s702 + $0x1c] sm:$0xf]
      %v2564 = vld [vmem:[%s702 + $0x20] sm:$0x1]
      %v2565 = vld [vmem:[%s702 + $0x24] sm:$0xe]
      %v2566 = vld [vmem:[%s702 + $0x28] sm:$0xf]
      %v2567 = vld [vmem:[%s702 + $0x2c] sm:$0x1]
      %v2568 = vld [vmem:[%s702 + $0x30] sm:$0xe]
      %v2569 = vld [vmem:[%s702 + $0x34] sm:$0xf]
      %v2570 = vld [vmem:[%s702 + $0x38] sm:$0x1]
      %v2571 = vld [vmem:[%s702 + $0x3c] sm:$0xe]
      %v2572 = vld [vmem:[%s702 + $0x40] sm:$0xf]
      %v2573 = vld [vmem:[%s702 + $0x44] sm:$0x1]
      %v2574 = vld [vmem:[%s702 + $0x48] sm:$0xe]
      %v2575 = vld [vmem:[%s702 + $0x4c] sm:$0xf]
      %v2576 = vld [vmem:[%s702 + $0x50] sm:$0x1]
      %v2577 = vld [vmem:[%s702 + $0x54] sm:$0xe]
      %v2578 = vld [vmem:[%s702 + $0x58] sm:$0xf]
      %v2579 = vld [vmem:[%s702 + $0x5c] sm:$0x1]
      %v2580 = vld [vmem:[%s702 + $0x60] sm:$0xe]
      %v2581 = vld [vmem:[%s702 + $0x64] sm:$0xf]
      %v2582 = vld [vmem:[%s702 + $0x68] sm:$0x1]
      %v2583 = vld [vmem:[%s702 + $0x6c] sm:$0xe]
      %v2584 = vld [vmem:[%s702 + $0x70] sm:$0xf]
      %v2585 = vld [vmem:[%s702 + $0x74] sm:$0x1]
      %v2586 = vld [vmem:[%s702 + $0x78] sm:$0xe]
      %v2587 = vld [vmem:[%s702 + $0x7c] sm:$0xf]
      %v2588 = vld [vmem:[%s702 + $0x80] sm:$0x1]
      %v2589 = vld [vmem:[%s702 + $0x84] sm:$0xe]
      %v2590 = vld [vmem:[%s702 + $0x88] sm:$0xf]
      %v2591 = vld [vmem:[%s702 + $0x8c] sm:$0x1]
      %v2592 = vld [vmem:[%s702 + $0x90] sm:$0xe]
      %v2593 = vld [vmem:[%s702 + $0x94] sm:$0xf]
      %v2594 = vld [vmem:[%s702 + $0x98] sm:$0x1]
      %v2595 = vld [vmem:[%s702 + $0x9c] sm:$0xe]
      %v2596 = vld [vmem:[%s702 + $0xa0] sm:$0xf]
      %v2597 = vld [vmem:[%s702 + $0xa4] sm:$0x1]
      %v2598 = vld [vmem:[%s702 + $0xa8] sm:$0xe]
      %v2599 = vld [vmem:[%s702 + $0xac] sm:$0xf]
      %v2600 = vld [vmem:[%s702 + $0xb0] sm:$0x1]
      %v2601 = vld [vmem:[%s702 + $0xb4] sm:$0xe]
      %v2602 = vld [vmem:[%s702 + $0xb8] sm:$0xf]
      %v2603 = vld [vmem:[%s702 + $0xbc] sm:$0x1]
      %v2652 = vrot.slane %v2556, 5
      %v2653 = vrot.slane %v2652, 4
      %v2654 = vrot.slane %v2557, 5
      %v2655 = vsel %vm1608, %v2653, %v2654
      %v2656 = vrot.slane %v2654, 4
      %v2657 = vrot.slane %v2558, 5
      %v2658 = vsel %vm1608, %v2656, %v2657
      %v2659 = vrot.slane %v2559, 5
      %v2660 = vrot.slane %v2659, 4
      %v2661 = vrot.slane %v2560, 5
      %v2662 = vsel %vm1608, %v2660, %v2661
      %v2663 = vrot.slane %v2661, 4
      %v2664 = vrot.slane %v2561, 5
      %v2665 = vsel %vm1608, %v2663, %v2664
      %v2666 = vrot.slane %v2562, 5
      %v2667 = vrot.slane %v2666, 4
      %v2668 = vrot.slane %v2563, 5
      %v2669 = vsel %vm1608, %v2667, %v2668
      %v2670 = vrot.slane %v2668, 4
      %v2671 = vrot.slane %v2564, 5
      %v2672 = vsel %vm1608, %v2670, %v2671
      %v2673 = vrot.slane %v2565, 5
      %v2674 = vrot.slane %v2673, 4
      %v2675 = vrot.slane %v2566, 5
      %v2676 = vsel %vm1608, %v2674, %v2675
      %v2677 = vrot.slane %v2675, 4
      %v2678 = vrot.slane %v2567, 5
      %v2679 = vsel %vm1608, %v2677, %v2678
      %v2680 = vrot.slane %v2568, 5
      %v2681 = vrot.slane %v2680, 4
      %v2682 = vrot.slane %v2569, 5
      %v2683 = vsel %vm1608, %v2681, %v2682
      %v2684 = vrot.slane %v2682, 4
      %v2685 = vrot.slane %v2570, 5
      %v2686 = vsel %vm1608, %v2684, %v2685
      %v2687 = vrot.slane %v2571, 5
      %v2688 = vrot.slane %v2687, 4
      %v2689 = vrot.slane %v2572, 5
      %v2690 = vsel %vm1608, %v2688, %v2689
      %v2691 = vrot.slane %v2689, 4
      %v2692 = vrot.slane %v2573, 5
      %v2693 = vsel %vm1608, %v2691, %v2692
      %v2694 = vrot.slane %v2574, 5
      %v2695 = vrot.slane %v2694, 4
      %v2696 = vrot.slane %v2575, 5
      %v2697 = vsel %vm1608, %v2695, %v2696
      %v2698 = vrot.slane %v2696, 4
      %v2699 = vrot.slane %v2576, 5
      %v2700 = vsel %vm1608, %v2698, %v2699
      %v2701 = vrot.slane %v2577, 5
      %v2702 = vrot.slane %v2701, 4
      %v2703 = vrot.slane %v2578, 5
      %v2704 = vsel %vm1608, %v2702, %v2703
      %v2705 = vrot.slane %v2703, 4
      %v2706 = vrot.slane %v2579, 5
      %v2707 = vsel %vm1608, %v2705, %v2706
      %v2708 = vrot.slane %v2580, 5
      %v2709 = vrot.slane %v2708, 4
      %v2710 = vrot.slane %v2581, 5
      %v2711 = vsel %vm1608, %v2709, %v2710
      %v2712 = vrot.slane %v2710, 4
      %v2713 = vrot.slane %v2582, 5
      %v2714 = vsel %vm1608, %v2712, %v2713
      %v2715 = vrot.slane %v2583, 5
      %v2716 = vrot.slane %v2715, 4
      %v2717 = vrot.slane %v2584, 5
      %v2718 = vsel %vm1608, %v2716, %v2717
      %v2719 = vrot.slane %v2717, 4
      %v2720 = vrot.slane %v2585, 5
      %v2721 = vsel %vm1608, %v2719, %v2720
      %v2722 = vrot.slane %v2586, 5
      %v2723 = vrot.slane %v2722, 4
      %v2724 = vrot.slane %v2587, 5
      %v2725 = vsel %vm1608, %v2723, %v2724
      %v2726 = vrot.slane %v2724, 4
      %v2727 = vrot.slane %v2588, 5
      %v2728 = vsel %vm1608, %v2726, %v2727
      %v2729 = vrot.slane %v2589, 5
      %v2730 = vrot.slane %v2729, 4
      %v2731 = vrot.slane %v2590, 5
      %v2732 = vsel %vm1608, %v2730, %v2731
      %v2733 = vrot.slane %v2731, 4
      %v2734 = vrot.slane %v2591, 5
      %v2735 = vsel %vm1608, %v2733, %v2734
      %v2736 = vrot.slane %v2592, 5
      %v2737 = vrot.slane %v2736, 4
      %v2738 = vrot.slane %v2593, 5
      %v2739 = vsel %vm1608, %v2737, %v2738
      %v2740 = vrot.slane %v2738, 4
      %v2741 = vrot.slane %v2594, 5
      %v2742 = vsel %vm1608, %v2740, %v2741
      %v2743 = vrot.slane %v2595, 5
      %v2744 = vrot.slane %v2743, 4
      %v2745 = vrot.slane %v2596, 5
      %v2746 = vsel %vm1608, %v2744, %v2745
      %v2747 = vrot.slane %v2745, 4
      %v2748 = vrot.slane %v2597, 5
      %v2749 = vsel %vm1608, %v2747, %v2748
      %v2750 = vrot.slane %v2598, 5
      %v2751 = vrot.slane %v2750, 4
      %v2752 = vrot.slane %v2599, 5
      %v2753 = vsel %vm1608, %v2751, %v2752
      %v2754 = vrot.slane %v2752, 4
      %v2755 = vrot.slane %v2600, 5
      %v2756 = vsel %vm1608, %v2754, %v2755
      %v2757 = vrot.slane %v2601, 5
      %v2758 = vrot.slane %v2757, 4
      %v2759 = vrot.slane %v2602, 5
      %v2760 = vsel %vm1608, %v2758, %v2759
      %v2761 = vrot.slane %v2759, 4
      %v2762 = vrot.slane %v2603, 5
      %v2763 = vsel %vm1608, %v2761, %v2762
      %v2764 = vunpack.c.l.b16 %v2655
      %v2765 = vunpack.c.l.b16 %v2658
      %v2766 = vunpack.c.l.b16 %v2662
      %v2767 = vunpack.c.l.b16 %v2665
      %v2768 = vunpack.c.l.b16 %v2669
      %v2769 = vunpack.c.l.b16 %v2672
      %v2770 = vunpack.c.l.b16 %v2676
      %v2771 = vunpack.c.l.b16 %v2679
      %v2772 = vunpack.c.l.b16 %v2683
      %v2773 = vunpack.c.l.b16 %v2686
      %v2774 = vunpack.c.l.b16 %v2690
      %v2775 = vunpack.c.l.b16 %v2693
      %v2776 = vunpack.c.l.b16 %v2697
      %v2777 = vunpack.c.l.b16 %v2700
      %v2778 = vunpack.c.l.b16 %v2704
      %v2779 = vunpack.c.l.b16 %v2707
      %v2780 = vunpack.c.l.b16 %v2711
      %v2781 = vunpack.c.l.b16 %v2714
      %v2782 = vunpack.c.l.b16 %v2718
      %v2783 = vunpack.c.l.b16 %v2721
      %v2784 = vunpack.c.l.b16 %v2725
      %v2785 = vunpack.c.l.b16 %v2728
      %v2786 = vunpack.c.l.b16 %v2732
      %v2787 = vunpack.c.l.b16 %v2735
      %v2788 = vunpack.c.l.b16 %v2739
      %v2789 = vunpack.c.l.b16 %v2742
      %v2790 = vunpack.c.l.b16 %v2746
      %v2791 = vunpack.c.l.b16 %v2749
      %v2792 = vunpack.c.l.b16 %v2753
      %v2793 = vunpack.c.l.b16 %v2756
      %v2794 = vunpack.c.l.b16 %v2760
      %v2795 = vunpack.c.l.b16 %v2763
      %v2796 = vpack.c.b16 %v2765, %v2764
      %v2797 = vpack.c.b16 %v2767, %v2766
      %v2798 = vpack.c.b16 %v2769, %v2768
      %v2799 = vpack.c.b16 %v2771, %v2770
      %v2800 = vpack.c.b16 %v2773, %v2772
      %v2801 = vpack.c.b16 %v2775, %v2774
      %v2802 = vpack.c.b16 %v2777, %v2776
      %v2803 = vpack.c.b16 %v2779, %v2778
      %v2804 = vpack.c.b16 %v2781, %v2780
      %v2805 = vpack.c.b16 %v2783, %v2782
      %v2806 = vpack.c.b16 %v2785, %v2784
      %v2807 = vpack.c.b16 %v2787, %v2786
      %v2808 = vpack.c.b16 %v2789, %v2788
      %v2809 = vpack.c.b16 %v2791, %v2790
      %v2810 = vpack.c.b16 %v2793, %v2792
      %v2811 = vpack.c.b16 %v2795, %v2794
      %2812 = vrot.lane.b32.xlu0 %v2796, 40
      %v2813 = vpop.permute.xlu0 %2812
      %2814 = vrot.lane.b32.xlu0 %v2797, 40
      %v2815 = vpop.permute.xlu0 %2814
      %2816 = vrot.lane.b32.xlu0 %v2798, 40
      %v2817 = vpop.permute.xlu0 %2816
      %2818 = vrot.lane.b32.xlu0 %v2799, 40
      %v2819 = vpop.permute.xlu0 %2818
      %2820 = vrot.lane.b32.xlu0 %v2800, 40
      %v2821 = vpop.permute.xlu0 %2820
      %2822 = vrot.lane.b32.xlu0 %v2801, 40
      %v2823 = vpop.permute.xlu0 %2822
      %2824 = vrot.lane.b32.xlu0 %v2802, 40
      %v2825 = vpop.permute.xlu0 %2824
      %2826 = vrot.lane.b32.xlu0 %v2803, 40
      %v2827 = vpop.permute.xlu0 %2826
      %2828 = vrot.lane.b32.xlu0 %v2804, 40
      %v2829 = vpop.permute.xlu0 %2828
      %2830 = vrot.lane.b32.xlu0 %v2805, 40
      %v2831 = vpop.permute.xlu0 %2830
      %2832 = vrot.lane.b32.xlu0 %v2806, 40
      %v2833 = vpop.permute.xlu0 %2832
      %2834 = vrot.lane.b32.xlu0 %v2807, 40
      %v2835 = vpop.permute.xlu0 %2834
      %2836 = vrot.lane.b32.xlu0 %v2808, 40
      %v2837 = vpop.permute.xlu0 %2836
      %2838 = vrot.lane.b32.xlu0 %v2809, 40
      %v2839 = vpop.permute.xlu0 %2838
      %2840 = vrot.lane.b32.xlu0 %v2810, 40
      %v2841 = vpop.permute.xlu0 %2840
      %2842 = vrot.lane.b32.xlu0 %v2811, 40
      %v2843 = vpop.permute.xlu0 %2842
      %vm2860 = vcmask 392512
      %2861 = vst.msk [vmem:[#allocation4] sm:$0xff] %vm2860, %v2813
      %2862 = vst.msk [vmem:[#allocation4 + $0x8] sm:$0xff] %vm2860, %v2815
      %2863 = vst.msk [vmem:[#allocation4 + $0x10] sm:$0xff] %vm2860, %v2817
      %2864 = vst.msk [vmem:[#allocation4 + $0x18] sm:$0xff] %vm2860, %v2819
      %2865 = vst.msk [vmem:[#allocation4 + $0x20] sm:$0xff] %vm2860, %v2821
      %2866 = vst.msk [vmem:[#allocation4 + $0x28] sm:$0xff] %vm2860, %v2823
      %2867 = vst.msk [vmem:[#allocation4 + $0x30] sm:$0xff] %vm2860, %v2825
      %2868 = vst.msk [vmem:[#allocation4 + $0x38] sm:$0xff] %vm2860, %v2827
      %2869 = vst.msk [vmem:[#allocation4 + $0x40] sm:$0xff] %vm2860, %v2829
      %2870 = vst.msk [vmem:[#allocation4 + $0x48] sm:$0xff] %vm2860, %v2831
      %2871 = vst.msk [vmem:[#allocation4 + $0x50] sm:$0xff] %vm2860, %v2833
      %2872 = vst.msk [vmem:[#allocation4 + $0x58] sm:$0xff] %vm2860, %v2835
      %2873 = vst.msk [vmem:[#allocation4 + $0x60] sm:$0xff] %vm2860, %v2837
      %2874 = vst.msk [vmem:[#allocation4 + $0x68] sm:$0xff] %vm2860, %v2839
      %2875 = vst.msk [vmem:[#allocation4 + $0x70] sm:$0xff] %vm2860, %v2841
      %2876 = vst.msk [vmem:[#allocation4 + $0x78] sm:$0xff] %vm2860, %v2843
      %s2877 = scalar_lea.vmem [#allocation2], 24
      %v2878 = vld [vmem:[%s2877] sm:$0xf]
      %v2879 = vld [vmem:[%s2877 + $0x4] sm:$0xf]
      %v2880 = vld [vmem:[%s2877 + $0xc] sm:$0xf]
      %v2881 = vld [vmem:[%s2877 + $0x10] sm:$0xf]
      %v2882 = vld [vmem:[%s2877 + $0x18] sm:$0xf]
      %v2883 = vld [vmem:[%s2877 + $0x1c] sm:$0xf]
      %v2884 = vld [vmem:[%s2877 + $0x24] sm:$0xf]
      %v2885 = vld [vmem:[%s2877 + $0x28] sm:$0xf]
      %v2886 = vld [vmem:[%s2877 + $0x30] sm:$0xf]
      %v2887 = vld [vmem:[%s2877 + $0x34] sm:$0xf]
      %v2888 = vld [vmem:[%s2877 + $0x3c] sm:$0xf]
      %v2889 = vld [vmem:[%s2877 + $0x40] sm:$0xf]
      %v2890 = vld [vmem:[%s2877 + $0x48] sm:$0xf]
      %v2891 = vld [vmem:[%s2877 + $0x4c] sm:$0xf]
      %v2892 = vld [vmem:[%s2877 + $0x54] sm:$0xf]
      %v2893 = vld [vmem:[%s2877 + $0x58] sm:$0xf]
      %v2894 = vld [vmem:[%s2877 + $0x60] sm:$0xf]
      %v2895 = vld [vmem:[%s2877 + $0x64] sm:$0xf]
      %v2896 = vld [vmem:[%s2877 + $0x6c] sm:$0xf]
      %v2897 = vld [vmem:[%s2877 + $0x70] sm:$0xf]
      %v2898 = vld [vmem:[%s2877 + $0x78] sm:$0xf]
      %v2899 = vld [vmem:[%s2877 + $0x7c] sm:$0xf]
      %v2900 = vld [vmem:[%s2877 + $0x84] sm:$0xf]
      %v2901 = vld [vmem:[%s2877 + $0x88] sm:$0xf]
      %v2902 = vld [vmem:[%s2877 + $0x90] sm:$0xf]
      %v2903 = vld [vmem:[%s2877 + $0x94] sm:$0xf]
      %v2904 = vld [vmem:[%s2877 + $0x9c] sm:$0xf]
      %v2905 = vld [vmem:[%s2877 + $0xa0] sm:$0xf]
      %v2906 = vld [vmem:[%s2877 + $0xa8] sm:$0xf]
      %v2907 = vld [vmem:[%s2877 + $0xac] sm:$0xf]
      %v2908 = vld [vmem:[%s2877 + $0xb4] sm:$0xf]
      %v2909 = vld [vmem:[%s2877 + $0xb8] sm:$0xf]
      %v2942 = vunpack.c.l.b16 %v2878
      %v2943 = vunpack.c.l.b16 %v2879
      %v2944 = vunpack.c.l.b16 %v2880
      %v2945 = vunpack.c.l.b16 %v2881
      %v2946 = vunpack.c.l.b16 %v2882
      %v2947 = vunpack.c.l.b16 %v2883
      %v2948 = vunpack.c.l.b16 %v2884
      %v2949 = vunpack.c.l.b16 %v2885
      %v2950 = vunpack.c.l.b16 %v2886
      %v2951 = vunpack.c.l.b16 %v2887
      %v2952 = vunpack.c.l.b16 %v2888
      %v2953 = vunpack.c.l.b16 %v2889
      %v2954 = vunpack.c.l.b16 %v2890
      %v2955 = vunpack.c.l.b16 %v2891
      %v2956 = vunpack.c.l.b16 %v2892
      %v2957 = vunpack.c.l.b16 %v2893
      %v2958 = vunpack.c.l.b16 %v2894
      %v2959 = vunpack.c.l.b16 %v2895
      %v2960 = vunpack.c.l.b16 %v2896
      %v2961 = vunpack.c.l.b16 %v2897
      %v2962 = vunpack.c.l.b16 %v2898
      %v2963 = vunpack.c.l.b16 %v2899
      %v2964 = vunpack.c.l.b16 %v2900
      %v2965 = vunpack.c.l.b16 %v2901
      %v2966 = vunpack.c.l.b16 %v2902
      %v2967 = vunpack.c.l.b16 %v2903
      %v2968 = vunpack.c.l.b16 %v2904
      %v2969 = vunpack.c.l.b16 %v2905
      %v2970 = vunpack.c.l.b16 %v2906
      %v2971 = vunpack.c.l.b16 %v2907
      %v2972 = vunpack.c.l.b16 %v2908
      %v2973 = vunpack.c.l.b16 %v2909
      %v2974 = vpack.c.b16 %v2943, %v2942
      %v2975 = vpack.c.b16 %v2945, %v2944
      %v2976 = vpack.c.b16 %v2947, %v2946
      %v2977 = vpack.c.b16 %v2949, %v2948
      %v2978 = vpack.c.b16 %v2951, %v2950
      %v2979 = vpack.c.b16 %v2953, %v2952
      %v2980 = vpack.c.b16 %v2955, %v2954
      %v2981 = vpack.c.b16 %v2957, %v2956
      %v2982 = vpack.c.b16 %v2959, %v2958
      %v2983 = vpack.c.b16 %v2961, %v2960
      %v2984 = vpack.c.b16 %v2963, %v2962
      %v2985 = vpack.c.b16 %v2965, %v2964
      %v2986 = vpack.c.b16 %v2967, %v2966
      %v2987 = vpack.c.b16 %v2969, %v2968
      %v2988 = vpack.c.b16 %v2971, %v2970
      %v2989 = vpack.c.b16 %v2973, %v2972
      %2990 = vrot.lane.b32.xlu0 %v2974, 48
      %v2991 = vpop.permute.xlu0 %2990
      %2992 = vrot.lane.b32.xlu0 %v2975, 48
      %v2993 = vpop.permute.xlu0 %2992
      %2994 = vrot.lane.b32.xlu0 %v2976, 48
      %v2995 = vpop.permute.xlu0 %2994
      %2996 = vrot.lane.b32.xlu0 %v2977, 48
      %v2997 = vpop.permute.xlu0 %2996
      %2998 = vrot.lane.b32.xlu0 %v2978, 48
      %v2999 = vpop.permute.xlu0 %2998
      %3000 = vrot.lane.b32.xlu0 %v2979, 48
      %v3001 = vpop.permute.xlu0 %3000
      %3002 = vrot.lane.b32.xlu0 %v2980, 48
      %v3003 = vpop.permute.xlu0 %3002
      %3004 = vrot.lane.b32.xlu0 %v2981, 48
      %v3005 = vpop.permute.xlu0 %3004
      %3006 = vrot.lane.b32.xlu0 %v2982, 48
      %v3007 = vpop.permute.xlu0 %3006
      %3008 = vrot.lane.b32.xlu0 %v2983, 48
      %v3009 = vpop.permute.xlu0 %3008
      %3010 = vrot.lane.b32.xlu0 %v2984, 48
      %v3011 = vpop.permute.xlu0 %3010
      %3012 = vrot.lane.b32.xlu0 %v2985, 48
      %v3013 = vpop.permute.xlu0 %3012
      %3014 = vrot.lane.b32.xlu0 %v2986, 48
      %v3015 = vpop.permute.xlu0 %3014
      %3016 = vrot.lane.b32.xlu0 %v2987, 48
      %v3017 = vpop.permute.xlu0 %3016
      %3018 = vrot.lane.b32.xlu0 %v2988, 48
      %v3019 = vpop.permute.xlu0 %3018
      %3020 = vrot.lane.b32.xlu0 %v2989, 48
      %v3021 = vpop.permute.xlu0 %3020
      %vm3038 = vcmask 458112
      %3039 = vst.msk [vmem:[#allocation4] sm:$0xff] %vm3038, %v2991
      %3040 = vst.msk [vmem:[#allocation4 + $0x8] sm:$0xff] %vm3038, %v2993
      %3041 = vst.msk [vmem:[#allocation4 + $0x10] sm:$0xff] %vm3038, %v2995
      %3042 = vst.msk [vmem:[#allocation4 + $0x18] sm:$0xff] %vm3038, %v2997
      %3043 = vst.msk [vmem:[#allocation4 + $0x20] sm:$0xff] %vm3038, %v2999
      %3044 = vst.msk [vmem:[#allocation4 + $0x28] sm:$0xff] %vm3038, %v3001
      %3045 = vst.msk [vmem:[#allocation4 + $0x30] sm:$0xff] %vm3038, %v3003
      %3046 = vst.msk [vmem:[#allocation4 + $0x38] sm:$0xff] %vm3038, %v3005
      %3047 = vst.msk [vmem:[#allocation4 + $0x40] sm:$0xff] %vm3038, %v3007
      %3048 = vst.msk [vmem:[#allocation4 + $0x48] sm:$0xff] %vm3038, %v3009
      %3049 = vst.msk [vmem:[#allocation4 + $0x50] sm:$0xff] %vm3038, %v3011
      %3050 = vst.msk [vmem:[#allocation4 + $0x58] sm:$0xff] %vm3038, %v3013
      %3051 = vst.msk [vmem:[#allocation4 + $0x60] sm:$0xff] %vm3038, %v3015
      %3052 = vst.msk [vmem:[#allocation4 + $0x68] sm:$0xff] %vm3038, %v3017
      %3053 = vst.msk [vmem:[#allocation4 + $0x70] sm:$0xff] %vm3038, %v3019
      %3054 = vst.msk [vmem:[#allocation4 + $0x78] sm:$0xff] %vm3038, %v3021
      %v3055 = vld [vmem:[%s2877] sm:$0xf]
      %v3056 = vld [vmem:[%s2877 + $0x4] sm:$0xf]
      %v3057 = vld [vmem:[%s2877 + $0x8] sm:$0x1]
      %v3058 = vld [vmem:[%s2877 + $0xc] sm:$0xf]
      %v3059 = vld [vmem:[%s2877 + $0x10] sm:$0xf]
      %v3060 = vld [vmem:[%s2877 + $0x14] sm:$0x1]
      %v3061 = vld [vmem:[%s2877 + $0x18] sm:$0xf]
      %v3062 = vld [vmem:[%s2877 + $0x1c] sm:$0xf]
      %v3063 = vld [vmem:[%s2877 + $0x20] sm:$0x1]
      %v3064 = vld [vmem:[%s2877 + $0x24] sm:$0xf]
      %v3065 = vld [vmem:[%s2877 + $0x28] sm:$0xf]
      %v3066 = vld [vmem:[%s2877 + $0x2c] sm:$0x1]
      %v3067 = vld [vmem:[%s2877 + $0x30] sm:$0xf]
      %v3068 = vld [vmem:[%s2877 + $0x34] sm:$0xf]
      %v3069 = vld [vmem:[%s2877 + $0x38] sm:$0x1]
      %v3070 = vld [vmem:[%s2877 + $0x3c] sm:$0xf]
      %v3071 = vld [vmem:[%s2877 + $0x40] sm:$0xf]
      %v3072 = vld [vmem:[%s2877 + $0x44] sm:$0x1]
      %v3073 = vld [vmem:[%s2877 + $0x48] sm:$0xf]
      %v3074 = vld [vmem:[%s2877 + $0x4c] sm:$0xf]
      %v3075 = vld [vmem:[%s2877 + $0x50] sm:$0x1]
      %v3076 = vld [vmem:[%s2877 + $0x54] sm:$0xf]
      %v3077 = vld [vmem:[%s2877 + $0x58] sm:$0xf]
      %v3078 = vld [vmem:[%s2877 + $0x5c] sm:$0x1]
      %v3079 = vld [vmem:[%s2877 + $0x60] sm:$0xf]
      %v3080 = vld [vmem:[%s2877 + $0x64] sm:$0xf]
      %v3081 = vld [vmem:[%s2877 + $0x68] sm:$0x1]
      %v3082 = vld [vmem:[%s2877 + $0x6c] sm:$0xf]
      %v3083 = vld [vmem:[%s2877 + $0x70] sm:$0xf]
      %v3084 = vld [vmem:[%s2877 + $0x74] sm:$0x1]
      %v3085 = vld [vmem:[%s2877 + $0x78] sm:$0xf]
      %v3086 = vld [vmem:[%s2877 + $0x7c] sm:$0xf]
      %v3087 = vld [vmem:[%s2877 + $0x80] sm:$0x1]
      %v3088 = vld [vmem:[%s2877 + $0x84] sm:$0xf]
      %v3089 = vld [vmem:[%s2877 + $0x88] sm:$0xf]
      %v3090 = vld [vmem:[%s2877 + $0x8c] sm:$0x1]
      %v3091 = vld [vmem:[%s2877 + $0x90] sm:$0xf]
      %v3092 = vld [vmem:[%s2877 + $0x94] sm:$0xf]
      %v3093 = vld [vmem:[%s2877 + $0x98] sm:$0x1]
      %v3094 = vld [vmem:[%s2877 + $0x9c] sm:$0xf]
      %v3095 = vld [vmem:[%s2877 + $0xa0] sm:$0xf]
      %v3096 = vld [vmem:[%s2877 + $0xa4] sm:$0x1]
      %v3097 = vld [vmem:[%s2877 + $0xa8] sm:$0xf]
      %v3098 = vld [vmem:[%s2877 + $0xac] sm:$0xf]
      %v3099 = vld [vmem:[%s2877 + $0xb0] sm:$0x1]
      %v3100 = vld [vmem:[%s2877 + $0xb4] sm:$0xf]
      %v3101 = vld [vmem:[%s2877 + $0xb8] sm:$0xf]
      %v3102 = vld [vmem:[%s2877 + $0xbc] sm:$0x1]
      %v3104 = vshrl.u32 %v3055, 16
      %v3106 = vrot.slane %v3104, 4
      %v3107 = vshll.u32 %v3055, 16
      %v3109 = vrot.slane %v3107, 5
      %v3110 = vor.u32 %v3106, %v3109
      %v3111 = vrot.slane %v3110, 4
      %v3113 = vshll.u32 %v3056, 16
      %v3115 = vrot.slane %v3113, 5
      %v3116 = vsel %vm1012, %v3111, %v3115
      %v3117 = vshrl.u32 %v3056, 16
      %v3119 = vrot.slane %v3117, 4
      %v3120 = vor.u32 %v3119, %v3115
      %v3121 = vrot.slane %v3120, 4
      %v3123 = vshll.u32 %v3057, 16
      %v3125 = vrot.slane %v3123, 5
      %v3126 = vsel %vm1012, %v3121, %v3125
      %v3128 = vshrl.u32 %v3058, 16
      %v3130 = vrot.slane %v3128, 4
      %v3131 = vshll.u32 %v3058, 16
      %v3133 = vrot.slane %v3131, 5
      %v3134 = vor.u32 %v3130, %v3133
      %v3135 = vrot.slane %v3134, 4
      %v3137 = vshll.u32 %v3059, 16
      %v3139 = vrot.slane %v3137, 5
      %v3140 = vsel %vm1012, %v3135, %v3139
      %v3141 = vshrl.u32 %v3059, 16
      %v3143 = vrot.slane %v3141, 4
      %v3144 = vor.u32 %v3143, %v3139
      %v3145 = vrot.slane %v3144, 4
      %v3147 = vshll.u32 %v3060, 16
      %v3149 = vrot.slane %v3147, 5
      %v3150 = vsel %vm1012, %v3145, %v3149
      %v3152 = vshrl.u32 %v3061, 16
      %v3154 = vrot.slane %v3152, 4
      %v3155 = vshll.u32 %v3061, 16
      %v3157 = vrot.slane %v3155, 5
      %v3158 = vor.u32 %v3154, %v3157
      %v3159 = vrot.slane %v3158, 4
      %v3161 = vshll.u32 %v3062, 16
      %v3163 = vrot.slane %v3161, 5
      %v3164 = vsel %vm1012, %v3159, %v3163
      %v3165 = vshrl.u32 %v3062, 16
      %v3167 = vrot.slane %v3165, 4
      %v3168 = vor.u32 %v3167, %v3163
      %v3169 = vrot.slane %v3168, 4
      %v3171 = vshll.u32 %v3063, 16
      %v3173 = vrot.slane %v3171, 5
      %v3174 = vsel %vm1012, %v3169, %v3173
      %v3176 = vshrl.u32 %v3064, 16
      %v3178 = vrot.slane %v3176, 4
      %v3179 = vshll.u32 %v3064, 16
      %v3181 = vrot.slane %v3179, 5
      %v3182 = vor.u32 %v3178, %v3181
      %v3183 = vrot.slane %v3182, 4
      %v3185 = vshll.u32 %v3065, 16
      %v3187 = vrot.slane %v3185, 5
      %v3188 = vsel %vm1012, %v3183, %v3187
      %v3189 = vshrl.u32 %v3065, 16
      %v3191 = vrot.slane %v3189, 4
      %v3192 = vor.u32 %v3191, %v3187
      %v3193 = vrot.slane %v3192, 4
      %v3195 = vshll.u32 %v3066, 16
      %v3197 = vrot.slane %v3195, 5
      %v3198 = vsel %vm1012, %v3193, %v3197
      %v3200 = vshrl.u32 %v3067, 16
      %v3202 = vrot.slane %v3200, 4
      %v3203 = vshll.u32 %v3067, 16
      %v3205 = vrot.slane %v3203, 5
      %v3206 = vor.u32 %v3202, %v3205
      %v3207 = vrot.slane %v3206, 4
      %v3209 = vshll.u32 %v3068, 16
      %v3211 = vrot.slane %v3209, 5
      %v3212 = vsel %vm1012, %v3207, %v3211
      %v3213 = vshrl.u32 %v3068, 16
      %v3215 = vrot.slane %v3213, 4
      %v3216 = vor.u32 %v3215, %v3211
      %v3217 = vrot.slane %v3216, 4
      %v3219 = vshll.u32 %v3069, 16
      %v3221 = vrot.slane %v3219, 5
      %v3222 = vsel %vm1012, %v3217, %v3221
      %v3224 = vshrl.u32 %v3070, 16
      %v3226 = vrot.slane %v3224, 4
      %v3227 = vshll.u32 %v3070, 16
      %v3229 = vrot.slane %v3227, 5
      %v3230 = vor.u32 %v3226, %v3229
      %v3231 = vrot.slane %v3230, 4
      %v3233 = vshll.u32 %v3071, 16
      %v3235 = vrot.slane %v3233, 5
      %v3236 = vsel %vm1012, %v3231, %v3235
      %v3237 = vshrl.u32 %v3071, 16
      %v3239 = vrot.slane %v3237, 4
      %v3240 = vor.u32 %v3239, %v3235
      %v3241 = vrot.slane %v3240, 4
      %v3243 = vshll.u32 %v3072, 16
      %v3245 = vrot.slane %v3243, 5
      %v3246 = vsel %vm1012, %v3241, %v3245
      %v3248 = vshrl.u32 %v3073, 16
      %v3250 = vrot.slane %v3248, 4
      %v3251 = vshll.u32 %v3073, 16
      %v3253 = vrot.slane %v3251, 5
      %v3254 = vor.u32 %v3250, %v3253
      %v3255 = vrot.slane %v3254, 4
      %v3257 = vshll.u32 %v3074, 16
      %v3259 = vrot.slane %v3257, 5
      %v3260 = vsel %vm1012, %v3255, %v3259
      %v3261 = vshrl.u32 %v3074, 16
      %v3263 = vrot.slane %v3261, 4
      %v3264 = vor.u32 %v3263, %v3259
      %v3265 = vrot.slane %v3264, 4
      %v3267 = vshll.u32 %v3075, 16
      %v3269 = vrot.slane %v3267, 5
      %v3270 = vsel %vm1012, %v3265, %v3269
      %v3272 = vshrl.u32 %v3076, 16
      %v3274 = vrot.slane %v3272, 4
      %v3275 = vshll.u32 %v3076, 16
      %v3277 = vrot.slane %v3275, 5
      %v3278 = vor.u32 %v3274, %v3277
      %v3279 = vrot.slane %v3278, 4
      %v3281 = vshll.u32 %v3077, 16
      %v3283 = vrot.slane %v3281, 5
      %v3284 = vsel %vm1012, %v3279, %v3283
      %v3285 = vshrl.u32 %v3077, 16
      %v3287 = vrot.slane %v3285, 4
      %v3288 = vor.u32 %v3287, %v3283
      %v3289 = vrot.slane %v3288, 4
      %v3291 = vshll.u32 %v3078, 16
      %v3293 = vrot.slane %v3291, 5
      %v3294 = vsel %vm1012, %v3289, %v3293
      %v3296 = vshrl.u32 %v3079, 16
      %v3298 = vrot.slane %v3296, 4
      %v3299 = vshll.u32 %v3079, 16
      %v3301 = vrot.slane %v3299, 5
      %v3302 = vor.u32 %v3298, %v3301
      %v3303 = vrot.slane %v3302, 4
      %v3305 = vshll.u32 %v3080, 16
      %v3307 = vrot.slane %v3305, 5
      %v3308 = vsel %vm1012, %v3303, %v3307
      %v3309 = vshrl.u32 %v3080, 16
      %v3311 = vrot.slane %v3309, 4
      %v3312 = vor.u32 %v3311, %v3307
      %v3313 = vrot.slane %v3312, 4
      %v3315 = vshll.u32 %v3081, 16
      %v3317 = vrot.slane %v3315, 5
      %v3318 = vsel %vm1012, %v3313, %v3317
      %v3320 = vshrl.u32 %v3082, 16
      %v3322 = vrot.slane %v3320, 4
      %v3323 = vshll.u32 %v3082, 16
      %v3325 = vrot.slane %v3323, 5
      %v3326 = vor.u32 %v3322, %v3325
      %v3327 = vrot.slane %v3326, 4
      %v3329 = vshll.u32 %v3083, 16
      %v3331 = vrot.slane %v3329, 5
      %v3332 = vsel %vm1012, %v3327, %v3331
      %v3333 = vshrl.u32 %v3083, 16
      %v3335 = vrot.slane %v3333, 4
      %v3336 = vor.u32 %v3335, %v3331
      %v3337 = vrot.slane %v3336, 4
      %v3339 = vshll.u32 %v3084, 16
      %v3341 = vrot.slane %v3339, 5
      %v3342 = vsel %vm1012, %v3337, %v3341
      %v3344 = vshrl.u32 %v3085, 16
      %v3346 = vrot.slane %v3344, 4
      %v3347 = vshll.u32 %v3085, 16
      %v3349 = vrot.slane %v3347, 5
      %v3350 = vor.u32 %v3346, %v3349
      %v3351 = vrot.slane %v3350, 4
      %v3353 = vshll.u32 %v3086, 16
      %v3355 = vrot.slane %v3353, 5
      %v3356 = vsel %vm1012, %v3351, %v3355
      %v3357 = vshrl.u32 %v3086, 16
      %v3359 = vrot.slane %v3357, 4
      %v3360 = vor.u32 %v3359, %v3355
      %v3361 = vrot.slane %v3360, 4
      %v3363 = vshll.u32 %v3087, 16
      %v3365 = vrot.slane %v3363, 5
      %v3366 = vsel %vm1012, %v3361, %v3365
      %v3368 = vshrl.u32 %v3088, 16
      %v3370 = vrot.slane %v3368, 4
      %v3371 = vshll.u32 %v3088, 16
      %v3373 = vrot.slane %v3371, 5
      %v3374 = vor.u32 %v3370, %v3373
      %v3375 = vrot.slane %v3374, 4
      %v3377 = vshll.u32 %v3089, 16
      %v3379 = vrot.slane %v3377, 5
      %v3380 = vsel %vm1012, %v3375, %v3379
      %v3381 = vshrl.u32 %v3089, 16
      %v3383 = vrot.slane %v3381, 4
      %v3384 = vor.u32 %v3383, %v3379
      %v3385 = vrot.slane %v3384, 4
      %v3387 = vshll.u32 %v3090, 16
      %v3389 = vrot.slane %v3387, 5
      %v3390 = vsel %vm1012, %v3385, %v3389
      %v3392 = vshrl.u32 %v3091, 16
      %v3394 = vrot.slane %v3392, 4
      %v3395 = vshll.u32 %v3091, 16
      %v3397 = vrot.slane %v3395, 5
      %v3398 = vor.u32 %v3394, %v3397
      %v3399 = vrot.slane %v3398, 4
      %v3401 = vshll.u32 %v3092, 16
      %v3403 = vrot.slane %v3401, 5
      %v3404 = vsel %vm1012, %v3399, %v3403
      %v3405 = vshrl.u32 %v3092, 16
      %v3407 = vrot.slane %v3405, 4
      %v3408 = vor.u32 %v3407, %v3403
      %v3409 = vrot.slane %v3408, 4
      %v3411 = vshll.u32 %v3093, 16
      %v3413 = vrot.slane %v3411, 5
      %v3414 = vsel %vm1012, %v3409, %v3413
      %v3416 = vshrl.u32 %v3094, 16
      %v3418 = vrot.slane %v3416, 4
      %v3419 = vshll.u32 %v3094, 16
      %v3421 = vrot.slane %v3419, 5
      %v3422 = vor.u32 %v3418, %v3421
      %v3423 = vrot.slane %v3422, 4
      %v3425 = vshll.u32 %v3095, 16
      %v3427 = vrot.slane %v3425, 5
      %v3428 = vsel %vm1012, %v3423, %v3427
      %v3429 = vshrl.u32 %v3095, 16
      %v3431 = vrot.slane %v3429, 4
      %v3432 = vor.u32 %v3431, %v3427
      %v3433 = vrot.slane %v3432, 4
      %v3435 = vshll.u32 %v3096, 16
      %v3437 = vrot.slane %v3435, 5
      %v3438 = vsel %vm1012, %v3433, %v3437
      %v3440 = vshrl.u32 %v3097, 16
      %v3442 = vrot.slane %v3440, 4
      %v3443 = vshll.u32 %v3097, 16
      %v3445 = vrot.slane %v3443, 5
      %v3446 = vor.u32 %v3442, %v3445
      %v3447 = vrot.slane %v3446, 4
      %v3449 = vshll.u32 %v3098, 16
      %v3451 = vrot.slane %v3449, 5
      %v3452 = vsel %vm1012, %v3447, %v3451
      %v3453 = vshrl.u32 %v3098, 16
      %v3455 = vrot.slane %v3453, 4
      %v3456 = vor.u32 %v3455, %v3451
      %v3457 = vrot.slane %v3456, 4
      %v3459 = vshll.u32 %v3099, 16
      %v3461 = vrot.slane %v3459, 5
      %v3462 = vsel %vm1012, %v3457, %v3461
      %v3464 = vshrl.u32 %v3100, 16
      %v3466 = vrot.slane %v3464, 4
      %v3467 = vshll.u32 %v3100, 16
      %v3469 = vrot.slane %v3467, 5
      %v3470 = vor.u32 %v3466, %v3469
      %v3471 = vrot.slane %v3470, 4
      %v3473 = vshll.u32 %v3101, 16
      %v3475 = vrot.slane %v3473, 5
      %v3476 = vsel %vm1012, %v3471, %v3475
      %v3477 = vshrl.u32 %v3101, 16
      %v3479 = vrot.slane %v3477, 4
      %v3480 = vor.u32 %v3479, %v3475
      %v3481 = vrot.slane %v3480, 4
      %v3483 = vshll.u32 %v3102, 16
      %v3485 = vrot.slane %v3483, 5
      %v3486 = vsel %vm1012, %v3481, %v3485
      %v3487 = vunpack.c.l.b16 %v3116
      %v3488 = vunpack.c.l.b16 %v3126
      %v3489 = vunpack.c.l.b16 %v3140
      %v3490 = vunpack.c.l.b16 %v3150
      %v3491 = vunpack.c.l.b16 %v3164
      %v3492 = vunpack.c.l.b16 %v3174
      %v3493 = vunpack.c.l.b16 %v3188
      %v3494 = vunpack.c.l.b16 %v3198
      %v3495 = vunpack.c.l.b16 %v3212
      %v3496 = vunpack.c.l.b16 %v3222
      %v3497 = vunpack.c.l.b16 %v3236
      %v3498 = vunpack.c.l.b16 %v3246
      %v3499 = vunpack.c.l.b16 %v3260
      %v3500 = vunpack.c.l.b16 %v3270
      %v3501 = vunpack.c.l.b16 %v3284
      %v3502 = vunpack.c.l.b16 %v3294
      %v3503 = vunpack.c.l.b16 %v3308
      %v3504 = vunpack.c.l.b16 %v3318
      %v3505 = vunpack.c.l.b16 %v3332
      %v3506 = vunpack.c.l.b16 %v3342
      %v3507 = vunpack.c.l.b16 %v3356
      %v3508 = vunpack.c.l.b16 %v3366
      %v3509 = vunpack.c.l.b16 %v3380
      %v3510 = vunpack.c.l.b16 %v3390
      %v3511 = vunpack.c.l.b16 %v3404
      %v3512 = vunpack.c.l.b16 %v3414
      %v3513 = vunpack.c.l.b16 %v3428
      %v3514 = vunpack.c.l.b16 %v3438
      %v3515 = vunpack.c.l.b16 %v3452
      %v3516 = vunpack.c.l.b16 %v3462
      %v3517 = vunpack.c.l.b16 %v3476
      %v3518 = vunpack.c.l.b16 %v3486
      %v3519 = vpack.c.b16 %v3488, %v3487
      %v3520 = vpack.c.b16 %v3490, %v3489
      %v3521 = vpack.c.b16 %v3492, %v3491
      %v3522 = vpack.c.b16 %v3494, %v3493
      %v3523 = vpack.c.b16 %v3496, %v3495
      %v3524 = vpack.c.b16 %v3498, %v3497
      %v3525 = vpack.c.b16 %v3500, %v3499
      %v3526 = vpack.c.b16 %v3502, %v3501
      %v3527 = vpack.c.b16 %v3504, %v3503
      %v3528 = vpack.c.b16 %v3506, %v3505
      %v3529 = vpack.c.b16 %v3508, %v3507
      %v3530 = vpack.c.b16 %v3510, %v3509
      %v3531 = vpack.c.b16 %v3512, %v3511
      %v3532 = vpack.c.b16 %v3514, %v3513
      %v3533 = vpack.c.b16 %v3516, %v3515
      %v3534 = vpack.c.b16 %v3518, %v3517
      %3535 = vrot.lane.b32.xlu0 %v3519, 56
      %v3536 = vpop.permute.xlu0 %3535
      %3537 = vrot.lane.b32.xlu0 %v3520, 56
      %v3538 = vpop.permute.xlu0 %3537
      %3539 = vrot.lane.b32.xlu0 %v3521, 56
      %v3540 = vpop.permute.xlu0 %3539
      %3541 = vrot.lane.b32.xlu0 %v3522, 56
      %v3542 = vpop.permute.xlu0 %3541
      %3543 = vrot.lane.b32.xlu0 %v3523, 56
      %v3544 = vpop.permute.xlu0 %3543
      %3545 = vrot.lane.b32.xlu0 %v3524, 56
      %v3546 = vpop.permute.xlu0 %3545
      %3547 = vrot.lane.b32.xlu0 %v3525, 56
      %v3548 = vpop.permute.xlu0 %3547
      %3549 = vrot.lane.b32.xlu0 %v3526, 56
      %v3550 = vpop.permute.xlu0 %3549
      %3551 = vrot.lane.b32.xlu0 %v3527, 56
      %v3552 = vpop.permute.xlu0 %3551
      %3553 = vrot.lane.b32.xlu0 %v3528, 56
      %v3554 = vpop.permute.xlu0 %3553
      %3555 = vrot.lane.b32.xlu0 %v3529, 56
      %v3556 = vpop.permute.xlu0 %3555
      %3557 = vrot.lane.b32.xlu0 %v3530, 56
      %v3558 = vpop.permute.xlu0 %3557
      %3559 = vrot.lane.b32.xlu0 %v3531, 56
      %v3560 = vpop.permute.xlu0 %3559
      %3561 = vrot.lane.b32.xlu0 %v3532, 56
      %v3562 = vpop.permute.xlu0 %3561
      %3563 = vrot.lane.b32.xlu0 %v3533, 56
      %v3564 = vpop.permute.xlu0 %3563
      %3565 = vrot.lane.b32.xlu0 %v3534, 56
      %v3566 = vpop.permute.xlu0 %3565
      %vm3583 = vcmask 523712
      %3584 = vst.msk [vmem:[#allocation4] sm:$0xff] %vm3583, %v3536
      %3585 = vst.msk [vmem:[#allocation4 + $0x8] sm:$0xff] %vm3583, %v3538
      %3586 = vst.msk [vmem:[#allocation4 + $0x10] sm:$0xff] %vm3583, %v3540
      %3587 = vst.msk [vmem:[#allocation4 + $0x18] sm:$0xff] %vm3583, %v3542
      %3588 = vst.msk [vmem:[#allocation4 + $0x20] sm:$0xff] %vm3583, %v3544
      %3589 = vst.msk [vmem:[#allocation4 + $0x28] sm:$0xff] %vm3583, %v3546
      %3590 = vst.msk [vmem:[#allocation4 + $0x30] sm:$0xff] %vm3583, %v3548
      %3591 = vst.msk [vmem:[#allocation4 + $0x38] sm:$0xff] %vm3583, %v3550
      %3592 = vst.msk [vmem:[#allocation4 + $0x40] sm:$0xff] %vm3583, %v3552
      %3593 = vst.msk [vmem:[#allocation4 + $0x48] sm:$0xff] %vm3583, %v3554
      %3594 = vst.msk [vmem:[#allocation4 + $0x50] sm:$0xff] %vm3583, %v3556
      %3595 = vst.msk [vmem:[#allocation4 + $0x58] sm:$0xff] %vm3583, %v3558
      %3596 = vst.msk [vmem:[#allocation4 + $0x60] sm:$0xff] %vm3583, %v3560
      %3597 = vst.msk [vmem:[#allocation4 + $0x68] sm:$0xff] %vm3583, %v3562
      %3598 = vst.msk [vmem:[#allocation4 + $0x70] sm:$0xff] %vm3583, %v3564
      %3599 = vst.msk [vmem:[#allocation4 + $0x78] sm:$0xff] %vm3583, %v3566
      %v3600 = vld [vmem:[%s2877] sm:$0xe]
      %v3601 = vld [vmem:[%s2877 + $0x4] sm:$0xf]
      %v3602 = vld [vmem:[%s2877 + $0x8] sm:$0x1]
      %v3603 = vld [vmem:[%s2877 + $0xc] sm:$0xe]
      %v3604 = vld [vmem:[%s2877 + $0x10] sm:$0xf]
      %v3605 = vld [vmem:[%s2877 + $0x14] sm:$0x1]
      %v3606 = vld [vmem:[%s2877 + $0x18] sm:$0xe]
      %v3607 = vld [vmem:[%s2877 + $0x1c] sm:$0xf]
      %v3608 = vld [vmem:[%s2877 + $0x20] sm:$0x1]
      %v3609 = vld [vmem:[%s2877 + $0x24] sm:$0xe]
      %v3610 = vld [vmem:[%s2877 + $0x28] sm:$0xf]
      %v3611 = vld [vmem:[%s2877 + $0x2c] sm:$0x1]
      %v3612 = vld [vmem:[%s2877 + $0x30] sm:$0xe]
      %v3613 = vld [vmem:[%s2877 + $0x34] sm:$0xf]
      %v3614 = vld [vmem:[%s2877 + $0x38] sm:$0x1]
      %v3615 = vld [vmem:[%s2877 + $0x3c] sm:$0xe]
      %v3616 = vld [vmem:[%s2877 + $0x40] sm:$0xf]
      %v3617 = vld [vmem:[%s2877 + $0x44] sm:$0x1]
      %v3618 = vld [vmem:[%s2877 + $0x48] sm:$0xe]
      %v3619 = vld [vmem:[%s2877 + $0x4c] sm:$0xf]
      %v3620 = vld [vmem:[%s2877 + $0x50] sm:$0x1]
      %v3621 = vld [vmem:[%s2877 + $0x54] sm:$0xe]
      %v3622 = vld [vmem:[%s2877 + $0x58] sm:$0xf]
      %v3623 = vld [vmem:[%s2877 + $0x5c] sm:$0x1]
      %v3624 = vld [vmem:[%s2877 + $0x60] sm:$0xe]
      %v3625 = vld [vmem:[%s2877 + $0x64] sm:$0xf]
      %v3626 = vld [vmem:[%s2877 + $0x68] sm:$0x1]
      %v3627 = vld [vmem:[%s2877 + $0x6c] sm:$0xe]
      %v3628 = vld [vmem:[%s2877 + $0x70] sm:$0xf]
      %v3629 = vld [vmem:[%s2877 + $0x74] sm:$0x1]
      %v3630 = vld [vmem:[%s2877 + $0x78] sm:$0xe]
      %v3631 = vld [vmem:[%s2877 + $0x7c] sm:$0xf]
      %v3632 = vld [vmem:[%s2877 + $0x80] sm:$0x1]
      %v3633 = vld [vmem:[%s2877 + $0x84] sm:$0xe]
      %v3634 = vld [vmem:[%s2877 + $0x88] sm:$0xf]
      %v3635 = vld [vmem:[%s2877 + $0x8c] sm:$0x1]
      %v3636 = vld [vmem:[%s2877 + $0x90] sm:$0xe]
      %v3637 = vld [vmem:[%s2877 + $0x94] sm:$0xf]
      %v3638 = vld [vmem:[%s2877 + $0x98] sm:$0x1]
      %v3639 = vld [vmem:[%s2877 + $0x9c] sm:$0xe]
      %v3640 = vld [vmem:[%s2877 + $0xa0] sm:$0xf]
      %v3641 = vld [vmem:[%s2877 + $0xa4] sm:$0x1]
      %v3642 = vld [vmem:[%s2877 + $0xa8] sm:$0xe]
      %v3643 = vld [vmem:[%s2877 + $0xac] sm:$0xf]
      %v3644 = vld [vmem:[%s2877 + $0xb0] sm:$0x1]
      %v3645 = vld [vmem:[%s2877 + $0xb4] sm:$0xe]
      %v3646 = vld [vmem:[%s2877 + $0xb8] sm:$0xf]
      %v3647 = vld [vmem:[%s2877 + $0xbc] sm:$0x1]
      %v3696 = vrot.slane %v3600, 5
      %v3697 = vrot.slane %v3696, 4
      %v3698 = vrot.slane %v3601, 5
      %v3699 = vsel %vm1608, %v3697, %v3698
      %v3700 = vrot.slane %v3698, 4
      %v3701 = vrot.slane %v3602, 5
      %v3702 = vsel %vm1608, %v3700, %v3701
      %v3703 = vrot.slane %v3603, 5
      %v3704 = vrot.slane %v3703, 4
      %v3705 = vrot.slane %v3604, 5
      %v3706 = vsel %vm1608, %v3704, %v3705
      %v3707 = vrot.slane %v3705, 4
      %v3708 = vrot.slane %v3605, 5
      %v3709 = vsel %vm1608, %v3707, %v3708
      %v3710 = vrot.slane %v3606, 5
      %v3711 = vrot.slane %v3710, 4
      %v3712 = vrot.slane %v3607, 5
      %v3713 = vsel %vm1608, %v3711, %v3712
      %v3714 = vrot.slane %v3712, 4
      %v3715 = vrot.slane %v3608, 5
      %v3716 = vsel %vm1608, %v3714, %v3715
      %v3717 = vrot.slane %v3609, 5
      %v3718 = vrot.slane %v3717, 4
      %v3719 = vrot.slane %v3610, 5
      %v3720 = vsel %vm1608, %v3718, %v3719
      %v3721 = vrot.slane %v3719, 4
      %v3722 = vrot.slane %v3611, 5
      %v3723 = vsel %vm1608, %v3721, %v3722
      %v3724 = vrot.slane %v3612, 5
      %v3725 = vrot.slane %v3724, 4
      %v3726 = vrot.slane %v3613, 5
      %v3727 = vsel %vm1608, %v3725, %v3726
      %v3728 = vrot.slane %v3726, 4
      %v3729 = vrot.slane %v3614, 5
      %v3730 = vsel %vm1608, %v3728, %v3729
      %v3731 = vrot.slane %v3615, 5
      %v3732 = vrot.slane %v3731, 4
      %v3733 = vrot.slane %v3616, 5
      %v3734 = vsel %vm1608, %v3732, %v3733
      %v3735 = vrot.slane %v3733, 4
      %v3736 = vrot.slane %v3617, 5
      %v3737 = vsel %vm1608, %v3735, %v3736
      %v3738 = vrot.slane %v3618, 5
      %v3739 = vrot.slane %v3738, 4
      %v3740 = vrot.slane %v3619, 5
      %v3741 = vsel %vm1608, %v3739, %v3740
      %v3742 = vrot.slane %v3740, 4
      %v3743 = vrot.slane %v3620, 5
      %v3744 = vsel %vm1608, %v3742, %v3743
      %v3745 = vrot.slane %v3621, 5
      %v3746 = vrot.slane %v3745, 4
      %v3747 = vrot.slane %v3622, 5
      %v3748 = vsel %vm1608, %v3746, %v3747
      %v3749 = vrot.slane %v3747, 4
      %v3750 = vrot.slane %v3623, 5
      %v3751 = vsel %vm1608, %v3749, %v3750
      %v3752 = vrot.slane %v3624, 5
      %v3753 = vrot.slane %v3752, 4
      %v3754 = vrot.slane %v3625, 5
      %v3755 = vsel %vm1608, %v3753, %v3754
      %v3756 = vrot.slane %v3754, 4
      %v3757 = vrot.slane %v3626, 5
      %v3758 = vsel %vm1608, %v3756, %v3757
      %v3759 = vrot.slane %v3627, 5
      %v3760 = vrot.slane %v3759, 4
      %v3761 = vrot.slane %v3628, 5
      %v3762 = vsel %vm1608, %v3760, %v3761
      %v3763 = vrot.slane %v3761, 4
      %v3764 = vrot.slane %v3629, 5
      %v3765 = vsel %vm1608, %v3763, %v3764
      %v3766 = vrot.slane %v3630, 5
      %v3767 = vrot.slane %v3766, 4
      %v3768 = vrot.slane %v3631, 5
      %v3769 = vsel %vm1608, %v3767, %v3768
      %v3770 = vrot.slane %v3768, 4
      %v3771 = vrot.slane %v3632, 5
      %v3772 = vsel %vm1608, %v3770, %v3771
      %v3773 = vrot.slane %v3633, 5
      %v3774 = vrot.slane %v3773, 4
      %v3775 = vrot.slane %v3634, 5
      %v3776 = vsel %vm1608, %v3774, %v3775
      %v3777 = vrot.slane %v3775, 4
      %v3778 = vrot.slane %v3635, 5
      %v3779 = vsel %vm1608, %v3777, %v3778
      %v3780 = vrot.slane %v3636, 5
      %v3781 = vrot.slane %v3780, 4
      %v3782 = vrot.slane %v3637, 5
      %v3783 = vsel %vm1608, %v3781, %v3782
      %v3784 = vrot.slane %v3782, 4
      %v3785 = vrot.slane %v3638, 5
      %v3786 = vsel %vm1608, %v3784, %v3785
      %v3787 = vrot.slane %v3639, 5
      %v3788 = vrot.slane %v3787, 4
      %v3789 = vrot.slane %v3640, 5
      %v3790 = vsel %vm1608, %v3788, %v3789
      %v3791 = vrot.slane %v3789, 4
      %v3792 = vrot.slane %v3641, 5
      %v3793 = vsel %vm1608, %v3791, %v3792
      %v3794 = vrot.slane %v3642, 5
      %v3795 = vrot.slane %v3794, 4
      %v3796 = vrot.slane %v3643, 5
      %v3797 = vsel %vm1608, %v3795, %v3796
      %v3798 = vrot.slane %v3796, 4
      %v3799 = vrot.slane %v3644, 5
      %v3800 = vsel %vm1608, %v3798, %v3799
      %v3801 = vrot.slane %v3645, 5
      %v3802 = vrot.slane %v3801, 4
      %v3803 = vrot.slane %v3646, 5
      %v3804 = vsel %vm1608, %v3802, %v3803
      %v3805 = vrot.slane %v3803, 4
      %v3806 = vrot.slane %v3647, 5
      %v3807 = vsel %vm1608, %v3805, %v3806
      %v3808 = vunpack.c.l.b16 %v3699
      %v3809 = vunpack.c.l.b16 %v3702
      %v3810 = vunpack.c.l.b16 %v3706
      %v3811 = vunpack.c.l.b16 %v3709
      %v3812 = vunpack.c.l.b16 %v3713
      %v3813 = vunpack.c.l.b16 %v3716
      %v3814 = vunpack.c.l.b16 %v3720
      %v3815 = vunpack.c.l.b16 %v3723
      %v3816 = vunpack.c.l.b16 %v3727
      %v3817 = vunpack.c.l.b16 %v3730
      %v3818 = vunpack.c.l.b16 %v3734
      %v3819 = vunpack.c.l.b16 %v3737
      %v3820 = vunpack.c.l.b16 %v3741
      %v3821 = vunpack.c.l.b16 %v3744
      %v3822 = vunpack.c.l.b16 %v3748
      %v3823 = vunpack.c.l.b16 %v3751
      %v3824 = vunpack.c.l.b16 %v3755
      %v3825 = vunpack.c.l.b16 %v3758
      %v3826 = vunpack.c.l.b16 %v3762
      %v3827 = vunpack.c.l.b16 %v3765
      %v3828 = vunpack.c.l.b16 %v3769
      %v3829 = vunpack.c.l.b16 %v3772
      %v3830 = vunpack.c.l.b16 %v3776
      %v3831 = vunpack.c.l.b16 %v3779
      %v3832 = vunpack.c.l.b16 %v3783
      %v3833 = vunpack.c.l.b16 %v3786
      %v3834 = vunpack.c.l.b16 %v3790
      %v3835 = vunpack.c.l.b16 %v3793
      %v3836 = vunpack.c.l.b16 %v3797
      %v3837 = vunpack.c.l.b16 %v3800
      %v3838 = vunpack.c.l.b16 %v3804
      %v3839 = vunpack.c.l.b16 %v3807
      %v3840 = vpack.c.b16 %v3809, %v3808
      %v3841 = vpack.c.b16 %v3811, %v3810
      %v3842 = vpack.c.b16 %v3813, %v3812
      %v3843 = vpack.c.b16 %v3815, %v3814
      %v3844 = vpack.c.b16 %v3817, %v3816
      %v3845 = vpack.c.b16 %v3819, %v3818
      %v3846 = vpack.c.b16 %v3821, %v3820
      %v3847 = vpack.c.b16 %v3823, %v3822
      %v3848 = vpack.c.b16 %v3825, %v3824
      %v3849 = vpack.c.b16 %v3827, %v3826
      %v3850 = vpack.c.b16 %v3829, %v3828
      %v3851 = vpack.c.b16 %v3831, %v3830
      %v3852 = vpack.c.b16 %v3833, %v3832
      %v3853 = vpack.c.b16 %v3835, %v3834
      %v3854 = vpack.c.b16 %v3837, %v3836
      %v3855 = vpack.c.b16 %v3839, %v3838
      %3856 = vrot.lane.b32.xlu0 %v3840, 64
      %v3857 = vpop.permute.xlu0 %3856
      %3858 = vrot.lane.b32.xlu0 %v3841, 64
      %v3859 = vpop.permute.xlu0 %3858
      %3860 = vrot.lane.b32.xlu0 %v3842, 64
      %v3861 = vpop.permute.xlu0 %3860
      %3862 = vrot.lane.b32.xlu0 %v3843, 64
      %v3863 = vpop.permute.xlu0 %3862
      %3864 = vrot.lane.b32.xlu0 %v3844, 64
      %v3865 = vpop.permute.xlu0 %3864
      %3866 = vrot.lane.b32.xlu0 %v3845, 64
      %v3867 = vpop.permute.xlu0 %3866
      %3868 = vrot.lane.b32.xlu0 %v3846, 64
      %v3869 = vpop.permute.xlu0 %3868
      %3870 = vrot.lane.b32.xlu0 %v3847, 64
      %v3871 = vpop.permute.xlu0 %3870
      %3872 = vrot.lane.b32.xlu0 %v3848, 64
      %v3873 = vpop.permute.xlu0 %3872
      %3874 = vrot.lane.b32.xlu0 %v3849, 64
      %v3875 = vpop.permute.xlu0 %3874
      %3876 = vrot.lane.b32.xlu0 %v3850, 64
      %v3877 = vpop.permute.xlu0 %3876
      %3878 = vrot.lane.b32.xlu0 %v3851, 64
      %v3879 = vpop.permute.xlu0 %3878
      %3880 = vrot.lane.b32.xlu0 %v3852, 64
      %v3881 = vpop.permute.xlu0 %3880
      %3882 = vrot.lane.b32.xlu0 %v3853, 64
      %v3883 = vpop.permute.xlu0 %3882
      %3884 = vrot.lane.b32.xlu0 %v3854, 64
      %v3885 = vpop.permute.xlu0 %3884
      %3886 = vrot.lane.b32.xlu0 %v3855, 64
      %v3887 = vpop.permute.xlu0 %3886
      %vm3904 = vcmask 589312
      %3905 = vst.msk [vmem:[#allocation4] sm:$0xff] %vm3904, %v3857
      %3906 = vst.msk [vmem:[#allocation4 + $0x8] sm:$0xff] %vm3904, %v3859
      %3907 = vst.msk [vmem:[#allocation4 + $0x10] sm:$0xff] %vm3904, %v3861
      %3908 = vst.msk [vmem:[#allocation4 + $0x18] sm:$0xff] %vm3904, %v3863
      %3909 = vst.msk [vmem:[#allocation4 + $0x20] sm:$0xff] %vm3904, %v3865
      %3910 = vst.msk [vmem:[#allocation4 + $0x28] sm:$0xff] %vm3904, %v3867
      %3911 = vst.msk [vmem:[#allocation4 + $0x30] sm:$0xff] %vm3904, %v3869
      %3912 = vst.msk [vmem:[#allocation4 + $0x38] sm:$0xff] %vm3904, %v3871
      %3913 = vst.msk [vmem:[#allocation4 + $0x40] sm:$0xff] %vm3904, %v3873
      %3914 = vst.msk [vmem:[#allocation4 + $0x48] sm:$0xff] %vm3904, %v3875
      %3915 = vst.msk [vmem:[#allocation4 + $0x50] sm:$0xff] %vm3904, %v3877
      %3916 = vst.msk [vmem:[#allocation4 + $0x58] sm:$0xff] %vm3904, %v3879
      %3917 = vst.msk [vmem:[#allocation4 + $0x60] sm:$0xff] %vm3904, %v3881
      %3918 = vst.msk [vmem:[#allocation4 + $0x68] sm:$0xff] %vm3904, %v3883
      %3919 = vst.msk [vmem:[#allocation4 + $0x70] sm:$0xff] %vm3904, %v3885
      %3920 = vst.msk [vmem:[#allocation4 + $0x78] sm:$0xff] %vm3904, %v3887
      %v3921 = vld [vmem:[#allocation4] sm:$0xff]
      %v3922 = vld [vmem:[#allocation4 + $0x8] sm:$0xff]
      %v3923 = vld [vmem:[#allocation4 + $0x10] sm:$0xff]
      %v3924 = vld [vmem:[#allocation4 + $0x18] sm:$0xff]
      %v3925 = vld [vmem:[#allocation4 + $0x20] sm:$0xff]
      %v3926 = vld [vmem:[#allocation4 + $0x28] sm:$0xff]
      %v3927 = vld [vmem:[#allocation4 + $0x30] sm:$0xff]
      %v3928 = vld [vmem:[#allocation4 + $0x38] sm:$0xff]
      %v3929 = vld [vmem:[#allocation4 + $0x40] sm:$0xff]
      %v3930 = vld [vmem:[#allocation4 + $0x48] sm:$0xff]
      %v3931 = vld [vmem:[#allocation4 + $0x50] sm:$0xff]
      %v3932 = vld [vmem:[#allocation4 + $0x58] sm:$0xff]
      %v3933 = vld [vmem:[#allocation4 + $0x60] sm:$0xff]
      %v3934 = vld [vmem:[#allocation4 + $0x68] sm:$0xff]
      %v3935 = vld [vmem:[#allocation4 + $0x70] sm:$0xff]
      %v3936 = vld [vmem:[#allocation4 + $0x78] sm:$0xff]
      %v3937 = vld [vmem:[%s1] sm:$0xf]
      %v3938 = vld [vmem:[%s1 + $0x4] sm:$0xf]
      %v3939 = vld [vmem:[%s1 + $0x8] sm:$0xf]
      %v3940 = vld [vmem:[%s1 + $0xc] sm:$0xf]
      %v3941 = vld [vmem:[%s1 + $0x10] sm:$0xf]
      %v3942 = vld [vmem:[%s1 + $0x14] sm:$0xf]
      %v3943 = vld [vmem:[%s1 + $0x18] sm:$0xf]
      %v3944 = vld [vmem:[%s1 + $0x1c] sm:$0xf]
      %v3945 = vld [vmem:[%s1 + $0x20] sm:$0xf]
      %v3946 = vld [vmem:[%s2] sm:$0x1]
      %v3948 = vlaneseq
      %v3949 = vshrl.u32 %v3948, 7
      %v3950 = vsub.s32 0, %v3949
      %v3951 = vrot.slane %v3946, %v3950
      %v3962 = vunpack.c.l.b16 %v3937
      %v3963 = vunpack.c.l.b16 %v3938
      %v3964 = vunpack.c.l.b16 %v3939
      %v3965 = vunpack.c.l.b16 %v3940
      %v3966 = vunpack.c.l.b16 %v3941
      %v3967 = vunpack.c.l.b16 %v3942
      %v3968 = vunpack.c.l.b16 %v3943
      %v3969 = vunpack.c.l.b16 %v3944
      %v3970 = vunpack.c.l.b16 %v3945
      %v3971 = vpack.c.b16 %v3963, %v3962
      %v3972 = vpack.c.b16 %v3965, %v3964
      %v3973 = vpack.c.b16 %v3967, %v3966
      %v3974 = vpack.c.b16 %v3969, %v3968
      %v3975 = vpack.c.b16 %v3970, %v3970
      %vm3980 = vcmask 588800
      %v3982 = vsel %vm3980, %v3921, 0
      %v3985 = vsel %vm3980, %v3922, 0
      %v3988 = vsel %vm3980, %v3923, 0
      %v3991 = vsel %vm3980, %v3924, 0
      %v3994 = vsel %vm3980, %v3925, 0
      %v3997 = vsel %vm3980, %v3926, 0
      %v4000 = vsel %vm3980, %v3927, 0
      %v4003 = vsel %vm3980, %v3928, 0
      %v4006 = vsel %vm3980, %v3929, 0
      %v4009 = vsel %vm3980, %v3930, 0
      %v4012 = vsel %vm3980, %v3931, 0
      %v4015 = vsel %vm3980, %v3932, 0
      %v4018 = vsel %vm3980, %v3933, 0
      %v4021 = vsel %vm3980, %v3934, 0
      %v4024 = vsel %vm3980, %v3935, 0
      %v4027 = vsel %vm3980, %v3936, 0
      %vm4029 = vcmask 1043456
      %v4031 = vsel %vm4029, %v3975, 0
      %4033 = vmatprep.subr.bf16.mxu0 0
      %4034 = vmatpush1.bf16.msra.mxu0 %v3971
      %4035 = vmatprep.subr.bf16.mxu0 0
      %4036 = vmatpush1.bf16.msra.mxu0 %v3972
      %4037 = vmatprep.subr.bf16.mxu0 0
      %4038 = vmatpush1.bf16.msra.mxu0 %v3973
      %4039 = vmatprep.subr.bf16.mxu0 0
      %4040 = vmatpush1.bf16.msra.mxu0 %v3974
      %4041 = vmatprep.subr.bf16.mxu0 0
      %4042 = vmatpush1.bf16.msra.mxu0 %v4031
      %4043 = vmatprep.subr.bf16.mxu0 0
      %4044 = vmatpush1.bf16.msra.mxu0 0
      %4045 = vmatprep.subr.bf16.mxu0 0
      %4046 = vmatpush1.bf16.msra.mxu0 0
      %4047 = vmatprep.subr.bf16.mxu0 0
      %4048 = vmatpush1.bf16.msra.mxu0 0
      %4049 = vmatprep.subr.bf16.mxu0 0
      %4050 = vmatpush1.bf16.msra.mxu0 0
      %4051 = vmatprep.subr.bf16.mxu0 0
      %4052 = vmatpush1.bf16.msra.mxu0 0
      %4053 = vmatprep.subr.bf16.mxu0 0
      %4054 = vmatpush1.bf16.msra.mxu0 0
      %4055 = vmatprep.subr.bf16.mxu0 0
      %4056 = vmatpush1.bf16.msra.mxu0 0
      %4057 = vmatprep.subr.bf16.mxu0 0
      %4058 = vmatpush1.bf16.msra.mxu0 0
      %4059 = vmatprep.subr.bf16.mxu0 0
      %4060 = vmatpush1.bf16.msra.mxu0 0
      %4061 = vmatprep.subr.bf16.mxu0 0
      %4062 = vmatpush1.bf16.msra.mxu0 0
      %4063 = vmatprep.subr.bf16.mxu0 0
      %4064 = vmatpush1.bf16.msra.mxu0 0
      %4065 = vmatprep.mubr.bf16.mxu0 0
      %4066 = vmatmul.mubr.bf16.gmra.mrb[0].mxu0 %v3982
      %v4067 = vpop.f32.mrb[0].mxu0
      %v4068 = vadd.f32 %v3951, %v4067
      %v4069 = vpop.f32.mrb[0].mxu0
      %v4070 = vpop.f32.mrb[0].mxu0
      %v4071 = vadd.f32 %v3951, %v4070
      %v4072 = vpop.f32.mrb[0].mxu0
      %4073 = vmatprep.mubr.bf16.mxu0 0
      %4074 = vmatmul.mubr.bf16.gmra.mrb[0].mxu0 %v3985
      %v4075 = vpop.f32.mrb[0].mxu0
      %v4076 = vadd.f32 %v3951, %v4075
      %v4077 = vpop.f32.mrb[0].mxu0
      %v4078 = vpop.f32.mrb[0].mxu0
      %v4079 = vadd.f32 %v3951, %v4078
      %v4080 = vpop.f32.mrb[0].mxu0
      %4081 = vmatprep.mubr.bf16.mxu0 0
      %4082 = vmatmul.mubr.bf16.gmra.mrb[0].mxu0 %v3988
      %v4083 = vpop.f32.mrb[0].mxu0
      %v4084 = vadd.f32 %v3951, %v4083
      %v4085 = vpop.f32.mrb[0].mxu0
      %v4086 = vpop.f32.mrb[0].mxu0
      %v4087 = vadd.f32 %v3951, %v4086
      %v4088 = vpop.f32.mrb[0].mxu0
      %4089 = vmatprep.mubr.bf16.mxu0 0
      %4090 = vmatmul.mubr.bf16.gmra.mrb[0].mxu0 %v3991
      %v4091 = vpop.f32.mrb[0].mxu0
      %v4092 = vadd.f32 %v3951, %v4091
      %v4093 = vpop.f32.mrb[0].mxu0
      %v4094 = vpop.f32.mrb[0].mxu0
      %v4095 = vadd.f32 %v3951, %v4094
      %v4096 = vpop.f32.mrb[0].mxu0
      %4097 = vmatprep.mubr.bf16.mxu0 0
      %4098 = vmatmul.mubr.bf16.gmra.mrb[0].mxu0 %v3994
      %v4099 = vpop.f32.mrb[0].mxu0
      %v4100 = vadd.f32 %v3951, %v4099
      %v4101 = vpop.f32.mrb[0].mxu0
      %v4102 = vpop.f32.mrb[0].mxu0
      %v4103 = vadd.f32 %v3951, %v4102
      %v4104 = vpop.f32.mrb[0].mxu0
      %4105 = vmatprep.mubr.bf16.mxu0 0
      %4106 = vmatmul.mubr.bf16.gmra.mrb[0].mxu0 %v3997
      %v4107 = vpop.f32.mrb[0].mxu0
      %v4108 = vadd.f32 %v3951, %v4107
      %v4109 = vpop.f32.mrb[0].mxu0
      %v4110 = vpop.f32.mrb[0].mxu0
      %v4111 = vadd.f32 %v3951, %v4110
      %v4112 = vpop.f32.mrb[0].mxu0
      %4113 = vmatprep.mubr.bf16.mxu0 0
      %4114 = vmatmul.mubr.bf16.gmra.mrb[0].mxu0 %v4000
      %v4115 = vpop.f32.mrb[0].mxu0
      %v4116 = vadd.f32 %v3951, %v4115
      %v4117 = vpop.f32.mrb[0].mxu0
      %v4118 = vpop.f32.mrb[0].mxu0
      %v4119 = vadd.f32 %v3951, %v4118
      %v4120 = vpop.f32.mrb[0].mxu0
      %4121 = vmatprep.mubr.bf16.mxu0 0
      %4122 = vmatmul.mubr.bf16.gmra.mrb[0].mxu0 %v4003
      %v4123 = vpop.f32.mrb[0].mxu0
      %v4124 = vadd.f32 %v3951, %v4123
      %v4125 = vpop.f32.mrb[0].mxu0
      %v4126 = vpop.f32.mrb[0].mxu0
      %v4127 = vadd.f32 %v3951, %v4126
      %v4128 = vpop.f32.mrb[0].mxu0
      %4129 = vmatprep.mubr.bf16.mxu0 0
      %4130 = vmatmul.mubr.bf16.gmra.mrb[0].mxu0 %v4006
      %v4131 = vpop.f32.mrb[0].mxu0
      %v4132 = vadd.f32 %v3951, %v4131
      %v4133 = vpop.f32.mrb[0].mxu0
      %v4134 = vpop.f32.mrb[0].mxu0
      %v4135 = vadd.f32 %v3951, %v4134
      %v4136 = vpop.f32.mrb[0].mxu0
      %4137 = vmatprep.mubr.bf16.mxu0 0
      %4138 = vmatmul.mubr.bf16.gmra.mrb[0].mxu0 %v4009
      %v4139 = vpop.f32.mrb[0].mxu0
      %v4140 = vadd.f32 %v3951, %v4139
      %v4141 = vpop.f32.mrb[0].mxu0
      %v4142 = vpop.f32.mrb[0].mxu0
      %v4143 = vadd.f32 %v3951, %v4142
      %v4144 = vpop.f32.mrb[0].mxu0
      %4145 = vmatprep.mubr.bf16.mxu0 0
      %4146 = vmatmul.mubr.bf16.gmra.mrb[0].mxu0 %v4012
      %v4147 = vpop.f32.mrb[0].mxu0
      %v4148 = vadd.f32 %v3951, %v4147
      %v4149 = vpop.f32.mrb[0].mxu0
      %v4150 = vpop.f32.mrb[0].mxu0
      %v4151 = vadd.f32 %v3951, %v4150
      %v4152 = vpop.f32.mrb[0].mxu0
      %4153 = vmatprep.mubr.bf16.mxu0 0
      %4154 = vmatmul.mubr.bf16.gmra.mrb[0].mxu0 %v4015
      %v4155 = vpop.f32.mrb[0].mxu0
      %v4156 = vadd.f32 %v3951, %v4155
      %v4157 = vpop.f32.mrb[0].mxu0
      %v4158 = vpop.f32.mrb[0].mxu0
      %v4159 = vadd.f32 %v3951, %v4158
      %v4160 = vpop.f32.mrb[0].mxu0
      %4161 = vmatprep.mubr.bf16.mxu0 0
      %4162 = vmatmul.mubr.bf16.gmra.mrb[0].mxu0 %v4018
      %v4163 = vpop.f32.mrb[0].mxu0
      %v4164 = vadd.f32 %v3951, %v4163
      %v4165 = vpop.f32.mrb[0].mxu0
      %v4166 = vpop.f32.mrb[0].mxu0
      %v4167 = vadd.f32 %v3951, %v4166
      %v4168 = vpop.f32.mrb[0].mxu0
      %4169 = vmatprep.mubr.bf16.mxu0 0
      %4170 = vmatmul.mubr.bf16.gmra.mrb[0].mxu0 %v4021
      %v4171 = vpop.f32.mrb[0].mxu0
      %v4172 = vadd.f32 %v3951, %v4171
      %v4173 = vpop.f32.mrb[0].mxu0
      %v4174 = vpop.f32.mrb[0].mxu0
      %v4175 = vadd.f32 %v3951, %v4174
      %v4176 = vpop.f32.mrb[0].mxu0
      %4177 = vmatprep.mubr.bf16.mxu0 0
      %4178 = vmatmul.mubr.bf16.gmra.mrb[0].mxu0 %v4024
      %v4179 = vpop.f32.mrb[0].mxu0
      %v4180 = vadd.f32 %v3951, %v4179
      %v4181 = vpop.f32.mrb[0].mxu0
      %v4182 = vpop.f32.mrb[0].mxu0
      %v4183 = vadd.f32 %v3951, %v4182
      %v4184 = vpop.f32.mrb[0].mxu0
      %4185 = vmatprep.mubr.bf16.mxu0 0
      %4186 = vmatmul.mubr.bf16.gmra.mrb[0].mxu0 %v4027
      %v4187 = vpop.f32.mrb[0].mxu0
      %v4188 = vadd.f32 %v3951, %v4187
      %v4189 = vpop.f32.mrb[0].mxu0
      %v4190 = vpop.f32.mrb[0].mxu0
      %v4191 = vadd.f32 %v3951, %v4190
      %v4192 = vpop.f32.mrb[0].mxu0
      %4193 = vdwg.mxu0
      %v4194 = vmax.f32 %v4068, 0.0
      %v4195 = vmax.f32 %v4071, 0.0
      %v4196 = vmax.f32 %v4076, 0.0
      %v4197 = vmax.f32 %v4079, 0.0
      %v4198 = vmax.f32 %v4084, 0.0
      %v4199 = vmax.f32 %v4087, 0.0
      %v4200 = vmax.f32 %v4092, 0.0
      %v4201 = vmax.f32 %v4095, 0.0
      %v4202 = vmax.f32 %v4100, 0.0
      %v4203 = vmax.f32 %v4103, 0.0
      %v4204 = vmax.f32 %v4108, 0.0
      %v4205 = vmax.f32 %v4111, 0.0
      %v4206 = vmax.f32 %v4116, 0.0
      %v4207 = vmax.f32 %v4119, 0.0
      %v4208 = vmax.f32 %v4124, 0.0
      %v4209 = vmax.f32 %v4127, 0.0
      %v4210 = vmax.f32 %v4132, 0.0
      %v4211 = vmax.f32 %v4135, 0.0
      %v4212 = vmax.f32 %v4140, 0.0
      %v4213 = vmax.f32 %v4143, 0.0
      %v4214 = vmax.f32 %v4148, 0.0
      %v4215 = vmax.f32 %v4151, 0.0
      %v4216 = vmax.f32 %v4156, 0.0
      %v4217 = vmax.f32 %v4159, 0.0
      %v4218 = vmax.f32 %v4164, 0.0
      %v4219 = vmax.f32 %v4167, 0.0
      %v4220 = vmax.f32 %v4172, 0.0
      %v4221 = vmax.f32 %v4175, 0.0
      %v4222 = vmax.f32 %v4180, 0.0
      %v4223 = vmax.f32 %v4183, 0.0
      %v4224 = vmax.f32 %v4188, 0.0
      %v4225 = vmax.f32 %v4191, 0.0
      %4226 = vst.msk [vmem:[#allocation3] sm:$0xf] %vm258, 0
      %4227 = vst.msk [vmem:[#allocation3 + $0x4] sm:$0xf] %vm258, 0
      %4228 = vst.msk [vmem:[#allocation3 + $0x8] sm:$0x1] %vm261, 0
      %s4229 = scalar_lea.vmem [#allocation3], 204
      %4230 = vst.msk [vmem:[%s4229] sm:$0xf] %vm258, 0
      %4231 = vst.msk [vmem:[%s4229 + $0x4] sm:$0xf] %vm258, 0
      %4232 = vst.msk [vmem:[%s4229 + $0x8] sm:$0x1] %vm261, 0
      %v4233 = vld [vmem:[#allocation3] sm:$0x1]
      %v4234 = vsel %vm269, 0, %v4233
      %4235 = vst [vmem:[#allocation3] sm:$0x1] %v4234
      %v4236 = vld [vmem:[#allocation3 + $0xc] sm:$0x1]
      %v4237 = vsel %vm269, 0, %v4236
      %4238 = vst [vmem:[#allocation3 + $0xc] sm:$0x1] %v4237
      %v4239 = vld [vmem:[#allocation3 + $0x18] sm:$0x1]
      %v4240 = vsel %vm269, 0, %v4239
      %4241 = vst [vmem:[#allocation3 + $0x18] sm:$0x1] %v4240
      %v4242 = vld [vmem:[#allocation3 + $0x24] sm:$0x1]
      %v4243 = vsel %vm269, 0, %v4242
      %4244 = vst [vmem:[#allocation3 + $0x24] sm:$0x1] %v4243
      %v4245 = vld [vmem:[#allocation3 + $0x30] sm:$0x1]
      %v4246 = vsel %vm269, 0, %v4245
      %4247 = vst [vmem:[#allocation3 + $0x30] sm:$0x1] %v4246
      %v4248 = vld [vmem:[#allocation3 + $0x3c] sm:$0x1]
      %v4249 = vsel %vm269, 0, %v4248
      %4250 = vst [vmem:[#allocation3 + $0x3c] sm:$0x1] %v4249
      %v4251 = vld [vmem:[#allocation3 + $0x48] sm:$0x1]
      %v4252 = vsel %vm269, 0, %v4251
      %4253 = vst [vmem:[#allocation3 + $0x48] sm:$0x1] %v4252
      %v4254 = vld [vmem:[#allocation3 + $0x54] sm:$0x1]
      %v4255 = vsel %vm269, 0, %v4254
      %4256 = vst [vmem:[#allocation3 + $0x54] sm:$0x1] %v4255
      %v4257 = vld [vmem:[#allocation3 + $0x60] sm:$0x1]
      %v4258 = vsel %vm269, 0, %v4257
      %4259 = vst [vmem:[#allocation3 + $0x60] sm:$0x1] %v4258
      %v4260 = vld [vmem:[#allocation3 + $0x6c] sm:$0x1]
      %v4261 = vsel %vm269, 0, %v4260
      %4262 = vst [vmem:[#allocation3 + $0x6c] sm:$0x1] %v4261
      %v4263 = vld [vmem:[#allocation3 + $0x78] sm:$0x1]
      %v4264 = vsel %vm269, 0, %v4263
      %4265 = vst [vmem:[#allocation3 + $0x78] sm:$0x1] %v4264
      %v4266 = vld [vmem:[#allocation3 + $0x84] sm:$0x1]
      %v4267 = vsel %vm269, 0, %v4266
      %4268 = vst [vmem:[#allocation3 + $0x84] sm:$0x1] %v4267
      %v4269 = vld [vmem:[#allocation3 + $0x90] sm:$0x1]
      %v4270 = vsel %vm269, 0, %v4269
      %4271 = vst [vmem:[#allocation3 + $0x90] sm:$0x1] %v4270
      %v4272 = vld [vmem:[#allocation3 + $0x9c] sm:$0x1]
      %v4273 = vsel %vm269, 0, %v4272
      %4274 = vst [vmem:[#allocation3 + $0x9c] sm:$0x1] %v4273
      %v4275 = vld [vmem:[#allocation3 + $0xa8] sm:$0x1]
      %v4276 = vsel %vm269, 0, %v4275
      %4277 = vst [vmem:[#allocation3 + $0xa8] sm:$0x1] %v4276
      %v4278 = vld [vmem:[#allocation3 + $0xb4] sm:$0x1]
      %v4279 = vsel %vm269, 0, %v4278
      %4280 = vst [vmem:[#allocation3 + $0xb4] sm:$0x1] %v4279
      %v4281 = vld [vmem:[#allocation3 + $0xc0] sm:$0x1]
      %v4282 = vsel %vm269, 0, %v4281
      %4283 = vst [vmem:[#allocation3 + $0xc0] sm:$0x1] %v4282
      %v4284 = vld [vmem:[#allocation3 + $0xcc] sm:$0x1]
      %v4285 = vsel %vm269, 0, %v4284
      %4286 = vst [vmem:[#allocation3 + $0xcc] sm:$0x1] %v4285
      %v4287 = vld [vmem:[#allocation3 + $0x8] sm:$0x1]
      %v4288 = vsel %vm325, 0, %v4287
      %4289 = vst [vmem:[#allocation3 + $0x8] sm:$0x1] %v4288
      %v4290 = vld [vmem:[#allocation3 + $0x14] sm:$0x1]
      %v4291 = vsel %vm325, 0, %v4290
      %4292 = vst [vmem:[#allocation3 + $0x14] sm:$0x1] %v4291
      %v4293 = vld [vmem:[#allocation3 + $0x20] sm:$0x1]
      %v4294 = vsel %vm325, 0, %v4293
      %4295 = vst [vmem:[#allocation3 + $0x20] sm:$0x1] %v4294
      %v4296 = vld [vmem:[#allocation3 + $0x2c] sm:$0x1]
      %v4297 = vsel %vm325, 0, %v4296
      %4298 = vst [vmem:[#allocation3 + $0x2c] sm:$0x1] %v4297
      %v4299 = vld [vmem:[#allocation3 + $0x38] sm:$0x1]
      %v4300 = vsel %vm325, 0, %v4299
      %4301 = vst [vmem:[#allocation3 + $0x38] sm:$0x1] %v4300
      %v4302 = vld [vmem:[#allocation3 + $0x44] sm:$0x1]
      %v4303 = vsel %vm325, 0, %v4302
      %4304 = vst [vmem:[#allocation3 + $0x44] sm:$0x1] %v4303
      %v4305 = vld [vmem:[#allocation3 + $0x50] sm:$0x1]
      %v4306 = vsel %vm325, 0, %v4305
      %4307 = vst [vmem:[#allocation3 + $0x50] sm:$0x1] %v4306
      %v4308 = vld [vmem:[#allocation3 + $0x5c] sm:$0x1]
      %v4309 = vsel %vm325, 0, %v4308
      %4310 = vst [vmem:[#allocation3 + $0x5c] sm:$0x1] %v4309
      %v4311 = vld [vmem:[#allocation3 + $0x68] sm:$0x1]
      %v4312 = vsel %vm325, 0, %v4311
      %4313 = vst [vmem:[#allocation3 + $0x68] sm:$0x1] %v4312
      %v4314 = vld [vmem:[#allocation3 + $0x74] sm:$0x1]
      %v4315 = vsel %vm325, 0, %v4314
      %4316 = vst [vmem:[#allocation3 + $0x74] sm:$0x1] %v4315
      %v4317 = vld [vmem:[#allocation3 + $0x80] sm:$0x1]
      %v4318 = vsel %vm325, 0, %v4317
      %4319 = vst [vmem:[#allocation3 + $0x80] sm:$0x1] %v4318
      %v4320 = vld [vmem:[#allocation3 + $0x8c] sm:$0x1]
      %v4321 = vsel %vm325, 0, %v4320
      %4322 = vst [vmem:[#allocation3 + $0x8c] sm:$0x1] %v4321
      %v4323 = vld [vmem:[#allocation3 + $0x98] sm:$0x1]
      %v4324 = vsel %vm325, 0, %v4323
      %4325 = vst [vmem:[#allocation3 + $0x98] sm:$0x1] %v4324
      %v4326 = vld [vmem:[#allocation3 + $0xa4] sm:$0x1]
      %v4327 = vsel %vm325, 0, %v4326
      %4328 = vst [vmem:[#allocation3 + $0xa4] sm:$0x1] %v4327
      %v4329 = vld [vmem:[#allocation3 + $0xb0] sm:$0x1]
      %v4330 = vsel %vm325, 0, %v4329
      %4331 = vst [vmem:[#allocation3 + $0xb0] sm:$0x1] %v4330
      %v4332 = vld [vmem:[#allocation3 + $0xbc] sm:$0x1]
      %v4333 = vsel %vm325, 0, %v4332
      %4334 = vst [vmem:[#allocation3 + $0xbc] sm:$0x1] %v4333
      %v4335 = vld [vmem:[#allocation3 + $0xc8] sm:$0x1]
      %v4336 = vsel %vm325, 0, %v4335
      %4337 = vst [vmem:[#allocation3 + $0xc8] sm:$0x1] %v4336
      %v4338 = vld [vmem:[#allocation3 + $0xd4] sm:$0x1]
      %v4339 = vsel %vm325, 0, %v4338
      %4340 = vst [vmem:[#allocation3 + $0xd4] sm:$0x1] %v4339
      %v4341 = vpack.c.bf16 %v4195, %v4194
      %v4342 = vpack.c.bf16 %v4197, %v4196
      %v4343 = vpack.c.bf16 %v4199, %v4198
      %v4344 = vpack.c.bf16 %v4201, %v4200
      %v4345 = vpack.c.bf16 %v4203, %v4202
      %v4346 = vpack.c.bf16 %v4205, %v4204
      %v4347 = vpack.c.bf16 %v4207, %v4206
      %v4348 = vpack.c.bf16 %v4209, %v4208
      %v4349 = vpack.c.bf16 %v4211, %v4210
      %v4350 = vpack.c.bf16 %v4213, %v4212
      %v4351 = vpack.c.bf16 %v4215, %v4214
      %v4352 = vpack.c.bf16 %v4217, %v4216
      %v4353 = vpack.c.bf16 %v4219, %v4218
      %v4354 = vpack.c.bf16 %v4221, %v4220
      %v4355 = vpack.c.bf16 %v4223, %v4222
      %v4356 = vpack.c.bf16 %v4225, %v4224
      %v4373 = vunpack.c.l.b16 %v4341
      %v4374 = vunpack.c.h.b16 %v4341
      %v4375 = vunpack.c.l.b16 %v4342
      %v4376 = vunpack.c.h.b16 %v4342
      %v4377 = vunpack.c.l.b16 %v4343
      %v4378 = vunpack.c.h.b16 %v4343
      %v4379 = vunpack.c.l.b16 %v4344
      %v4380 = vunpack.c.h.b16 %v4344
      %v4381 = vunpack.c.l.b16 %v4345
      %v4382 = vunpack.c.h.b16 %v4345
      %v4383 = vunpack.c.l.b16 %v4346
      %v4384 = vunpack.c.h.b16 %v4346
      %v4385 = vunpack.c.l.b16 %v4347
      %v4386 = vunpack.c.h.b16 %v4347
      %v4387 = vunpack.c.l.b16 %v4348
      %v4388 = vunpack.c.h.b16 %v4348
      %v4389 = vunpack.c.l.b16 %v4349
      %v4390 = vunpack.c.h.b16 %v4349
      %v4391 = vunpack.c.l.b16 %v4350
      %v4392 = vunpack.c.h.b16 %v4350
      %v4393 = vunpack.c.l.b16 %v4351
      %v4394 = vunpack.c.h.b16 %v4351
      %v4395 = vunpack.c.l.b16 %v4352
      %v4396 = vunpack.c.h.b16 %v4352
      %v4397 = vunpack.c.l.b16 %v4353
      %v4398 = vunpack.c.h.b16 %v4353
      %v4399 = vunpack.c.l.b16 %v4354
      %v4400 = vunpack.c.h.b16 %v4354
      %v4401 = vunpack.c.l.b16 %v4355
      %v4402 = vunpack.c.h.b16 %v4355
      %v4403 = vunpack.c.l.b16 %v4356
      %v4404 = vunpack.c.h.b16 %v4356
      %v4405 = vpack.c.b16 %v4373, %v4373
      %v4406 = vpack.c.b16 %v4374, %v4374
      %v4407 = vpack.c.b16 %v4375, %v4375
      %v4408 = vpack.c.b16 %v4376, %v4376
      %v4409 = vpack.c.b16 %v4377, %v4377
      %v4410 = vpack.c.b16 %v4378, %v4378
      %v4411 = vpack.c.b16 %v4379, %v4379
      %v4412 = vpack.c.b16 %v4380, %v4380
      %v4413 = vpack.c.b16 %v4381, %v4381
      %v4414 = vpack.c.b16 %v4382, %v4382
      %v4415 = vpack.c.b16 %v4383, %v4383
      %v4416 = vpack.c.b16 %v4384, %v4384
      %v4417 = vpack.c.b16 %v4385, %v4385
      %v4418 = vpack.c.b16 %v4386, %v4386
      %v4419 = vpack.c.b16 %v4387, %v4387
      %v4420 = vpack.c.b16 %v4388, %v4388
      %v4421 = vpack.c.b16 %v4389, %v4389
      %v4422 = vpack.c.b16 %v4390, %v4390
      %v4423 = vpack.c.b16 %v4391, %v4391
      %v4424 = vpack.c.b16 %v4392, %v4392
      %v4425 = vpack.c.b16 %v4393, %v4393
      %v4426 = vpack.c.b16 %v4394, %v4394
      %v4427 = vpack.c.b16 %v4395, %v4395
      %v4428 = vpack.c.b16 %v4396, %v4396
      %v4429 = vpack.c.b16 %v4397, %v4397
      %v4430 = vpack.c.b16 %v4398, %v4398
      %v4431 = vpack.c.b16 %v4399, %v4399
      %v4432 = vpack.c.b16 %v4400, %v4400
      %v4433 = vpack.c.b16 %v4401, %v4401
      %v4434 = vpack.c.b16 %v4402, %v4402
      %v4435 = vpack.c.b16 %v4403, %v4403
      %v4436 = vpack.c.b16 %v4404, %v4404
      %v4438 = vshrl.u32 %v4405, 16
      %v4440 = vrot.slane %v4438, 7
      %v4441 = vshll.u32 %v4405, 16
      %v4443 = vor.u32 %v4440, %v4441
      %v4444 = vrot.slane %v4440, 4
      %v4446 = vshrl.u32 %v4406, 16
      %v4448 = vrot.slane %v4446, 7
      %v4449 = vshll.u32 %v4406, 16
      %v4451 = vor.u32 %v4448, %v4449
      %v4452 = vsel %vm381, %v4444, %v4451
      %v4453 = vrot.slane %v4448, 4
      %v4455 = vshrl.u32 %v4407, 16
      %v4457 = vrot.slane %v4455, 7
      %v4458 = vshll.u32 %v4407, 16
      %v4460 = vor.u32 %v4457, %v4458
      %v4461 = vrot.slane %v4457, 4
      %v4463 = vshrl.u32 %v4408, 16
      %v4465 = vrot.slane %v4463, 7
      %v4466 = vshll.u32 %v4408, 16
      %v4468 = vor.u32 %v4465, %v4466
      %v4469 = vsel %vm381, %v4461, %v4468
      %v4470 = vrot.slane %v4465, 4
      %v4472 = vshrl.u32 %v4409, 16
      %v4474 = vrot.slane %v4472, 7
      %v4475 = vshll.u32 %v4409, 16
      %v4477 = vor.u32 %v4474, %v4475
      %v4478 = vrot.slane %v4474, 4
      %v4480 = vshrl.u32 %v4410, 16
      %v4482 = vrot.slane %v4480, 7
      %v4483 = vshll.u32 %v4410, 16
      %v4485 = vor.u32 %v4482, %v4483
      %v4486 = vsel %vm381, %v4478, %v4485
      %v4487 = vrot.slane %v4482, 4
      %v4489 = vshrl.u32 %v4411, 16
      %v4491 = vrot.slane %v4489, 7
      %v4492 = vshll.u32 %v4411, 16
      %v4494 = vor.u32 %v4491, %v4492
      %v4495 = vrot.slane %v4491, 4
      %v4497 = vshrl.u32 %v4412, 16
      %v4499 = vrot.slane %v4497, 7
      %v4500 = vshll.u32 %v4412, 16
      %v4502 = vor.u32 %v4499, %v4500
      %v4503 = vsel %vm381, %v4495, %v4502
      %v4504 = vrot.slane %v4499, 4
      %v4506 = vshrl.u32 %v4413, 16
      %v4508 = vrot.slane %v4506, 7
      %v4509 = vshll.u32 %v4413, 16
      %v4511 = vor.u32 %v4508, %v4509
      %v4512 = vrot.slane %v4508, 4
      %v4514 = vshrl.u32 %v4414, 16
      %v4516 = vrot.slane %v4514, 7
      %v4517 = vshll.u32 %v4414, 16
      %v4519 = vor.u32 %v4516, %v4517
      %v4520 = vsel %vm381, %v4512, %v4519
      %v4521 = vrot.slane %v4516, 4
      %v4523 = vshrl.u32 %v4415, 16
      %v4525 = vrot.slane %v4523, 7
      %v4526 = vshll.u32 %v4415, 16
      %v4528 = vor.u32 %v4525, %v4526
      %v4529 = vrot.slane %v4525, 4
      %v4531 = vshrl.u32 %v4416, 16
      %v4533 = vrot.slane %v4531, 7
      %v4534 = vshll.u32 %v4416, 16
      %v4536 = vor.u32 %v4533, %v4534
      %v4537 = vsel %vm381, %v4529, %v4536
      %v4538 = vrot.slane %v4533, 4
      %v4540 = vshrl.u32 %v4417, 16
      %v4542 = vrot.slane %v4540, 7
      %v4543 = vshll.u32 %v4417, 16
      %v4545 = vor.u32 %v4542, %v4543
      %v4546 = vrot.slane %v4542, 4
      %v4548 = vshrl.u32 %v4418, 16
      %v4550 = vrot.slane %v4548, 7
      %v4551 = vshll.u32 %v4418, 16
      %v4553 = vor.u32 %v4550, %v4551
      %v4554 = vsel %vm381, %v4546, %v4553
      %v4555 = vrot.slane %v4550, 4
      %v4557 = vshrl.u32 %v4419, 16
      %v4559 = vrot.slane %v4557, 7
      %v4560 = vshll.u32 %v4419, 16
      %v4562 = vor.u32 %v4559, %v4560
      %v4563 = vrot.slane %v4559, 4
      %v4565 = vshrl.u32 %v4420, 16
      %v4567 = vrot.slane %v4565, 7
      %v4568 = vshll.u32 %v4420, 16
      %v4570 = vor.u32 %v4567, %v4568
      %v4571 = vsel %vm381, %v4563, %v4570
      %v4572 = vrot.slane %v4567, 4
      %v4574 = vshrl.u32 %v4421, 16
      %v4576 = vrot.slane %v4574, 7
      %v4577 = vshll.u32 %v4421, 16
      %v4579 = vor.u32 %v4576, %v4577
      %v4580 = vrot.slane %v4576, 4
      %v4582 = vshrl.u32 %v4422, 16
      %v4584 = vrot.slane %v4582, 7
      %v4585 = vshll.u32 %v4422, 16
      %v4587 = vor.u32 %v4584, %v4585
      %v4588 = vsel %vm381, %v4580, %v4587
      %v4589 = vrot.slane %v4584, 4
      %v4591 = vshrl.u32 %v4423, 16
      %v4593 = vrot.slane %v4591, 7
      %v4594 = vshll.u32 %v4423, 16
      %v4596 = vor.u32 %v4593, %v4594
      %v4597 = vrot.slane %v4593, 4
      %v4599 = vshrl.u32 %v4424, 16
      %v4601 = vrot.slane %v4599, 7
      %v4602 = vshll.u32 %v4424, 16
      %v4604 = vor.u32 %v4601, %v4602
      %v4605 = vsel %vm381, %v4597, %v4604
      %v4606 = vrot.slane %v4601, 4
      %v4608 = vshrl.u32 %v4425, 16
      %v4610 = vrot.slane %v4608, 7
      %v4611 = vshll.u32 %v4425, 16
      %v4613 = vor.u32 %v4610, %v4611
      %v4614 = vrot.slane %v4610, 4
      %v4616 = vshrl.u32 %v4426, 16
      %v4618 = vrot.slane %v4616, 7
      %v4619 = vshll.u32 %v4426, 16
      %v4621 = vor.u32 %v4618, %v4619
      %v4622 = vsel %vm381, %v4614, %v4621
      %v4623 = vrot.slane %v4618, 4
      %v4625 = vshrl.u32 %v4427, 16
      %v4627 = vrot.slane %v4625, 7
      %v4628 = vshll.u32 %v4427, 16
      %v4630 = vor.u32 %v4627, %v4628
      %v4631 = vrot.slane %v4627, 4
      %v4633 = vshrl.u32 %v4428, 16
      %v4635 = vrot.slane %v4633, 7
      %v4636 = vshll.u32 %v4428, 16
      %v4638 = vor.u32 %v4635, %v4636
      %v4639 = vsel %vm381, %v4631, %v4638
      %v4640 = vrot.slane %v4635, 4
      %v4642 = vshrl.u32 %v4429, 16
      %v4644 = vrot.slane %v4642, 7
      %v4645 = vshll.u32 %v4429, 16
      %v4647 = vor.u32 %v4644, %v4645
      %v4648 = vrot.slane %v4644, 4
      %v4650 = vshrl.u32 %v4430, 16
      %v4652 = vrot.slane %v4650, 7
      %v4653 = vshll.u32 %v4430, 16
      %v4655 = vor.u32 %v4652, %v4653
      %v4656 = vsel %vm381, %v4648, %v4655
      %v4657 = vrot.slane %v4652, 4
      %v4659 = vshrl.u32 %v4431, 16
      %v4661 = vrot.slane %v4659, 7
      %v4662 = vshll.u32 %v4431, 16
      %v4664 = vor.u32 %v4661, %v4662
      %v4665 = vrot.slane %v4661, 4
      %v4667 = vshrl.u32 %v4432, 16
      %v4669 = vrot.slane %v4667, 7
      %v4670 = vshll.u32 %v4432, 16
      %v4672 = vor.u32 %v4669, %v4670
      %v4673 = vsel %vm381, %v4665, %v4672
      %v4674 = vrot.slane %v4669, 4
      %v4676 = vshrl.u32 %v4433, 16
      %v4678 = vrot.slane %v4676, 7
      %v4679 = vshll.u32 %v4433, 16
      %v4681 = vor.u32 %v4678, %v4679
      %v4682 = vrot.slane %v4678, 4
      %v4684 = vshrl.u32 %v4434, 16
      %v4686 = vrot.slane %v4684, 7
      %v4687 = vshll.u32 %v4434, 16
      %v4689 = vor.u32 %v4686, %v4687
      %v4690 = vsel %vm381, %v4682, %v4689
      %v4691 = vrot.slane %v4686, 4
      %v4693 = vshrl.u32 %v4435, 16
      %v4695 = vrot.slane %v4693, 7
      %v4696 = vshll.u32 %v4435, 16
      %v4698 = vor.u32 %v4695, %v4696
      %v4699 = vrot.slane %v4695, 4
      %v4701 = vshrl.u32 %v4436, 16
      %v4703 = vrot.slane %v4701, 7
      %v4704 = vshll.u32 %v4436, 16
      %v4706 = vor.u32 %v4703, %v4704
      %v4707 = vsel %vm381, %v4699, %v4706
      %v4708 = vrot.slane %v4703, 4
      %s4757 = scalar_lea.vmem [#allocation3], 12
      %v4758 = vld [vmem:[%s4757] sm:$0xf]
      %v4759 = vsel %vm704, %v4443, %v4758
      %4760 = vst [vmem:[%s4757] sm:$0xf] %v4759
      %4761 = vst.msk [vmem:[%s4757 + $0x4] sm:$0xf] %vm258, %v4452
      %v4762 = vld [vmem:[%s4757 + $0x8] sm:$0x1]
      %v4763 = vsel %vm269, %v4453, %v4762
      %4764 = vst [vmem:[%s4757 + $0x8] sm:$0x1] %v4763
      %v4765 = vld [vmem:[%s4757 + $0xc] sm:$0xf]
      %v4766 = vsel %vm704, %v4460, %v4765
      %4767 = vst [vmem:[%s4757 + $0xc] sm:$0xf] %v4766
      %4768 = vst.msk [vmem:[%s4757 + $0x10] sm:$0xf] %vm258, %v4469
      %v4769 = vld [vmem:[%s4757 + $0x14] sm:$0x1]
      %v4770 = vsel %vm269, %v4470, %v4769
      %4771 = vst [vmem:[%s4757 + $0x14] sm:$0x1] %v4770
      %v4772 = vld [vmem:[%s4757 + $0x18] sm:$0xf]
      %v4773 = vsel %vm704, %v4477, %v4772
      %4774 = vst [vmem:[%s4757 + $0x18] sm:$0xf] %v4773
      %4775 = vst.msk [vmem:[%s4757 + $0x1c] sm:$0xf] %vm258, %v4486
      %v4776 = vld [vmem:[%s4757 + $0x20] sm:$0x1]
      %v4777 = vsel %vm269, %v4487, %v4776
      %4778 = vst [vmem:[%s4757 + $0x20] sm:$0x1] %v4777
      %v4779 = vld [vmem:[%s4757 + $0x24] sm:$0xf]
      %v4780 = vsel %vm704, %v4494, %v4779
      %4781 = vst [vmem:[%s4757 + $0x24] sm:$0xf] %v4780
      %4782 = vst.msk [vmem:[%s4757 + $0x28] sm:$0xf] %vm258, %v4503
      %v4783 = vld [vmem:[%s4757 + $0x2c] sm:$0x1]
      %v4784 = vsel %vm269, %v4504, %v4783
      %4785 = vst [vmem:[%s4757 + $0x2c] sm:$0x1] %v4784
      %v4786 = vld [vmem:[%s4757 + $0x30] sm:$0xf]
      %v4787 = vsel %vm704, %v4511, %v4786
      %4788 = vst [vmem:[%s4757 + $0x30] sm:$0xf] %v4787
      %4789 = vst.msk [vmem:[%s4757 + $0x34] sm:$0xf] %vm258, %v4520
      %v4790 = vld [vmem:[%s4757 + $0x38] sm:$0x1]
      %v4791 = vsel %vm269, %v4521, %v4790
      %4792 = vst [vmem:[%s4757 + $0x38] sm:$0x1] %v4791
      %v4793 = vld [vmem:[%s4757 + $0x3c] sm:$0xf]
      %v4794 = vsel %vm704, %v4528, %v4793
      %4795 = vst [vmem:[%s4757 + $0x3c] sm:$0xf] %v4794
      %4796 = vst.msk [vmem:[%s4757 + $0x40] sm:$0xf] %vm258, %v4537
      %v4797 = vld [vmem:[%s4757 + $0x44] sm:$0x1]
      %v4798 = vsel %vm269, %v4538, %v4797
      %4799 = vst [vmem:[%s4757 + $0x44] sm:$0x1] %v4798
      %v4800 = vld [vmem:[%s4757 + $0x48] sm:$0xf]
      %v4801 = vsel %vm704, %v4545, %v4800
      %4802 = vst [vmem:[%s4757 + $0x48] sm:$0xf] %v4801
      %4803 = vst.msk [vmem:[%s4757 + $0x4c] sm:$0xf] %vm258, %v4554
      %v4804 = vld [vmem:[%s4757 + $0x50] sm:$0x1]
      %v4805 = vsel %vm269, %v4555, %v4804
      %4806 = vst [vmem:[%s4757 + $0x50] sm:$0x1] %v4805
      %v4807 = vld [vmem:[%s4757 + $0x54] sm:$0xf]
      %v4808 = vsel %vm704, %v4562, %v4807
      %4809 = vst [vmem:[%s4757 + $0x54] sm:$0xf] %v4808
      %4810 = vst.msk [vmem:[%s4757 + $0x58] sm:$0xf] %vm258, %v4571
      %v4811 = vld [vmem:[%s4757 + $0x5c] sm:$0x1]
      %v4812 = vsel %vm269, %v4572, %v4811
      %4813 = vst [vmem:[%s4757 + $0x5c] sm:$0x1] %v4812
      %v4814 = vld [vmem:[%s4757 + $0x60] sm:$0xf]
      %v4815 = vsel %vm704, %v4579, %v4814
      %4816 = vst [vmem:[%s4757 + $0x60] sm:$0xf] %v4815
      %4817 = vst.msk [vmem:[%s4757 + $0x64] sm:$0xf] %vm258, %v4588
      %v4818 = vld [vmem:[%s4757 + $0x68] sm:$0x1]
      %v4819 = vsel %vm269, %v4589, %v4818
      %4820 = vst [vmem:[%s4757 + $0x68] sm:$0x1] %v4819
      %v4821 = vld [vmem:[%s4757 + $0x6c] sm:$0xf]
      %v4822 = vsel %vm704, %v4596, %v4821
      %4823 = vst [vmem:[%s4757 + $0x6c] sm:$0xf] %v4822
      %4824 = vst.msk [vmem:[%s4757 + $0x70] sm:$0xf] %vm258, %v4605
      %v4825 = vld [vmem:[%s4757 + $0x74] sm:$0x1]
      %v4826 = vsel %vm269, %v4606, %v4825
      %4827 = vst [vmem:[%s4757 + $0x74] sm:$0x1] %v4826
      %v4828 = vld [vmem:[%s4757 + $0x78] sm:$0xf]
      %v4829 = vsel %vm704, %v4613, %v4828
      %4830 = vst [vmem:[%s4757 + $0x78] sm:$0xf] %v4829
      %4831 = vst.msk [vmem:[%s4757 + $0x7c] sm:$0xf] %vm258, %v4622
      %v4832 = vld [vmem:[%s4757 + $0x80] sm:$0x1]
      %v4833 = vsel %vm269, %v4623, %v4832
      %4834 = vst [vmem:[%s4757 + $0x80] sm:$0x1] %v4833
      %v4835 = vld [vmem:[%s4757 + $0x84] sm:$0xf]
      %v4836 = vsel %vm704, %v4630, %v4835
      %4837 = vst [vmem:[%s4757 + $0x84] sm:$0xf] %v4836
      %4838 = vst.msk [vmem:[%s4757 + $0x88] sm:$0xf] %vm258, %v4639
      %v4839 = vld [vmem:[%s4757 + $0x8c] sm:$0x1]
      %v4840 = vsel %vm269, %v4640, %v4839
      %4841 = vst [vmem:[%s4757 + $0x8c] sm:$0x1] %v4840
      %v4842 = vld [vmem:[%s4757 + $0x90] sm:$0xf]
      %v4843 = vsel %vm704, %v4647, %v4842
      %4844 = vst [vmem:[%s4757 + $0x90] sm:$0xf] %v4843
      %4845 = vst.msk [vmem:[%s4757 + $0x94] sm:$0xf] %vm258, %v4656
      %v4846 = vld [vmem:[%s4757 + $0x98] sm:$0x1]
      %v4847 = vsel %vm269, %v4657, %v4846
      %4848 = vst [vmem:[%s4757 + $0x98] sm:$0x1] %v4847
      %v4849 = vld [vmem:[%s4757 + $0x9c] sm:$0xf]
      %v4850 = vsel %vm704, %v4664, %v4849
      %4851 = vst [vmem:[%s4757 + $0x9c] sm:$0xf] %v4850
      %4852 = vst.msk [vmem:[%s4757 + $0xa0] sm:$0xf] %vm258, %v4673
      %v4853 = vld [vmem:[%s4757 + $0xa4] sm:$0x1]
      %v4854 = vsel %vm269, %v4674, %v4853
      %4855 = vst [vmem:[%s4757 + $0xa4] sm:$0x1] %v4854
      %v4856 = vld [vmem:[%s4757 + $0xa8] sm:$0xf]
      %v4857 = vsel %vm704, %v4681, %v4856
      %4858 = vst [vmem:[%s4757 + $0xa8] sm:$0xf] %v4857
      %4859 = vst.msk [vmem:[%s4757 + $0xac] sm:$0xf] %vm258, %v4690
      %v4860 = vld [vmem:[%s4757 + $0xb0] sm:$0x1]
      %v4861 = vsel %vm269, %v4691, %v4860
      %4862 = vst [vmem:[%s4757 + $0xb0] sm:$0x1] %v4861
      %v4863 = vld [vmem:[%s4757 + $0xb4] sm:$0xf]
      %v4864 = vsel %vm704, %v4698, %v4863
      %4865 = vst [vmem:[%s4757 + $0xb4] sm:$0xf] %v4864
      %4866 = vst.msk [vmem:[%s4757 + $0xb8] sm:$0xf] %vm258, %v4707
      %v4867 = vld [vmem:[%s4757 + $0xbc] sm:$0x1]
      %v4868 = vsel %vm269, %v4708, %v4867
      %4869 = vst [vmem:[%s4757 + $0xbc] sm:$0x1] %v4868
      %v4870 = vld [vmem:[#allocation3] sm:$0xf]
      %v4871 = vld [vmem:[#allocation3 + $0x4] sm:$0xf]
      %v4872 = vld [vmem:[#allocation3 + $0xc] sm:$0xf]
      %v4873 = vld [vmem:[#allocation3 + $0x10] sm:$0xf]
      %v4874 = vld [vmem:[#allocation3 + $0x18] sm:$0xf]
      %v4875 = vld [vmem:[#allocation3 + $0x1c] sm:$0xf]
      %v4876 = vld [vmem:[#allocation3 + $0x24] sm:$0xf]
      %v4877 = vld [vmem:[#allocation3 + $0x28] sm:$0xf]
      %v4878 = vld [vmem:[#allocation3 + $0x30] sm:$0xf]
      %v4879 = vld [vmem:[#allocation3 + $0x34] sm:$0xf]
      %v4880 = vld [vmem:[#allocation3 + $0x3c] sm:$0xf]
      %v4881 = vld [vmem:[#allocation3 + $0x40] sm:$0xf]
      %v4882 = vld [vmem:[#allocation3 + $0x48] sm:$0xf]
      %v4883 = vld [vmem:[#allocation3 + $0x4c] sm:$0xf]
      %v4884 = vld [vmem:[#allocation3 + $0x54] sm:$0xf]
      %v4885 = vld [vmem:[#allocation3 + $0x58] sm:$0xf]
      %v4886 = vld [vmem:[#allocation3 + $0x60] sm:$0xf]
      %v4887 = vld [vmem:[#allocation3 + $0x64] sm:$0xf]
      %v4888 = vld [vmem:[#allocation3 + $0x6c] sm:$0xf]
      %v4889 = vld [vmem:[#allocation3 + $0x70] sm:$0xf]
      %v4890 = vld [vmem:[#allocation3 + $0x78] sm:$0xf]
      %v4891 = vld [vmem:[#allocation3 + $0x7c] sm:$0xf]
      %v4892 = vld [vmem:[#allocation3 + $0x84] sm:$0xf]
      %v4893 = vld [vmem:[#allocation3 + $0x88] sm:$0xf]
      %v4894 = vld [vmem:[#allocation3 + $0x90] sm:$0xf]
      %v4895 = vld [vmem:[#allocation3 + $0x94] sm:$0xf]
      %v4896 = vld [vmem:[#allocation3 + $0x9c] sm:$0xf]
      %v4897 = vld [vmem:[#allocation3 + $0xa0] sm:$0xf]
      %v4898 = vld [vmem:[#allocation3 + $0xa8] sm:$0xf]
      %v4899 = vld [vmem:[#allocation3 + $0xac] sm:$0xf]
      %v4900 = vld [vmem:[#allocation3 + $0xb4] sm:$0xf]
      %v4901 = vld [vmem:[#allocation3 + $0xb8] sm:$0xf]
      %v4934 = vunpack.c.l.b16 %v4870
      %v4935 = vunpack.c.l.b16 %v4871
      %v4936 = vunpack.c.l.b16 %v4872
      %v4937 = vunpack.c.l.b16 %v4873
      %v4938 = vunpack.c.l.b16 %v4874
      %v4939 = vunpack.c.l.b16 %v4875
      %v4940 = vunpack.c.l.b16 %v4876
      %v4941 = vunpack.c.l.b16 %v4877
      %v4942 = vunpack.c.l.b16 %v4878
      %v4943 = vunpack.c.l.b16 %v4879
      %v4944 = vunpack.c.l.b16 %v4880
      %v4945 = vunpack.c.l.b16 %v4881
      %v4946 = vunpack.c.l.b16 %v4882
      %v4947 = vunpack.c.l.b16 %v4883
      %v4948 = vunpack.c.l.b16 %v4884
      %v4949 = vunpack.c.l.b16 %v4885
      %v4950 = vunpack.c.l.b16 %v4886
      %v4951 = vunpack.c.l.b16 %v4887
      %v4952 = vunpack.c.l.b16 %v4888
      %v4953 = vunpack.c.l.b16 %v4889
      %v4954 = vunpack.c.l.b16 %v4890
      %v4955 = vunpack.c.l.b16 %v4891
      %v4956 = vunpack.c.l.b16 %v4892
      %v4957 = vunpack.c.l.b16 %v4893
      %v4958 = vunpack.c.l.b16 %v4894
      %v4959 = vunpack.c.l.b16 %v4895
      %v4960 = vunpack.c.l.b16 %v4896
      %v4961 = vunpack.c.l.b16 %v4897
      %v4962 = vunpack.c.l.b16 %v4898
      %v4963 = vunpack.c.l.b16 %v4899
      %v4964 = vunpack.c.l.b16 %v4900
      %v4965 = vunpack.c.l.b16 %v4901
      %v4966 = vpack.c.b16 %v4935, %v4934
      %v4967 = vpack.c.b16 %v4937, %v4936
      %v4968 = vpack.c.b16 %v4939, %v4938
      %v4969 = vpack.c.b16 %v4941, %v4940
      %v4970 = vpack.c.b16 %v4943, %v4942
      %v4971 = vpack.c.b16 %v4945, %v4944
      %v4972 = vpack.c.b16 %v4947, %v4946
      %v4973 = vpack.c.b16 %v4949, %v4948
      %v4974 = vpack.c.b16 %v4951, %v4950
      %v4975 = vpack.c.b16 %v4953, %v4952
      %v4976 = vpack.c.b16 %v4955, %v4954
      %v4977 = vpack.c.b16 %v4957, %v4956
      %v4978 = vpack.c.b16 %v4959, %v4958
      %v4979 = vpack.c.b16 %v4961, %v4960
      %v4980 = vpack.c.b16 %v4963, %v4962
      %v4981 = vpack.c.b16 %v4965, %v4964
      %4998 = vst.msk [vmem:[#allocation4] sm:$0xff] %vm945, %v4966
      %4999 = vst.msk [vmem:[#allocation4 + $0x8] sm:$0xff] %vm945, %v4967
      %5000 = vst.msk [vmem:[#allocation4 + $0x10] sm:$0xff] %vm945, %v4968
      %5001 = vst.msk [vmem:[#allocation4 + $0x18] sm:$0xff] %vm945, %v4969
      %5002 = vst.msk [vmem:[#allocation4 + $0x20] sm:$0xff] %vm945, %v4970
      %5003 = vst.msk [vmem:[#allocation4 + $0x28] sm:$0xff] %vm945, %v4971
      %5004 = vst.msk [vmem:[#allocation4 + $0x30] sm:$0xff] %vm945, %v4972
      %5005 = vst.msk [vmem:[#allocation4 + $0x38] sm:$0xff] %vm945, %v4973
      %5006 = vst.msk [vmem:[#allocation4 + $0x40] sm:$0xff] %vm945, %v4974
      %5007 = vst.msk [vmem:[#allocation4 + $0x48] sm:$0xff] %vm945, %v4975
      %5008 = vst.msk [vmem:[#allocation4 + $0x50] sm:$0xff] %vm945, %v4976
      %5009 = vst.msk [vmem:[#allocation4 + $0x58] sm:$0xff] %vm945, %v4977
      %5010 = vst.msk [vmem:[#allocation4 + $0x60] sm:$0xff] %vm945, %v4978
      %5011 = vst.msk [vmem:[#allocation4 + $0x68] sm:$0xff] %vm945, %v4979
      %5012 = vst.msk [vmem:[#allocation4 + $0x70] sm:$0xff] %vm945, %v4980
      %5013 = vst.msk [vmem:[#allocation4 + $0x78] sm:$0xff] %vm945, %v4981
      %v5014 = vld [vmem:[#allocation3] sm:$0xf]
      %v5015 = vld [vmem:[#allocation3 + $0x4] sm:$0xf]
      %v5016 = vld [vmem:[#allocation3 + $0x8] sm:$0x1]
      %v5017 = vld [vmem:[#allocation3 + $0xc] sm:$0xf]
      %v5018 = vld [vmem:[#allocation3 + $0x10] sm:$0xf]
      %v5019 = vld [vmem:[#allocation3 + $0x14] sm:$0x1]
      %v5020 = vld [vmem:[#allocation3 + $0x18] sm:$0xf]
      %v5021 = vld [vmem:[#allocation3 + $0x1c] sm:$0xf]
      %v5022 = vld [vmem:[#allocation3 + $0x20] sm:$0x1]
      %v5023 = vld [vmem:[#allocation3 + $0x24] sm:$0xf]
      %v5024 = vld [vmem:[#allocation3 + $0x28] sm:$0xf]
      %v5025 = vld [vmem:[#allocation3 + $0x2c] sm:$0x1]
      %v5026 = vld [vmem:[#allocation3 + $0x30] sm:$0xf]
      %v5027 = vld [vmem:[#allocation3 + $0x34] sm:$0xf]
      %v5028 = vld [vmem:[#allocation3 + $0x38] sm:$0x1]
      %v5029 = vld [vmem:[#allocation3 + $0x3c] sm:$0xf]
      %v5030 = vld [vmem:[#allocation3 + $0x40] sm:$0xf]
      %v5031 = vld [vmem:[#allocation3 + $0x44] sm:$0x1]
      %v5032 = vld [vmem:[#allocation3 + $0x48] sm:$0xf]
      %v5033 = vld [vmem:[#allocation3 + $0x4c] sm:$0xf]
      %v5034 = vld [vmem:[#allocation3 + $0x50] sm:$0x1]
      %v5035 = vld [vmem:[#allocation3 + $0x54] sm:$0xf]
      %v5036 = vld [vmem:[#allocation3 + $0x58] sm:$0xf]
      %v5037 = vld [vmem:[#allocation3 + $0x5c] sm:$0x1]
      %v5038 = vld [vmem:[#allocation3 + $0x60] sm:$0xf]
      %v5039 = vld [vmem:[#allocation3 + $0x64] sm:$0xf]
      %v5040 = vld [vmem:[#allocation3 + $0x68] sm:$0x1]
      %v5041 = vld [vmem:[#allocation3 + $0x6c] sm:$0xf]
      %v5042 = vld [vmem:[#allocation3 + $0x70] sm:$0xf]
      %v5043 = vld [vmem:[#allocation3 + $0x74] sm:$0x1]
      %v5044 = vld [vmem:[#allocation3 + $0x78] sm:$0xf]
      %v5045 = vld [vmem:[#allocation3 + $0x7c] sm:$0xf]
      %v5046 = vld [vmem:[#allocation3 + $0x80] sm:$0x1]
      %v5047 = vld [vmem:[#allocation3 + $0x84] sm:$0xf]
      %v5048 = vld [vmem:[#allocation3 + $0x88] sm:$0xf]
      %v5049 = vld [vmem:[#allocation3 + $0x8c] sm:$0x1]
      %v5050 = vld [vmem:[#allocation3 + $0x90] sm:$0xf]
      %v5051 = vld [vmem:[#allocation3 + $0x94] sm:$0xf]
      %v5052 = vld [vmem:[#allocation3 + $0x98] sm:$0x1]
      %v5053 = vld [vmem:[#allocation3 + $0x9c] sm:$0xf]
      %v5054 = vld [vmem:[#allocation3 + $0xa0] sm:$0xf]
      %v5055 = vld [vmem:[#allocation3 + $0xa4] sm:$0x1]
      %v5056 = vld [vmem:[#allocation3 + $0xa8] sm:$0xf]
      %v5057 = vld [vmem:[#allocation3 + $0xac] sm:$0xf]
      %v5058 = vld [vmem:[#allocation3 + $0xb0] sm:$0x1]
      %v5059 = vld [vmem:[#allocation3 + $0xb4] sm:$0xf]
      %v5060 = vld [vmem:[#allocation3 + $0xb8] sm:$0xf]
      %v5061 = vld [vmem:[#allocation3 + $0xbc] sm:$0x1]
      %v5063 = vshrl.u32 %v5014, 16
      %v5065 = vrot.slane %v5063, 4
      %v5066 = vshll.u32 %v5014, 16
      %v5068 = vrot.slane %v5066, 5
      %v5069 = vor.u32 %v5065, %v5068
      %v5070 = vrot.slane %v5069, 4
      %v5072 = vshll.u32 %v5015, 16
      %v5074 = vrot.slane %v5072, 5
      %v5075 = vsel %vm1012, %v5070, %v5074
      %v5076 = vshrl.u32 %v5015, 16
      %v5078 = vrot.slane %v5076, 4
      %v5079 = vor.u32 %v5078, %v5074
      %v5080 = vrot.slane %v5079, 4
      %v5082 = vshll.u32 %v5016, 16
      %v5084 = vrot.slane %v5082, 5
      %v5085 = vsel %vm1012, %v5080, %v5084
      %v5087 = vshrl.u32 %v5017, 16
      %v5089 = vrot.slane %v5087, 4
      %v5090 = vshll.u32 %v5017, 16
      %v5092 = vrot.slane %v5090, 5
      %v5093 = vor.u32 %v5089, %v5092
      %v5094 = vrot.slane %v5093, 4
      %v5096 = vshll.u32 %v5018, 16
      %v5098 = vrot.slane %v5096, 5
      %v5099 = vsel %vm1012, %v5094, %v5098
      %v5100 = vshrl.u32 %v5018, 16
      %v5102 = vrot.slane %v5100, 4
      %v5103 = vor.u32 %v5102, %v5098
      %v5104 = vrot.slane %v5103, 4
      %v5106 = vshll.u32 %v5019, 16
      %v5108 = vrot.slane %v5106, 5
      %v5109 = vsel %vm1012, %v5104, %v5108
      %v5111 = vshrl.u32 %v5020, 16
      %v5113 = vrot.slane %v5111, 4
      %v5114 = vshll.u32 %v5020, 16
      %v5116 = vrot.slane %v5114, 5
      %v5117 = vor.u32 %v5113, %v5116
      %v5118 = vrot.slane %v5117, 4
      %v5120 = vshll.u32 %v5021, 16
      %v5122 = vrot.slane %v5120, 5
      %v5123 = vsel %vm1012, %v5118, %v5122
      %v5124 = vshrl.u32 %v5021, 16
      %v5126 = vrot.slane %v5124, 4
      %v5127 = vor.u32 %v5126, %v5122
      %v5128 = vrot.slane %v5127, 4
      %v5130 = vshll.u32 %v5022, 16
      %v5132 = vrot.slane %v5130, 5
      %v5133 = vsel %vm1012, %v5128, %v5132
      %v5135 = vshrl.u32 %v5023, 16
      %v5137 = vrot.slane %v5135, 4
      %v5138 = vshll.u32 %v5023, 16
      %v5140 = vrot.slane %v5138, 5
      %v5141 = vor.u32 %v5137, %v5140
      %v5142 = vrot.slane %v5141, 4
      %v5144 = vshll.u32 %v5024, 16
      %v5146 = vrot.slane %v5144, 5
      %v5147 = vsel %vm1012, %v5142, %v5146
      %v5148 = vshrl.u32 %v5024, 16
      %v5150 = vrot.slane %v5148, 4
      %v5151 = vor.u32 %v5150, %v5146
      %v5152 = vrot.slane %v5151, 4
      %v5154 = vshll.u32 %v5025, 16
      %v5156 = vrot.slane %v5154, 5
      %v5157 = vsel %vm1012, %v5152, %v5156
      %v5159 = vshrl.u32 %v5026, 16
      %v5161 = vrot.slane %v5159, 4
      %v5162 = vshll.u32 %v5026, 16
      %v5164 = vrot.slane %v5162, 5
      %v5165 = vor.u32 %v5161, %v5164
      %v5166 = vrot.slane %v5165, 4
      %v5168 = vshll.u32 %v5027, 16
      %v5170 = vrot.slane %v5168, 5
      %v5171 = vsel %vm1012, %v5166, %v5170
      %v5172 = vshrl.u32 %v5027, 16
      %v5174 = vrot.slane %v5172, 4
      %v5175 = vor.u32 %v5174, %v5170
      %v5176 = vrot.slane %v5175, 4
      %v5178 = vshll.u32 %v5028, 16
      %v5180 = vrot.slane %v5178, 5
      %v5181 = vsel %vm1012, %v5176, %v5180
      %v5183 = vshrl.u32 %v5029, 16
      %v5185 = vrot.slane %v5183, 4
      %v5186 = vshll.u32 %v5029, 16
      %v5188 = vrot.slane %v5186, 5
      %v5189 = vor.u32 %v5185, %v5188
      %v5190 = vrot.slane %v5189, 4
      %v5192 = vshll.u32 %v5030, 16
      %v5194 = vrot.slane %v5192, 5
      %v5195 = vsel %vm1012, %v5190, %v5194
      %v5196 = vshrl.u32 %v5030, 16
      %v5198 = vrot.slane %v5196, 4
      %v5199 = vor.u32 %v5198, %v5194
      %v5200 = vrot.slane %v5199, 4
      %v5202 = vshll.u32 %v5031, 16
      %v5204 = vrot.slane %v5202, 5
      %v5205 = vsel %vm1012, %v5200, %v5204
      %v5207 = vshrl.u32 %v5032, 16
      %v5209 = vrot.slane %v5207, 4
      %v5210 = vshll.u32 %v5032, 16
      %v5212 = vrot.slane %v5210, 5
      %v5213 = vor.u32 %v5209, %v5212
      %v5214 = vrot.slane %v5213, 4
      %v5216 = vshll.u32 %v5033, 16
      %v5218 = vrot.slane %v5216, 5
      %v5219 = vsel %vm1012, %v5214, %v5218
      %v5220 = vshrl.u32 %v5033, 16
      %v5222 = vrot.slane %v5220, 4
      %v5223 = vor.u32 %v5222, %v5218
      %v5224 = vrot.slane %v5223, 4
      %v5226 = vshll.u32 %v5034, 16
      %v5228 = vrot.slane %v5226, 5
      %v5229 = vsel %vm1012, %v5224, %v5228
      %v5231 = vshrl.u32 %v5035, 16
      %v5233 = vrot.slane %v5231, 4
      %v5234 = vshll.u32 %v5035, 16
      %v5236 = vrot.slane %v5234, 5
      %v5237 = vor.u32 %v5233, %v5236
      %v5238 = vrot.slane %v5237, 4
      %v5240 = vshll.u32 %v5036, 16
      %v5242 = vrot.slane %v5240, 5
      %v5243 = vsel %vm1012, %v5238, %v5242
      %v5244 = vshrl.u32 %v5036, 16
      %v5246 = vrot.slane %v5244, 4
      %v5247 = vor.u32 %v5246, %v5242
      %v5248 = vrot.slane %v5247, 4
      %v5250 = vshll.u32 %v5037, 16
      %v5252 = vrot.slane %v5250, 5
      %v5253 = vsel %vm1012, %v5248, %v5252
      %v5255 = vshrl.u32 %v5038, 16
      %v5257 = vrot.slane %v5255, 4
      %v5258 = vshll.u32 %v5038, 16
      %v5260 = vrot.slane %v5258, 5
      %v5261 = vor.u32 %v5257, %v5260
      %v5262 = vrot.slane %v5261, 4
      %v5264 = vshll.u32 %v5039, 16
      %v5266 = vrot.slane %v5264, 5
      %v5267 = vsel %vm1012, %v5262, %v5266
      %v5268 = vshrl.u32 %v5039, 16
      %v5270 = vrot.slane %v5268, 4
      %v5271 = vor.u32 %v5270, %v5266
      %v5272 = vrot.slane %v5271, 4
      %v5274 = vshll.u32 %v5040, 16
      %v5276 = vrot.slane %v5274, 5
      %v5277 = vsel %vm1012, %v5272, %v5276
      %v5279 = vshrl.u32 %v5041, 16
      %v5281 = vrot.slane %v5279, 4
      %v5282 = vshll.u32 %v5041, 16
      %v5284 = vrot.slane %v5282, 5
      %v5285 = vor.u32 %v5281, %v5284
      %v5286 = vrot.slane %v5285, 4
      %v5288 = vshll.u32 %v5042, 16
      %v5290 = vrot.slane %v5288, 5
      %v5291 = vsel %vm1012, %v5286, %v5290
      %v5292 = vshrl.u32 %v5042, 16
      %v5294 = vrot.slane %v5292, 4
      %v5295 = vor.u32 %v5294, %v5290
      %v5296 = vrot.slane %v5295, 4
      %v5298 = vshll.u32 %v5043, 16
      %v5300 = vrot.slane %v5298, 5
      %v5301 = vsel %vm1012, %v5296, %v5300
      %v5303 = vshrl.u32 %v5044, 16
      %v5305 = vrot.slane %v5303, 4
      %v5306 = vshll.u32 %v5044, 16
      %v5308 = vrot.slane %v5306, 5
      %v5309 = vor.u32 %v5305, %v5308
      %v5310 = vrot.slane %v5309, 4
      %v5312 = vshll.u32 %v5045, 16
      %v5314 = vrot.slane %v5312, 5
      %v5315 = vsel %vm1012, %v5310, %v5314
      %v5316 = vshrl.u32 %v5045, 16
      %v5318 = vrot.slane %v5316, 4
      %v5319 = vor.u32 %v5318, %v5314
      %v5320 = vrot.slane %v5319, 4
      %v5322 = vshll.u32 %v5046, 16
      %v5324 = vrot.slane %v5322, 5
      %v5325 = vsel %vm1012, %v5320, %v5324
      %v5327 = vshrl.u32 %v5047, 16
      %v5329 = vrot.slane %v5327, 4
      %v5330 = vshll.u32 %v5047, 16
      %v5332 = vrot.slane %v5330, 5
      %v5333 = vor.u32 %v5329, %v5332
      %v5334 = vrot.slane %v5333, 4
      %v5336 = vshll.u32 %v5048, 16
      %v5338 = vrot.slane %v5336, 5
      %v5339 = vsel %vm1012, %v5334, %v5338
      %v5340 = vshrl.u32 %v5048, 16
      %v5342 = vrot.slane %v5340, 4
      %v5343 = vor.u32 %v5342, %v5338
      %v5344 = vrot.slane %v5343, 4
      %v5346 = vshll.u32 %v5049, 16
      %v5348 = vrot.slane %v5346, 5
      %v5349 = vsel %vm1012, %v5344, %v5348
      %v5351 = vshrl.u32 %v5050, 16
      %v5353 = vrot.slane %v5351, 4
      %v5354 = vshll.u32 %v5050, 16
      %v5356 = vrot.slane %v5354, 5
      %v5357 = vor.u32 %v5353, %v5356
      %v5358 = vrot.slane %v5357, 4
      %v5360 = vshll.u32 %v5051, 16
      %v5362 = vrot.slane %v5360, 5
      %v5363 = vsel %vm1012, %v5358, %v5362
      %v5364 = vshrl.u32 %v5051, 16
      %v5366 = vrot.slane %v5364, 4
      %v5367 = vor.u32 %v5366, %v5362
      %v5368 = vrot.slane %v5367, 4
      %v5370 = vshll.u32 %v5052, 16
      %v5372 = vrot.slane %v5370, 5
      %v5373 = vsel %vm1012, %v5368, %v5372
      %v5375 = vshrl.u32 %v5053, 16
      %v5377 = vrot.slane %v5375, 4
      %v5378 = vshll.u32 %v5053, 16
      %v5380 = vrot.slane %v5378, 5
      %v5381 = vor.u32 %v5377, %v5380
      %v5382 = vrot.slane %v5381, 4
      %v5384 = vshll.u32 %v5054, 16
      %v5386 = vrot.slane %v5384, 5
      %v5387 = vsel %vm1012, %v5382, %v5386
      %v5388 = vshrl.u32 %v5054, 16
      %v5390 = vrot.slane %v5388, 4
      %v5391 = vor.u32 %v5390, %v5386
      %v5392 = vrot.slane %v5391, 4
      %v5394 = vshll.u32 %v5055, 16
      %v5396 = vrot.slane %v5394, 5
      %v5397 = vsel %vm1012, %v5392, %v5396
      %v5399 = vshrl.u32 %v5056, 16
      %v5401 = vrot.slane %v5399, 4
      %v5402 = vshll.u32 %v5056, 16
      %v5404 = vrot.slane %v5402, 5
      %v5405 = vor.u32 %v5401, %v5404
      %v5406 = vrot.slane %v5405, 4
      %v5408 = vshll.u32 %v5057, 16
      %v5410 = vrot.slane %v5408, 5
      %v5411 = vsel %vm1012, %v5406, %v5410
      %v5412 = vshrl.u32 %v5057, 16
      %v5414 = vrot.slane %v5412, 4
      %v5415 = vor.u32 %v5414, %v5410
      %v5416 = vrot.slane %v5415, 4
      %v5418 = vshll.u32 %v5058, 16
      %v5420 = vrot.slane %v5418, 5
      %v5421 = vsel %vm1012, %v5416, %v5420
      %v5423 = vshrl.u32 %v5059, 16
      %v5425 = vrot.slane %v5423, 4
      %v5426 = vshll.u32 %v5059, 16
      %v5428 = vrot.slane %v5426, 5
      %v5429 = vor.u32 %v5425, %v5428
      %v5430 = vrot.slane %v5429, 4
      %v5432 = vshll.u32 %v5060, 16
      %v5434 = vrot.slane %v5432, 5
      %v5435 = vsel %vm1012, %v5430, %v5434
      %v5436 = vshrl.u32 %v5060, 16
      %v5438 = vrot.slane %v5436, 4
      %v5439 = vor.u32 %v5438, %v5434
      %v5440 = vrot.slane %v5439, 4
      %v5442 = vshll.u32 %v5061, 16
      %v5444 = vrot.slane %v5442, 5
      %v5445 = vsel %vm1012, %v5440, %v5444
      %v5446 = vunpack.c.l.b16 %v5075
      %v5447 = vunpack.c.l.b16 %v5085
      %v5448 = vunpack.c.l.b16 %v5099
      %v5449 = vunpack.c.l.b16 %v5109
      %v5450 = vunpack.c.l.b16 %v5123
      %v5451 = vunpack.c.l.b16 %v5133
      %v5452 = vunpack.c.l.b16 %v5147
      %v5453 = vunpack.c.l.b16 %v5157
      %v5454 = vunpack.c.l.b16 %v5171
      %v5455 = vunpack.c.l.b16 %v5181
      %v5456 = vunpack.c.l.b16 %v5195
      %v5457 = vunpack.c.l.b16 %v5205
      %v5458 = vunpack.c.l.b16 %v5219
      %v5459 = vunpack.c.l.b16 %v5229
      %v5460 = vunpack.c.l.b16 %v5243
      %v5461 = vunpack.c.l.b16 %v5253
      %v5462 = vunpack.c.l.b16 %v5267
      %v5463 = vunpack.c.l.b16 %v5277
      %v5464 = vunpack.c.l.b16 %v5291
      %v5465 = vunpack.c.l.b16 %v5301
      %v5466 = vunpack.c.l.b16 %v5315
      %v5467 = vunpack.c.l.b16 %v5325
      %v5468 = vunpack.c.l.b16 %v5339
      %v5469 = vunpack.c.l.b16 %v5349
      %v5470 = vunpack.c.l.b16 %v5363
      %v5471 = vunpack.c.l.b16 %v5373
      %v5472 = vunpack.c.l.b16 %v5387
      %v5473 = vunpack.c.l.b16 %v5397
      %v5474 = vunpack.c.l.b16 %v5411
      %v5475 = vunpack.c.l.b16 %v5421
      %v5476 = vunpack.c.l.b16 %v5435
      %v5477 = vunpack.c.l.b16 %v5445
      %v5478 = vpack.c.b16 %v5447, %v5446
      %v5479 = vpack.c.b16 %v5449, %v5448
      %v5480 = vpack.c.b16 %v5451, %v5450
      %v5481 = vpack.c.b16 %v5453, %v5452
      %v5482 = vpack.c.b16 %v5455, %v5454
      %v5483 = vpack.c.b16 %v5457, %v5456
      %v5484 = vpack.c.b16 %v5459, %v5458
      %v5485 = vpack.c.b16 %v5461, %v5460
      %v5486 = vpack.c.b16 %v5463, %v5462
      %v5487 = vpack.c.b16 %v5465, %v5464
      %v5488 = vpack.c.b16 %v5467, %v5466
      %v5489 = vpack.c.b16 %v5469, %v5468
      %v5490 = vpack.c.b16 %v5471, %v5470
      %v5491 = vpack.c.b16 %v5473, %v5472
      %v5492 = vpack.c.b16 %v5475, %v5474
      %v5493 = vpack.c.b16 %v5477, %v5476
      %5494 = vrot.lane.b32.xlu0 %v5478, 8
      %v5495 = vpop.permute.xlu0 %5494
      %5496 = vrot.lane.b32.xlu0 %v5479, 8
      %v5497 = vpop.permute.xlu0 %5496
      %5498 = vrot.lane.b32.xlu0 %v5480, 8
      %v5499 = vpop.permute.xlu0 %5498
      %5500 = vrot.lane.b32.xlu0 %v5481, 8
      %v5501 = vpop.permute.xlu0 %5500
      %5502 = vrot.lane.b32.xlu0 %v5482, 8
      %v5503 = vpop.permute.xlu0 %5502
      %5504 = vrot.lane.b32.xlu0 %v5483, 8
      %v5505 = vpop.permute.xlu0 %5504
      %5506 = vrot.lane.b32.xlu0 %v5484, 8
      %v5507 = vpop.permute.xlu0 %5506
      %5508 = vrot.lane.b32.xlu0 %v5485, 8
      %v5509 = vpop.permute.xlu0 %5508
      %5510 = vrot.lane.b32.xlu0 %v5486, 8
      %v5511 = vpop.permute.xlu0 %5510
      %5512 = vrot.lane.b32.xlu0 %v5487, 8
      %v5513 = vpop.permute.xlu0 %5512
      %5514 = vrot.lane.b32.xlu0 %v5488, 8
      %v5515 = vpop.permute.xlu0 %5514
      %5516 = vrot.lane.b32.xlu0 %v5489, 8
      %v5517 = vpop.permute.xlu0 %5516
      %5518 = vrot.lane.b32.xlu0 %v5490, 8
      %v5519 = vpop.permute.xlu0 %5518
      %5520 = vrot.lane.b32.xlu0 %v5491, 8
      %v5521 = vpop.permute.xlu0 %5520
      %5522 = vrot.lane.b32.xlu0 %v5492, 8
      %v5523 = vpop.permute.xlu0 %5522
      %5524 = vrot.lane.b32.xlu0 %v5493, 8
      %v5525 = vpop.permute.xlu0 %5524
      %5542 = vst.msk [vmem:[#allocation4] sm:$0xff] %vm1493, %v5495
      %5543 = vst.msk [vmem:[#allocation4 + $0x8] sm:$0xff] %vm1493, %v5497
      %5544 = vst.msk [vmem:[#allocation4 + $0x10] sm:$0xff] %vm1493, %v5499
      %5545 = vst.msk [vmem:[#allocation4 + $0x18] sm:$0xff] %vm1493, %v5501
      %5546 = vst.msk [vmem:[#allocation4 + $0x20] sm:$0xff] %vm1493, %v5503
      %5547 = vst.msk [vmem:[#allocation4 + $0x28] sm:$0xff] %vm1493, %v5505
      %5548 = vst.msk [vmem:[#allocation4 + $0x30] sm:$0xff] %vm1493, %v5507
      %5549 = vst.msk [vmem:[#allocation4 + $0x38] sm:$0xff] %vm1493, %v5509
      %5550 = vst.msk [vmem:[#allocation4 + $0x40] sm:$0xff] %vm1493, %v5511
      %5551 = vst.msk [vmem:[#allocation4 + $0x48] sm:$0xff] %vm1493, %v5513
      %5552 = vst.msk [vmem:[#allocation4 + $0x50] sm:$0xff] %vm1493, %v5515
      %5553 = vst.msk [vmem:[#allocation4 + $0x58] sm:$0xff] %vm1493, %v5517
      %5554 = vst.msk [vmem:[#allocation4 + $0x60] sm:$0xff] %vm1493, %v5519
      %5555 = vst.msk [vmem:[#allocation4 + $0x68] sm:$0xff] %vm1493, %v5521
      %5556 = vst.msk [vmem:[#allocation4 + $0x70] sm:$0xff] %vm1493, %v5523
      %5557 = vst.msk [vmem:[#allocation4 + $0x78] sm:$0xff] %vm1493, %v5525
      %v5558 = vld [vmem:[#allocation3] sm:$0xe]
      %v5559 = vld [vmem:[#allocation3 + $0x4] sm:$0xf]
      %v5560 = vld [vmem:[#allocation3 + $0x8] sm:$0x1]
      %v5561 = vld [vmem:[#allocation3 + $0xc] sm:$0xe]
      %v5562 = vld [vmem:[#allocation3 + $0x10] sm:$0xf]
      %v5563 = vld [vmem:[#allocation3 + $0x14] sm:$0x1]
      %v5564 = vld [vmem:[#allocation3 + $0x18] sm:$0xe]
      %v5565 = vld [vmem:[#allocation3 + $0x1c] sm:$0xf]
      %v5566 = vld [vmem:[#allocation3 + $0x20] sm:$0x1]
      %v5567 = vld [vmem:[#allocation3 + $0x24] sm:$0xe]
      %v5568 = vld [vmem:[#allocation3 + $0x28] sm:$0xf]
      %v5569 = vld [vmem:[#allocation3 + $0x2c] sm:$0x1]
      %v5570 = vld [vmem:[#allocation3 + $0x30] sm:$0xe]
      %v5571 = vld [vmem:[#allocation3 + $0x34] sm:$0xf]
      %v5572 = vld [vmem:[#allocation3 + $0x38] sm:$0x1]
      %v5573 = vld [vmem:[#allocation3 + $0x3c] sm:$0xe]
      %v5574 = vld [vmem:[#allocation3 + $0x40] sm:$0xf]
      %v5575 = vld [vmem:[#allocation3 + $0x44] sm:$0x1]
      %v5576 = vld [vmem:[#allocation3 + $0x48] sm:$0xe]
      %v5577 = vld [vmem:[#allocation3 + $0x4c] sm:$0xf]
      %v5578 = vld [vmem:[#allocation3 + $0x50] sm:$0x1]
      %v5579 = vld [vmem:[#allocation3 + $0x54] sm:$0xe]
      %v5580 = vld [vmem:[#allocation3 + $0x58] sm:$0xf]
      %v5581 = vld [vmem:[#allocation3 + $0x5c] sm:$0x1]
      %v5582 = vld [vmem:[#allocation3 + $0x60] sm:$0xe]
      %v5583 = vld [vmem:[#allocation3 + $0x64] sm:$0xf]
      %v5584 = vld [vmem:[#allocation3 + $0x68] sm:$0x1]
      %v5585 = vld [vmem:[#allocation3 + $0x6c] sm:$0xe]
      %v5586 = vld [vmem:[#allocation3 + $0x70] sm:$0xf]
      %v5587 = vld [vmem:[#allocation3 + $0x74] sm:$0x1]
      %v5588 = vld [vmem:[#allocation3 + $0x78] sm:$0xe]
      %v5589 = vld [vmem:[#allocation3 + $0x7c] sm:$0xf]
      %v5590 = vld [vmem:[#allocation3 + $0x80] sm:$0x1]
      %v5591 = vld [vmem:[#allocation3 + $0x84] sm:$0xe]
      %v5592 = vld [vmem:[#allocation3 + $0x88] sm:$0xf]
      %v5593 = vld [vmem:[#allocation3 + $0x8c] sm:$0x1]
      %v5594 = vld [vmem:[#allocation3 + $0x90] sm:$0xe]
      %v5595 = vld [vmem:[#allocation3 + $0x94] sm:$0xf]
      %v5596 = vld [vmem:[#allocation3 + $0x98] sm:$0x1]
      %v5597 = vld [vmem:[#allocation3 + $0x9c] sm:$0xe]
      %v5598 = vld [vmem:[#allocation3 + $0xa0] sm:$0xf]
      %v5599 = vld [vmem:[#allocation3 + $0xa4] sm:$0x1]
      %v5600 = vld [vmem:[#allocation3 + $0xa8] sm:$0xe]
      %v5601 = vld [vmem:[#allocation3 + $0xac] sm:$0xf]
      %v5602 = vld [vmem:[#allocation3 + $0xb0] sm:$0x1]
      %v5603 = vld [vmem:[#allocation3 + $0xb4] sm:$0xe]
      %v5604 = vld [vmem:[#allocation3 + $0xb8] sm:$0xf]
      %v5605 = vld [vmem:[#allocation3 + $0xbc] sm:$0x1]
      %v5654 = vrot.slane %v5558, 5
      %v5655 = vrot.slane %v5654, 4
      %v5656 = vrot.slane %v5559, 5
      %v5657 = vsel %vm1608, %v5655, %v5656
      %v5658 = vrot.slane %v5656, 4
      %v5659 = vrot.slane %v5560, 5
      %v5660 = vsel %vm1608, %v5658, %v5659
      %v5661 = vrot.slane %v5561, 5
      %v5662 = vrot.slane %v5661, 4
      %v5663 = vrot.slane %v5562, 5
      %v5664 = vsel %vm1608, %v5662, %v5663
      %v5665 = vrot.slane %v5663, 4
      %v5666 = vrot.slane %v5563, 5
      %v5667 = vsel %vm1608, %v5665, %v5666
      %v5668 = vrot.slane %v5564, 5
      %v5669 = vrot.slane %v5668, 4
      %v5670 = vrot.slane %v5565, 5
      %v5671 = vsel %vm1608, %v5669, %v5670
      %v5672 = vrot.slane %v5670, 4
      %v5673 = vrot.slane %v5566, 5
      %v5674 = vsel %vm1608, %v5672, %v5673
      %v5675 = vrot.slane %v5567, 5
      %v5676 = vrot.slane %v5675, 4
      %v5677 = vrot.slane %v5568, 5
      %v5678 = vsel %vm1608, %v5676, %v5677
      %v5679 = vrot.slane %v5677, 4
      %v5680 = vrot.slane %v5569, 5
      %v5681 = vsel %vm1608, %v5679, %v5680
      %v5682 = vrot.slane %v5570, 5
      %v5683 = vrot.slane %v5682, 4
      %v5684 = vrot.slane %v5571, 5
      %v5685 = vsel %vm1608, %v5683, %v5684
      %v5686 = vrot.slane %v5684, 4
      %v5687 = vrot.slane %v5572, 5
      %v5688 = vsel %vm1608, %v5686, %v5687
      %v5689 = vrot.slane %v5573, 5
      %v5690 = vrot.slane %v5689, 4
      %v5691 = vrot.slane %v5574, 5
      %v5692 = vsel %vm1608, %v5690, %v5691
      %v5693 = vrot.slane %v5691, 4
      %v5694 = vrot.slane %v5575, 5
      %v5695 = vsel %vm1608, %v5693, %v5694
      %v5696 = vrot.slane %v5576, 5
      %v5697 = vrot.slane %v5696, 4
      %v5698 = vrot.slane %v5577, 5
      %v5699 = vsel %vm1608, %v5697, %v5698
      %v5700 = vrot.slane %v5698, 4
      %v5701 = vrot.slane %v5578, 5
      %v5702 = vsel %vm1608, %v5700, %v5701
      %v5703 = vrot.slane %v5579, 5
      %v5704 = vrot.slane %v5703, 4
      %v5705 = vrot.slane %v5580, 5
      %v5706 = vsel %vm1608, %v5704, %v5705
      %v5707 = vrot.slane %v5705, 4
      %v5708 = vrot.slane %v5581, 5
      %v5709 = vsel %vm1608, %v5707, %v5708
      %v5710 = vrot.slane %v5582, 5
      %v5711 = vrot.slane %v5710, 4
      %v5712 = vrot.slane %v5583, 5
      %v5713 = vsel %vm1608, %v5711, %v5712
      %v5714 = vrot.slane %v5712, 4
      %v5715 = vrot.slane %v5584, 5
      %v5716 = vsel %vm1608, %v5714, %v5715
      %v5717 = vrot.slane %v5585, 5
      %v5718 = vrot.slane %v5717, 4
      %v5719 = vrot.slane %v5586, 5
      %v5720 = vsel %vm1608, %v5718, %v5719
      %v5721 = vrot.slane %v5719, 4
      %v5722 = vrot.slane %v5587, 5
      %v5723 = vsel %vm1608, %v5721, %v5722
      %v5724 = vrot.slane %v5588, 5
      %v5725 = vrot.slane %v5724, 4
      %v5726 = vrot.slane %v5589, 5
      %v5727 = vsel %vm1608, %v5725, %v5726
      %v5728 = vrot.slane %v5726, 4
      %v5729 = vrot.slane %v5590, 5
      %v5730 = vsel %vm1608, %v5728, %v5729
      %v5731 = vrot.slane %v5591, 5
      %v5732 = vrot.slane %v5731, 4
      %v5733 = vrot.slane %v5592, 5
      %v5734 = vsel %vm1608, %v5732, %v5733
      %v5735 = vrot.slane %v5733, 4
      %v5736 = vrot.slane %v5593, 5
      %v5737 = vsel %vm1608, %v5735, %v5736
      %v5738 = vrot.slane %v5594, 5
      %v5739 = vrot.slane %v5738, 4
      %v5740 = vrot.slane %v5595, 5
      %v5741 = vsel %vm1608, %v5739, %v5740
      %v5742 = vrot.slane %v5740, 4
      %v5743 = vrot.slane %v5596, 5
      %v5744 = vsel %vm1608, %v5742, %v5743
      %v5745 = vrot.slane %v5597, 5
      %v5746 = vrot.slane %v5745, 4
      %v5747 = vrot.slane %v5598, 5
      %v5748 = vsel %vm1608, %v5746, %v5747
      %v5749 = vrot.slane %v5747, 4
      %v5750 = vrot.slane %v5599, 5
      %v5751 = vsel %vm1608, %v5749, %v5750
      %v5752 = vrot.slane %v5600, 5
      %v5753 = vrot.slane %v5752, 4
      %v5754 = vrot.slane %v5601, 5
      %v5755 = vsel %vm1608, %v5753, %v5754
      %v5756 = vrot.slane %v5754, 4
      %v5757 = vrot.slane %v5602, 5
      %v5758 = vsel %vm1608, %v5756, %v5757
      %v5759 = vrot.slane %v5603, 5
      %v5760 = vrot.slane %v5759, 4
      %v5761 = vrot.slane %v5604, 5
      %v5762 = vsel %vm1608, %v5760, %v5761
      %v5763 = vrot.slane %v5761, 4
      %v5764 = vrot.slane %v5605, 5
      %v5765 = vsel %vm1608, %v5763, %v5764
      %v5766 = vunpack.c.l.b16 %v5657
      %v5767 = vunpack.c.l.b16 %v5660
      %v5768 = vunpack.c.l.b16 %v5664
      %v5769 = vunpack.c.l.b16 %v5667
      %v5770 = vunpack.c.l.b16 %v5671
      %v5771 = vunpack.c.l.b16 %v5674
      %v5772 = vunpack.c.l.b16 %v5678
      %v5773 = vunpack.c.l.b16 %v5681
      %v5774 = vunpack.c.l.b16 %v5685
      %v5775 = vunpack.c.l.b16 %v5688
      %v5776 = vunpack.c.l.b16 %v5692
      %v5777 = vunpack.c.l.b16 %v5695
      %v5778 = vunpack.c.l.b16 %v5699
      %v5779 = vunpack.c.l.b16 %v5702
      %v5780 = vunpack.c.l.b16 %v5706
      %v5781 = vunpack.c.l.b16 %v5709
      %v5782 = vunpack.c.l.b16 %v5713
      %v5783 = vunpack.c.l.b16 %v5716
      %v5784 = vunpack.c.l.b16 %v5720
      %v5785 = vunpack.c.l.b16 %v5723
      %v5786 = vunpack.c.l.b16 %v5727
      %v5787 = vunpack.c.l.b16 %v5730
      %v5788 = vunpack.c.l.b16 %v5734
      %v5789 = vunpack.c.l.b16 %v5737
      %v5790 = vunpack.c.l.b16 %v5741
      %v5791 = vunpack.c.l.b16 %v5744
      %v5792 = vunpack.c.l.b16 %v5748
      %v5793 = vunpack.c.l.b16 %v5751
      %v5794 = vunpack.c.l.b16 %v5755
      %v5795 = vunpack.c.l.b16 %v5758
      %v5796 = vunpack.c.l.b16 %v5762
      %v5797 = vunpack.c.l.b16 %v5765
      %v5798 = vpack.c.b16 %v5767, %v5766
      %v5799 = vpack.c.b16 %v5769, %v5768
      %v5800 = vpack.c.b16 %v5771, %v5770
      %v5801 = vpack.c.b16 %v5773, %v5772
      %v5802 = vpack.c.b16 %v5775, %v5774
      %v5803 = vpack.c.b16 %v5777, %v5776
      %v5804 = vpack.c.b16 %v5779, %v5778
      %v5805 = vpack.c.b16 %v5781, %v5780
      %v5806 = vpack.c.b16 %v5783, %v5782
      %v5807 = vpack.c.b16 %v5785, %v5784
      %v5808 = vpack.c.b16 %v5787, %v5786
      %v5809 = vpack.c.b16 %v5789, %v5788
      %v5810 = vpack.c.b16 %v5791, %v5790
      %v5811 = vpack.c.b16 %v5793, %v5792
      %v5812 = vpack.c.b16 %v5795, %v5794
      %v5813 = vpack.c.b16 %v5797, %v5796
      %5814 = vrot.lane.b32.xlu0 %v5798, 16
      %v5815 = vpop.permute.xlu0 %5814
      %5816 = vrot.lane.b32.xlu0 %v5799, 16
      %v5817 = vpop.permute.xlu0 %5816
      %5818 = vrot.lane.b32.xlu0 %v5800, 16
      %v5819 = vpop.permute.xlu0 %5818
      %5820 = vrot.lane.b32.xlu0 %v5801, 16
      %v5821 = vpop.permute.xlu0 %5820
      %5822 = vrot.lane.b32.xlu0 %v5802, 16
      %v5823 = vpop.permute.xlu0 %5822
      %5824 = vrot.lane.b32.xlu0 %v5803, 16
      %v5825 = vpop.permute.xlu0 %5824
      %5826 = vrot.lane.b32.xlu0 %v5804, 16
      %v5827 = vpop.permute.xlu0 %5826
      %5828 = vrot.lane.b32.xlu0 %v5805, 16
      %v5829 = vpop.permute.xlu0 %5828
      %5830 = vrot.lane.b32.xlu0 %v5806, 16
      %v5831 = vpop.permute.xlu0 %5830
      %5832 = vrot.lane.b32.xlu0 %v5807, 16
      %v5833 = vpop.permute.xlu0 %5832
      %5834 = vrot.lane.b32.xlu0 %v5808, 16
      %v5835 = vpop.permute.xlu0 %5834
      %5836 = vrot.lane.b32.xlu0 %v5809, 16
      %v5837 = vpop.permute.xlu0 %5836
      %5838 = vrot.lane.b32.xlu0 %v5810, 16
      %v5839 = vpop.permute.xlu0 %5838
      %5840 = vrot.lane.b32.xlu0 %v5811, 16
      %v5841 = vpop.permute.xlu0 %5840
      %5842 = vrot.lane.b32.xlu0 %v5812, 16
      %v5843 = vpop.permute.xlu0 %5842
      %5844 = vrot.lane.b32.xlu0 %v5813, 16
      %v5845 = vpop.permute.xlu0 %5844
      %5862 = vst.msk [vmem:[#allocation4] sm:$0xff] %vm1817, %v5815
      %5863 = vst.msk [vmem:[#allocation4 + $0x8] sm:$0xff] %vm1817, %v5817
      %5864 = vst.msk [vmem:[#allocation4 + $0x10] sm:$0xff] %vm1817, %v5819
      %5865 = vst.msk [vmem:[#allocation4 + $0x18] sm:$0xff] %vm1817, %v5821
      %5866 = vst.msk [vmem:[#allocation4 + $0x20] sm:$0xff] %vm1817, %v5823
      %5867 = vst.msk [vmem:[#allocation4 + $0x28] sm:$0xff] %vm1817, %v5825
      %5868 = vst.msk [vmem:[#allocation4 + $0x30] sm:$0xff] %vm1817, %v5827
      %5869 = vst.msk [vmem:[#allocation4 + $0x38] sm:$0xff] %vm1817, %v5829
      %5870 = vst.msk [vmem:[#allocation4 + $0x40] sm:$0xff] %vm1817, %v5831
      %5871 = vst.msk [vmem:[#allocation4 + $0x48] sm:$0xff] %vm1817, %v5833
      %5872 = vst.msk [vmem:[#allocation4 + $0x50] sm:$0xff] %vm1817, %v5835
      %5873 = vst.msk [vmem:[#allocation4 + $0x58] sm:$0xff] %vm1817, %v5837
      %5874 = vst.msk [vmem:[#allocation4 + $0x60] sm:$0xff] %vm1817, %v5839
      %5875 = vst.msk [vmem:[#allocation4 + $0x68] sm:$0xff] %vm1817, %v5841
      %5876 = vst.msk [vmem:[#allocation4 + $0x70] sm:$0xff] %vm1817, %v5843
      %5877 = vst.msk [vmem:[#allocation4 + $0x78] sm:$0xff] %vm1817, %v5845
      %v5878 = vld [vmem:[%s4757] sm:$0xf]
      %v5879 = vld [vmem:[%s4757 + $0x4] sm:$0xf]
      %v5880 = vld [vmem:[%s4757 + $0xc] sm:$0xf]
      %v5881 = vld [vmem:[%s4757 + $0x10] sm:$0xf]
      %v5882 = vld [vmem:[%s4757 + $0x18] sm:$0xf]
      %v5883 = vld [vmem:[%s4757 + $0x1c] sm:$0xf]
      %v5884 = vld [vmem:[%s4757 + $0x24] sm:$0xf]
      %v5885 = vld [vmem:[%s4757 + $0x28] sm:$0xf]
      %v5886 = vld [vmem:[%s4757 + $0x30] sm:$0xf]
      %v5887 = vld [vmem:[%s4757 + $0x34] sm:$0xf]
      %v5888 = vld [vmem:[%s4757 + $0x3c] sm:$0xf]
      %v5889 = vld [vmem:[%s4757 + $0x40] sm:$0xf]
      %v5890 = vld [vmem:[%s4757 + $0x48] sm:$0xf]
      %v5891 = vld [vmem:[%s4757 + $0x4c] sm:$0xf]
      %v5892 = vld [vmem:[%s4757 + $0x54] sm:$0xf]
      %v5893 = vld [vmem:[%s4757 + $0x58] sm:$0xf]
      %v5894 = vld [vmem:[%s4757 + $0x60] sm:$0xf]
      %v5895 = vld [vmem:[%s4757 + $0x64] sm:$0xf]
      %v5896 = vld [vmem:[%s4757 + $0x6c] sm:$0xf]
      %v5897 = vld [vmem:[%s4757 + $0x70] sm:$0xf]
      %v5898 = vld [vmem:[%s4757 + $0x78] sm:$0xf]
      %v5899 = vld [vmem:[%s4757 + $0x7c] sm:$0xf]
      %v5900 = vld [vmem:[%s4757 + $0x84] sm:$0xf]
      %v5901 = vld [vmem:[%s4757 + $0x88] sm:$0xf]
      %v5902 = vld [vmem:[%s4757 + $0x90] sm:$0xf]
      %v5903 = vld [vmem:[%s4757 + $0x94] sm:$0xf]
      %v5904 = vld [vmem:[%s4757 + $0x9c] sm:$0xf]
      %v5905 = vld [vmem:[%s4757 + $0xa0] sm:$0xf]
      %v5906 = vld [vmem:[%s4757 + $0xa8] sm:$0xf]
      %v5907 = vld [vmem:[%s4757 + $0xac] sm:$0xf]
      %v5908 = vld [vmem:[%s4757 + $0xb4] sm:$0xf]
      %v5909 = vld [vmem:[%s4757 + $0xb8] sm:$0xf]
      %v5942 = vunpack.c.l.b16 %v5878
      %v5943 = vunpack.c.l.b16 %v5879
      %v5944 = vunpack.c.l.b16 %v5880
      %v5945 = vunpack.c.l.b16 %v5881
      %v5946 = vunpack.c.l.b16 %v5882
      %v5947 = vunpack.c.l.b16 %v5883
      %v5948 = vunpack.c.l.b16 %v5884
      %v5949 = vunpack.c.l.b16 %v5885
      %v5950 = vunpack.c.l.b16 %v5886
      %v5951 = vunpack.c.l.b16 %v5887
      %v5952 = vunpack.c.l.b16 %v5888
      %v5953 = vunpack.c.l.b16 %v5889
      %v5954 = vunpack.c.l.b16 %v5890
      %v5955 = vunpack.c.l.b16 %v5891
      %v5956 = vunpack.c.l.b16 %v5892
      %v5957 = vunpack.c.l.b16 %v5893
      %v5958 = vunpack.c.l.b16 %v5894
      %v5959 = vunpack.c.l.b16 %v5895
      %v5960 = vunpack.c.l.b16 %v5896
      %v5961 = vunpack.c.l.b16 %v5897
      %v5962 = vunpack.c.l.b16 %v5898
      %v5963 = vunpack.c.l.b16 %v5899
      %v5964 = vunpack.c.l.b16 %v5900
      %v5965 = vunpack.c.l.b16 %v5901
      %v5966 = vunpack.c.l.b16 %v5902
      %v5967 = vunpack.c.l.b16 %v5903
      %v5968 = vunpack.c.l.b16 %v5904
      %v5969 = vunpack.c.l.b16 %v5905
      %v5970 = vunpack.c.l.b16 %v5906
      %v5971 = vunpack.c.l.b16 %v5907
      %v5972 = vunpack.c.l.b16 %v5908
      %v5973 = vunpack.c.l.b16 %v5909
      %v5974 = vpack.c.b16 %v5943, %v5942
      %v5975 = vpack.c.b16 %v5945, %v5944
      %v5976 = vpack.c.b16 %v5947, %v5946
      %v5977 = vpack.c.b16 %v5949, %v5948
      %v5978 = vpack.c.b16 %v5951, %v5950
      %v5979 = vpack.c.b16 %v5953, %v5952
      %v5980 = vpack.c.b16 %v5955, %v5954
      %v5981 = vpack.c.b16 %v5957, %v5956
      %v5982 = vpack.c.b16 %v5959, %v5958
      %v5983 = vpack.c.b16 %v5961, %v5960
      %v5984 = vpack.c.b16 %v5963, %v5962
      %v5985 = vpack.c.b16 %v5965, %v5964
      %v5986 = vpack.c.b16 %v5967, %v5966
      %v5987 = vpack.c.b16 %v5969, %v5968
      %v5988 = vpack.c.b16 %v5971, %v5970
      %v5989 = vpack.c.b16 %v5973, %v5972
      %5990 = vrot.lane.b32.xlu0 %v5974, 24
      %v5991 = vpop.permute.xlu0 %5990
      %5992 = vrot.lane.b32.xlu0 %v5975, 24
      %v5993 = vpop.permute.xlu0 %5992
      %5994 = vrot.lane.b32.xlu0 %v5976, 24
      %v5995 = vpop.permute.xlu0 %5994
      %5996 = vrot.lane.b32.xlu0 %v5977, 24
      %v5997 = vpop.permute.xlu0 %5996
      %5998 = vrot.lane.b32.xlu0 %v5978, 24
      %v5999 = vpop.permute.xlu0 %5998
      %6000 = vrot.lane.b32.xlu0 %v5979, 24
      %v6001 = vpop.permute.xlu0 %6000
      %6002 = vrot.lane.b32.xlu0 %v5980, 24
      %v6003 = vpop.permute.xlu0 %6002
      %6004 = vrot.lane.b32.xlu0 %v5981, 24
      %v6005 = vpop.permute.xlu0 %6004
      %6006 = vrot.lane.b32.xlu0 %v5982, 24
      %v6007 = vpop.permute.xlu0 %6006
      %6008 = vrot.lane.b32.xlu0 %v5983, 24
      %v6009 = vpop.permute.xlu0 %6008
      %6010 = vrot.lane.b32.xlu0 %v5984, 24
      %v6011 = vpop.permute.xlu0 %6010
      %6012 = vrot.lane.b32.xlu0 %v5985, 24
      %v6013 = vpop.permute.xlu0 %6012
      %6014 = vrot.lane.b32.xlu0 %v5986, 24
      %v6015 = vpop.permute.xlu0 %6014
      %6016 = vrot.lane.b32.xlu0 %v5987, 24
      %v6017 = vpop.permute.xlu0 %6016
      %6018 = vrot.lane.b32.xlu0 %v5988, 24
      %v6019 = vpop.permute.xlu0 %6018
      %6020 = vrot.lane.b32.xlu0 %v5989, 24
      %v6021 = vpop.permute.xlu0 %6020
      %6038 = vst.msk [vmem:[#allocation4] sm:$0xff] %vm1994, %v5991
      %6039 = vst.msk [vmem:[#allocation4 + $0x8] sm:$0xff] %vm1994, %v5993
      %6040 = vst.msk [vmem:[#allocation4 + $0x10] sm:$0xff] %vm1994, %v5995
      %6041 = vst.msk [vmem:[#allocation4 + $0x18] sm:$0xff] %vm1994, %v5997
      %6042 = vst.msk [vmem:[#allocation4 + $0x20] sm:$0xff] %vm1994, %v5999
      %6043 = vst.msk [vmem:[#allocation4 + $0x28] sm:$0xff] %vm1994, %v6001
      %6044 = vst.msk [vmem:[#allocation4 + $0x30] sm:$0xff] %vm1994, %v6003
      %6045 = vst.msk [vmem:[#allocation4 + $0x38] sm:$0xff] %vm1994, %v6005
      %6046 = vst.msk [vmem:[#allocation4 + $0x40] sm:$0xff] %vm1994, %v6007
      %6047 = vst.msk [vmem:[#allocation4 + $0x48] sm:$0xff] %vm1994, %v6009
      %6048 = vst.msk [vmem:[#allocation4 + $0x50] sm:$0xff] %vm1994, %v6011
      %6049 = vst.msk [vmem:[#allocation4 + $0x58] sm:$0xff] %vm1994, %v6013
      %6050 = vst.msk [vmem:[#allocation4 + $0x60] sm:$0xff] %vm1994, %v6015
      %6051 = vst.msk [vmem:[#allocation4 + $0x68] sm:$0xff] %vm1994, %v6017
      %6052 = vst.msk [vmem:[#allocation4 + $0x70] sm:$0xff] %vm1994, %v6019
      %6053 = vst.msk [vmem:[#allocation4 + $0x78] sm:$0xff] %vm1994, %v6021
      %v6054 = vld [vmem:[%s4757] sm:$0xf]
      %v6055 = vld [vmem:[%s4757 + $0x4] sm:$0xf]
      %v6056 = vld [vmem:[%s4757 + $0x8] sm:$0x1]
      %v6057 = vld [vmem:[%s4757 + $0xc] sm:$0xf]
      %v6058 = vld [vmem:[%s4757 + $0x10] sm:$0xf]
      %v6059 = vld [vmem:[%s4757 + $0x14] sm:$0x1]
      %v6060 = vld [vmem:[%s4757 + $0x18] sm:$0xf]
      %v6061 = vld [vmem:[%s4757 + $0x1c] sm:$0xf]
      %v6062 = vld [vmem:[%s4757 + $0x20] sm:$0x1]
      %v6063 = vld [vmem:[%s4757 + $0x24] sm:$0xf]
      %v6064 = vld [vmem:[%s4757 + $0x28] sm:$0xf]
      %v6065 = vld [vmem:[%s4757 + $0x2c] sm:$0x1]
      %v6066 = vld [vmem:[%s4757 + $0x30] sm:$0xf]
      %v6067 = vld [vmem:[%s4757 + $0x34] sm:$0xf]
      %v6068 = vld [vmem:[%s4757 + $0x38] sm:$0x1]
      %v6069 = vld [vmem:[%s4757 + $0x3c] sm:$0xf]
      %v6070 = vld [vmem:[%s4757 + $0x40] sm:$0xf]
      %v6071 = vld [vmem:[%s4757 + $0x44] sm:$0x1]
      %v6072 = vld [vmem:[%s4757 + $0x48] sm:$0xf]
      %v6073 = vld [vmem:[%s4757 + $0x4c] sm:$0xf]
      %v6074 = vld [vmem:[%s4757 + $0x50] sm:$0x1]
      %v6075 = vld [vmem:[%s4757 + $0x54] sm:$0xf]
      %v6076 = vld [vmem:[%s4757 + $0x58] sm:$0xf]
      %v6077 = vld [vmem:[%s4757 + $0x5c] sm:$0x1]
      %v6078 = vld [vmem:[%s4757 + $0x60] sm:$0xf]
      %v6079 = vld [vmem:[%s4757 + $0x64] sm:$0xf]
      %v6080 = vld [vmem:[%s4757 + $0x68] sm:$0x1]
      %v6081 = vld [vmem:[%s4757 + $0x6c] sm:$0xf]
      %v6082 = vld [vmem:[%s4757 + $0x70] sm:$0xf]
      %v6083 = vld [vmem:[%s4757 + $0x74] sm:$0x1]
      %v6084 = vld [vmem:[%s4757 + $0x78] sm:$0xf]
      %v6085 = vld [vmem:[%s4757 + $0x7c] sm:$0xf]
      %v6086 = vld [vmem:[%s4757 + $0x80] sm:$0x1]
      %v6087 = vld [vmem:[%s4757 + $0x84] sm:$0xf]
      %v6088 = vld [vmem:[%s4757 + $0x88] sm:$0xf]
      %v6089 = vld [vmem:[%s4757 + $0x8c] sm:$0x1]
      %v6090 = vld [vmem:[%s4757 + $0x90] sm:$0xf]
      %v6091 = vld [vmem:[%s4757 + $0x94] sm:$0xf]
      %v6092 = vld [vmem:[%s4757 + $0x98] sm:$0x1]
      %v6093 = vld [vmem:[%s4757 + $0x9c] sm:$0xf]
      %v6094 = vld [vmem:[%s4757 + $0xa0] sm:$0xf]
      %v6095 = vld [vmem:[%s4757 + $0xa4] sm:$0x1]
      %v6096 = vld [vmem:[%s4757 + $0xa8] sm:$0xf]
      %v6097 = vld [vmem:[%s4757 + $0xac] sm:$0xf]
      %v6098 = vld [vmem:[%s4757 + $0xb0] sm:$0x1]
      %v6099 = vld [vmem:[%s4757 + $0xb4] sm:$0xf]
      %v6100 = vld [vmem:[%s4757 + $0xb8] sm:$0xf]
      %v6101 = vld [vmem:[%s4757 + $0xbc] sm:$0x1]
      %v6103 = vshrl.u32 %v6054, 16
      %v6105 = vrot.slane %v6103, 4
      %v6106 = vshll.u32 %v6054, 16
      %v6108 = vrot.slane %v6106, 5
      %v6109 = vor.u32 %v6105, %v6108
      %v6110 = vrot.slane %v6109, 4
      %v6112 = vshll.u32 %v6055, 16
      %v6114 = vrot.slane %v6112, 5
      %v6115 = vsel %vm1012, %v6110, %v6114
      %v6116 = vshrl.u32 %v6055, 16
      %v6118 = vrot.slane %v6116, 4
      %v6119 = vor.u32 %v6118, %v6114
      %v6120 = vrot.slane %v6119, 4
      %v6122 = vshll.u32 %v6056, 16
      %v6124 = vrot.slane %v6122, 5
      %v6125 = vsel %vm1012, %v6120, %v6124
      %v6127 = vshrl.u32 %v6057, 16
      %v6129 = vrot.slane %v6127, 4
      %v6130 = vshll.u32 %v6057, 16
      %v6132 = vrot.slane %v6130, 5
      %v6133 = vor.u32 %v6129, %v6132
      %v6134 = vrot.slane %v6133, 4
      %v6136 = vshll.u32 %v6058, 16
      %v6138 = vrot.slane %v6136, 5
      %v6139 = vsel %vm1012, %v6134, %v6138
      %v6140 = vshrl.u32 %v6058, 16
      %v6142 = vrot.slane %v6140, 4
      %v6143 = vor.u32 %v6142, %v6138
      %v6144 = vrot.slane %v6143, 4
      %v6146 = vshll.u32 %v6059, 16
      %v6148 = vrot.slane %v6146, 5
      %v6149 = vsel %vm1012, %v6144, %v6148
      %v6151 = vshrl.u32 %v6060, 16
      %v6153 = vrot.slane %v6151, 4
      %v6154 = vshll.u32 %v6060, 16
      %v6156 = vrot.slane %v6154, 5
      %v6157 = vor.u32 %v6153, %v6156
      %v6158 = vrot.slane %v6157, 4
      %v6160 = vshll.u32 %v6061, 16
      %v6162 = vrot.slane %v6160, 5
      %v6163 = vsel %vm1012, %v6158, %v6162
      %v6164 = vshrl.u32 %v6061, 16
      %v6166 = vrot.slane %v6164, 4
      %v6167 = vor.u32 %v6166, %v6162
      %v6168 = vrot.slane %v6167, 4
      %v6170 = vshll.u32 %v6062, 16
      %v6172 = vrot.slane %v6170, 5
      %v6173 = vsel %vm1012, %v6168, %v6172
      %v6175 = vshrl.u32 %v6063, 16
      %v6177 = vrot.slane %v6175, 4
      %v6178 = vshll.u32 %v6063, 16
      %v6180 = vrot.slane %v6178, 5
      %v6181 = vor.u32 %v6177, %v6180
      %v6182 = vrot.slane %v6181, 4
      %v6184 = vshll.u32 %v6064, 16
      %v6186 = vrot.slane %v6184, 5
      %v6187 = vsel %vm1012, %v6182, %v6186
      %v6188 = vshrl.u32 %v6064, 16
      %v6190 = vrot.slane %v6188, 4
      %v6191 = vor.u32 %v6190, %v6186
      %v6192 = vrot.slane %v6191, 4
      %v6194 = vshll.u32 %v6065, 16
      %v6196 = vrot.slane %v6194, 5
      %v6197 = vsel %vm1012, %v6192, %v6196
      %v6199 = vshrl.u32 %v6066, 16
      %v6201 = vrot.slane %v6199, 4
      %v6202 = vshll.u32 %v6066, 16
      %v6204 = vrot.slane %v6202, 5
      %v6205 = vor.u32 %v6201, %v6204
      %v6206 = vrot.slane %v6205, 4
      %v6208 = vshll.u32 %v6067, 16
      %v6210 = vrot.slane %v6208, 5
      %v6211 = vsel %vm1012, %v6206, %v6210
      %v6212 = vshrl.u32 %v6067, 16
      %v6214 = vrot.slane %v6212, 4
      %v6215 = vor.u32 %v6214, %v6210
      %v6216 = vrot.slane %v6215, 4
      %v6218 = vshll.u32 %v6068, 16
      %v6220 = vrot.slane %v6218, 5
      %v6221 = vsel %vm1012, %v6216, %v6220
      %v6223 = vshrl.u32 %v6069, 16
      %v6225 = vrot.slane %v6223, 4
      %v6226 = vshll.u32 %v6069, 16
      %v6228 = vrot.slane %v6226, 5
      %v6229 = vor.u32 %v6225, %v6228
      %v6230 = vrot.slane %v6229, 4
      %v6232 = vshll.u32 %v6070, 16
      %v6234 = vrot.slane %v6232, 5
      %v6235 = vsel %vm1012, %v6230, %v6234
      %v6236 = vshrl.u32 %v6070, 16
      %v6238 = vrot.slane %v6236, 4
      %v6239 = vor.u32 %v6238, %v6234
      %v6240 = vrot.slane %v6239, 4
      %v6242 = vshll.u32 %v6071, 16
      %v6244 = vrot.slane %v6242, 5
      %v6245 = vsel %vm1012, %v6240, %v6244
      %v6247 = vshrl.u32 %v6072, 16
      %v6249 = vrot.slane %v6247, 4
      %v6250 = vshll.u32 %v6072, 16
      %v6252 = vrot.slane %v6250, 5
      %v6253 = vor.u32 %v6249, %v6252
      %v6254 = vrot.slane %v6253, 4
      %v6256 = vshll.u32 %v6073, 16
      %v6258 = vrot.slane %v6256, 5
      %v6259 = vsel %vm1012, %v6254, %v6258
      %v6260 = vshrl.u32 %v6073, 16
      %v6262 = vrot.slane %v6260, 4
      %v6263 = vor.u32 %v6262, %v6258
      %v6264 = vrot.slane %v6263, 4
      %v6266 = vshll.u32 %v6074, 16
      %v6268 = vrot.slane %v6266, 5
      %v6269 = vsel %vm1012, %v6264, %v6268
      %v6271 = vshrl.u32 %v6075, 16
      %v6273 = vrot.slane %v6271, 4
      %v6274 = vshll.u32 %v6075, 16
      %v6276 = vrot.slane %v6274, 5
      %v6277 = vor.u32 %v6273, %v6276
      %v6278 = vrot.slane %v6277, 4
      %v6280 = vshll.u32 %v6076, 16
      %v6282 = vrot.slane %v6280, 5
      %v6283 = vsel %vm1012, %v6278, %v6282
      %v6284 = vshrl.u32 %v6076, 16
      %v6286 = vrot.slane %v6284, 4
      %v6287 = vor.u32 %v6286, %v6282
      %v6288 = vrot.slane %v6287, 4
      %v6290 = vshll.u32 %v6077, 16
      %v6292 = vrot.slane %v6290, 5
      %v6293 = vsel %vm1012, %v6288, %v6292
      %v6295 = vshrl.u32 %v6078, 16
      %v6297 = vrot.slane %v6295, 4
      %v6298 = vshll.u32 %v6078, 16
      %v6300 = vrot.slane %v6298, 5
      %v6301 = vor.u32 %v6297, %v6300
      %v6302 = vrot.slane %v6301, 4
      %v6304 = vshll.u32 %v6079, 16
      %v6306 = vrot.slane %v6304, 5
      %v6307 = vsel %vm1012, %v6302, %v6306
      %v6308 = vshrl.u32 %v6079, 16
      %v6310 = vrot.slane %v6308, 4
      %v6311 = vor.u32 %v6310, %v6306
      %v6312 = vrot.slane %v6311, 4
      %v6314 = vshll.u32 %v6080, 16
      %v6316 = vrot.slane %v6314, 5
      %v6317 = vsel %vm1012, %v6312, %v6316
      %v6319 = vshrl.u32 %v6081, 16
      %v6321 = vrot.slane %v6319, 4
      %v6322 = vshll.u32 %v6081, 16
      %v6324 = vrot.slane %v6322, 5
      %v6325 = vor.u32 %v6321, %v6324
      %v6326 = vrot.slane %v6325, 4
      %v6328 = vshll.u32 %v6082, 16
      %v6330 = vrot.slane %v6328, 5
      %v6331 = vsel %vm1012, %v6326, %v6330
      %v6332 = vshrl.u32 %v6082, 16
      %v6334 = vrot.slane %v6332, 4
      %v6335 = vor.u32 %v6334, %v6330
      %v6336 = vrot.slane %v6335, 4
      %v6338 = vshll.u32 %v6083, 16
      %v6340 = vrot.slane %v6338, 5
      %v6341 = vsel %vm1012, %v6336, %v6340
      %v6343 = vshrl.u32 %v6084, 16
      %v6345 = vrot.slane %v6343, 4
      %v6346 = vshll.u32 %v6084, 16
      %v6348 = vrot.slane %v6346, 5
      %v6349 = vor.u32 %v6345, %v6348
      %v6350 = vrot.slane %v6349, 4
      %v6352 = vshll.u32 %v6085, 16
      %v6354 = vrot.slane %v6352, 5
      %v6355 = vsel %vm1012, %v6350, %v6354
      %v6356 = vshrl.u32 %v6085, 16
      %v6358 = vrot.slane %v6356, 4
      %v6359 = vor.u32 %v6358, %v6354
      %v6360 = vrot.slane %v6359, 4
      %v6362 = vshll.u32 %v6086, 16
      %v6364 = vrot.slane %v6362, 5
      %v6365 = vsel %vm1012, %v6360, %v6364
      %v6367 = vshrl.u32 %v6087, 16
      %v6369 = vrot.slane %v6367, 4
      %v6370 = vshll.u32 %v6087, 16
      %v6372 = vrot.slane %v6370, 5
      %v6373 = vor.u32 %v6369, %v6372
      %v6374 = vrot.slane %v6373, 4
      %v6376 = vshll.u32 %v6088, 16
      %v6378 = vrot.slane %v6376, 5
      %v6379 = vsel %vm1012, %v6374, %v6378
      %v6380 = vshrl.u32 %v6088, 16
      %v6382 = vrot.slane %v6380, 4
      %v6383 = vor.u32 %v6382, %v6378
      %v6384 = vrot.slane %v6383, 4
      %v6386 = vshll.u32 %v6089, 16
      %v6388 = vrot.slane %v6386, 5
      %v6389 = vsel %vm1012, %v6384, %v6388
      %v6391 = vshrl.u32 %v6090, 16
      %v6393 = vrot.slane %v6391, 4
      %v6394 = vshll.u32 %v6090, 16
      %v6396 = vrot.slane %v6394, 5
      %v6397 = vor.u32 %v6393, %v6396
      %v6398 = vrot.slane %v6397, 4
      %v6400 = vshll.u32 %v6091, 16
      %v6402 = vrot.slane %v6400, 5
      %v6403 = vsel %vm1012, %v6398, %v6402
      %v6404 = vshrl.u32 %v6091, 16
      %v6406 = vrot.slane %v6404, 4
      %v6407 = vor.u32 %v6406, %v6402
      %v6408 = vrot.slane %v6407, 4
      %v6410 = vshll.u32 %v6092, 16
      %v6412 = vrot.slane %v6410, 5
      %v6413 = vsel %vm1012, %v6408, %v6412
      %v6415 = vshrl.u32 %v6093, 16
      %v6417 = vrot.slane %v6415, 4
      %v6418 = vshll.u32 %v6093, 16
      %v6420 = vrot.slane %v6418, 5
      %v6421 = vor.u32 %v6417, %v6420
      %v6422 = vrot.slane %v6421, 4
      %v6424 = vshll.u32 %v6094, 16
      %v6426 = vrot.slane %v6424, 5
      %v6427 = vsel %vm1012, %v6422, %v6426
      %v6428 = vshrl.u32 %v6094, 16
      %v6430 = vrot.slane %v6428, 4
      %v6431 = vor.u32 %v6430, %v6426
      %v6432 = vrot.slane %v6431, 4
      %v6434 = vshll.u32 %v6095, 16
      %v6436 = vrot.slane %v6434, 5
      %v6437 = vsel %vm1012, %v6432, %v6436
      %v6439 = vshrl.u32 %v6096, 16
      %v6441 = vrot.slane %v6439, 4
      %v6442 = vshll.u32 %v6096, 16
      %v6444 = vrot.slane %v6442, 5
      %v6445 = vor.u32 %v6441, %v6444
      %v6446 = vrot.slane %v6445, 4
      %v6448 = vshll.u32 %v6097, 16
      %v6450 = vrot.slane %v6448, 5
      %v6451 = vsel %vm1012, %v6446, %v6450
      %v6452 = vshrl.u32 %v6097, 16
      %v6454 = vrot.slane %v6452, 4
      %v6455 = vor.u32 %v6454, %v6450
      %v6456 = vrot.slane %v6455, 4
      %v6458 = vshll.u32 %v6098, 16
      %v6460 = vrot.slane %v6458, 5
      %v6461 = vsel %vm1012, %v6456, %v6460
      %v6463 = vshrl.u32 %v6099, 16
      %v6465 = vrot.slane %v6463, 4
      %v6466 = vshll.u32 %v6099, 16
      %v6468 = vrot.slane %v6466, 5
      %v6469 = vor.u32 %v6465, %v6468
      %v6470 = vrot.slane %v6469, 4
      %v6472 = vshll.u32 %v6100, 16
      %v6474 = vrot.slane %v6472, 5
      %v6475 = vsel %vm1012, %v6470, %v6474
      %v6476 = vshrl.u32 %v6100, 16
      %v6478 = vrot.slane %v6476, 4
      %v6479 = vor.u32 %v6478, %v6474
      %v6480 = vrot.slane %v6479, 4
      %v6482 = vshll.u32 %v6101, 16
      %v6484 = vrot.slane %v6482, 5
      %v6485 = vsel %vm1012, %v6480, %v6484
      %v6486 = vunpack.c.l.b16 %v6115
      %v6487 = vunpack.c.l.b16 %v6125
      %v6488 = vunpack.c.l.b16 %v6139
      %v6489 = vunpack.c.l.b16 %v6149
      %v6490 = vunpack.c.l.b16 %v6163
      %v6491 = vunpack.c.l.b16 %v6173
      %v6492 = vunpack.c.l.b16 %v6187
      %v6493 = vunpack.c.l.b16 %v6197
      %v6494 = vunpack.c.l.b16 %v6211
      %v6495 = vunpack.c.l.b16 %v6221
      %v6496 = vunpack.c.l.b16 %v6235
      %v6497 = vunpack.c.l.b16 %v6245
      %v6498 = vunpack.c.l.b16 %v6259
      %v6499 = vunpack.c.l.b16 %v6269
      %v6500 = vunpack.c.l.b16 %v6283
      %v6501 = vunpack.c.l.b16 %v6293
      %v6502 = vunpack.c.l.b16 %v6307
      %v6503 = vunpack.c.l.b16 %v6317
      %v6504 = vunpack.c.l.b16 %v6331
      %v6505 = vunpack.c.l.b16 %v6341
      %v6506 = vunpack.c.l.b16 %v6355
      %v6507 = vunpack.c.l.b16 %v6365
      %v6508 = vunpack.c.l.b16 %v6379
      %v6509 = vunpack.c.l.b16 %v6389
      %v6510 = vunpack.c.l.b16 %v6403
      %v6511 = vunpack.c.l.b16 %v6413
      %v6512 = vunpack.c.l.b16 %v6427
      %v6513 = vunpack.c.l.b16 %v6437
      %v6514 = vunpack.c.l.b16 %v6451
      %v6515 = vunpack.c.l.b16 %v6461
      %v6516 = vunpack.c.l.b16 %v6475
      %v6517 = vunpack.c.l.b16 %v6485
      %v6518 = vpack.c.b16 %v6487, %v6486
      %v6519 = vpack.c.b16 %v6489, %v6488
      %v6520 = vpack.c.b16 %v6491, %v6490
      %v6521 = vpack.c.b16 %v6493, %v6492
      %v6522 = vpack.c.b16 %v6495, %v6494
      %v6523 = vpack.c.b16 %v6497, %v6496
      %v6524 = vpack.c.b16 %v6499, %v6498
      %v6525 = vpack.c.b16 %v6501, %v6500
      %v6526 = vpack.c.b16 %v6503, %v6502
      %v6527 = vpack.c.b16 %v6505, %v6504
      %v6528 = vpack.c.b16 %v6507, %v6506
      %v6529 = vpack.c.b16 %v6509, %v6508
      %v6530 = vpack.c.b16 %v6511, %v6510
      %v6531 = vpack.c.b16 %v6513, %v6512
      %v6532 = vpack.c.b16 %v6515, %v6514
      %v6533 = vpack.c.b16 %v6517, %v6516
      %6534 = vrot.lane.b32.xlu0 %v6518, 32
      %v6535 = vpop.permute.xlu0 %6534
      %6536 = vrot.lane.b32.xlu0 %v6519, 32
      %v6537 = vpop.permute.xlu0 %6536
      %6538 = vrot.lane.b32.xlu0 %v6520, 32
      %v6539 = vpop.permute.xlu0 %6538
      %6540 = vrot.lane.b32.xlu0 %v6521, 32
      %v6541 = vpop.permute.xlu0 %6540
      %6542 = vrot.lane.b32.xlu0 %v6522, 32
      %v6543 = vpop.permute.xlu0 %6542
      %6544 = vrot.lane.b32.xlu0 %v6523, 32
      %v6545 = vpop.permute.xlu0 %6544
      %6546 = vrot.lane.b32.xlu0 %v6524, 32
      %v6547 = vpop.permute.xlu0 %6546
      %6548 = vrot.lane.b32.xlu0 %v6525, 32
      %v6549 = vpop.permute.xlu0 %6548
      %6550 = vrot.lane.b32.xlu0 %v6526, 32
      %v6551 = vpop.permute.xlu0 %6550
      %6552 = vrot.lane.b32.xlu0 %v6527, 32
      %v6553 = vpop.permute.xlu0 %6552
      %6554 = vrot.lane.b32.xlu0 %v6528, 32
      %v6555 = vpop.permute.xlu0 %6554
      %6556 = vrot.lane.b32.xlu0 %v6529, 32
      %v6557 = vpop.permute.xlu0 %6556
      %6558 = vrot.lane.b32.xlu0 %v6530, 32
      %v6559 = vpop.permute.xlu0 %6558
      %6560 = vrot.lane.b32.xlu0 %v6531, 32
      %v6561 = vpop.permute.xlu0 %6560
      %6562 = vrot.lane.b32.xlu0 %v6532, 32
      %v6563 = vpop.permute.xlu0 %6562
      %6564 = vrot.lane.b32.xlu0 %v6533, 32
      %v6565 = vpop.permute.xlu0 %6564
      %6582 = vst.msk [vmem:[#allocation4] sm:$0xff] %vm2539, %v6535
      %6583 = vst.msk [vmem:[#allocation4 + $0x8] sm:$0xff] %vm2539, %v6537
      %6584 = vst.msk [vmem:[#allocation4 + $0x10] sm:$0xff] %vm2539, %v6539
      %6585 = vst.msk [vmem:[#allocation4 + $0x18] sm:$0xff] %vm2539, %v6541
      %6586 = vst.msk [vmem:[#allocation4 + $0x20] sm:$0xff] %vm2539, %v6543
      %6587 = vst.msk [vmem:[#allocation4 + $0x28] sm:$0xff] %vm2539, %v6545
      %6588 = vst.msk [vmem:[#allocation4 + $0x30] sm:$0xff] %vm2539, %v6547
      %6589 = vst.msk [vmem:[#allocation4 + $0x38] sm:$0xff] %vm2539, %v6549
      %6590 = vst.msk [vmem:[#allocation4 + $0x40] sm:$0xff] %vm2539, %v6551
      %6591 = vst.msk [vmem:[#allocation4 + $0x48] sm:$0xff] %vm2539, %v6553
      %6592 = vst.msk [vmem:[#allocation4 + $0x50] sm:$0xff] %vm2539, %v6555
      %6593 = vst.msk [vmem:[#allocation4 + $0x58] sm:$0xff] %vm2539, %v6557
      %6594 = vst.msk [vmem:[#allocation4 + $0x60] sm:$0xff] %vm2539, %v6559
      %6595 = vst.msk [vmem:[#allocation4 + $0x68] sm:$0xff] %vm2539, %v6561
      %6596 = vst.msk [vmem:[#allocation4 + $0x70] sm:$0xff] %vm2539, %v6563
      %6597 = vst.msk [vmem:[#allocation4 + $0x78] sm:$0xff] %vm2539, %v6565
      %v6598 = vld [vmem:[%s4757] sm:$0xe]
      %v6599 = vld [vmem:[%s4757 + $0x4] sm:$0xf]
      %v6600 = vld [vmem:[%s4757 + $0x8] sm:$0x1]
      %v6601 = vld [vmem:[%s4757 + $0xc] sm:$0xe]
      %v6602 = vld [vmem:[%s4757 + $0x10] sm:$0xf]
      %v6603 = vld [vmem:[%s4757 + $0x14] sm:$0x1]
      %v6604 = vld [vmem:[%s4757 + $0x18] sm:$0xe]
      %v6605 = vld [vmem:[%s4757 + $0x1c] sm:$0xf]
      %v6606 = vld [vmem:[%s4757 + $0x20] sm:$0x1]
      %v6607 = vld [vmem:[%s4757 + $0x24] sm:$0xe]
      %v6608 = vld [vmem:[%s4757 + $0x28] sm:$0xf]
      %v6609 = vld [vmem:[%s4757 + $0x2c] sm:$0x1]
      %v6610 = vld [vmem:[%s4757 + $0x30] sm:$0xe]
      %v6611 = vld [vmem:[%s4757 + $0x34] sm:$0xf]
      %v6612 = vld [vmem:[%s4757 + $0x38] sm:$0x1]
      %v6613 = vld [vmem:[%s4757 + $0x3c] sm:$0xe]
      %v6614 = vld [vmem:[%s4757 + $0x40] sm:$0xf]
      %v6615 = vld [vmem:[%s4757 + $0x44] sm:$0x1]
      %v6616 = vld [vmem:[%s4757 + $0x48] sm:$0xe]
      %v6617 = vld [vmem:[%s4757 + $0x4c] sm:$0xf]
      %v6618 = vld [vmem:[%s4757 + $0x50] sm:$0x1]
      %v6619 = vld [vmem:[%s4757 + $0x54] sm:$0xe]
      %v6620 = vld [vmem:[%s4757 + $0x58] sm:$0xf]
      %v6621 = vld [vmem:[%s4757 + $0x5c] sm:$0x1]
      %v6622 = vld [vmem:[%s4757 + $0x60] sm:$0xe]
      %v6623 = vld [vmem:[%s4757 + $0x64] sm:$0xf]
      %v6624 = vld [vmem:[%s4757 + $0x68] sm:$0x1]
      %v6625 = vld [vmem:[%s4757 + $0x6c] sm:$0xe]
      %v6626 = vld [vmem:[%s4757 + $0x70] sm:$0xf]
      %v6627 = vld [vmem:[%s4757 + $0x74] sm:$0x1]
      %v6628 = vld [vmem:[%s4757 + $0x78] sm:$0xe]
      %v6629 = vld [vmem:[%s4757 + $0x7c] sm:$0xf]
      %v6630 = vld [vmem:[%s4757 + $0x80] sm:$0x1]
      %v6631 = vld [vmem:[%s4757 + $0x84] sm:$0xe]
      %v6632 = vld [vmem:[%s4757 + $0x88] sm:$0xf]
      %v6633 = vld [vmem:[%s4757 + $0x8c] sm:$0x1]
      %v6634 = vld [vmem:[%s4757 + $0x90] sm:$0xe]
      %v6635 = vld [vmem:[%s4757 + $0x94] sm:$0xf]
      %v6636 = vld [vmem:[%s4757 + $0x98] sm:$0x1]
      %v6637 = vld [vmem:[%s4757 + $0x9c] sm:$0xe]
      %v6638 = vld [vmem:[%s4757 + $0xa0] sm:$0xf]
      %v6639 = vld [vmem:[%s4757 + $0xa4] sm:$0x1]
      %v6640 = vld [vmem:[%s4757 + $0xa8] sm:$0xe]
      %v6641 = vld [vmem:[%s4757 + $0xac] sm:$0xf]
      %v6642 = vld [vmem:[%s4757 + $0xb0] sm:$0x1]
      %v6643 = vld [vmem:[%s4757 + $0xb4] sm:$0xe]
      %v6644 = vld [vmem:[%s4757 + $0xb8] sm:$0xf]
      %v6645 = vld [vmem:[%s4757 + $0xbc] sm:$0x1]
      %v6694 = vrot.slane %v6598, 5
      %v6695 = vrot.slane %v6694, 4
      %v6696 = vrot.slane %v6599, 5
      %v6697 = vsel %vm1608, %v6695, %v6696
      %v6698 = vrot.slane %v6696, 4
      %v6699 = vrot.slane %v6600, 5
      %v6700 = vsel %vm1608, %v6698, %v6699
      %v6701 = vrot.slane %v6601, 5
      %v6702 = vrot.slane %v6701, 4
      %v6703 = vrot.slane %v6602, 5
      %v6704 = vsel %vm1608, %v6702, %v6703
      %v6705 = vrot.slane %v6703, 4
      %v6706 = vrot.slane %v6603, 5
      %v6707 = vsel %vm1608, %v6705, %v6706
      %v6708 = vrot.slane %v6604, 5
      %v6709 = vrot.slane %v6708, 4
      %v6710 = vrot.slane %v6605, 5
      %v6711 = vsel %vm1608, %v6709, %v6710
      %v6712 = vrot.slane %v6710, 4
      %v6713 = vrot.slane %v6606, 5
      %v6714 = vsel %vm1608, %v6712, %v6713
      %v6715 = vrot.slane %v6607, 5
      %v6716 = vrot.slane %v6715, 4
      %v6717 = vrot.slane %v6608, 5
      %v6718 = vsel %vm1608, %v6716, %v6717
      %v6719 = vrot.slane %v6717, 4
      %v6720 = vrot.slane %v6609, 5
      %v6721 = vsel %vm1608, %v6719, %v6720
      %v6722 = vrot.slane %v6610, 5
      %v6723 = vrot.slane %v6722, 4
      %v6724 = vrot.slane %v6611, 5
      %v6725 = vsel %vm1608, %v6723, %v6724
      %v6726 = vrot.slane %v6724, 4
      %v6727 = vrot.slane %v6612, 5
      %v6728 = vsel %vm1608, %v6726, %v6727
      %v6729 = vrot.slane %v6613, 5
      %v6730 = vrot.slane %v6729, 4
      %v6731 = vrot.slane %v6614, 5
      %v6732 = vsel %vm1608, %v6730, %v6731
      %v6733 = vrot.slane %v6731, 4
      %v6734 = vrot.slane %v6615, 5
      %v6735 = vsel %vm1608, %v6733, %v6734
      %v6736 = vrot.slane %v6616, 5
      %v6737 = vrot.slane %v6736, 4
      %v6738 = vrot.slane %v6617, 5
      %v6739 = vsel %vm1608, %v6737, %v6738
      %v6740 = vrot.slane %v6738, 4
      %v6741 = vrot.slane %v6618, 5
      %v6742 = vsel %vm1608, %v6740, %v6741
      %v6743 = vrot.slane %v6619, 5
      %v6744 = vrot.slane %v6743, 4
      %v6745 = vrot.slane %v6620, 5
      %v6746 = vsel %vm1608, %v6744, %v6745
      %v6747 = vrot.slane %v6745, 4
      %v6748 = vrot.slane %v6621, 5
      %v6749 = vsel %vm1608, %v6747, %v6748
      %v6750 = vrot.slane %v6622, 5
      %v6751 = vrot.slane %v6750, 4
      %v6752 = vrot.slane %v6623, 5
      %v6753 = vsel %vm1608, %v6751, %v6752
      %v6754 = vrot.slane %v6752, 4
      %v6755 = vrot.slane %v6624, 5
      %v6756 = vsel %vm1608, %v6754, %v6755
      %v6757 = vrot.slane %v6625, 5
      %v6758 = vrot.slane %v6757, 4
      %v6759 = vrot.slane %v6626, 5
      %v6760 = vsel %vm1608, %v6758, %v6759
      %v6761 = vrot.slane %v6759, 4
      %v6762 = vrot.slane %v6627, 5
      %v6763 = vsel %vm1608, %v6761, %v6762
      %v6764 = vrot.slane %v6628, 5
      %v6765 = vrot.slane %v6764, 4
      %v6766 = vrot.slane %v6629, 5
      %v6767 = vsel %vm1608, %v6765, %v6766
      %v6768 = vrot.slane %v6766, 4
      %v6769 = vrot.slane %v6630, 5
      %v6770 = vsel %vm1608, %v6768, %v6769
      %v6771 = vrot.slane %v6631, 5
      %v6772 = vrot.slane %v6771, 4
      %v6773 = vrot.slane %v6632, 5
      %v6774 = vsel %vm1608, %v6772, %v6773
      %v6775 = vrot.slane %v6773, 4
      %v6776 = vrot.slane %v6633, 5
      %v6777 = vsel %vm1608, %v6775, %v6776
      %v6778 = vrot.slane %v6634, 5
      %v6779 = vrot.slane %v6778, 4
      %v6780 = vrot.slane %v6635, 5
      %v6781 = vsel %vm1608, %v6779, %v6780
      %v6782 = vrot.slane %v6780, 4
      %v6783 = vrot.slane %v6636, 5
      %v6784 = vsel %vm1608, %v6782, %v6783
      %v6785 = vrot.slane %v6637, 5
      %v6786 = vrot.slane %v6785, 4
      %v6787 = vrot.slane %v6638, 5
      %v6788 = vsel %vm1608, %v6786, %v6787
      %v6789 = vrot.slane %v6787, 4
      %v6790 = vrot.slane %v6639, 5
      %v6791 = vsel %vm1608, %v6789, %v6790
      %v6792 = vrot.slane %v6640, 5
      %v6793 = vrot.slane %v6792, 4
      %v6794 = vrot.slane %v6641, 5
      %v6795 = vsel %vm1608, %v6793, %v6794
      %v6796 = vrot.slane %v6794, 4
      %v6797 = vrot.slane %v6642, 5
      %v6798 = vsel %vm1608, %v6796, %v6797
      %v6799 = vrot.slane %v6643, 5
      %v6800 = vrot.slane %v6799, 4
      %v6801 = vrot.slane %v6644, 5
      %v6802 = vsel %vm1608, %v6800, %v6801
      %v6803 = vrot.slane %v6801, 4
      %v6804 = vrot.slane %v6645, 5
      %v6805 = vsel %vm1608, %v6803, %v6804
      %v6806 = vunpack.c.l.b16 %v6697
      %v6807 = vunpack.c.l.b16 %v6700
      %v6808 = vunpack.c.l.b16 %v6704
      %v6809 = vunpack.c.l.b16 %v6707
      %v6810 = vunpack.c.l.b16 %v6711
      %v6811 = vunpack.c.l.b16 %v6714
      %v6812 = vunpack.c.l.b16 %v6718
      %v6813 = vunpack.c.l.b16 %v6721
      %v6814 = vunpack.c.l.b16 %v6725
      %v6815 = vunpack.c.l.b16 %v6728
      %v6816 = vunpack.c.l.b16 %v6732
      %v6817 = vunpack.c.l.b16 %v6735
      %v6818 = vunpack.c.l.b16 %v6739
      %v6819 = vunpack.c.l.b16 %v6742
      %v6820 = vunpack.c.l.b16 %v6746
      %v6821 = vunpack.c.l.b16 %v6749
      %v6822 = vunpack.c.l.b16 %v6753
      %v6823 = vunpack.c.l.b16 %v6756
      %v6824 = vunpack.c.l.b16 %v6760
      %v6825 = vunpack.c.l.b16 %v6763
      %v6826 = vunpack.c.l.b16 %v6767
      %v6827 = vunpack.c.l.b16 %v6770
      %v6828 = vunpack.c.l.b16 %v6774
      %v6829 = vunpack.c.l.b16 %v6777
      %v6830 = vunpack.c.l.b16 %v6781
      %v6831 = vunpack.c.l.b16 %v6784
      %v6832 = vunpack.c.l.b16 %v6788
      %v6833 = vunpack.c.l.b16 %v6791
      %v6834 = vunpack.c.l.b16 %v6795
      %v6835 = vunpack.c.l.b16 %v6798
      %v6836 = vunpack.c.l.b16 %v6802
      %v6837 = vunpack.c.l.b16 %v6805
      %v6838 = vpack.c.b16 %v6807, %v6806
      %v6839 = vpack.c.b16 %v6809, %v6808
      %v6840 = vpack.c.b16 %v6811, %v6810
      %v6841 = vpack.c.b16 %v6813, %v6812
      %v6842 = vpack.c.b16 %v6815, %v6814
      %v6843 = vpack.c.b16 %v6817, %v6816
      %v6844 = vpack.c.b16 %v6819, %v6818
      %v6845 = vpack.c.b16 %v6821, %v6820
      %v6846 = vpack.c.b16 %v6823, %v6822
      %v6847 = vpack.c.b16 %v6825, %v6824
      %v6848 = vpack.c.b16 %v6827, %v6826
      %v6849 = vpack.c.b16 %v6829, %v6828
      %v6850 = vpack.c.b16 %v6831, %v6830
      %v6851 = vpack.c.b16 %v6833, %v6832
      %v6852 = vpack.c.b16 %v6835, %v6834
      %v6853 = vpack.c.b16 %v6837, %v6836
      %6854 = vrot.lane.b32.xlu0 %v6838, 40
      %v6855 = vpop.permute.xlu0 %6854
      %6856 = vrot.lane.b32.xlu0 %v6839, 40
      %v6857 = vpop.permute.xlu0 %6856
      %6858 = vrot.lane.b32.xlu0 %v6840, 40
      %v6859 = vpop.permute.xlu0 %6858
      %6860 = vrot.lane.b32.xlu0 %v6841, 40
      %v6861 = vpop.permute.xlu0 %6860
      %6862 = vrot.lane.b32.xlu0 %v6842, 40
      %v6863 = vpop.permute.xlu0 %6862
      %6864 = vrot.lane.b32.xlu0 %v6843, 40
      %v6865 = vpop.permute.xlu0 %6864
      %6866 = vrot.lane.b32.xlu0 %v6844, 40
      %v6867 = vpop.permute.xlu0 %6866
      %6868 = vrot.lane.b32.xlu0 %v6845, 40
      %v6869 = vpop.permute.xlu0 %6868
      %6870 = vrot.lane.b32.xlu0 %v6846, 40
      %v6871 = vpop.permute.xlu0 %6870
      %6872 = vrot.lane.b32.xlu0 %v6847, 40
      %v6873 = vpop.permute.xlu0 %6872
      %6874 = vrot.lane.b32.xlu0 %v6848, 40
      %v6875 = vpop.permute.xlu0 %6874
      %6876 = vrot.lane.b32.xlu0 %v6849, 40
      %v6877 = vpop.permute.xlu0 %6876
      %6878 = vrot.lane.b32.xlu0 %v6850, 40
      %v6879 = vpop.permute.xlu0 %6878
      %6880 = vrot.lane.b32.xlu0 %v6851, 40
      %v6881 = vpop.permute.xlu0 %6880
      %6882 = vrot.lane.b32.xlu0 %v6852, 40
      %v6883 = vpop.permute.xlu0 %6882
      %6884 = vrot.lane.b32.xlu0 %v6853, 40
      %v6885 = vpop.permute.xlu0 %6884
      %6902 = vst.msk [vmem:[#allocation4] sm:$0xff] %vm2860, %v6855
      %6903 = vst.msk [vmem:[#allocation4 + $0x8] sm:$0xff] %vm2860, %v6857
      %6904 = vst.msk [vmem:[#allocation4 + $0x10] sm:$0xff] %vm2860, %v6859
      %6905 = vst.msk [vmem:[#allocation4 + $0x18] sm:$0xff] %vm2860, %v6861
      %6906 = vst.msk [vmem:[#allocation4 + $0x20] sm:$0xff] %vm2860, %v6863
      %6907 = vst.msk [vmem:[#allocation4 + $0x28] sm:$0xff] %vm2860, %v6865
      %6908 = vst.msk [vmem:[#allocation4 + $0x30] sm:$0xff] %vm2860, %v6867
      %6909 = vst.msk [vmem:[#allocation4 + $0x38] sm:$0xff] %vm2860, %v6869
      %6910 = vst.msk [vmem:[#allocation4 + $0x40] sm:$0xff] %vm2860, %v6871
      %6911 = vst.msk [vmem:[#allocation4 + $0x48] sm:$0xff] %vm2860, %v6873
      %6912 = vst.msk [vmem:[#allocation4 + $0x50] sm:$0xff] %vm2860, %v6875
      %6913 = vst.msk [vmem:[#allocation4 + $0x58] sm:$0xff] %vm2860, %v6877
      %6914 = vst.msk [vmem:[#allocation4 + $0x60] sm:$0xff] %vm2860, %v6879
      %6915 = vst.msk [vmem:[#allocation4 + $0x68] sm:$0xff] %vm2860, %v6881
      %6916 = vst.msk [vmem:[#allocation4 + $0x70] sm:$0xff] %vm2860, %v6883
      %6917 = vst.msk [vmem:[#allocation4 + $0x78] sm:$0xff] %vm2860, %v6885
      %s6918 = scalar_lea.vmem [#allocation3], 24
      %v6919 = vld [vmem:[%s6918] sm:$0xf]
      %v6920 = vld [vmem:[%s6918 + $0x4] sm:$0xf]
      %v6921 = vld [vmem:[%s6918 + $0xc] sm:$0xf]
      %v6922 = vld [vmem:[%s6918 + $0x10] sm:$0xf]
      %v6923 = vld [vmem:[%s6918 + $0x18] sm:$0xf]
      %v6924 = vld [vmem:[%s6918 + $0x1c] sm:$0xf]
      %v6925 = vld [vmem:[%s6918 + $0x24] sm:$0xf]
      %v6926 = vld [vmem:[%s6918 + $0x28] sm:$0xf]
      %v6927 = vld [vmem:[%s6918 + $0x30] sm:$0xf]
      %v6928 = vld [vmem:[%s6918 + $0x34] sm:$0xf]
      %v6929 = vld [vmem:[%s6918 + $0x3c] sm:$0xf]
      %v6930 = vld [vmem:[%s6918 + $0x40] sm:$0xf]
      %v6931 = vld [vmem:[%s6918 + $0x48] sm:$0xf]
      %v6932 = vld [vmem:[%s6918 + $0x4c] sm:$0xf]
      %v6933 = vld [vmem:[%s6918 + $0x54] sm:$0xf]
      %v6934 = vld [vmem:[%s6918 + $0x58] sm:$0xf]
      %v6935 = vld [vmem:[%s6918 + $0x60] sm:$0xf]
      %v6936 = vld [vmem:[%s6918 + $0x64] sm:$0xf]
      %v6937 = vld [vmem:[%s6918 + $0x6c] sm:$0xf]
      %v6938 = vld [vmem:[%s6918 + $0x70] sm:$0xf]
      %v6939 = vld [vmem:[%s6918 + $0x78] sm:$0xf]
      %v6940 = vld [vmem:[%s6918 + $0x7c] sm:$0xf]
      %v6941 = vld [vmem:[%s6918 + $0x84] sm:$0xf]
      %v6942 = vld [vmem:[%s6918 + $0x88] sm:$0xf]
      %v6943 = vld [vmem:[%s6918 + $0x90] sm:$0xf]
      %v6944 = vld [vmem:[%s6918 + $0x94] sm:$0xf]
      %v6945 = vld [vmem:[%s6918 + $0x9c] sm:$0xf]
      %v6946 = vld [vmem:[%s6918 + $0xa0] sm:$0xf]
      %v6947 = vld [vmem:[%s6918 + $0xa8] sm:$0xf]
      %v6948 = vld [vmem:[%s6918 + $0xac] sm:$0xf]
      %v6949 = vld [vmem:[%s6918 + $0xb4] sm:$0xf]
      %v6950 = vld [vmem:[%s6918 + $0xb8] sm:$0xf]
      %v6983 = vunpack.c.l.b16 %v6919
      %v6984 = vunpack.c.l.b16 %v6920
      %v6985 = vunpack.c.l.b16 %v6921
      %v6986 = vunpack.c.l.b16 %v6922
      %v6987 = vunpack.c.l.b16 %v6923
      %v6988 = vunpack.c.l.b16 %v6924
      %v6989 = vunpack.c.l.b16 %v6925
      %v6990 = vunpack.c.l.b16 %v6926
      %v6991 = vunpack.c.l.b16 %v6927
      %v6992 = vunpack.c.l.b16 %v6928
      %v6993 = vunpack.c.l.b16 %v6929
      %v6994 = vunpack.c.l.b16 %v6930
      %v6995 = vunpack.c.l.b16 %v6931
      %v6996 = vunpack.c.l.b16 %v6932
      %v6997 = vunpack.c.l.b16 %v6933
      %v6998 = vunpack.c.l.b16 %v6934
      %v6999 = vunpack.c.l.b16 %v6935
      %v7000 = vunpack.c.l.b16 %v6936
      %v7001 = vunpack.c.l.b16 %v6937
      %v7002 = vunpack.c.l.b16 %v6938
      %v7003 = vunpack.c.l.b16 %v6939
      %v7004 = vunpack.c.l.b16 %v6940
      %v7005 = vunpack.c.l.b16 %v6941
      %v7006 = vunpack.c.l.b16 %v6942
      %v7007 = vunpack.c.l.b16 %v6943
      %v7008 = vunpack.c.l.b16 %v6944
      %v7009 = vunpack.c.l.b16 %v6945
      %v7010 = vunpack.c.l.b16 %v6946
      %v7011 = vunpack.c.l.b16 %v6947
      %v7012 = vunpack.c.l.b16 %v6948
      %v7013 = vunpack.c.l.b16 %v6949
      %v7014 = vunpack.c.l.b16 %v6950
      %v7015 = vpack.c.b16 %v6984, %v6983
      %v7016 = vpack.c.b16 %v6986, %v6985
      %v7017 = vpack.c.b16 %v6988, %v6987
      %v7018 = vpack.c.b16 %v6990, %v6989
      %v7019 = vpack.c.b16 %v6992, %v6991
      %v7020 = vpack.c.b16 %v6994, %v6993
      %v7021 = vpack.c.b16 %v6996, %v6995
      %v7022 = vpack.c.b16 %v6998, %v6997
      %v7023 = vpack.c.b16 %v7000, %v6999
      %v7024 = vpack.c.b16 %v7002, %v7001
      %v7025 = vpack.c.b16 %v7004, %v7003
      %v7026 = vpack.c.b16 %v7006, %v7005
      %v7027 = vpack.c.b16 %v7008, %v7007
      %v7028 = vpack.c.b16 %v7010, %v7009
      %v7029 = vpack.c.b16 %v7012, %v7011
      %v7030 = vpack.c.b16 %v7014, %v7013
      %7031 = vrot.lane.b32.xlu0 %v7015, 48
      %v7032 = vpop.permute.xlu0 %7031
      %7033 = vrot.lane.b32.xlu0 %v7016, 48
      %v7034 = vpop.permute.xlu0 %7033
      %7035 = vrot.lane.b32.xlu0 %v7017, 48
      %v7036 = vpop.permute.xlu0 %7035
      %7037 = vrot.lane.b32.xlu0 %v7018, 48
      %v7038 = vpop.permute.xlu0 %7037
      %7039 = vrot.lane.b32.xlu0 %v7019, 48
      %v7040 = vpop.permute.xlu0 %7039
      %7041 = vrot.lane.b32.xlu0 %v7020, 48
      %v7042 = vpop.permute.xlu0 %7041
      %7043 = vrot.lane.b32.xlu0 %v7021, 48
      %v7044 = vpop.permute.xlu0 %7043
      %7045 = vrot.lane.b32.xlu0 %v7022, 48
      %v7046 = vpop.permute.xlu0 %7045
      %7047 = vrot.lane.b32.xlu0 %v7023, 48
      %v7048 = vpop.permute.xlu0 %7047
      %7049 = vrot.lane.b32.xlu0 %v7024, 48
      %v7050 = vpop.permute.xlu0 %7049
      %7051 = vrot.lane.b32.xlu0 %v7025, 48
      %v7052 = vpop.permute.xlu0 %7051
      %7053 = vrot.lane.b32.xlu0 %v7026, 48
      %v7054 = vpop.permute.xlu0 %7053
      %7055 = vrot.lane.b32.xlu0 %v7027, 48
      %v7056 = vpop.permute.xlu0 %7055
      %7057 = vrot.lane.b32.xlu0 %v7028, 48
      %v7058 = vpop.permute.xlu0 %7057
      %7059 = vrot.lane.b32.xlu0 %v7029, 48
      %v7060 = vpop.permute.xlu0 %7059
      %7061 = vrot.lane.b32.xlu0 %v7030, 48
      %v7062 = vpop.permute.xlu0 %7061
      %7079 = vst.msk [vmem:[#allocation4] sm:$0xff] %vm3038, %v7032
      %7080 = vst.msk [vmem:[#allocation4 + $0x8] sm:$0xff] %vm3038, %v7034
      %7081 = vst.msk [vmem:[#allocation4 + $0x10] sm:$0xff] %vm3038, %v7036
      %7082 = vst.msk [vmem:[#allocation4 + $0x18] sm:$0xff] %vm3038, %v7038
      %7083 = vst.msk [vmem:[#allocation4 + $0x20] sm:$0xff] %vm3038, %v7040
      %7084 = vst.msk [vmem:[#allocation4 + $0x28] sm:$0xff] %vm3038, %v7042
      %7085 = vst.msk [vmem:[#allocation4 + $0x30] sm:$0xff] %vm3038, %v7044
      %7086 = vst.msk [vmem:[#allocation4 + $0x38] sm:$0xff] %vm3038, %v7046
      %7087 = vst.msk [vmem:[#allocation4 + $0x40] sm:$0xff] %vm3038, %v7048
      %7088 = vst.msk [vmem:[#allocation4 + $0x48] sm:$0xff] %vm3038, %v7050
      %7089 = vst.msk [vmem:[#allocation4 + $0x50] sm:$0xff] %vm3038, %v7052
      %7090 = vst.msk [vmem:[#allocation4 + $0x58] sm:$0xff] %vm3038, %v7054
      %7091 = vst.msk [vmem:[#allocation4 + $0x60] sm:$0xff] %vm3038, %v7056
      %7092 = vst.msk [vmem:[#allocation4 + $0x68] sm:$0xff] %vm3038, %v7058
      %7093 = vst.msk [vmem:[#allocation4 + $0x70] sm:$0xff] %vm3038, %v7060
      %7094 = vst.msk [vmem:[#allocation4 + $0x78] sm:$0xff] %vm3038, %v7062
      %v7095 = vld [vmem:[%s6918] sm:$0xf]
      %v7096 = vld [vmem:[%s6918 + $0x4] sm:$0xf]
      %v7097 = vld [vmem:[%s6918 + $0x8] sm:$0x1]
      %v7098 = vld [vmem:[%s6918 + $0xc] sm:$0xf]
      %v7099 = vld [vmem:[%s6918 + $0x10] sm:$0xf]
      %v7100 = vld [vmem:[%s6918 + $0x14] sm:$0x1]
      %v7101 = vld [vmem:[%s6918 + $0x18] sm:$0xf]
      %v7102 = vld [vmem:[%s6918 + $0x1c] sm:$0xf]
      %v7103 = vld [vmem:[%s6918 + $0x20] sm:$0x1]
      %v7104 = vld [vmem:[%s6918 + $0x24] sm:$0xf]
      %v7105 = vld [vmem:[%s6918 + $0x28] sm:$0xf]
      %v7106 = vld [vmem:[%s6918 + $0x2c] sm:$0x1]
      %v7107 = vld [vmem:[%s6918 + $0x30] sm:$0xf]
      %v7108 = vld [vmem:[%s6918 + $0x34] sm:$0xf]
      %v7109 = vld [vmem:[%s6918 + $0x38] sm:$0x1]
      %v7110 = vld [vmem:[%s6918 + $0x3c] sm:$0xf]
      %v7111 = vld [vmem:[%s6918 + $0x40] sm:$0xf]
      %v7112 = vld [vmem:[%s6918 + $0x44] sm:$0x1]
      %v7113 = vld [vmem:[%s6918 + $0x48] sm:$0xf]
      %v7114 = vld [vmem:[%s6918 + $0x4c] sm:$0xf]
      %v7115 = vld [vmem:[%s6918 + $0x50] sm:$0x1]
      %v7116 = vld [vmem:[%s6918 + $0x54] sm:$0xf]
      %v7117 = vld [vmem:[%s6918 + $0x58] sm:$0xf]
      %v7118 = vld [vmem:[%s6918 + $0x5c] sm:$0x1]
      %v7119 = vld [vmem:[%s6918 + $0x60] sm:$0xf]
      %v7120 = vld [vmem:[%s6918 + $0x64] sm:$0xf]
      %v7121 = vld [vmem:[%s6918 + $0x68] sm:$0x1]
      %v7122 = vld [vmem:[%s6918 + $0x6c] sm:$0xf]
      %v7123 = vld [vmem:[%s6918 + $0x70] sm:$0xf]
      %v7124 = vld [vmem:[%s6918 + $0x74] sm:$0x1]
      %v7125 = vld [vmem:[%s6918 + $0x78] sm:$0xf]
      %v7126 = vld [vmem:[%s6918 + $0x7c] sm:$0xf]
      %v7127 = vld [vmem:[%s6918 + $0x80] sm:$0x1]
      %v7128 = vld [vmem:[%s6918 + $0x84] sm:$0xf]
      %v7129 = vld [vmem:[%s6918 + $0x88] sm:$0xf]
      %v7130 = vld [vmem:[%s6918 + $0x8c] sm:$0x1]
      %v7131 = vld [vmem:[%s6918 + $0x90] sm:$0xf]
      %v7132 = vld [vmem:[%s6918 + $0x94] sm:$0xf]
      %v7133 = vld [vmem:[%s6918 + $0x98] sm:$0x1]
      %v7134 = vld [vmem:[%s6918 + $0x9c] sm:$0xf]
      %v7135 = vld [vmem:[%s6918 + $0xa0] sm:$0xf]
      %v7136 = vld [vmem:[%s6918 + $0xa4] sm:$0x1]
      %v7137 = vld [vmem:[%s6918 + $0xa8] sm:$0xf]
      %v7138 = vld [vmem:[%s6918 + $0xac] sm:$0xf]
      %v7139 = vld [vmem:[%s6918 + $0xb0] sm:$0x1]
      %v7140 = vld [vmem:[%s6918 + $0xb4] sm:$0xf]
      %v7141 = vld [vmem:[%s6918 + $0xb8] sm:$0xf]
      %v7142 = vld [vmem:[%s6918 + $0xbc] sm:$0x1]
      %v7144 = vshrl.u32 %v7095, 16
      %v7146 = vrot.slane %v7144, 4
      %v7147 = vshll.u32 %v7095, 16
      %v7149 = vrot.slane %v7147, 5
      %v7150 = vor.u32 %v7146, %v7149
      %v7151 = vrot.slane %v7150, 4
      %v7153 = vshll.u32 %v7096, 16
      %v7155 = vrot.slane %v7153, 5
      %v7156 = vsel %vm1012, %v7151, %v7155
      %v7157 = vshrl.u32 %v7096, 16
      %v7159 = vrot.slane %v7157, 4
      %v7160 = vor.u32 %v7159, %v7155
      %v7161 = vrot.slane %v7160, 4
      %v7163 = vshll.u32 %v7097, 16
      %v7165 = vrot.slane %v7163, 5
      %v7166 = vsel %vm1012, %v7161, %v7165
      %v7168 = vshrl.u32 %v7098, 16
      %v7170 = vrot.slane %v7168, 4
      %v7171 = vshll.u32 %v7098, 16
      %v7173 = vrot.slane %v7171, 5
      %v7174 = vor.u32 %v7170, %v7173
      %v7175 = vrot.slane %v7174, 4
      %v7177 = vshll.u32 %v7099, 16
      %v7179 = vrot.slane %v7177, 5
      %v7180 = vsel %vm1012, %v7175, %v7179
      %v7181 = vshrl.u32 %v7099, 16
      %v7183 = vrot.slane %v7181, 4
      %v7184 = vor.u32 %v7183, %v7179
      %v7185 = vrot.slane %v7184, 4
      %v7187 = vshll.u32 %v7100, 16
      %v7189 = vrot.slane %v7187, 5
      %v7190 = vsel %vm1012, %v7185, %v7189
      %v7192 = vshrl.u32 %v7101, 16
      %v7194 = vrot.slane %v7192, 4
      %v7195 = vshll.u32 %v7101, 16
      %v7197 = vrot.slane %v7195, 5
      %v7198 = vor.u32 %v7194, %v7197
      %v7199 = vrot.slane %v7198, 4
      %v7201 = vshll.u32 %v7102, 16
      %v7203 = vrot.slane %v7201, 5
      %v7204 = vsel %vm1012, %v7199, %v7203
      %v7205 = vshrl.u32 %v7102, 16
      %v7207 = vrot.slane %v7205, 4
      %v7208 = vor.u32 %v7207, %v7203
      %v7209 = vrot.slane %v7208, 4
      %v7211 = vshll.u32 %v7103, 16
      %v7213 = vrot.slane %v7211, 5
      %v7214 = vsel %vm1012, %v7209, %v7213
      %v7216 = vshrl.u32 %v7104, 16
      %v7218 = vrot.slane %v7216, 4
      %v7219 = vshll.u32 %v7104, 16
      %v7221 = vrot.slane %v7219, 5
      %v7222 = vor.u32 %v7218, %v7221
      %v7223 = vrot.slane %v7222, 4
      %v7225 = vshll.u32 %v7105, 16
      %v7227 = vrot.slane %v7225, 5
      %v7228 = vsel %vm1012, %v7223, %v7227
      %v7229 = vshrl.u32 %v7105, 16
      %v7231 = vrot.slane %v7229, 4
      %v7232 = vor.u32 %v7231, %v7227
      %v7233 = vrot.slane %v7232, 4
      %v7235 = vshll.u32 %v7106, 16
      %v7237 = vrot.slane %v7235, 5
      %v7238 = vsel %vm1012, %v7233, %v7237
      %v7240 = vshrl.u32 %v7107, 16
      %v7242 = vrot.slane %v7240, 4
      %v7243 = vshll.u32 %v7107, 16
      %v7245 = vrot.slane %v7243, 5
      %v7246 = vor.u32 %v7242, %v7245
      %v7247 = vrot.slane %v7246, 4
      %v7249 = vshll.u32 %v7108, 16
      %v7251 = vrot.slane %v7249, 5
      %v7252 = vsel %vm1012, %v7247, %v7251
      %v7253 = vshrl.u32 %v7108, 16
      %v7255 = vrot.slane %v7253, 4
      %v7256 = vor.u32 %v7255, %v7251
      %v7257 = vrot.slane %v7256, 4
      %v7259 = vshll.u32 %v7109, 16
      %v7261 = vrot.slane %v7259, 5
      %v7262 = vsel %vm1012, %v7257, %v7261
      %v7264 = vshrl.u32 %v7110, 16
      %v7266 = vrot.slane %v7264, 4
      %v7267 = vshll.u32 %v7110, 16
      %v7269 = vrot.slane %v7267, 5
      %v7270 = vor.u32 %v7266, %v7269
      %v7271 = vrot.slane %v7270, 4
      %v7273 = vshll.u32 %v7111, 16
      %v7275 = vrot.slane %v7273, 5
      %v7276 = vsel %vm1012, %v7271, %v7275
      %v7277 = vshrl.u32 %v7111, 16
      %v7279 = vrot.slane %v7277, 4
      %v7280 = vor.u32 %v7279, %v7275
      %v7281 = vrot.slane %v7280, 4
      %v7283 = vshll.u32 %v7112, 16
      %v7285 = vrot.slane %v7283, 5
      %v7286 = vsel %vm1012, %v7281, %v7285
      %v7288 = vshrl.u32 %v7113, 16
      %v7290 = vrot.slane %v7288, 4
      %v7291 = vshll.u32 %v7113, 16
      %v7293 = vrot.slane %v7291, 5
      %v7294 = vor.u32 %v7290, %v7293
      %v7295 = vrot.slane %v7294, 4
      %v7297 = vshll.u32 %v7114, 16
      %v7299 = vrot.slane %v7297, 5
      %v7300 = vsel %vm1012, %v7295, %v7299
      %v7301 = vshrl.u32 %v7114, 16
      %v7303 = vrot.slane %v7301, 4
      %v7304 = vor.u32 %v7303, %v7299
      %v7305 = vrot.slane %v7304, 4
      %v7307 = vshll.u32 %v7115, 16
      %v7309 = vrot.slane %v7307, 5
      %v7310 = vsel %vm1012, %v7305, %v7309
      %v7312 = vshrl.u32 %v7116, 16
      %v7314 = vrot.slane %v7312, 4
      %v7315 = vshll.u32 %v7116, 16
      %v7317 = vrot.slane %v7315, 5
      %v7318 = vor.u32 %v7314, %v7317
      %v7319 = vrot.slane %v7318, 4
      %v7321 = vshll.u32 %v7117, 16
      %v7323 = vrot.slane %v7321, 5
      %v7324 = vsel %vm1012, %v7319, %v7323
      %v7325 = vshrl.u32 %v7117, 16
      %v7327 = vrot.slane %v7325, 4
      %v7328 = vor.u32 %v7327, %v7323
      %v7329 = vrot.slane %v7328, 4
      %v7331 = vshll.u32 %v7118, 16
      %v7333 = vrot.slane %v7331, 5
      %v7334 = vsel %vm1012, %v7329, %v7333
      %v7336 = vshrl.u32 %v7119, 16
      %v7338 = vrot.slane %v7336, 4
      %v7339 = vshll.u32 %v7119, 16
      %v7341 = vrot.slane %v7339, 5
      %v7342 = vor.u32 %v7338, %v7341
      %v7343 = vrot.slane %v7342, 4
      %v7345 = vshll.u32 %v7120, 16
      %v7347 = vrot.slane %v7345, 5
      %v7348 = vsel %vm1012, %v7343, %v7347
      %v7349 = vshrl.u32 %v7120, 16
      %v7351 = vrot.slane %v7349, 4
      %v7352 = vor.u32 %v7351, %v7347
      %v7353 = vrot.slane %v7352, 4
      %v7355 = vshll.u32 %v7121, 16
      %v7357 = vrot.slane %v7355, 5
      %v7358 = vsel %vm1012, %v7353, %v7357
      %v7360 = vshrl.u32 %v7122, 16
      %v7362 = vrot.slane %v7360, 4
      %v7363 = vshll.u32 %v7122, 16
      %v7365 = vrot.slane %v7363, 5
      %v7366 = vor.u32 %v7362, %v7365
      %v7367 = vrot.slane %v7366, 4
      %v7369 = vshll.u32 %v7123, 16
      %v7371 = vrot.slane %v7369, 5
      %v7372 = vsel %vm1012, %v7367, %v7371
      %v7373 = vshrl.u32 %v7123, 16
      %v7375 = vrot.slane %v7373, 4
      %v7376 = vor.u32 %v7375, %v7371
      %v7377 = vrot.slane %v7376, 4
      %v7379 = vshll.u32 %v7124, 16
      %v7381 = vrot.slane %v7379, 5
      %v7382 = vsel %vm1012, %v7377, %v7381
      %v7384 = vshrl.u32 %v7125, 16
      %v7386 = vrot.slane %v7384, 4
      %v7387 = vshll.u32 %v7125, 16
      %v7389 = vrot.slane %v7387, 5
      %v7390 = vor.u32 %v7386, %v7389
      %v7391 = vrot.slane %v7390, 4
      %v7393 = vshll.u32 %v7126, 16
      %v7395 = vrot.slane %v7393, 5
      %v7396 = vsel %vm1012, %v7391, %v7395
      %v7397 = vshrl.u32 %v7126, 16
      %v7399 = vrot.slane %v7397, 4
      %v7400 = vor.u32 %v7399, %v7395
      %v7401 = vrot.slane %v7400, 4
      %v7403 = vshll.u32 %v7127, 16
      %v7405 = vrot.slane %v7403, 5
      %v7406 = vsel %vm1012, %v7401, %v7405
      %v7408 = vshrl.u32 %v7128, 16
      %v7410 = vrot.slane %v7408, 4
      %v7411 = vshll.u32 %v7128, 16
      %v7413 = vrot.slane %v7411, 5
      %v7414 = vor.u32 %v7410, %v7413
      %v7415 = vrot.slane %v7414, 4
      %v7417 = vshll.u32 %v7129, 16
      %v7419 = vrot.slane %v7417, 5
      %v7420 = vsel %vm1012, %v7415, %v7419
      %v7421 = vshrl.u32 %v7129, 16
      %v7423 = vrot.slane %v7421, 4
      %v7424 = vor.u32 %v7423, %v7419
      %v7425 = vrot.slane %v7424, 4
      %v7427 = vshll.u32 %v7130, 16
      %v7429 = vrot.slane %v7427, 5
      %v7430 = vsel %vm1012, %v7425, %v7429
      %v7432 = vshrl.u32 %v7131, 16
      %v7434 = vrot.slane %v7432, 4
      %v7435 = vshll.u32 %v7131, 16
      %v7437 = vrot.slane %v7435, 5
      %v7438 = vor.u32 %v7434, %v7437
      %v7439 = vrot.slane %v7438, 4
      %v7441 = vshll.u32 %v7132, 16
      %v7443 = vrot.slane %v7441, 5
      %v7444 = vsel %vm1012, %v7439, %v7443
      %v7445 = vshrl.u32 %v7132, 16
      %v7447 = vrot.slane %v7445, 4
      %v7448 = vor.u32 %v7447, %v7443
      %v7449 = vrot.slane %v7448, 4
      %v7451 = vshll.u32 %v7133, 16
      %v7453 = vrot.slane %v7451, 5
      %v7454 = vsel %vm1012, %v7449, %v7453
      %v7456 = vshrl.u32 %v7134, 16
      %v7458 = vrot.slane %v7456, 4
      %v7459 = vshll.u32 %v7134, 16
      %v7461 = vrot.slane %v7459, 5
      %v7462 = vor.u32 %v7458, %v7461
      %v7463 = vrot.slane %v7462, 4
      %v7465 = vshll.u32 %v7135, 16
      %v7467 = vrot.slane %v7465, 5
      %v7468 = vsel %vm1012, %v7463, %v7467
      %v7469 = vshrl.u32 %v7135, 16
      %v7471 = vrot.slane %v7469, 4
      %v7472 = vor.u32 %v7471, %v7467
      %v7473 = vrot.slane %v7472, 4
      %v7475 = vshll.u32 %v7136, 16
      %v7477 = vrot.slane %v7475, 5
      %v7478 = vsel %vm1012, %v7473, %v7477
      %v7480 = vshrl.u32 %v7137, 16
      %v7482 = vrot.slane %v7480, 4
      %v7483 = vshll.u32 %v7137, 16
      %v7485 = vrot.slane %v7483, 5
      %v7486 = vor.u32 %v7482, %v7485
      %v7487 = vrot.slane %v7486, 4
      %v7489 = vshll.u32 %v7138, 16
      %v7491 = vrot.slane %v7489, 5
      %v7492 = vsel %vm1012, %v7487, %v7491
      %v7493 = vshrl.u32 %v7138, 16
      %v7495 = vrot.slane %v7493, 4
      %v7496 = vor.u32 %v7495, %v7491
      %v7497 = vrot.slane %v7496, 4
      %v7499 = vshll.u32 %v7139, 16
      %v7501 = vrot.slane %v7499, 5
      %v7502 = vsel %vm1012, %v7497, %v7501
      %v7504 = vshrl.u32 %v7140, 16
      %v7506 = vrot.slane %v7504, 4
      %v7507 = vshll.u32 %v7140, 16
      %v7509 = vrot.slane %v7507, 5
      %v7510 = vor.u32 %v7506, %v7509
      %v7511 = vrot.slane %v7510, 4
      %v7513 = vshll.u32 %v7141, 16
      %v7515 = vrot.slane %v7513, 5
      %v7516 = vsel %vm1012, %v7511, %v7515
      %v7517 = vshrl.u32 %v7141, 16
      %v7519 = vrot.slane %v7517, 4
      %v7520 = vor.u32 %v7519, %v7515
      %v7521 = vrot.slane %v7520, 4
      %v7523 = vshll.u32 %v7142, 16
      %v7525 = vrot.slane %v7523, 5
      %v7526 = vsel %vm1012, %v7521, %v7525
      %v7527 = vunpack.c.l.b16 %v7156
      %v7528 = vunpack.c.l.b16 %v7166
      %v7529 = vunpack.c.l.b16 %v7180
      %v7530 = vunpack.c.l.b16 %v7190
      %v7531 = vunpack.c.l.b16 %v7204
      %v7532 = vunpack.c.l.b16 %v7214
      %v7533 = vunpack.c.l.b16 %v7228
      %v7534 = vunpack.c.l.b16 %v7238
      %v7535 = vunpack.c.l.b16 %v7252
      %v7536 = vunpack.c.l.b16 %v7262
      %v7537 = vunpack.c.l.b16 %v7276
      %v7538 = vunpack.c.l.b16 %v7286
      %v7539 = vunpack.c.l.b16 %v7300
      %v7540 = vunpack.c.l.b16 %v7310
      %v7541 = vunpack.c.l.b16 %v7324
      %v7542 = vunpack.c.l.b16 %v7334
      %v7543 = vunpack.c.l.b16 %v7348
      %v7544 = vunpack.c.l.b16 %v7358
      %v7545 = vunpack.c.l.b16 %v7372
      %v7546 = vunpack.c.l.b16 %v7382
      %v7547 = vunpack.c.l.b16 %v7396
      %v7548 = vunpack.c.l.b16 %v7406
      %v7549 = vunpack.c.l.b16 %v7420
      %v7550 = vunpack.c.l.b16 %v7430
      %v7551 = vunpack.c.l.b16 %v7444
      %v7552 = vunpack.c.l.b16 %v7454
      %v7553 = vunpack.c.l.b16 %v7468
      %v7554 = vunpack.c.l.b16 %v7478
      %v7555 = vunpack.c.l.b16 %v7492
      %v7556 = vunpack.c.l.b16 %v7502
      %v7557 = vunpack.c.l.b16 %v7516
      %v7558 = vunpack.c.l.b16 %v7526
      %v7559 = vpack.c.b16 %v7528, %v7527
      %v7560 = vpack.c.b16 %v7530, %v7529
      %v7561 = vpack.c.b16 %v7532, %v7531
      %v7562 = vpack.c.b16 %v7534, %v7533
      %v7563 = vpack.c.b16 %v7536, %v7535
      %v7564 = vpack.c.b16 %v7538, %v7537
      %v7565 = vpack.c.b16 %v7540, %v7539
      %v7566 = vpack.c.b16 %v7542, %v7541
      %v7567 = vpack.c.b16 %v7544, %v7543
      %v7568 = vpack.c.b16 %v7546, %v7545
      %v7569 = vpack.c.b16 %v7548, %v7547
      %v7570 = vpack.c.b16 %v7550, %v7549
      %v7571 = vpack.c.b16 %v7552, %v7551
      %v7572 = vpack.c.b16 %v7554, %v7553
      %v7573 = vpack.c.b16 %v7556, %v7555
      %v7574 = vpack.c.b16 %v7558, %v7557
      %7575 = vrot.lane.b32.xlu0 %v7559, 56
      %v7576 = vpop.permute.xlu0 %7575
      %7577 = vrot.lane.b32.xlu0 %v7560, 56
      %v7578 = vpop.permute.xlu0 %7577
      %7579 = vrot.lane.b32.xlu0 %v7561, 56
      %v7580 = vpop.permute.xlu0 %7579
      %7581 = vrot.lane.b32.xlu0 %v7562, 56
      %v7582 = vpop.permute.xlu0 %7581
      %7583 = vrot.lane.b32.xlu0 %v7563, 56
      %v7584 = vpop.permute.xlu0 %7583
      %7585 = vrot.lane.b32.xlu0 %v7564, 56
      %v7586 = vpop.permute.xlu0 %7585
      %7587 = vrot.lane.b32.xlu0 %v7565, 56
      %v7588 = vpop.permute.xlu0 %7587
      %7589 = vrot.lane.b32.xlu0 %v7566, 56
      %v7590 = vpop.permute.xlu0 %7589
      %7591 = vrot.lane.b32.xlu0 %v7567, 56
      %v7592 = vpop.permute.xlu0 %7591
      %7593 = vrot.lane.b32.xlu0 %v7568, 56
      %v7594 = vpop.permute.xlu0 %7593
      %7595 = vrot.lane.b32.xlu0 %v7569, 56
      %v7596 = vpop.permute.xlu0 %7595
      %7597 = vrot.lane.b32.xlu0 %v7570, 56
      %v7598 = vpop.permute.xlu0 %7597
      %7599 = vrot.lane.b32.xlu0 %v7571, 56
      %v7600 = vpop.permute.xlu0 %7599
      %7601 = vrot.lane.b32.xlu0 %v7572, 56
      %v7602 = vpop.permute.xlu0 %7601
      %7603 = vrot.lane.b32.xlu0 %v7573, 56
      %v7604 = vpop.permute.xlu0 %7603
      %7605 = vrot.lane.b32.xlu0 %v7574, 56
      %v7606 = vpop.permute.xlu0 %7605
      %7623 = vst.msk [vmem:[#allocation4] sm:$0xff] %vm3583, %v7576
      %7624 = vst.msk [vmem:[#allocation4 + $0x8] sm:$0xff] %vm3583, %v7578
      %7625 = vst.msk [vmem:[#allocation4 + $0x10] sm:$0xff] %vm3583, %v7580
      %7626 = vst.msk [vmem:[#allocation4 + $0x18] sm:$0xff] %vm3583, %v7582
      %7627 = vst.msk [vmem:[#allocation4 + $0x20] sm:$0xff] %vm3583, %v7584
      %7628 = vst.msk [vmem:[#allocation4 + $0x28] sm:$0xff] %vm3583, %v7586
      %7629 = vst.msk [vmem:[#allocation4 + $0x30] sm:$0xff] %vm3583, %v7588
      %7630 = vst.msk [vmem:[#allocation4 + $0x38] sm:$0xff] %vm3583, %v7590
      %7631 = vst.msk [vmem:[#allocation4 + $0x40] sm:$0xff] %vm3583, %v7592
      %7632 = vst.msk [vmem:[#allocation4 + $0x48] sm:$0xff] %vm3583, %v7594
      %7633 = vst.msk [vmem:[#allocation4 + $0x50] sm:$0xff] %vm3583, %v7596
      %7634 = vst.msk [vmem:[#allocation4 + $0x58] sm:$0xff] %vm3583, %v7598
      %7635 = vst.msk [vmem:[#allocation4 + $0x60] sm:$0xff] %vm3583, %v7600
      %7636 = vst.msk [vmem:[#allocation4 + $0x68] sm:$0xff] %vm3583, %v7602
      %7637 = vst.msk [vmem:[#allocation4 + $0x70] sm:$0xff] %vm3583, %v7604
      %7638 = vst.msk [vmem:[#allocation4 + $0x78] sm:$0xff] %vm3583, %v7606
      %v7639 = vld [vmem:[%s6918] sm:$0xe]
      %v7640 = vld [vmem:[%s6918 + $0x4] sm:$0xf]
      %v7641 = vld [vmem:[%s6918 + $0x8] sm:$0x1]
      %v7642 = vld [vmem:[%s6918 + $0xc] sm:$0xe]
      %v7643 = vld [vmem:[%s6918 + $0x10] sm:$0xf]
      %v7644 = vld [vmem:[%s6918 + $0x14] sm:$0x1]
      %v7645 = vld [vmem:[%s6918 + $0x18] sm:$0xe]
      %v7646 = vld [vmem:[%s6918 + $0x1c] sm:$0xf]
      %v7647 = vld [vmem:[%s6918 + $0x20] sm:$0x1]
      %v7648 = vld [vmem:[%s6918 + $0x24] sm:$0xe]
      %v7649 = vld [vmem:[%s6918 + $0x28] sm:$0xf]
      %v7650 = vld [vmem:[%s6918 + $0x2c] sm:$0x1]
      %v7651 = vld [vmem:[%s6918 + $0x30] sm:$0xe]
      %v7652 = vld [vmem:[%s6918 + $0x34] sm:$0xf]
      %v7653 = vld [vmem:[%s6918 + $0x38] sm:$0x1]
      %v7654 = vld [vmem:[%s6918 + $0x3c] sm:$0xe]
      %v7655 = vld [vmem:[%s6918 + $0x40] sm:$0xf]
      %v7656 = vld [vmem:[%s6918 + $0x44] sm:$0x1]
      %v7657 = vld [vmem:[%s6918 + $0x48] sm:$0xe]
      %v7658 = vld [vmem:[%s6918 + $0x4c] sm:$0xf]
      %v7659 = vld [vmem:[%s6918 + $0x50] sm:$0x1]
      %v7660 = vld [vmem:[%s6918 + $0x54] sm:$0xe]
      %v7661 = vld [vmem:[%s6918 + $0x58] sm:$0xf]
      %v7662 = vld [vmem:[%s6918 + $0x5c] sm:$0x1]
      %v7663 = vld [vmem:[%s6918 + $0x60] sm:$0xe]
      %v7664 = vld [vmem:[%s6918 + $0x64] sm:$0xf]
      %v7665 = vld [vmem:[%s6918 + $0x68] sm:$0x1]
      %v7666 = vld [vmem:[%s6918 + $0x6c] sm:$0xe]
      %v7667 = vld [vmem:[%s6918 + $0x70] sm:$0xf]
      %v7668 = vld [vmem:[%s6918 + $0x74] sm:$0x1]
      %v7669 = vld [vmem:[%s6918 + $0x78] sm:$0xe]
      %v7670 = vld [vmem:[%s6918 + $0x7c] sm:$0xf]
      %v7671 = vld [vmem:[%s6918 + $0x80] sm:$0x1]
      %v7672 = vld [vmem:[%s6918 + $0x84] sm:$0xe]
      %v7673 = vld [vmem:[%s6918 + $0x88] sm:$0xf]
      %v7674 = vld [vmem:[%s6918 + $0x8c] sm:$0x1]
      %v7675 = vld [vmem:[%s6918 + $0x90] sm:$0xe]
      %v7676 = vld [vmem:[%s6918 + $0x94] sm:$0xf]
      %v7677 = vld [vmem:[%s6918 + $0x98] sm:$0x1]
      %v7678 = vld [vmem:[%s6918 + $0x9c] sm:$0xe]
      %v7679 = vld [vmem:[%s6918 + $0xa0] sm:$0xf]
      %v7680 = vld [vmem:[%s6918 + $0xa4] sm:$0x1]
      %v7681 = vld [vmem:[%s6918 + $0xa8] sm:$0xe]
      %v7682 = vld [vmem:[%s6918 + $0xac] sm:$0xf]
      %v7683 = vld [vmem:[%s6918 + $0xb0] sm:$0x1]
      %v7684 = vld [vmem:[%s6918 + $0xb4] sm:$0xe]
      %v7685 = vld [vmem:[%s6918 + $0xb8] sm:$0xf]
      %v7686 = vld [vmem:[%s6918 + $0xbc] sm:$0x1]
      %v7735 = vrot.slane %v7639, 5
      %v7736 = vrot.slane %v7735, 4
      %v7737 = vrot.slane %v7640, 5
      %v7738 = vsel %vm1608, %v7736, %v7737
      %v7739 = vrot.slane %v7737, 4
      %v7740 = vrot.slane %v7641, 5
      %v7741 = vsel %vm1608, %v7739, %v7740
      %v7742 = vrot.slane %v7642, 5
      %v7743 = vrot.slane %v7742, 4
      %v7744 = vrot.slane %v7643, 5
      %v7745 = vsel %vm1608, %v7743, %v7744
      %v7746 = vrot.slane %v7744, 4
      %v7747 = vrot.slane %v7644, 5
      %v7748 = vsel %vm1608, %v7746, %v7747
      %v7749 = vrot.slane %v7645, 5
      %v7750 = vrot.slane %v7749, 4
      %v7751 = vrot.slane %v7646, 5
      %v7752 = vsel %vm1608, %v7750, %v7751
      %v7753 = vrot.slane %v7751, 4
      %v7754 = vrot.slane %v7647, 5
      %v7755 = vsel %vm1608, %v7753, %v7754
      %v7756 = vrot.slane %v7648, 5
      %v7757 = vrot.slane %v7756, 4
      %v7758 = vrot.slane %v7649, 5
      %v7759 = vsel %vm1608, %v7757, %v7758
      %v7760 = vrot.slane %v7758, 4
      %v7761 = vrot.slane %v7650, 5
      %v7762 = vsel %vm1608, %v7760, %v7761
      %v7763 = vrot.slane %v7651, 5
      %v7764 = vrot.slane %v7763, 4
      %v7765 = vrot.slane %v7652, 5
      %v7766 = vsel %vm1608, %v7764, %v7765
      %v7767 = vrot.slane %v7765, 4
      %v7768 = vrot.slane %v7653, 5
      %v7769 = vsel %vm1608, %v7767, %v7768
      %v7770 = vrot.slane %v7654, 5
      %v7771 = vrot.slane %v7770, 4
      %v7772 = vrot.slane %v7655, 5
      %v7773 = vsel %vm1608, %v7771, %v7772
      %v7774 = vrot.slane %v7772, 4
      %v7775 = vrot.slane %v7656, 5
      %v7776 = vsel %vm1608, %v7774, %v7775
      %v7777 = vrot.slane %v7657, 5
      %v7778 = vrot.slane %v7777, 4
      %v7779 = vrot.slane %v7658, 5
      %v7780 = vsel %vm1608, %v7778, %v7779
      %v7781 = vrot.slane %v7779, 4
      %v7782 = vrot.slane %v7659, 5
      %v7783 = vsel %vm1608, %v7781, %v7782
      %v7784 = vrot.slane %v7660, 5
      %v7785 = vrot.slane %v7784, 4
      %v7786 = vrot.slane %v7661, 5
      %v7787 = vsel %vm1608, %v7785, %v7786
      %v7788 = vrot.slane %v7786, 4
      %v7789 = vrot.slane %v7662, 5
      %v7790 = vsel %vm1608, %v7788, %v7789
      %v7791 = vrot.slane %v7663, 5
      %v7792 = vrot.slane %v7791, 4
      %v7793 = vrot.slane %v7664, 5
      %v7794 = vsel %vm1608, %v7792, %v7793
      %v7795 = vrot.slane %v7793, 4
      %v7796 = vrot.slane %v7665, 5
      %v7797 = vsel %vm1608, %v7795, %v7796
      %v7798 = vrot.slane %v7666, 5
      %v7799 = vrot.slane %v7798, 4
      %v7800 = vrot.slane %v7667, 5
      %v7801 = vsel %vm1608, %v7799, %v7800
      %v7802 = vrot.slane %v7800, 4
      %v7803 = vrot.slane %v7668, 5
      %v7804 = vsel %vm1608, %v7802, %v7803
      %v7805 = vrot.slane %v7669, 5
      %v7806 = vrot.slane %v7805, 4
      %v7807 = vrot.slane %v7670, 5
      %v7808 = vsel %vm1608, %v7806, %v7807
      %v7809 = vrot.slane %v7807, 4
      %v7810 = vrot.slane %v7671, 5
      %v7811 = vsel %vm1608, %v7809, %v7810
      %v7812 = vrot.slane %v7672, 5
      %v7813 = vrot.slane %v7812, 4
      %v7814 = vrot.slane %v7673, 5
      %v7815 = vsel %vm1608, %v7813, %v7814
      %v7816 = vrot.slane %v7814, 4
      %v7817 = vrot.slane %v7674, 5
      %v7818 = vsel %vm1608, %v7816, %v7817
      %v7819 = vrot.slane %v7675, 5
      %v7820 = vrot.slane %v7819, 4
      %v7821 = vrot.slane %v7676, 5
      %v7822 = vsel %vm1608, %v7820, %v7821
      %v7823 = vrot.slane %v7821, 4
      %v7824 = vrot.slane %v7677, 5
      %v7825 = vsel %vm1608, %v7823, %v7824
      %v7826 = vrot.slane %v7678, 5
      %v7827 = vrot.slane %v7826, 4
      %v7828 = vrot.slane %v7679, 5
      %v7829 = vsel %vm1608, %v7827, %v7828
      %v7830 = vrot.slane %v7828, 4
      %v7831 = vrot.slane %v7680, 5
      %v7832 = vsel %vm1608, %v7830, %v7831
      %v7833 = vrot.slane %v7681, 5
      %v7834 = vrot.slane %v7833, 4
      %v7835 = vrot.slane %v7682, 5
      %v7836 = vsel %vm1608, %v7834, %v7835
      %v7837 = vrot.slane %v7835, 4
      %v7838 = vrot.slane %v7683, 5
      %v7839 = vsel %vm1608, %v7837, %v7838
      %v7840 = vrot.slane %v7684, 5
      %v7841 = vrot.slane %v7840, 4
      %v7842 = vrot.slane %v7685, 5
      %v7843 = vsel %vm1608, %v7841, %v7842
      %v7844 = vrot.slane %v7842, 4
      %v7845 = vrot.slane %v7686, 5
      %v7846 = vsel %vm1608, %v7844, %v7845
      %v7847 = vunpack.c.l.b16 %v7738
      %v7848 = vunpack.c.l.b16 %v7741
      %v7849 = vunpack.c.l.b16 %v7745
      %v7850 = vunpack.c.l.b16 %v7748
      %v7851 = vunpack.c.l.b16 %v7752
      %v7852 = vunpack.c.l.b16 %v7755
      %v7853 = vunpack.c.l.b16 %v7759
      %v7854 = vunpack.c.l.b16 %v7762
      %v7855 = vunpack.c.l.b16 %v7766
      %v7856 = vunpack.c.l.b16 %v7769
      %v7857 = vunpack.c.l.b16 %v7773
      %v7858 = vunpack.c.l.b16 %v7776
      %v7859 = vunpack.c.l.b16 %v7780
      %v7860 = vunpack.c.l.b16 %v7783
      %v7861 = vunpack.c.l.b16 %v7787
      %v7862 = vunpack.c.l.b16 %v7790
      %v7863 = vunpack.c.l.b16 %v7794
      %v7864 = vunpack.c.l.b16 %v7797
      %v7865 = vunpack.c.l.b16 %v7801
      %v7866 = vunpack.c.l.b16 %v7804
      %v7867 = vunpack.c.l.b16 %v7808
      %v7868 = vunpack.c.l.b16 %v7811
      %v7869 = vunpack.c.l.b16 %v7815
      %v7870 = vunpack.c.l.b16 %v7818
      %v7871 = vunpack.c.l.b16 %v7822
      %v7872 = vunpack.c.l.b16 %v7825
      %v7873 = vunpack.c.l.b16 %v7829
      %v7874 = vunpack.c.l.b16 %v7832
      %v7875 = vunpack.c.l.b16 %v7836
      %v7876 = vunpack.c.l.b16 %v7839
      %v7877 = vunpack.c.l.b16 %v7843
      %v7878 = vunpack.c.l.b16 %v7846
      %v7879 = vpack.c.b16 %v7848, %v7847
      %v7880 = vpack.c.b16 %v7850, %v7849
      %v7881 = vpack.c.b16 %v7852, %v7851
      %v7882 = vpack.c.b16 %v7854, %v7853
      %v7883 = vpack.c.b16 %v7856, %v7855
      %v7884 = vpack.c.b16 %v7858, %v7857
      %v7885 = vpack.c.b16 %v7860, %v7859
      %v7886 = vpack.c.b16 %v7862, %v7861
      %v7887 = vpack.c.b16 %v7864, %v7863
      %v7888 = vpack.c.b16 %v7866, %v7865
      %v7889 = vpack.c.b16 %v7868, %v7867
      %v7890 = vpack.c.b16 %v7870, %v7869
      %v7891 = vpack.c.b16 %v7872, %v7871
      %v7892 = vpack.c.b16 %v7874, %v7873
      %v7893 = vpack.c.b16 %v7876, %v7875
      %v7894 = vpack.c.b16 %v7878, %v7877
      %7895 = vrot.lane.b32.xlu0 %v7879, 64
      %v7896 = vpop.permute.xlu0 %7895
      %7897 = vrot.lane.b32.xlu0 %v7880, 64
      %v7898 = vpop.permute.xlu0 %7897
      %7899 = vrot.lane.b32.xlu0 %v7881, 64
      %v7900 = vpop.permute.xlu0 %7899
      %7901 = vrot.lane.b32.xlu0 %v7882, 64
      %v7902 = vpop.permute.xlu0 %7901
      %7903 = vrot.lane.b32.xlu0 %v7883, 64
      %v7904 = vpop.permute.xlu0 %7903
      %7905 = vrot.lane.b32.xlu0 %v7884, 64
      %v7906 = vpop.permute.xlu0 %7905
      %7907 = vrot.lane.b32.xlu0 %v7885, 64
      %v7908 = vpop.permute.xlu0 %7907
      %7909 = vrot.lane.b32.xlu0 %v7886, 64
      %v7910 = vpop.permute.xlu0 %7909
      %7911 = vrot.lane.b32.xlu0 %v7887, 64
      %v7912 = vpop.permute.xlu0 %7911
      %7913 = vrot.lane.b32.xlu0 %v7888, 64
      %v7914 = vpop.permute.xlu0 %7913
      %7915 = vrot.lane.b32.xlu0 %v7889, 64
      %v7916 = vpop.permute.xlu0 %7915
      %7917 = vrot.lane.b32.xlu0 %v7890, 64
      %v7918 = vpop.permute.xlu0 %7917
      %7919 = vrot.lane.b32.xlu0 %v7891, 64
      %v7920 = vpop.permute.xlu0 %7919
      %7921 = vrot.lane.b32.xlu0 %v7892, 64
      %v7922 = vpop.permute.xlu0 %7921
      %7923 = vrot.lane.b32.xlu0 %v7893, 64
      %v7924 = vpop.permute.xlu0 %7923
      %7925 = vrot.lane.b32.xlu0 %v7894, 64
      %v7926 = vpop.permute.xlu0 %7925
      %7943 = vst.msk [vmem:[#allocation4] sm:$0xff] %vm3904, %v7896
      %7944 = vst.msk [vmem:[#allocation4 + $0x8] sm:$0xff] %vm3904, %v7898
      %7945 = vst.msk [vmem:[#allocation4 + $0x10] sm:$0xff] %vm3904, %v7900
      %7946 = vst.msk [vmem:[#allocation4 + $0x18] sm:$0xff] %vm3904, %v7902
      %7947 = vst.msk [vmem:[#allocation4 + $0x20] sm:$0xff] %vm3904, %v7904
      %7948 = vst.msk [vmem:[#allocation4 + $0x28] sm:$0xff] %vm3904, %v7906
      %7949 = vst.msk [vmem:[#allocation4 + $0x30] sm:$0xff] %vm3904, %v7908
      %7950 = vst.msk [vmem:[#allocation4 + $0x38] sm:$0xff] %vm3904, %v7910
      %7951 = vst.msk [vmem:[#allocation4 + $0x40] sm:$0xff] %vm3904, %v7912
      %7952 = vst.msk [vmem:[#allocation4 + $0x48] sm:$0xff] %vm3904, %v7914
      %7953 = vst.msk [vmem:[#allocation4 + $0x50] sm:$0xff] %vm3904, %v7916
      %7954 = vst.msk [vmem:[#allocation4 + $0x58] sm:$0xff] %vm3904, %v7918
      %7955 = vst.msk [vmem:[#allocation4 + $0x60] sm:$0xff] %vm3904, %v7920
      %7956 = vst.msk [vmem:[#allocation4 + $0x68] sm:$0xff] %vm3904, %v7922
      %7957 = vst.msk [vmem:[#allocation4 + $0x70] sm:$0xff] %vm3904, %v7924
      %7958 = vst.msk [vmem:[#allocation4 + $0x78] sm:$0xff] %vm3904, %v7926
      %v7959 = vld [vmem:[#allocation4] sm:$0xff]
      %v7960 = vld [vmem:[#allocation4 + $0x8] sm:$0xff]
      %v7961 = vld [vmem:[#allocation4 + $0x10] sm:$0xff]
      %v7962 = vld [vmem:[#allocation4 + $0x18] sm:$0xff]
      %v7963 = vld [vmem:[#allocation4 + $0x20] sm:$0xff]
      %v7964 = vld [vmem:[#allocation4 + $0x28] sm:$0xff]
      %v7965 = vld [vmem:[#allocation4 + $0x30] sm:$0xff]
      %v7966 = vld [vmem:[#allocation4 + $0x38] sm:$0xff]
      %v7967 = vld [vmem:[#allocation4 + $0x40] sm:$0xff]
      %v7968 = vld [vmem:[#allocation4 + $0x48] sm:$0xff]
      %v7969 = vld [vmem:[#allocation4 + $0x50] sm:$0xff]
      %v7970 = vld [vmem:[#allocation4 + $0x58] sm:$0xff]
      %v7971 = vld [vmem:[#allocation4 + $0x60] sm:$0xff]
      %v7972 = vld [vmem:[#allocation4 + $0x68] sm:$0xff]
      %v7973 = vld [vmem:[#allocation4 + $0x70] sm:$0xff]
      %v7974 = vld [vmem:[#allocation4 + $0x78] sm:$0xff]
      %v7975 = vld [vmem:[%s3] sm:$0xf]
      %v7976 = vld [vmem:[%s3 + $0x4] sm:$0xf]
      %v7977 = vld [vmem:[%s3 + $0x8] sm:$0xf]
      %v7978 = vld [vmem:[%s3 + $0xc] sm:$0xf]
      %v7979 = vld [vmem:[%s3 + $0x10] sm:$0xf]
      %v7980 = vld [vmem:[%s3 + $0x14] sm:$0xf]
      %v7981 = vld [vmem:[%s3 + $0x18] sm:$0xf]
      %v7982 = vld [vmem:[%s3 + $0x1c] sm:$0xf]
      %v7983 = vld [vmem:[%s3 + $0x20] sm:$0xf]
      %v7984 = vld [vmem:[%s4] sm:$0x1]
      %v7986 = vlaneseq
      %v7987 = vshrl.u32 %v7986, 7
      %v7988 = vsub.s32 0, %v7987
      %v7989 = vrot.slane %v7984, %v7988
      %v8000 = vunpack.c.l.b16 %v7975
      %v8001 = vunpack.c.l.b16 %v7976
      %v8002 = vunpack.c.l.b16 %v7977
      %v8003 = vunpack.c.l.b16 %v7978
      %v8004 = vunpack.c.l.b16 %v7979
      %v8005 = vunpack.c.l.b16 %v7980
      %v8006 = vunpack.c.l.b16 %v7981
      %v8007 = vunpack.c.l.b16 %v7982
      %v8008 = vunpack.c.l.b16 %v7983
      %v8009 = vpack.c.b16 %v8001, %v8000
      %v8010 = vpack.c.b16 %v8003, %v8002
      %v8011 = vpack.c.b16 %v8005, %v8004
      %v8012 = vpack.c.b16 %v8007, %v8006
      %v8013 = vpack.c.b16 %v8008, %v8008
      %v8019 = vsel %vm3980, %v7959, 0
      %v8022 = vsel %vm3980, %v7960, 0
      %v8025 = vsel %vm3980, %v7961, 0
      %v8028 = vsel %vm3980, %v7962, 0
      %v8031 = vsel %vm3980, %v7963, 0
      %v8034 = vsel %vm3980, %v7964, 0
      %v8037 = vsel %vm3980, %v7965, 0
      %v8040 = vsel %vm3980, %v7966, 0
      %v8043 = vsel %vm3980, %v7967, 0
      %v8046 = vsel %vm3980, %v7968, 0
      %v8049 = vsel %vm3980, %v7969, 0
      %v8052 = vsel %vm3980, %v7970, 0
      %v8055 = vsel %vm3980, %v7971, 0
      %v8058 = vsel %vm3980, %v7972, 0
      %v8061 = vsel %vm3980, %v7973, 0
      %v8064 = vsel %vm3980, %v7974, 0
      %v8067 = vsel %vm4029, %v8013, 0
      %8069 = vmatprep.subr.bf16.mxu0 0
      %8070 = vmatpush1.bf16.msra.mxu0 %v8009
      %8071 = vmatprep.subr.bf16.mxu0 0
      %8072 = vmatpush1.bf16.msra.mxu0 %v8010
      %8073 = vmatprep.subr.bf16.mxu0 0
      %8074 = vmatpush1.bf16.msra.mxu0 %v8011
      %8075 = vmatprep.subr.bf16.mxu0 0
      %8076 = vmatpush1.bf16.msra.mxu0 %v8012
      %8077 = vmatprep.subr.bf16.mxu0 0
      %8078 = vmatpush1.bf16.msra.mxu0 %v8067
      %8079 = vmatprep.subr.bf16.mxu0 0
      %8080 = vmatpush1.bf16.msra.mxu0 0
      %8081 = vmatprep.subr.bf16.mxu0 0
      %8082 = vmatpush1.bf16.msra.mxu0 0
      %8083 = vmatprep.subr.bf16.mxu0 0
      %8084 = vmatpush1.bf16.msra.mxu0 0
      %8085 = vmatprep.subr.bf16.mxu0 0
      %8086 = vmatpush1.bf16.msra.mxu0 0
      %8087 = vmatprep.subr.bf16.mxu0 0
      %8088 = vmatpush1.bf16.msra.mxu0 0
      %8089 = vmatprep.subr.bf16.mxu0 0
      %8090 = vmatpush1.bf16.msra.mxu0 0
      %8091 = vmatprep.subr.bf16.mxu0 0
      %8092 = vmatpush1.bf16.msra.mxu0 0
      %8093 = vmatprep.subr.bf16.mxu0 0
      %8094 = vmatpush1.bf16.msra.mxu0 0
      %8095 = vmatprep.subr.bf16.mxu0 0
      %8096 = vmatpush1.bf16.msra.mxu0 0
      %8097 = vmatprep.subr.bf16.mxu0 0
      %8098 = vmatpush1.bf16.msra.mxu0 0
      %8099 = vmatprep.subr.bf16.mxu0 0
      %8100 = vmatpush1.bf16.msra.mxu0 0
      %8101 = vmatprep.mubr.bf16.mxu0 0
      %8102 = vmatmul.mubr.bf16.gmra.mrb[0].mxu0 %v8019
      %v8103 = vpop.f32.mrb[0].mxu0
      %v8104 = vadd.f32 %v7989, %v8103
      %v8105 = vpop.f32.mrb[0].mxu0
      %v8106 = vpop.f32.mrb[0].mxu0
      %v8107 = vadd.f32 %v7989, %v8106
      %v8108 = vpop.f32.mrb[0].mxu0
      %8109 = vmatprep.mubr.bf16.mxu0 0
      %8110 = vmatmul.mubr.bf16.gmra.mrb[0].mxu0 %v8022
      %v8111 = vpop.f32.mrb[0].mxu0
      %v8112 = vadd.f32 %v7989, %v8111
      %v8113 = vpop.f32.mrb[0].mxu0
      %v8114 = vpop.f32.mrb[0].mxu0
      %v8115 = vadd.f32 %v7989, %v8114
      %v8116 = vpop.f32.mrb[0].mxu0
      %8117 = vmatprep.mubr.bf16.mxu0 0
      %8118 = vmatmul.mubr.bf16.gmra.mrb[0].mxu0 %v8025
      %v8119 = vpop.f32.mrb[0].mxu0
      %v8120 = vadd.f32 %v7989, %v8119
      %v8121 = vpop.f32.mrb[0].mxu0
      %v8122 = vpop.f32.mrb[0].mxu0
      %v8123 = vadd.f32 %v7989, %v8122
      %v8124 = vpop.f32.mrb[0].mxu0
      %8125 = vmatprep.mubr.bf16.mxu0 0
      %8126 = vmatmul.mubr.bf16.gmra.mrb[0].mxu0 %v8028
      %v8127 = vpop.f32.mrb[0].mxu0
      %v8128 = vadd.f32 %v7989, %v8127
      %v8129 = vpop.f32.mrb[0].mxu0
      %v8130 = vpop.f32.mrb[0].mxu0
      %v8131 = vadd.f32 %v7989, %v8130
      %v8132 = vpop.f32.mrb[0].mxu0
      %8133 = vmatprep.mubr.bf16.mxu0 0
      %8134 = vmatmul.mubr.bf16.gmra.mrb[0].mxu0 %v8031
      %v8135 = vpop.f32.mrb[0].mxu0
      %v8136 = vadd.f32 %v7989, %v8135
      %v8137 = vpop.f32.mrb[0].mxu0
      %v8138 = vpop.f32.mrb[0].mxu0
      %v8139 = vadd.f32 %v7989, %v8138
      %v8140 = vpop.f32.mrb[0].mxu0
      %8141 = vmatprep.mubr.bf16.mxu0 0
      %8142 = vmatmul.mubr.bf16.gmra.mrb[0].mxu0 %v8034
      %v8143 = vpop.f32.mrb[0].mxu0
      %v8144 = vadd.f32 %v7989, %v8143
      %v8145 = vpop.f32.mrb[0].mxu0
      %v8146 = vpop.f32.mrb[0].mxu0
      %v8147 = vadd.f32 %v7989, %v8146
      %v8148 = vpop.f32.mrb[0].mxu0
      %8149 = vmatprep.mubr.bf16.mxu0 0
      %8150 = vmatmul.mubr.bf16.gmra.mrb[0].mxu0 %v8037
      %v8151 = vpop.f32.mrb[0].mxu0
      %v8152 = vadd.f32 %v7989, %v8151
      %v8153 = vpop.f32.mrb[0].mxu0
      %v8154 = vpop.f32.mrb[0].mxu0
      %v8155 = vadd.f32 %v7989, %v8154
      %v8156 = vpop.f32.mrb[0].mxu0
      %8157 = vmatprep.mubr.bf16.mxu0 0
      %8158 = vmatmul.mubr.bf16.gmra.mrb[0].mxu0 %v8040
      %v8159 = vpop.f32.mrb[0].mxu0
      %v8160 = vadd.f32 %v7989, %v8159
      %v8161 = vpop.f32.mrb[0].mxu0
      %v8162 = vpop.f32.mrb[0].mxu0
      %v8163 = vadd.f32 %v7989, %v8162
      %v8164 = vpop.f32.mrb[0].mxu0
      %8165 = vmatprep.mubr.bf16.mxu0 0
      %8166 = vmatmul.mubr.bf16.gmra.mrb[0].mxu0 %v8043
      %v8167 = vpop.f32.mrb[0].mxu0
      %v8168 = vadd.f32 %v7989, %v8167
      %v8169 = vpop.f32.mrb[0].mxu0
      %v8170 = vpop.f32.mrb[0].mxu0
      %v8171 = vadd.f32 %v7989, %v8170
      %v8172 = vpop.f32.mrb[0].mxu0
      %8173 = vmatprep.mubr.bf16.mxu0 0
      %8174 = vmatmul.mubr.bf16.gmra.mrb[0].mxu0 %v8046
      %v8175 = vpop.f32.mrb[0].mxu0
      %v8176 = vadd.f32 %v7989, %v8175
      %v8177 = vpop.f32.mrb[0].mxu0
      %v8178 = vpop.f32.mrb[0].mxu0
      %v8179 = vadd.f32 %v7989, %v8178
      %v8180 = vpop.f32.mrb[0].mxu0
      %8181 = vmatprep.mubr.bf16.mxu0 0
      %8182 = vmatmul.mubr.bf16.gmra.mrb[0].mxu0 %v8049
      %v8183 = vpop.f32.mrb[0].mxu0
      %v8184 = vadd.f32 %v7989, %v8183
      %v8185 = vpop.f32.mrb[0].mxu0
      %v8186 = vpop.f32.mrb[0].mxu0
      %v8187 = vadd.f32 %v7989, %v8186
      %v8188 = vpop.f32.mrb[0].mxu0
      %8189 = vmatprep.mubr.bf16.mxu0 0
      %8190 = vmatmul.mubr.bf16.gmra.mrb[0].mxu0 %v8052
      %v8191 = vpop.f32.mrb[0].mxu0
      %v8192 = vadd.f32 %v7989, %v8191
      %v8193 = vpop.f32.mrb[0].mxu0
      %v8194 = vpop.f32.mrb[0].mxu0
      %v8195 = vadd.f32 %v7989, %v8194
      %v8196 = vpop.f32.mrb[0].mxu0
      %8197 = vmatprep.mubr.bf16.mxu0 0
      %8198 = vmatmul.mubr.bf16.gmra.mrb[0].mxu0 %v8055
      %v8199 = vpop.f32.mrb[0].mxu0
      %v8200 = vadd.f32 %v7989, %v8199
      %v8201 = vpop.f32.mrb[0].mxu0
      %v8202 = vpop.f32.mrb[0].mxu0
      %v8203 = vadd.f32 %v7989, %v8202
      %v8204 = vpop.f32.mrb[0].mxu0
      %8205 = vmatprep.mubr.bf16.mxu0 0
      %8206 = vmatmul.mubr.bf16.gmra.mrb[0].mxu0 %v8058
      %v8207 = vpop.f32.mrb[0].mxu0
      %v8208 = vadd.f32 %v7989, %v8207
      %v8209 = vpop.f32.mrb[0].mxu0
      %v8210 = vpop.f32.mrb[0].mxu0
      %v8211 = vadd.f32 %v7989, %v8210
      %v8212 = vpop.f32.mrb[0].mxu0
      %8213 = vmatprep.mubr.bf16.mxu0 0
      %8214 = vmatmul.mubr.bf16.gmra.mrb[0].mxu0 %v8061
      %v8215 = vpop.f32.mrb[0].mxu0
      %v8216 = vadd.f32 %v7989, %v8215
      %v8217 = vpop.f32.mrb[0].mxu0
      %v8218 = vpop.f32.mrb[0].mxu0
      %v8219 = vadd.f32 %v7989, %v8218
      %v8220 = vpop.f32.mrb[0].mxu0
      %8221 = vmatprep.mubr.bf16.mxu0 0
      %8222 = vmatmul.mubr.bf16.gmra.mrb[0].mxu0 %v8064
      %v8223 = vpop.f32.mrb[0].mxu0
      %v8224 = vadd.f32 %v7989, %v8223
      %v8225 = vpop.f32.mrb[0].mxu0
      %v8226 = vpop.f32.mrb[0].mxu0
      %v8227 = vadd.f32 %v7989, %v8226
      %v8228 = vpop.f32.mrb[0].mxu0
      %8229 = vdwg.mxu0
      %v8230 = vunpack.c.l.bf16 %v226
      %v8231 = vunpack.c.l.bf16 %v227
      %v8232 = vunpack.c.l.bf16 %v228
      %v8233 = vunpack.c.l.bf16 %v229
      %v8234 = vunpack.c.l.bf16 %v230
      %v8235 = vunpack.c.l.bf16 %v231
      %v8236 = vunpack.c.l.bf16 %v232
      %v8237 = vunpack.c.l.bf16 %v233
      %v8238 = vunpack.c.l.bf16 %v234
      %v8239 = vunpack.c.l.bf16 %v235
      %v8240 = vunpack.c.l.bf16 %v236
      %v8241 = vunpack.c.l.bf16 %v237
      %v8242 = vunpack.c.l.bf16 %v238
      %v8243 = vunpack.c.l.bf16 %v239
      %v8244 = vunpack.c.l.bf16 %v240
      %v8245 = vunpack.c.l.bf16 %v241
      %v8246 = vunpack.c.l.bf16 %v242
      %v8247 = vunpack.c.l.bf16 %v243
      %v8248 = vunpack.c.l.bf16 %v244
      %v8249 = vunpack.c.l.bf16 %v245
      %v8250 = vunpack.c.l.bf16 %v246
      %v8251 = vunpack.c.l.bf16 %v247
      %v8252 = vunpack.c.l.bf16 %v248
      %v8253 = vunpack.c.l.bf16 %v249
      %v8254 = vunpack.c.l.bf16 %v250
      %v8255 = vunpack.c.l.bf16 %v251
      %v8256 = vunpack.c.l.bf16 %v252
      %v8257 = vunpack.c.l.bf16 %v253
      %v8258 = vunpack.c.l.bf16 %v254
      %v8259 = vunpack.c.l.bf16 %v255
      %v8260 = vunpack.c.l.bf16 %v256
      %v8261 = vunpack.c.l.bf16 %v257
      %v8262 = vadd.f32 %v8104, %v8230
      %v8263 = vadd.f32 %v8107, %v8231
      %v8264 = vadd.f32 %v8112, %v8232
      %v8265 = vadd.f32 %v8115, %v8233
      %v8266 = vadd.f32 %v8120, %v8234
      %v8267 = vadd.f32 %v8123, %v8235
      %v8268 = vadd.f32 %v8128, %v8236
      %v8269 = vadd.f32 %v8131, %v8237
      %v8270 = vadd.f32 %v8136, %v8238
      %v8271 = vadd.f32 %v8139, %v8239
      %v8272 = vadd.f32 %v8144, %v8240
      %v8273 = vadd.f32 %v8147, %v8241
      %v8274 = vadd.f32 %v8152, %v8242
      %v8275 = vadd.f32 %v8155, %v8243
      %v8276 = vadd.f32 %v8160, %v8244
      %v8277 = vadd.f32 %v8163, %v8245
      %v8278 = vadd.f32 %v8168, %v8246
      %v8279 = vadd.f32 %v8171, %v8247
      %v8280 = vadd.f32 %v8176, %v8248
      %v8281 = vadd.f32 %v8179, %v8249
      %v8282 = vadd.f32 %v8184, %v8250
      %v8283 = vadd.f32 %v8187, %v8251
      %v8284 = vadd.f32 %v8192, %v8252
      %v8285 = vadd.f32 %v8195, %v8253
      %v8286 = vadd.f32 %v8200, %v8254
      %v8287 = vadd.f32 %v8203, %v8255
      %v8288 = vadd.f32 %v8208, %v8256
      %v8289 = vadd.f32 %v8211, %v8257
      %v8290 = vadd.f32 %v8216, %v8258
      %v8291 = vadd.f32 %v8219, %v8259
      %v8292 = vadd.f32 %v8224, %v8260
      %v8293 = vadd.f32 %v8227, %v8261
      %v8294 = vmax.f32 %v8262, 0.0
      %v8295 = vmax.f32 %v8263, 0.0
      %v8296 = vmax.f32 %v8264, 0.0
      %v8297 = vmax.f32 %v8265, 0.0
      %v8298 = vmax.f32 %v8266, 0.0
      %v8299 = vmax.f32 %v8267, 0.0
      %v8300 = vmax.f32 %v8268, 0.0
      %v8301 = vmax.f32 %v8269, 0.0
      %v8302 = vmax.f32 %v8270, 0.0
      %v8303 = vmax.f32 %v8271, 0.0
      %v8304 = vmax.f32 %v8272, 0.0
      %v8305 = vmax.f32 %v8273, 0.0
      %v8306 = vmax.f32 %v8274, 0.0
      %v8307 = vmax.f32 %v8275, 0.0
      %v8308 = vmax.f32 %v8276, 0.0
      %v8309 = vmax.f32 %v8277, 0.0
      %v8310 = vmax.f32 %v8278, 0.0
      %v8311 = vmax.f32 %v8279, 0.0
      %v8312 = vmax.f32 %v8280, 0.0
      %v8313 = vmax.f32 %v8281, 0.0
      %v8314 = vmax.f32 %v8282, 0.0
      %v8315 = vmax.f32 %v8283, 0.0
      %v8316 = vmax.f32 %v8284, 0.0
      %v8317 = vmax.f32 %v8285, 0.0
      %v8318 = vmax.f32 %v8286, 0.0
      %v8319 = vmax.f32 %v8287, 0.0
      %v8320 = vmax.f32 %v8288, 0.0
      %v8321 = vmax.f32 %v8289, 0.0
      %v8322 = vmax.f32 %v8290, 0.0
      %v8323 = vmax.f32 %v8291, 0.0
      %v8324 = vmax.f32 %v8292, 0.0
      %v8325 = vmax.f32 %v8293, 0.0
      %8326 = vst.msk [vmem:[%s224] sm:$0xff] %vm945, %v8294
      %8327 = vst.msk [vmem:[%s224 + $0x8] sm:$0xff] %vm945, %v8295
      %8328 = vst.msk [vmem:[%s224 + $0x10] sm:$0xff] %vm945, %v8296
      %8329 = vst.msk [vmem:[%s224 + $0x18] sm:$0xff] %vm945, %v8297
      %8330 = vst.msk [vmem:[%s224 + $0x20] sm:$0xff] %vm945, %v8298
      %8331 = vst.msk [vmem:[%s224 + $0x28] sm:$0xff] %vm945, %v8299
      %8332 = vst.msk [vmem:[%s224 + $0x30] sm:$0xff] %vm945, %v8300
      %8333 = vst.msk [vmem:[%s224 + $0x38] sm:$0xff] %vm945, %v8301
      %8334 = vst.msk [vmem:[%s224 + $0x40] sm:$0xff] %vm945, %v8302
      %8335 = vst.msk [vmem:[%s224 + $0x48] sm:$0xff] %vm945, %v8303
      %8336 = vst.msk [vmem:[%s224 + $0x50] sm:$0xff] %vm945, %v8304
      %8337 = vst.msk [vmem:[%s224 + $0x58] sm:$0xff] %vm945, %v8305
      %8338 = vst.msk [vmem:[%s224 + $0x60] sm:$0xff] %vm945, %v8306
      %8339 = vst.msk [vmem:[%s224 + $0x68] sm:$0xff] %vm945, %v8307
      %8340 = vst.msk [vmem:[%s224 + $0x70] sm:$0xff] %vm945, %v8308
      %8341 = vst.msk [vmem:[%s224 + $0x78] sm:$0xff] %vm945, %v8309
      %8342 = vst.msk [vmem:[%s224 + $0x80] sm:$0xff] %vm945, %v8310
      %8343 = vst.msk [vmem:[%s224 + $0x88] sm:$0xff] %vm945, %v8311
      %8344 = vst.msk [vmem:[%s224 + $0x90] sm:$0xff] %vm945, %v8312
      %8345 = vst.msk [vmem:[%s224 + $0x98] sm:$0xff] %vm945, %v8313
      %8346 = vst.msk [vmem:[%s224 + $0xa0] sm:$0xff] %vm945, %v8314
      %8347 = vst.msk [vmem:[%s224 + $0xa8] sm:$0xff] %vm945, %v8315
      %8348 = vst.msk [vmem:[%s224 + $0xb0] sm:$0xff] %vm945, %v8316
      %8349 = vst.msk [vmem:[%s224 + $0xb8] sm:$0xff] %vm945, %v8317
      %8350 = vst.msk [vmem:[%s224 + $0xc0] sm:$0xff] %vm945, %v8318
      %8351 = vst.msk [vmem:[%s224 + $0xc8] sm:$0xff] %vm945, %v8319
      %8352 = vst.msk [vmem:[%s224 + $0xd0] sm:$0xff] %vm945, %v8320
      %8353 = vst.msk [vmem:[%s224 + $0xd8] sm:$0xff] %vm945, %v8321
      %8354 = vst.msk [vmem:[%s224 + $0xe0] sm:$0xff] %vm945, %v8322
      %8355 = vst.msk [vmem:[%s224 + $0xe8] sm:$0xff] %vm945, %v8323
      %8356 = vst.msk [vmem:[%s224 + $0xf0] sm:$0xff] %vm945, %v8324
      %8357 = vst.msk [vmem:[%s224 + $0xf8] sm:$0xff] %vm945, %v8325
      %p8358 = scmp.lt.s32.totalorder %s16, 1
      %s8359 = scalar_select %p8358, %s16, 1
      %s8360 = smul.addr %s8359, 32
      %s8361 = smul.addr %s8360, 8
      %s8362 = scalar_lea.vmem %s5, %s8361
      // Predicated region
      $region41: #{tpu_custom_call.1} parent=39 // pred_check
        %p8363 = pneg %p144
      $region42: #{tpu_custom_call.1} parent=39 // pred_check_branch
        %8365 = sbr.rel (%p8363) target = $region44
      $region43: #{tpu_custom_call.1} parent=39 // pred_region
        _
      $region44: #{tpu_custom_call.1} parent=39 // pred_fallthru
        _
    $region40: #{tpu_custom_call.1} parent=5 // pred_fallthru
      _
    %p8366 = scmp.le.s32.totalorder 2, %s11
    // Predicated region
    $region45: #{tpu_custom_call.1} parent=5 // pred_check
      %p8367 = pneg %p8366
    $region46: #{tpu_custom_call.1} parent=5 // pred_check_branch
      %8369 = sbr.rel (%p8367) target = $region48
    $region47: #{tpu_custom_call.1} parent=5 // pred_region
      %s8370 = ssub.s32 %s11, 2
      // Predicated region
      $region49: #{tpu_custom_call.1} parent=47 // pred_check
        %p8371 = pneg %p150
      $region50: #{tpu_custom_call.1} parent=47 // pred_check_branch
        %8373 = sbr.rel (%p8371) target = $region52
      $region51: #{tpu_custom_call.1} parent=47 // pred_region
        %p8374 = scmp.lt.s32.totalorder %s17, 1
        %s8375 = scalar_select %p8374, %s17, 1
        %s8376 = smul.addr %s8375, 32
        %s8377 = smul.addr %s8376, 8
        %s8378 = scalar_lea.vmem %s5, %s8377
      $region52: #{tpu_custom_call.1} parent=47 // pred_fallthru
        _
    $region48: #{tpu_custom_call.1} parent=5 // pred_fallthru
      _
  $region6: #{tpu_custom_call.1} parent=0 // loop_footer
    %s15 = sadd.s32 1, %s11
  $region7: #{tpu_custom_call.1} parent=0 // loop_footer_branch
    %10 = sbr.rel target = $region3
  $region8: #{tpu_custom_call.1} parent=0 // loop_exit
    _

</llo_original>
